<compile_context>
chip_gen: v7x
topology: tpu7x:2x2x1
jax: 0.10.0
libtpu: 0.0.40
codegen_flags: <defaults>
</compile_context>

<pallas_src>
import numpy as np
import jax
import jax.numpy as jnp
from jax.experimental import pallas as pl
from jax.experimental.pallas import tpu as pltpu

EPS = 1e-5  # PyTorch BatchNorm default eps


# ------------------------------ fused kernel --------------------------------

def _naive_cnn_kernel(x1_ref, w1_ref, b1_ref,
                      w2_ref, g2_ref, p2_ref, b2_ref,
                      w3_ref, g3_ref, p3_ref, b3_ref,
                      w4_ref, g4_ref, p4_ref, b4_ref,
                      wf_ref, bf_ref, o_ref):
    f32 = jnp.float32

    # -------- layer 1: conv(s=2,p=1) + BN + ReLU + maxpool(2,2) --------------
    # x1_ref[0]: (4*HW1, 27) host im2col, 9 taps merged on K, 4 pool phases on M.
    # BN scale already folded into w1 on the host; only the bias remains here.
    x1 = x1_ref[0]
    m1 = x1.shape[0] // 4
    z1 = jnp.dot(x1, w1_ref[...], preferred_element_type=f32) + b1_ref[...]
    a = jnp.maximum(jnp.maximum(z1[0 * m1:1 * m1], z1[1 * m1:2 * m1]),
                    jnp.maximum(z1[2 * m1:3 * m1], z1[3 * m1:4 * m1]))
    a = jnp.maximum(a, 0.0)                                           # (HW1, 16)

    # -------- layers 2-4: conv + BN + ReLU + maxpool, all on the MXU ----------
    def conv_bn_relu_pool(a, w_ref, g_ref, p_ref, b_ref):
        # a: (HW_in, Cin) row-major spatial.
        # g_ref[t]: (HW_conv, HW_in) 0/1 gather for tap t (zero rows = padding).
        # p_ref[ph]: (HW_pool, HW_conv) 0/1 maxpool-phase selection.
        conv = None
        for t in range(w_ref.shape[0]):                 # 9 taps, static unroll
            tap = jnp.dot(g_ref[t], a, preferred_element_type=f32)
            contrib = jnp.dot(tap, w_ref[t], preferred_element_type=f32)
            conv = contrib if conv is None else conv + contrib
        y = conv + b_ref[...]                           # folded BN (bias only)
        pooled = None
        for ph in range(p_ref.shape[0]):                # 4 pooling phases
            sel = jnp.dot(p_ref[ph], y, preferred_element_type=f32)
            pooled = sel if pooled is None else jnp.maximum(pooled, sel)
        return jnp.maximum(pooled, 0.0)                 # ReLU commutes with max

    a = conv_bn_relu_pool(a, w2_ref, g2_ref, p2_ref, b2_ref)          # (HW2, 32)
    a = conv_bn_relu_pool(a, w3_ref, g3_ref, p3_ref, b3_ref)          # (HW3, 64)
    a = conv_bn_relu_pool(a, w4_ref, g4_ref, p4_ref, b4_ref)          # (1, 128)

    # -------- fc1 + BN1d + ReLU (dropout = identity at inference) ------------
    y = jnp.dot(a, wf_ref[...], preferred_element_type=f32) + bf_ref[...]
    o_ref[0] = jnp.maximum(y, 0.0)


# ------------------------------ host helpers --------------------------------

def _fold_bn(w, bias, eps=EPS):
    """Fold inference BatchNorm (PyTorch-default stats: gamma=1, beta=0,
    running_mean=0, running_var=1) into the preceding conv/linear weights.

    w: (..., Cout);  bias: (Cout,).
    Returns (scaled_w, folded_bias[1, Cout])."""
    cout = w.shape[-1]
    gamma = jnp.ones((cout,), jnp.float32)
    beta = jnp.zeros((cout,), jnp.float32)
    mean = jnp.zeros((cout,), jnp.float32)
    var = jnp.ones((cout,), jnp.float32)
    scale = gamma * jax.lax.rsqrt(var + eps)                       # (Cout,)
    w_f = w.astype(jnp.float32) * scale                            # fold into W
    b_f = beta + scale * (bias.astype(jnp.float32) - mean)
    return w_f, b_f.reshape(1, -1)


def _layer1_phase_cols(x_nhwc):
    """(B,H,W,3) -> (B, 4*(H//4)*(W//4), 27).

    Input-boundary layout glue only: im2col for the stride-2 conv1 with the 9
    taps merged on the feature axis and the 4 maxpool phases stacked on rows.
    Everything downstream stays in VMEM inside the fused kernel.
    """
    B, H, W, C = x_nhwc.shape
    Hp, Wp = H // 4, W // 4
    xpad = jnp.pad(x_nhwc, ((0, 0), (1, 1), (1, 1), (0, 0)))
    phases = []
    for di in (0, 1):
        for dj in (0, 1):
            taps = []
            for kh in range(3):
                for kw in range(3):
                    r0 = 2 * di + kh
                    c0 = 2 * dj + kw
                    taps.append(xpad[:, r0:r0 + 4 * (Hp - 1) + 1:4,
                                        c0:c0 + 4 * (Wp - 1) + 1:4, :])
            phases.append(jnp.concatenate(taps, axis=-1).reshape(B, Hp * Wp, 9 * C))
    return jnp.concatenate(phases, axis=1)


def _gather_pool_mats(h, w, stride):
    """0/1 selection matrices for a 3x3 / pad-1 conv (given stride) followed by
    a 2x2 / stride-2 maxpool, acting on row-major (h*w, C) activations."""
    ho = (h - 1) // stride + 1
    wo = (w - 1) // stride + 1
    hp, wp = ho // 2, wo // 2
    g = np.zeros((9, ho * wo, h * w), np.float32)
    for kh in range(3):
        for kw in range(3):
            t = kh * 3 + kw
            for i in range(ho):
                r = stride * i + kh - 1
                if r < 0 or r >= h:
                    continue
                for j in range(wo):
                    c = stride * j + kw - 1
                    if c < 0 or c >= w:
                        continue
                    g[t, i * wo + j, r * w + c] = 1.0
    p = np.zeros((4, hp * wp, ho * wo), np.float32)
    for di in range(2):
        for dj in range(2):
            ph = di * 2 + dj
            for i2 in range(hp):
                for j2 in range(wp):
                    p[ph, i2 * wp + j2, (2 * i2 + di) * wo + (2 * j2 + dj)] = 1.0
    return jnp.asarray(g), jnp.asarray(p)


def _const_spec(arr):
    zeros = (0,) * arr.ndim
    return pl.BlockSpec(arr.shape, lambda b: zeros)   # same block every step -> resident


# ------------------------------ forward pass --------------------------------

@jax.jit
def naive_cnn_forward(x_nchw, params):
    x = jnp.transpose(x_nchw, (0, 2, 3, 1)).astype(jnp.float32)   # NCHW -> NHWC
    B, H, W, _ = x.shape
    # NOTE: final spatial extent must be 1x1 so the flatten matches PyTorch's
    # NCHW flatten (true for H = W = 64, matching fc1 in-features = 128).
    assert H % 64 == 0 and W % 64 == 0 and (H // 64) * (W // 64) == 1

    x1 = _layer1_phase_cols(x)                                    # (B, 4*HW1, 27)

    w1, b1 = _fold_bn(params["w1"].reshape(-1, params["w1"].shape[-1]),
                      params["b1"])                               # (27, 16)
    w2, b2 = _fold_bn(params["w2"].reshape(9, params["w2"].shape[2],
                                           params["w2"].shape[3]), params["b2"])
    w3, b3 = _fold_bn(params["w3"].reshape(9, params["w3"].shape[2],
                                           params["w3"].shape[3]), params["b3"])
    w4, b4 = _fold_bn(params["w4"].reshape(9, params["w4"].shape[2],
                                           params["w4"].shape[3]), params["b4"])
    wf, bf = _fold_bn(params["wf"], params["bf"])                 # (128, 512)

    g2, p2 = _gather_pool_mats(H // 4, W // 4, 2)                 # 16x16 -> 4x4
    g3, p3 = _gather_pool_mats(H // 16, W // 16, 1)               # 4x4   -> 2x2
    g4, p4 = _gather_pool_mats(H // 32, W // 32, 1)               # 2x2   -> 1x1

    operands = (x1, w1, b1,
                w2, g2, p2, b2,
                w3, g3, p3, b3,
                w4, g4, p4, b4,
                wf, bf)

    in_specs = [pl.BlockSpec((1,) + tuple(x1.shape[1:]), lambda b: (b, 0, 0))]
    in_specs += [_const_spec(op) for op in operands[1:]]

    out = pl.pallas_call(
        _naive_cnn_kernel,
        out_shape=jax.ShapeDtypeStruct((B, 1, wf.shape[1]), jnp.float32),
        grid=(B,),
        in_specs=in_specs,
        out_specs=pl.BlockSpec((1, 1, wf.shape[1]), lambda b: (b, 0, 0)),
        compiler_params=pltpu.CompilerParams(
            dimension_semantics=("parallel",)),  # lets v7x split batch over 2 TCs
    )(*operands)
    # TODO(synk): training-mode Dropout(p=0.5) and batch-statistics BatchNorm are
    # not implemented (inference semantics only).
    return out.reshape(B, wf.shape[1])


# --------------------------- plain-JAX reference ----------------------------

def reference_forward(x_nchw, params):
    x = jnp.transpose(x_nchw, (0, 2, 3, 1)).astype(jnp.float32)
    for idx, s in enumerate([2, 2, 1, 1], start=1):
        w = params[f"w{idx}"]
        b = params[f"b{idx}"]
        x = jax.lax.conv_general_dilated(
            x, w, (s, s), [(1, 1), (1, 1)],
            dimension_numbers=("NHWC", "HWIO", "NHWC"))
        x = (x + b) * jax.lax.rsqrt(jnp.float32(1.0 + EPS))
        x = jnp.maximum(x, 0.0)
        x = jax.lax.reduce_window(x, jnp.array(-jnp.inf, x.dtype), jax.lax.max,
                                  (1, 2, 2, 1), (1, 2, 2, 1), "VALID")
    x = x.reshape(x.shape[0], -1)
    x = x @ params["wf"] + params["bf"]
    x = x * jax.lax.rsqrt(jnp.float32(1.0 + EPS))
    return jnp.maximum(x, 0.0)


# ----------------------------------- main ------------------------------------

if __name__ == "__main__":
    HEIGHT = WIDTH = 64   # smallest size consistent with fc1 = 128*(H//64)*(W//64)
    B = 2

    key = jax.random.PRNGKey(0)
    ks = jax.random.split(key, 11)

    params = {}
    for i, (cin, cout) in enumerate([(3, 16), (16, 32), (32, 64), (64, 128)], start=1):
        params[f"w{i}"] = 0.05 * jax.random.normal(
            ks[2 * (i - 1)], (3, 3, cin, cout), jnp.float32)      # HWIO
        params[f"b{i}"] = 0.01 * jax.random.normal(
            ks[2 * (i - 1) + 1], (cout,), jnp.float32)
    fc_in = 128 * (HEIGHT // 64) * (WIDTH // 64)
    params["wf"] = 0.05 * jax.random.normal(ks[8], (fc_in, 512), jnp.float32)
    params["bf"] = 0.01 * jax.random.normal(ks[9], (512,), jnp.float32)

    x = jax.random.normal(ks[10], (B, 3, HEIGHT, WIDTH), jnp.float32)  # NCHW

    out = jax.block_until_ready(naive_cnn_forward(x, params))
    ref = jax.block_until_ready(reference_forward(x, params))

    assert out.shape == (B, 512), out.shape
    assert bool(jnp.isfinite(out).all()), "non-finite output"
    max_err = float(jnp.max(jnp.abs(out - ref)))
    assert max_err < 5e-3, f"mismatch vs reference: {max_err}"
    print("KERNEL_OK")
</pallas_src>

<mosaic_0001>
module attributes {stable_mosaic.version = 11 : i64} {
  func.func @_naive_cnn_kernel(%arg0: i32, %arg1: memref<1x1024x27xf32, #tpu.memory_space<vmem>>, %arg2: memref<27x16xf32, #tpu.memory_space<vmem>>, %arg3: memref<1x16xf32, #tpu.memory_space<vmem>>, %arg4: memref<9x16x32xf32, #tpu.memory_space<vmem>>, %arg5: memref<9x64x256xf32, #tpu.memory_space<vmem>>, %arg6: memref<4x16x64xf32, #tpu.memory_space<vmem>>, %arg7: memref<1x32xf32, #tpu.memory_space<vmem>>, %arg8: memref<9x32x64xf32, #tpu.memory_space<vmem>>, %arg9: memref<9x16x16xf32, #tpu.memory_space<vmem>>, %arg10: memref<4x4x16xf32, #tpu.memory_space<vmem>>, %arg11: memref<1x64xf32, #tpu.memory_space<vmem>>, %arg12: memref<9x64x128xf32, #tpu.memory_space<vmem>>, %arg13: memref<9x4x4xf32, #tpu.memory_space<vmem>>, %arg14: memref<4x1x4xf32, #tpu.memory_space<vmem>>, %arg15: memref<1x128xf32, #tpu.memory_space<vmem>>, %arg16: memref<128x512xf32, #tpu.memory_space<vmem>>, %arg17: memref<1x512xf32, #tpu.memory_space<vmem>>, %arg18: memref<1x1x512xf32, #tpu.memory_space<vmem>>) attributes {dimension_semantics = [#tpu.dimension_semantics<parallel>], iteration_bounds = array<i64: 2>, scalar_prefetch = 0 : i64, scratch_operands = 0 : i64, tpu.core_type = #tpu.core_type<tc>, window_params = [{transform_indices = @transform_0, window_bounds = array<i64: 1, 1024, 27>}, {pipeline_mode = #tpu.pipeline_mode<synchronous>, transform_indices = @transform_1, window_bounds = array<i64: 27, 16>}, {pipeline_mode = #tpu.pipeline_mode<synchronous>, transform_indices = @transform_2, window_bounds = array<i64: 1, 16>}, {pipeline_mode = #tpu.pipeline_mode<synchronous>, transform_indices = @transform_3, window_bounds = array<i64: 9, 16, 32>}, {pipeline_mode = #tpu.pipeline_mode<synchronous>, transform_indices = @transform_4, window_bounds = array<i64: 9, 64, 256>}, {pipeline_mode = #tpu.pipeline_mode<synchronous>, transform_indices = @transform_5, window_bounds = array<i64: 4, 16, 64>}, {pipeline_mode = #tpu.pipeline_mode<synchronous>, transform_indices = @transform_6, window_bounds = array<i64: 1, 32>}, {pipeline_mode = #tpu.pipeline_mode<synchronous>, transform_indices = @transform_7, window_bounds = array<i64: 9, 32, 64>}, {pipeline_mode = #tpu.pipeline_mode<synchronous>, transform_indices = @transform_8, window_bounds = array<i64: 9, 16, 16>}, {pipeline_mode = #tpu.pipeline_mode<synchronous>, transform_indices = @transform_9, window_bounds = array<i64: 4, 4, 16>}, {pipeline_mode = #tpu.pipeline_mode<synchronous>, transform_indices = @transform_10, window_bounds = array<i64: 1, 64>}, {pipeline_mode = #tpu.pipeline_mode<synchronous>, transform_indices = @transform_11, window_bounds = array<i64: 9, 64, 128>}, {pipeline_mode = #tpu.pipeline_mode<synchronous>, transform_indices = @transform_12, window_bounds = array<i64: 9, 4, 4>}, {pipeline_mode = #tpu.pipeline_mode<synchronous>, transform_indices = @transform_13, window_bounds = array<i64: 4, 1, 4>}, {pipeline_mode = #tpu.pipeline_mode<synchronous>, transform_indices = @transform_14, window_bounds = array<i64: 1, 128>}, {pipeline_mode = #tpu.pipeline_mode<synchronous>, transform_indices = @transform_15, window_bounds = array<i64: 128, 512>}, {pipeline_mode = #tpu.pipeline_mode<synchronous>, transform_indices = @transform_16, window_bounds = array<i64: 1, 512>}, {transform_indices = @transform_17, window_bounds = array<i64: 1, 1, 512>}]} {
    %c0 = arith.constant 0 : index
    %c0_0 = arith.constant 0 : index
    %c0_1 = arith.constant 0 : index
    %0 = vector.load %arg1[%c0, %c0_0, %c0_1] : memref<1x1024x27xf32, #tpu.memory_space<vmem>>, vector<1x1024x27xf32>
    %1 = vector.shape_cast %0 : vector<1x1024x27xf32> to vector<1024x27xf32>
    %c0_2 = arith.constant 0 : index
    %c0_3 = arith.constant 0 : index
    %2 = vector.load %arg2[%c0_2, %c0_3] : memref<27x16xf32, #tpu.memory_space<vmem>>, vector<27x16xf32>
    %cst = arith.constant dense<0.000000e+00> : vector<1024x16xf32>
    %3 = tpu.matmul %1, %2, %cst {dimension_numbers = #tpu.dot_dimension_numbers<[1], [0], [0], [1], [0, 0, 1, 1], [], []>} : vector<1024x27xf32>, vector<27x16xf32>, vector<1024x16xf32> -> vector<1024x16xf32>
    %c0_4 = arith.constant 0 : index
    %c0_5 = arith.constant 0 : index
    %4 = vector.load %arg3[%c0_4, %c0_5] : memref<1x16xf32, #tpu.memory_space<vmem>>, vector<1x16xf32>
    %5 = vector.broadcast %4 : vector<1x16xf32> to vector<1024x16xf32>
    %6 = arith.addf %3, %5 : vector<1024x16xf32>
    %7 = vector.extract_strided_slice %6 {offsets = [0, 0], sizes = [256, 16], strides = [1, 1]} : vector<1024x16xf32> to vector<256x16xf32>
    %8 = vector.extract_strided_slice %6 {offsets = [256, 0], sizes = [256, 16], strides = [1, 1]} : vector<1024x16xf32> to vector<256x16xf32>
    %9 = arith.maximumf %7, %8 : vector<256x16xf32>
    %10 = vector.extract_strided_slice %6 {offsets = [512, 0], sizes = [256, 16], strides = [1, 1]} : vector<1024x16xf32> to vector<256x16xf32>
    %11 = vector.extract_strided_slice %6 {offsets = [768, 0], sizes = [256, 16], strides = [1, 1]} : vector<1024x16xf32> to vector<256x16xf32>
    %12 = arith.maximumf %10, %11 : vector<256x16xf32>
    %13 = arith.maximumf %9, %12 : vector<256x16xf32>
    %cst_6 = arith.constant 0.000000e+00 : f32
    %14 = vector.broadcast %cst_6 : f32 to vector<256x16xf32>
    %15 = arith.maximumf %13, %14 : vector<256x16xf32>
    %c0_7 = arith.constant 0 : index
    %c0_8 = arith.constant 0 : index
    %c0_9 = arith.constant 0 : index
    %16 = vector.load %arg5[%c0_7, %c0_8, %c0_9] : memref<9x64x256xf32, #tpu.memory_space<vmem>>, vector<1x64x256xf32>
    %17 = vector.shape_cast %16 : vector<1x64x256xf32> to vector<64x256xf32>
    %cst_10 = arith.constant dense<0.000000e+00> : vector<64x16xf32>
    %18 = tpu.matmul %17, %15, %cst_10 {dimension_numbers = #tpu.dot_dimension_numbers<[1], [0], [0], [1], [0, 0, 1, 1], [], []>} : vector<64x256xf32>, vector<256x16xf32>, vector<64x16xf32> -> vector<64x16xf32>
    %c0_11 = arith.constant 0 : index
    %c0_12 = arith.constant 0 : index
    %c0_13 = arith.constant 0 : index
    %19 = vector.load %arg4[%c0_11, %c0_12, %c0_13] : memref<9x16x32xf32, #tpu.memory_space<vmem>>, vector<1x16x32xf32>
    %20 = vector.shape_cast %19 : vector<1x16x32xf32> to vector<16x32xf32>
    %cst_14 = arith.constant dense<0.000000e+00> : vector<64x32xf32>
    %21 = tpu.matmul %18, %20, %cst_14 {dimension_numbers = #tpu.dot_dimension_numbers<[1], [0], [0], [1], [0, 0, 1, 1], [], []>} : vector<64x16xf32>, vector<16x32xf32>, vector<64x32xf32> -> vector<64x32xf32>
    %c1 = arith.constant 1 : index
    %c0_15 = arith.constant 0 : index
    %c0_16 = arith.constant 0 : index
    %22 = vector.load %arg5[%c1, %c0_15, %c0_16] : memref<9x64x256xf32, #tpu.memory_space<vmem>>, vector<1x64x256xf32>
    %23 = vector.shape_cast %22 : vector<1x64x256xf32> to vector<64x256xf32>
    %cst_17 = arith.constant dense<0.000000e+00> : vector<64x16xf32>
    %24 = tpu.matmul %23, %15, %cst_17 {dimension_numbers = #tpu.dot_dimension_numbers<[1], [0], [0], [1], [0, 0, 1, 1], [], []>} : vector<64x256xf32>, vector<256x16xf32>, vector<64x16xf32> -> vector<64x16xf32>
    %c1_18 = arith.constant 1 : index
    %c0_19 = arith.constant 0 : index
    %c0_20 = arith.constant 0 : index
    %25 = vector.load %arg4[%c1_18, %c0_19, %c0_20] : memref<9x16x32xf32, #tpu.memory_space<vmem>>, vector<1x16x32xf32>
    %26 = vector.shape_cast %25 : vector<1x16x32xf32> to vector<16x32xf32>
    %cst_21 = arith.constant dense<0.000000e+00> : vector<64x32xf32>
    %27 = tpu.matmul %24, %26, %cst_21 {dimension_numbers = #tpu.dot_dimension_numbers<[1], [0], [0], [1], [0, 0, 1, 1], [], []>} : vector<64x16xf32>, vector<16x32xf32>, vector<64x32xf32> -> vector<64x32xf32>
    %28 = arith.addf %21, %27 : vector<64x32xf32>
    %c2 = arith.constant 2 : index
    %c0_22 = arith.constant 0 : index
    %c0_23 = arith.constant 0 : index
    %29 = vector.load %arg5[%c2, %c0_22, %c0_23] : memref<9x64x256xf32, #tpu.memory_space<vmem>>, vector<1x64x256xf32>
    %30 = vector.shape_cast %29 : vector<1x64x256xf32> to vector<64x256xf32>
    %cst_24 = arith.constant dense<0.000000e+00> : vector<64x16xf32>
    %31 = tpu.matmul %30, %15, %cst_24 {dimension_numbers = #tpu.dot_dimension_numbers<[1], [0], [0], [1], [0, 0, 1, 1], [], []>} : vector<64x256xf32>, vector<256x16xf32>, vector<64x16xf32> -> vector<64x16xf32>
    %c2_25 = arith.constant 2 : index
    %c0_26 = arith.constant 0 : index
    %c0_27 = arith.constant 0 : index
    %32 = vector.load %arg4[%c2_25, %c0_26, %c0_27] : memref<9x16x32xf32, #tpu.memory_space<vmem>>, vector<1x16x32xf32>
    %33 = vector.shape_cast %32 : vector<1x16x32xf32> to vector<16x32xf32>
    %cst_28 = arith.constant dense<0.000000e+00> : vector<64x32xf32>
    %34 = tpu.matmul %31, %33, %cst_28 {dimension_numbers = #tpu.dot_dimension_numbers<[1], [0], [0], [1], [0, 0, 1, 1], [], []>} : vector<64x16xf32>, vector<16x32xf32>, vector<64x32xf32> -> vector<64x32xf32>
    %35 = arith.addf %28, %34 : vector<64x32xf32>
    %c3 = arith.constant 3 : index
    %c0_29 = arith.constant 0 : index
    %c0_30 = arith.constant 0 : index
    %36 = vector.load %arg5[%c3, %c0_29, %c0_30] : memref<9x64x256xf32, #tpu.memory_space<vmem>>, vector<1x64x256xf32>
    %37 = vector.shape_cast %36 : vector<1x64x256xf32> to vector<64x256xf32>
    %cst_31 = arith.constant dense<0.000000e+00> : vector<64x16xf32>
    %38 = tpu.matmul %37, %15, %cst_31 {dimension_numbers = #tpu.dot_dimension_numbers<[1], [0], [0], [1], [0, 0, 1, 1], [], []>} : vector<64x256xf32>, vector<256x16xf32>, vector<64x16xf32> -> vector<64x16xf32>
    %c3_32 = arith.constant 3 : index
    %c0_33 = arith.constant 0 : index
    %c0_34 = arith.constant 0 : index
    %39 = vector.load %arg4[%c3_32, %c0_33, %c0_34] : memref<9x16x32xf32, #tpu.memory_space<vmem>>, vector<1x16x32xf32>
    %40 = vector.shape_cast %39 : vector<1x16x32xf32> to vector<16x32xf32>
    %cst_35 = arith.constant dense<0.000000e+00> : vector<64x32xf32>
    %41 = tpu.matmul %38, %40, %cst_35 {dimension_numbers = #tpu.dot_dimension_numbers<[1], [0], [0], [1], [0, 0, 1, 1], [], []>} : vector<64x16xf32>, vector<16x32xf32>, vector<64x32xf32> -> vector<64x32xf32>
    %42 = arith.addf %35, %41 : vector<64x32xf32>
    %c4 = arith.constant 4 : index
    %c0_36 = arith.constant 0 : index
    %c0_37 = arith.constant 0 : index
    %43 = vector.load %arg5[%c4, %c0_36, %c0_37] : memref<9x64x256xf32, #tpu.memory_space<vmem>>, vector<1x64x256xf32>
    %44 = vector.shape_cast %43 : vector<1x64x256xf32> to vector<64x256xf32>
    %cst_38 = arith.constant dense<0.000000e+00> : vector<64x16xf32>
    %45 = tpu.matmul %44, %15, %cst_38 {dimension_numbers = #tpu.dot_dimension_numbers<[1], [0], [0], [1], [0, 0, 1, 1], [], []>} : vector<64x256xf32>, vector<256x16xf32>, vector<64x16xf32> -> vector<64x16xf32>
    %c4_39 = arith.constant 4 : index
    %c0_40 = arith.constant 0 : index
    %c0_41 = arith.constant 0 : index
    %46 = vector.load %arg4[%c4_39, %c0_40, %c0_41] : memref<9x16x32xf32, #tpu.memory_space<vmem>>, vector<1x16x32xf32>
    %47 = vector.shape_cast %46 : vector<1x16x32xf32> to vector<16x32xf32>
    %cst_42 = arith.constant dense<0.000000e+00> : vector<64x32xf32>
    %48 = tpu.matmul %45, %47, %cst_42 {dimension_numbers = #tpu.dot_dimension_numbers<[1], [0], [0], [1], [0, 0, 1, 1], [], []>} : vector<64x16xf32>, vector<16x32xf32>, vector<64x32xf32> -> vector<64x32xf32>
    %49 = arith.addf %42, %48 : vector<64x32xf32>
    %c5 = arith.constant 5 : index
    %c0_43 = arith.constant 0 : index
    %c0_44 = arith.constant 0 : index
    %50 = vector.load %arg5[%c5, %c0_43, %c0_44] : memref<9x64x256xf32, #tpu.memory_space<vmem>>, vector<1x64x256xf32>
    %51 = vector.shape_cast %50 : vector<1x64x256xf32> to vector<64x256xf32>
    %cst_45 = arith.constant dense<0.000000e+00> : vector<64x16xf32>
    %52 = tpu.matmul %51, %15, %cst_45 {dimension_numbers = #tpu.dot_dimension_numbers<[1], [0], [0], [1], [0, 0, 1, 1], [], []>} : vector<64x256xf32>, vector<256x16xf32>, vector<64x16xf32> -> vector<64x16xf32>
    %c5_46 = arith.constant 5 : index
    %c0_47 = arith.constant 0 : index
    %c0_48 = arith.constant 0 : index
    %53 = vector.load %arg4[%c5_46, %c0_47, %c0_48] : memref<9x16x32xf32, #tpu.memory_space<vmem>>, vector<1x16x32xf32>
    %54 = vector.shape_cast %53 : vector<1x16x32xf32> to vector<16x32xf32>
    %cst_49 = arith.constant dense<0.000000e+00> : vector<64x32xf32>
    %55 = tpu.matmul %52, %54, %cst_49 {dimension_numbers = #tpu.dot_dimension_numbers<[1], [0], [0], [1], [0, 0, 1, 1], [], []>} : vector<64x16xf32>, vector<16x32xf32>, vector<64x32xf32> -> vector<64x32xf32>
    %56 = arith.addf %49, %55 : vector<64x32xf32>
    %c6 = arith.constant 6 : index
    %c0_50 = arith.constant 0 : index
    %c0_51 = arith.constant 0 : index
    %57 = vector.load %arg5[%c6, %c0_50, %c0_51] : memref<9x64x256xf32, #tpu.memory_space<vmem>>, vector<1x64x256xf32>
    %58 = vector.shape_cast %57 : vector<1x64x256xf32> to vector<64x256xf32>
    %cst_52 = arith.constant dense<0.000000e+00> : vector<64x16xf32>
    %59 = tpu.matmul %58, %15, %cst_52 {dimension_numbers = #tpu.dot_dimension_numbers<[1], [0], [0], [1], [0, 0, 1, 1], [], []>} : vector<64x256xf32>, vector<256x16xf32>, vector<64x16xf32> -> vector<64x16xf32>
    %c6_53 = arith.constant 6 : index
    %c0_54 = arith.constant 0 : index
    %c0_55 = arith.constant 0 : index
    %60 = vector.load %arg4[%c6_53, %c0_54, %c0_55] : memref<9x16x32xf32, #tpu.memory_space<vmem>>, vector<1x16x32xf32>
    %61 = vector.shape_cast %60 : vector<1x16x32xf32> to vector<16x32xf32>
    %cst_56 = arith.constant dense<0.000000e+00> : vector<64x32xf32>
    %62 = tpu.matmul %59, %61, %cst_56 {dimension_numbers = #tpu.dot_dimension_numbers<[1], [0], [0], [1], [0, 0, 1, 1], [], []>} : vector<64x16xf32>, vector<16x32xf32>, vector<64x32xf32> -> vector<64x32xf32>
    %63 = arith.addf %56, %62 : vector<64x32xf32>
    %c7 = arith.constant 7 : index
    %c0_57 = arith.constant 0 : index
    %c0_58 = arith.constant 0 : index
    %64 = vector.load %arg5[%c7, %c0_57, %c0_58] : memref<9x64x256xf32, #tpu.memory_space<vmem>>, vector<1x64x256xf32>
    %65 = vector.shape_cast %64 : vector<1x64x256xf32> to vector<64x256xf32>
    %cst_59 = arith.constant dense<0.000000e+00> : vector<64x16xf32>
    %66 = tpu.matmul %65, %15, %cst_59 {dimension_numbers = #tpu.dot_dimension_numbers<[1], [0], [0], [1], [0, 0, 1, 1], [], []>} : vector<64x256xf32>, vector<256x16xf32>, vector<64x16xf32> -> vector<64x16xf32>
    %c7_60 = arith.constant 7 : index
    %c0_61 = arith.constant 0 : index
    %c0_62 = arith.constant 0 : index
    %67 = vector.load %arg4[%c7_60, %c0_61, %c0_62] : memref<9x16x32xf32, #tpu.memory_space<vmem>>, vector<1x16x32xf32>
    %68 = vector.shape_cast %67 : vector<1x16x32xf32> to vector<16x32xf32>
    %cst_63 = arith.constant dense<0.000000e+00> : vector<64x32xf32>
    %69 = tpu.matmul %66, %68, %cst_63 {dimension_numbers = #tpu.dot_dimension_numbers<[1], [0], [0], [1], [0, 0, 1, 1], [], []>} : vector<64x16xf32>, vector<16x32xf32>, vector<64x32xf32> -> vector<64x32xf32>
    %70 = arith.addf %63, %69 : vector<64x32xf32>
    %c8 = arith.constant 8 : index
    %c0_64 = arith.constant 0 : index
    %c0_65 = arith.constant 0 : index
    %71 = vector.load %arg5[%c8, %c0_64, %c0_65] : memref<9x64x256xf32, #tpu.memory_space<vmem>>, vector<1x64x256xf32>
    %72 = vector.shape_cast %71 : vector<1x64x256xf32> to vector<64x256xf32>
    %cst_66 = arith.constant dense<0.000000e+00> : vector<64x16xf32>
    %73 = tpu.matmul %72, %15, %cst_66 {dimension_numbers = #tpu.dot_dimension_numbers<[1], [0], [0], [1], [0, 0, 1, 1], [], []>} : vector<64x256xf32>, vector<256x16xf32>, vector<64x16xf32> -> vector<64x16xf32>
    %c8_67 = arith.constant 8 : index
    %c0_68 = arith.constant 0 : index
    %c0_69 = arith.constant 0 : index
    %74 = vector.load %arg4[%c8_67, %c0_68, %c0_69] : memref<9x16x32xf32, #tpu.memory_space<vmem>>, vector<1x16x32xf32>
    %75 = vector.shape_cast %74 : vector<1x16x32xf32> to vector<16x32xf32>
    %cst_70 = arith.constant dense<0.000000e+00> : vector<64x32xf32>
    %76 = tpu.matmul %73, %75, %cst_70 {dimension_numbers = #tpu.dot_dimension_numbers<[1], [0], [0], [1], [0, 0, 1, 1], [], []>} : vector<64x16xf32>, vector<16x32xf32>, vector<64x32xf32> -> vector<64x32xf32>
    %77 = arith.addf %70, %76 : vector<64x32xf32>
    %c0_71 = arith.constant 0 : index
    %c0_72 = arith.constant 0 : index
    %78 = vector.load %arg7[%c0_71, %c0_72] : memref<1x32xf32, #tpu.memory_space<vmem>>, vector<1x32xf32>
    %79 = vector.broadcast %78 : vector<1x32xf32> to vector<64x32xf32>
    %80 = arith.addf %77, %79 : vector<64x32xf32>
    %c0_73 = arith.constant 0 : index
    %c0_74 = arith.constant 0 : index
    %c0_75 = arith.constant 0 : index
    %81 = vector.load %arg6[%c0_73, %c0_74, %c0_75] : memref<4x16x64xf32, #tpu.memory_space<vmem>>, vector<1x16x64xf32>
    %82 = vector.shape_cast %81 : vector<1x16x64xf32> to vector<16x64xf32>
    %cst_76 = arith.constant dense<0.000000e+00> : vector<16x32xf32>
    %83 = tpu.matmul %82, %80, %cst_76 {dimension_numbers = #tpu.dot_dimension_numbers<[1], [0], [0], [1], [0, 0, 1, 1], [], []>} : vector<16x64xf32>, vector<64x32xf32>, vector<16x32xf32> -> vector<16x32xf32>
    %c1_77 = arith.constant 1 : index
    %c0_78 = arith.constant 0 : index
    %c0_79 = arith.constant 0 : index
    %84 = vector.load %arg6[%c1_77, %c0_78, %c0_79] : memref<4x16x64xf32, #tpu.memory_space<vmem>>, vector<1x16x64xf32>
    %85 = vector.shape_cast %84 : vector<1x16x64xf32> to vector<16x64xf32>
    %cst_80 = arith.constant dense<0.000000e+00> : vector<16x32xf32>
    %86 = tpu.matmul %85, %80, %cst_80 {dimension_numbers = #tpu.dot_dimension_numbers<[1], [0], [0], [1], [0, 0, 1, 1], [], []>} : vector<16x64xf32>, vector<64x32xf32>, vector<16x32xf32> -> vector<16x32xf32>
    %87 = arith.maximumf %83, %86 : vector<16x32xf32>
    %c2_81 = arith.constant 2 : index
    %c0_82 = arith.constant 0 : index
    %c0_83 = arith.constant 0 : index
    %88 = vector.load %arg6[%c2_81, %c0_82, %c0_83] : memref<4x16x64xf32, #tpu.memory_space<vmem>>, vector<1x16x64xf32>
    %89 = vector.shape_cast %88 : vector<1x16x64xf32> to vector<16x64xf32>
    %cst_84 = arith.constant dense<0.000000e+00> : vector<16x32xf32>
    %90 = tpu.matmul %89, %80, %cst_84 {dimension_numbers = #tpu.dot_dimension_numbers<[1], [0], [0], [1], [0, 0, 1, 1], [], []>} : vector<16x64xf32>, vector<64x32xf32>, vector<16x32xf32> -> vector<16x32xf32>
    %91 = arith.maximumf %87, %90 : vector<16x32xf32>
    %c3_85 = arith.constant 3 : index
    %c0_86 = arith.constant 0 : index
    %c0_87 = arith.constant 0 : index
    %92 = vector.load %arg6[%c3_85, %c0_86, %c0_87] : memref<4x16x64xf32, #tpu.memory_space<vmem>>, vector<1x16x64xf32>
    %93 = vector.shape_cast %92 : vector<1x16x64xf32> to vector<16x64xf32>
    %cst_88 = arith.constant dense<0.000000e+00> : vector<16x32xf32>
    %94 = tpu.matmul %93, %80, %cst_88 {dimension_numbers = #tpu.dot_dimension_numbers<[1], [0], [0], [1], [0, 0, 1, 1], [], []>} : vector<16x64xf32>, vector<64x32xf32>, vector<16x32xf32> -> vector<16x32xf32>
    %95 = arith.maximumf %91, %94 : vector<16x32xf32>
    %cst_89 = arith.constant 0.000000e+00 : f32
    %96 = vector.broadcast %cst_89 : f32 to vector<16x32xf32>
    %97 = arith.maximumf %95, %96 : vector<16x32xf32>
    %c0_90 = arith.constant 0 : index
    %c0_91 = arith.constant 0 : index
    %c0_92 = arith.constant 0 : index
    %98 = vector.load %arg9[%c0_90, %c0_91, %c0_92] : memref<9x16x16xf32, #tpu.memory_space<vmem>>, vector<1x16x16xf32>
    %99 = vector.shape_cast %98 : vector<1x16x16xf32> to vector<16x16xf32>
    %cst_93 = arith.constant dense<0.000000e+00> : vector<16x32xf32>
    %100 = tpu.matmul %99, %97, %cst_93 {dimension_numbers = #tpu.dot_dimension_numbers<[1], [0], [0], [1], [0, 0, 1, 1], [], []>} : vector<16x16xf32>, vector<16x32xf32>, vector<16x32xf32> -> vector<16x32xf32>
    %c0_94 = arith.constant 0 : index
    %c0_95 = arith.constant 0 : index
    %c0_96 = arith.constant 0 : index
    %101 = vector.load %arg8[%c0_94, %c0_95, %c0_96] : memref<9x32x64xf32, #tpu.memory_space<vmem>>, vector<1x32x64xf32>
    %102 = vector.shape_cast %101 : vector<1x32x64xf32> to vector<32x64xf32>
    %cst_97 = arith.constant dense<0.000000e+00> : vector<16x64xf32>
    %103 = tpu.matmul %100, %102, %cst_97 {dimension_numbers = #tpu.dot_dimension_numbers<[1], [0], [0], [1], [0, 0, 1, 1], [], []>} : vector<16x32xf32>, vector<32x64xf32>, vector<16x64xf32> -> vector<16x64xf32>
    %c1_98 = arith.constant 1 : index
    %c0_99 = arith.constant 0 : index
    %c0_100 = arith.constant 0 : index
    %104 = vector.load %arg9[%c1_98, %c0_99, %c0_100] : memref<9x16x16xf32, #tpu.memory_space<vmem>>, vector<1x16x16xf32>
    %105 = vector.shape_cast %104 : vector<1x16x16xf32> to vector<16x16xf32>
    %cst_101 = arith.constant dense<0.000000e+00> : vector<16x32xf32>
    %106 = tpu.matmul %105, %97, %cst_101 {dimension_numbers = #tpu.dot_dimension_numbers<[1], [0], [0], [1], [0, 0, 1, 1], [], []>} : vector<16x16xf32>, vector<16x32xf32>, vector<16x32xf32> -> vector<16x32xf32>
    %c1_102 = arith.constant 1 : index
    %c0_103 = arith.constant 0 : index
    %c0_104 = arith.constant 0 : index
    %107 = vector.load %arg8[%c1_102, %c0_103, %c0_104] : memref<9x32x64xf32, #tpu.memory_space<vmem>>, vector<1x32x64xf32>
    %108 = vector.shape_cast %107 : vector<1x32x64xf32> to vector<32x64xf32>
    %cst_105 = arith.constant dense<0.000000e+00> : vector<16x64xf32>
    %109 = tpu.matmul %106, %108, %cst_105 {dimension_numbers = #tpu.dot_dimension_numbers<[1], [0], [0], [1], [0, 0, 1, 1], [], []>} : vector<16x32xf32>, vector<32x64xf32>, vector<16x64xf32> -> vector<16x64xf32>
    %110 = arith.addf %103, %109 : vector<16x64xf32>
    %c2_106 = arith.constant 2 : index
    %c0_107 = arith.constant 0 : index
    %c0_108 = arith.constant 0 : index
    %111 = vector.load %arg9[%c2_106, %c0_107, %c0_108] : memref<9x16x16xf32, #tpu.memory_space<vmem>>, vector<1x16x16xf32>
    %112 = vector.shape_cast %111 : vector<1x16x16xf32> to vector<16x16xf32>
    %cst_109 = arith.constant dense<0.000000e+00> : vector<16x32xf32>
    %113 = tpu.matmul %112, %97, %cst_109 {dimension_numbers = #tpu.dot_dimension_numbers<[1], [0], [0], [1], [0, 0, 1, 1], [], []>} : vector<16x16xf32>, vector<16x32xf32>, vector<16x32xf32> -> vector<16x32xf32>
    %c2_110 = arith.constant 2 : index
    %c0_111 = arith.constant 0 : index
    %c0_112 = arith.constant 0 : index
    %114 = vector.load %arg8[%c2_110, %c0_111, %c0_112] : memref<9x32x64xf32, #tpu.memory_space<vmem>>, vector<1x32x64xf32>
    %115 = vector.shape_cast %114 : vector<1x32x64xf32> to vector<32x64xf32>
    %cst_113 = arith.constant dense<0.000000e+00> : vector<16x64xf32>
    %116 = tpu.matmul %113, %115, %cst_113 {dimension_numbers = #tpu.dot_dimension_numbers<[1], [0], [0], [1], [0, 0, 1, 1], [], []>} : vector<16x32xf32>, vector<32x64xf32>, vector<16x64xf32> -> vector<16x64xf32>
    %117 = arith.addf %110, %116 : vector<16x64xf32>
    %c3_114 = arith.constant 3 : index
    %c0_115 = arith.constant 0 : index
    %c0_116 = arith.constant 0 : index
    %118 = vector.load %arg9[%c3_114, %c0_115, %c0_116] : memref<9x16x16xf32, #tpu.memory_space<vmem>>, vector<1x16x16xf32>
    %119 = vector.shape_cast %118 : vector<1x16x16xf32> to vector<16x16xf32>
    %cst_117 = arith.constant dense<0.000000e+00> : vector<16x32xf32>
    %120 = tpu.matmul %119, %97, %cst_117 {dimension_numbers = #tpu.dot_dimension_numbers<[1], [0], [0], [1], [0, 0, 1, 1], [], []>} : vector<16x16xf32>, vector<16x32xf32>, vector<16x32xf32> -> vector<16x32xf32>
    %c3_118 = arith.constant 3 : index
    %c0_119 = arith.constant 0 : index
    %c0_120 = arith.constant 0 : index
    %121 = vector.load %arg8[%c3_118, %c0_119, %c0_120] : memref<9x32x64xf32, #tpu.memory_space<vmem>>, vector<1x32x64xf32>
    %122 = vector.shape_cast %121 : vector<1x32x64xf32> to vector<32x64xf32>
    %cst_121 = arith.constant dense<0.000000e+00> : vector<16x64xf32>
    %123 = tpu.matmul %120, %122, %cst_121 {dimension_numbers = #tpu.dot_dimension_numbers<[1], [0], [0], [1], [0, 0, 1, 1], [], []>} : vector<16x32xf32>, vector<32x64xf32>, vector<16x64xf32> -> vector<16x64xf32>
    %124 = arith.addf %117, %123 : vector<16x64xf32>
    %c4_122 = arith.constant 4 : index
    %c0_123 = arith.constant 0 : index
    %c0_124 = arith.constant 0 : index
    %125 = vector.load %arg9[%c4_122, %c0_123, %c0_124] : memref<9x16x16xf32, #tpu.memory_space<vmem>>, vector<1x16x16xf32>
    %126 = vector.shape_cast %125 : vector<1x16x16xf32> to vector<16x16xf32>
    %cst_125 = arith.constant dense<0.000000e+00> : vector<16x32xf32>
    %127 = tpu.matmul %126, %97, %cst_125 {dimension_numbers = #tpu.dot_dimension_numbers<[1], [0], [0], [1], [0, 0, 1, 1], [], []>} : vector<16x16xf32>, vector<16x32xf32>, vector<16x32xf32> -> vector<16x32xf32>
    %c4_126 = arith.constant 4 : index
    %c0_127 = arith.constant 0 : index
    %c0_128 = arith.constant 0 : index
    %128 = vector.load %arg8[%c4_126, %c0_127, %c0_128] : memref<9x32x64xf32, #tpu.memory_space<vmem>>, vector<1x32x64xf32>
    %129 = vector.shape_cast %128 : vector<1x32x64xf32> to vector<32x64xf32>
    %cst_129 = arith.constant dense<0.000000e+00> : vector<16x64xf32>
    %130 = tpu.matmul %127, %129, %cst_129 {dimension_numbers = #tpu.dot_dimension_numbers<[1], [0], [0], [1], [0, 0, 1, 1], [], []>} : vector<16x32xf32>, vector<32x64xf32>, vector<16x64xf32> -> vector<16x64xf32>
    %131 = arith.addf %124, %130 : vector<16x64xf32>
    %c5_130 = arith.constant 5 : index
    %c0_131 = arith.constant 0 : index
    %c0_132 = arith.constant 0 : index
    %132 = vector.load %arg9[%c5_130, %c0_131, %c0_132] : memref<9x16x16xf32, #tpu.memory_space<vmem>>, vector<1x16x16xf32>
    %133 = vector.shape_cast %132 : vector<1x16x16xf32> to vector<16x16xf32>
    %cst_133 = arith.constant dense<0.000000e+00> : vector<16x32xf32>
    %134 = tpu.matmul %133, %97, %cst_133 {dimension_numbers = #tpu.dot_dimension_numbers<[1], [0], [0], [1], [0, 0, 1, 1], [], []>} : vector<16x16xf32>, vector<16x32xf32>, vector<16x32xf32> -> vector<16x32xf32>
    %c5_134 = arith.constant 5 : index
    %c0_135 = arith.constant 0 : index
    %c0_136 = arith.constant 0 : index
    %135 = vector.load %arg8[%c5_134, %c0_135, %c0_136] : memref<9x32x64xf32, #tpu.memory_space<vmem>>, vector<1x32x64xf32>
    %136 = vector.shape_cast %135 : vector<1x32x64xf32> to vector<32x64xf32>
    %cst_137 = arith.constant dense<0.000000e+00> : vector<16x64xf32>
    %137 = tpu.matmul %134, %136, %cst_137 {dimension_numbers = #tpu.dot_dimension_numbers<[1], [0], [0], [1], [0, 0, 1, 1], [], []>} : vector<16x32xf32>, vector<32x64xf32>, vector<16x64xf32> -> vector<16x64xf32>
    %138 = arith.addf %131, %137 : vector<16x64xf32>
    %c6_138 = arith.constant 6 : index
    %c0_139 = arith.constant 0 : index
    %c0_140 = arith.constant 0 : index
    %139 = vector.load %arg9[%c6_138, %c0_139, %c0_140] : memref<9x16x16xf32, #tpu.memory_space<vmem>>, vector<1x16x16xf32>
    %140 = vector.shape_cast %139 : vector<1x16x16xf32> to vector<16x16xf32>
    %cst_141 = arith.constant dense<0.000000e+00> : vector<16x32xf32>
    %141 = tpu.matmul %140, %97, %cst_141 {dimension_numbers = #tpu.dot_dimension_numbers<[1], [0], [0], [1], [0, 0, 1, 1], [], []>} : vector<16x16xf32>, vector<16x32xf32>, vector<16x32xf32> -> vector<16x32xf32>
    %c6_142 = arith.constant 6 : index
    %c0_143 = arith.constant 0 : index
    %c0_144 = arith.constant 0 : index
    %142 = vector.load %arg8[%c6_142, %c0_143, %c0_144] : memref<9x32x64xf32, #tpu.memory_space<vmem>>, vector<1x32x64xf32>
    %143 = vector.shape_cast %142 : vector<1x32x64xf32> to vector<32x64xf32>
    %cst_145 = arith.constant dense<0.000000e+00> : vector<16x64xf32>
    %144 = tpu.matmul %141, %143, %cst_145 {dimension_numbers = #tpu.dot_dimension_numbers<[1], [0], [0], [1], [0, 0, 1, 1], [], []>} : vector<16x32xf32>, vector<32x64xf32>, vector<16x64xf32> -> vector<16x64xf32>
    %145 = arith.addf %138, %144 : vector<16x64xf32>
    %c7_146 = arith.constant 7 : index
    %c0_147 = arith.constant 0 : index
    %c0_148 = arith.constant 0 : index
    %146 = vector.load %arg9[%c7_146, %c0_147, %c0_148] : memref<9x16x16xf32, #tpu.memory_space<vmem>>, vector<1x16x16xf32>
    %147 = vector.shape_cast %146 : vector<1x16x16xf32> to vector<16x16xf32>
    %cst_149 = arith.constant dense<0.000000e+00> : vector<16x32xf32>
    %148 = tpu.matmul %147, %97, %cst_149 {dimension_numbers = #tpu.dot_dimension_numbers<[1], [0], [0], [1], [0, 0, 1, 1], [], []>} : vector<16x16xf32>, vector<16x32xf32>, vector<16x32xf32> -> vector<16x32xf32>
    %c7_150 = arith.constant 7 : index
    %c0_151 = arith.constant 0 : index
    %c0_152 = arith.constant 0 : index
    %149 = vector.load %arg8[%c7_150, %c0_151, %c0_152] : memref<9x32x64xf32, #tpu.memory_space<vmem>>, vector<1x32x64xf32>
    %150 = vector.shape_cast %149 : vector<1x32x64xf32> to vector<32x64xf32>
    %cst_153 = arith.constant dense<0.000000e+00> : vector<16x64xf32>
    %151 = tpu.matmul %148, %150, %cst_153 {dimension_numbers = #tpu.dot_dimension_numbers<[1], [0], [0], [1], [0, 0, 1, 1], [], []>} : vector<16x32xf32>, vector<32x64xf32>, vector<16x64xf32> -> vector<16x64xf32>
    %152 = arith.addf %145, %151 : vector<16x64xf32>
    %c8_154 = arith.constant 8 : index
    %c0_155 = arith.constant 0 : index
    %c0_156 = arith.constant 0 : index
    %153 = vector.load %arg9[%c8_154, %c0_155, %c0_156] : memref<9x16x16xf32, #tpu.memory_space<vmem>>, vector<1x16x16xf32>
    %154 = vector.shape_cast %153 : vector<1x16x16xf32> to vector<16x16xf32>
    %cst_157 = arith.constant dense<0.000000e+00> : vector<16x32xf32>
    %155 = tpu.matmul %154, %97, %cst_157 {dimension_numbers = #tpu.dot_dimension_numbers<[1], [0], [0], [1], [0, 0, 1, 1], [], []>} : vector<16x16xf32>, vector<16x32xf32>, vector<16x32xf32> -> vector<16x32xf32>
    %c8_158 = arith.constant 8 : index
    %c0_159 = arith.constant 0 : index
    %c0_160 = arith.constant 0 : index
    %156 = vector.load %arg8[%c8_158, %c0_159, %c0_160] : memref<9x32x64xf32, #tpu.memory_space<vmem>>, vector<1x32x64xf32>
    %157 = vector.shape_cast %156 : vector<1x32x64xf32> to vector<32x64xf32>
    %cst_161 = arith.constant dense<0.000000e+00> : vector<16x64xf32>
    %158 = tpu.matmul %155, %157, %cst_161 {dimension_numbers = #tpu.dot_dimension_numbers<[1], [0], [0], [1], [0, 0, 1, 1], [], []>} : vector<16x32xf32>, vector<32x64xf32>, vector<16x64xf32> -> vector<16x64xf32>
    %159 = arith.addf %152, %158 : vector<16x64xf32>
    %c0_162 = arith.constant 0 : index
    %c0_163 = arith.constant 0 : index
    %160 = vector.load %arg11[%c0_162, %c0_163] : memref<1x64xf32, #tpu.memory_space<vmem>>, vector<1x64xf32>
    %161 = vector.broadcast %160 : vector<1x64xf32> to vector<16x64xf32>
    %162 = arith.addf %159, %161 : vector<16x64xf32>
    %c0_164 = arith.constant 0 : index
    %c0_165 = arith.constant 0 : index
    %c0_166 = arith.constant 0 : index
    %163 = vector.load %arg10[%c0_164, %c0_165, %c0_166] : memref<4x4x16xf32, #tpu.memory_space<vmem>>, vector<1x4x16xf32>
    %164 = vector.shape_cast %163 : vector<1x4x16xf32> to vector<4x16xf32>
    %cst_167 = arith.constant dense<0.000000e+00> : vector<4x64xf32>
    %165 = tpu.matmul %164, %162, %cst_167 {dimension_numbers = #tpu.dot_dimension_numbers<[1], [0], [0], [1], [0, 0, 1, 1], [], []>} : vector<4x16xf32>, vector<16x64xf32>, vector<4x64xf32> -> vector<4x64xf32>
    %c1_168 = arith.constant 1 : index
    %c0_169 = arith.constant 0 : index
    %c0_170 = arith.constant 0 : index
    %166 = vector.load %arg10[%c1_168, %c0_169, %c0_170] : memref<4x4x16xf32, #tpu.memory_space<vmem>>, vector<1x4x16xf32>
    %167 = vector.shape_cast %166 : vector<1x4x16xf32> to vector<4x16xf32>
    %cst_171 = arith.constant dense<0.000000e+00> : vector<4x64xf32>
    %168 = tpu.matmul %167, %162, %cst_171 {dimension_numbers = #tpu.dot_dimension_numbers<[1], [0], [0], [1], [0, 0, 1, 1], [], []>} : vector<4x16xf32>, vector<16x64xf32>, vector<4x64xf32> -> vector<4x64xf32>
    %169 = arith.maximumf %165, %168 : vector<4x64xf32>
    %c2_172 = arith.constant 2 : index
    %c0_173 = arith.constant 0 : index
    %c0_174 = arith.constant 0 : index
    %170 = vector.load %arg10[%c2_172, %c0_173, %c0_174] : memref<4x4x16xf32, #tpu.memory_space<vmem>>, vector<1x4x16xf32>
    %171 = vector.shape_cast %170 : vector<1x4x16xf32> to vector<4x16xf32>
    %cst_175 = arith.constant dense<0.000000e+00> : vector<4x64xf32>
    %172 = tpu.matmul %171, %162, %cst_175 {dimension_numbers = #tpu.dot_dimension_numbers<[1], [0], [0], [1], [0, 0, 1, 1], [], []>} : vector<4x16xf32>, vector<16x64xf32>, vector<4x64xf32> -> vector<4x64xf32>
    %173 = arith.maximumf %169, %172 : vector<4x64xf32>
    %c3_176 = arith.constant 3 : index
    %c0_177 = arith.constant 0 : index
    %c0_178 = arith.constant 0 : index
    %174 = vector.load %arg10[%c3_176, %c0_177, %c0_178] : memref<4x4x16xf32, #tpu.memory_space<vmem>>, vector<1x4x16xf32>
    %175 = vector.shape_cast %174 : vector<1x4x16xf32> to vector<4x16xf32>
    %cst_179 = arith.constant dense<0.000000e+00> : vector<4x64xf32>
    %176 = tpu.matmul %175, %162, %cst_179 {dimension_numbers = #tpu.dot_dimension_numbers<[1], [0], [0], [1], [0, 0, 1, 1], [], []>} : vector<4x16xf32>, vector<16x64xf32>, vector<4x64xf32> -> vector<4x64xf32>
    %177 = arith.maximumf %173, %176 : vector<4x64xf32>
    %cst_180 = arith.constant 0.000000e+00 : f32
    %178 = vector.broadcast %cst_180 : f32 to vector<4x64xf32>
    %179 = arith.maximumf %177, %178 : vector<4x64xf32>
    %c0_181 = arith.constant 0 : index
    %c0_182 = arith.constant 0 : index
    %c0_183 = arith.constant 0 : index
    %180 = vector.load %arg13[%c0_181, %c0_182, %c0_183] : memref<9x4x4xf32, #tpu.memory_space<vmem>>, vector<1x4x4xf32>
    %181 = vector.shape_cast %180 : vector<1x4x4xf32> to vector<4x4xf32>
    %cst_184 = arith.constant dense<0.000000e+00> : vector<4x64xf32>
    %182 = tpu.matmul %181, %179, %cst_184 {dimension_numbers = #tpu.dot_dimension_numbers<[1], [0], [0], [1], [0, 0, 1, 1], [], []>} : vector<4x4xf32>, vector<4x64xf32>, vector<4x64xf32> -> vector<4x64xf32>
    %c0_185 = arith.constant 0 : index
    %c0_186 = arith.constant 0 : index
    %c0_187 = arith.constant 0 : index
    %183 = vector.load %arg12[%c0_185, %c0_186, %c0_187] : memref<9x64x128xf32, #tpu.memory_space<vmem>>, vector<1x64x128xf32>
    %184 = vector.shape_cast %183 : vector<1x64x128xf32> to vector<64x128xf32>
    %cst_188 = arith.constant dense<0.000000e+00> : vector<4x128xf32>
    %185 = tpu.matmul %182, %184, %cst_188 {dimension_numbers = #tpu.dot_dimension_numbers<[1], [0], [0], [1], [0, 0, 1, 1], [], []>} : vector<4x64xf32>, vector<64x128xf32>, vector<4x128xf32> -> vector<4x128xf32>
    %c1_189 = arith.constant 1 : index
    %c0_190 = arith.constant 0 : index
    %c0_191 = arith.constant 0 : index
    %186 = vector.load %arg13[%c1_189, %c0_190, %c0_191] : memref<9x4x4xf32, #tpu.memory_space<vmem>>, vector<1x4x4xf32>
    %187 = vector.shape_cast %186 : vector<1x4x4xf32> to vector<4x4xf32>
    %cst_192 = arith.constant dense<0.000000e+00> : vector<4x64xf32>
    %188 = tpu.matmul %187, %179, %cst_192 {dimension_numbers = #tpu.dot_dimension_numbers<[1], [0], [0], [1], [0, 0, 1, 1], [], []>} : vector<4x4xf32>, vector<4x64xf32>, vector<4x64xf32> -> vector<4x64xf32>
    %c1_193 = arith.constant 1 : index
    %c0_194 = arith.constant 0 : index
    %c0_195 = arith.constant 0 : index
    %189 = vector.load %arg12[%c1_193, %c0_194, %c0_195] : memref<9x64x128xf32, #tpu.memory_space<vmem>>, vector<1x64x128xf32>
    %190 = vector.shape_cast %189 : vector<1x64x128xf32> to vector<64x128xf32>
    %cst_196 = arith.constant dense<0.000000e+00> : vector<4x128xf32>
    %191 = tpu.matmul %188, %190, %cst_196 {dimension_numbers = #tpu.dot_dimension_numbers<[1], [0], [0], [1], [0, 0, 1, 1], [], []>} : vector<4x64xf32>, vector<64x128xf32>, vector<4x128xf32> -> vector<4x128xf32>
    %192 = arith.addf %185, %191 : vector<4x128xf32>
    %c2_197 = arith.constant 2 : index
    %c0_198 = arith.constant 0 : index
    %c0_199 = arith.constant 0 : index
    %193 = vector.load %arg13[%c2_197, %c0_198, %c0_199] : memref<9x4x4xf32, #tpu.memory_space<vmem>>, vector<1x4x4xf32>
    %194 = vector.shape_cast %193 : vector<1x4x4xf32> to vector<4x4xf32>
    %cst_200 = arith.constant dense<0.000000e+00> : vector<4x64xf32>
    %195 = tpu.matmul %194, %179, %cst_200 {dimension_numbers = #tpu.dot_dimension_numbers<[1], [0], [0], [1], [0, 0, 1, 1], [], []>} : vector<4x4xf32>, vector<4x64xf32>, vector<4x64xf32> -> vector<4x64xf32>
    %c2_201 = arith.constant 2 : index
    %c0_202 = arith.constant 0 : index
    %c0_203 = arith.constant 0 : index
    %196 = vector.load %arg12[%c2_201, %c0_202, %c0_203] : memref<9x64x128xf32, #tpu.memory_space<vmem>>, vector<1x64x128xf32>
    %197 = vector.shape_cast %196 : vector<1x64x128xf32> to vector<64x128xf32>
    %cst_204 = arith.constant dense<0.000000e+00> : vector<4x128xf32>
    %198 = tpu.matmul %195, %197, %cst_204 {dimension_numbers = #tpu.dot_dimension_numbers<[1], [0], [0], [1], [0, 0, 1, 1], [], []>} : vector<4x64xf32>, vector<64x128xf32>, vector<4x128xf32> -> vector<4x128xf32>
    %199 = arith.addf %192, %198 : vector<4x128xf32>
    %c3_205 = arith.constant 3 : index
    %c0_206 = arith.constant 0 : index
    %c0_207 = arith.constant 0 : index
    %200 = vector.load %arg13[%c3_205, %c0_206, %c0_207] : memref<9x4x4xf32, #tpu.memory_space<vmem>>, vector<1x4x4xf32>
    %201 = vector.shape_cast %200 : vector<1x4x4xf32> to vector<4x4xf32>
    %cst_208 = arith.constant dense<0.000000e+00> : vector<4x64xf32>
    %202 = tpu.matmul %201, %179, %cst_208 {dimension_numbers = #tpu.dot_dimension_numbers<[1], [0], [0], [1], [0, 0, 1, 1], [], []>} : vector<4x4xf32>, vector<4x64xf32>, vector<4x64xf32> -> vector<4x64xf32>
    %c3_209 = arith.constant 3 : index
    %c0_210 = arith.constant 0 : index
    %c0_211 = arith.constant 0 : index
    %203 = vector.load %arg12[%c3_209, %c0_210, %c0_211] : memref<9x64x128xf32, #tpu.memory_space<vmem>>, vector<1x64x128xf32>
    %204 = vector.shape_cast %203 : vector<1x64x128xf32> to vector<64x128xf32>
    %cst_212 = arith.constant dense<0.000000e+00> : vector<4x128xf32>
    %205 = tpu.matmul %202, %204, %cst_212 {dimension_numbers = #tpu.dot_dimension_numbers<[1], [0], [0], [1], [0, 0, 1, 1], [], []>} : vector<4x64xf32>, vector<64x128xf32>, vector<4x128xf32> -> vector<4x128xf32>
    %206 = arith.addf %199, %205 : vector<4x128xf32>
    %c4_213 = arith.constant 4 : index
    %c0_214 = arith.constant 0 : index
    %c0_215 = arith.constant 0 : index
    %207 = vector.load %arg13[%c4_213, %c0_214, %c0_215] : memref<9x4x4xf32, #tpu.memory_space<vmem>>, vector<1x4x4xf32>
    %208 = vector.shape_cast %207 : vector<1x4x4xf32> to vector<4x4xf32>
    %cst_216 = arith.constant dense<0.000000e+00> : vector<4x64xf32>
    %209 = tpu.matmul %208, %179, %cst_216 {dimension_numbers = #tpu.dot_dimension_numbers<[1], [0], [0], [1], [0, 0, 1, 1], [], []>} : vector<4x4xf32>, vector<4x64xf32>, vector<4x64xf32> -> vector<4x64xf32>
    %c4_217 = arith.constant 4 : index
    %c0_218 = arith.constant 0 : index
    %c0_219 = arith.constant 0 : index
    %210 = vector.load %arg12[%c4_217, %c0_218, %c0_219] : memref<9x64x128xf32, #tpu.memory_space<vmem>>, vector<1x64x128xf32>
    %211 = vector.shape_cast %210 : vector<1x64x128xf32> to vector<64x128xf32>
    %cst_220 = arith.constant dense<0.000000e+00> : vector<4x128xf32>
    %212 = tpu.matmul %209, %211, %cst_220 {dimension_numbers = #tpu.dot_dimension_numbers<[1], [0], [0], [1], [0, 0, 1, 1], [], []>} : vector<4x64xf32>, vector<64x128xf32>, vector<4x128xf32> -> vector<4x128xf32>
    %213 = arith.addf %206, %212 : vector<4x128xf32>
    %c5_221 = arith.constant 5 : index
    %c0_222 = arith.constant 0 : index
    %c0_223 = arith.constant 0 : index
    %214 = vector.load %arg13[%c5_221, %c0_222, %c0_223] : memref<9x4x4xf32, #tpu.memory_space<vmem>>, vector<1x4x4xf32>
    %215 = vector.shape_cast %214 : vector<1x4x4xf32> to vector<4x4xf32>
    %cst_224 = arith.constant dense<0.000000e+00> : vector<4x64xf32>
    %216 = tpu.matmul %215, %179, %cst_224 {dimension_numbers = #tpu.dot_dimension_numbers<[1], [0], [0], [1], [0, 0, 1, 1], [], []>} : vector<4x4xf32>, vector<4x64xf32>, vector<4x64xf32> -> vector<4x64xf32>
    %c5_225 = arith.constant 5 : index
    %c0_226 = arith.constant 0 : index
    %c0_227 = arith.constant 0 : index
    %217 = vector.load %arg12[%c5_225, %c0_226, %c0_227] : memref<9x64x128xf32, #tpu.memory_space<vmem>>, vector<1x64x128xf32>
    %218 = vector.shape_cast %217 : vector<1x64x128xf32> to vector<64x128xf32>
    %cst_228 = arith.constant dense<0.000000e+00> : vector<4x128xf32>
    %219 = tpu.matmul %216, %218, %cst_228 {dimension_numbers = #tpu.dot_dimension_numbers<[1], [0], [0], [1], [0, 0, 1, 1], [], []>} : vector<4x64xf32>, vector<64x128xf32>, vector<4x128xf32> -> vector<4x128xf32>
    %220 = arith.addf %213, %219 : vector<4x128xf32>
    %c6_229 = arith.constant 6 : index
    %c0_230 = arith.constant 0 : index
    %c0_231 = arith.constant 0 : index
    %221 = vector.load %arg13[%c6_229, %c0_230, %c0_231] : memref<9x4x4xf32, #tpu.memory_space<vmem>>, vector<1x4x4xf32>
    %222 = vector.shape_cast %221 : vector<1x4x4xf32> to vector<4x4xf32>
    %cst_232 = arith.constant dense<0.000000e+00> : vector<4x64xf32>
    %223 = tpu.matmul %222, %179, %cst_232 {dimension_numbers = #tpu.dot_dimension_numbers<[1], [0], [0], [1], [0, 0, 1, 1], [], []>} : vector<4x4xf32>, vector<4x64xf32>, vector<4x64xf32> -> vector<4x64xf32>
    %c6_233 = arith.constant 6 : index
    %c0_234 = arith.constant 0 : index
    %c0_235 = arith.constant 0 : index
    %224 = vector.load %arg12[%c6_233, %c0_234, %c0_235] : memref<9x64x128xf32, #tpu.memory_space<vmem>>, vector<1x64x128xf32>
    %225 = vector.shape_cast %224 : vector<1x64x128xf32> to vector<64x128xf32>
    %cst_236 = arith.constant dense<0.000000e+00> : vector<4x128xf32>
    %226 = tpu.matmul %223, %225, %cst_236 {dimension_numbers = #tpu.dot_dimension_numbers<[1], [0], [0], [1], [0, 0, 1, 1], [], []>} : vector<4x64xf32>, vector<64x128xf32>, vector<4x128xf32> -> vector<4x128xf32>
    %227 = arith.addf %220, %226 : vector<4x128xf32>
    %c7_237 = arith.constant 7 : index
    %c0_238 = arith.constant 0 : index
    %c0_239 = arith.constant 0 : index
    %228 = vector.load %arg13[%c7_237, %c0_238, %c0_239] : memref<9x4x4xf32, #tpu.memory_space<vmem>>, vector<1x4x4xf32>
    %229 = vector.shape_cast %228 : vector<1x4x4xf32> to vector<4x4xf32>
    %cst_240 = arith.constant dense<0.000000e+00> : vector<4x64xf32>
    %230 = tpu.matmul %229, %179, %cst_240 {dimension_numbers = #tpu.dot_dimension_numbers<[1], [0], [0], [1], [0, 0, 1, 1], [], []>} : vector<4x4xf32>, vector<4x64xf32>, vector<4x64xf32> -> vector<4x64xf32>
    %c7_241 = arith.constant 7 : index
    %c0_242 = arith.constant 0 : index
    %c0_243 = arith.constant 0 : index
    %231 = vector.load %arg12[%c7_241, %c0_242, %c0_243] : memref<9x64x128xf32, #tpu.memory_space<vmem>>, vector<1x64x128xf32>
    %232 = vector.shape_cast %231 : vector<1x64x128xf32> to vector<64x128xf32>
    %cst_244 = arith.constant dense<0.000000e+00> : vector<4x128xf32>
    %233 = tpu.matmul %230, %232, %cst_244 {dimension_numbers = #tpu.dot_dimension_numbers<[1], [0], [0], [1], [0, 0, 1, 1], [], []>} : vector<4x64xf32>, vector<64x128xf32>, vector<4x128xf32> -> vector<4x128xf32>
    %234 = arith.addf %227, %233 : vector<4x128xf32>
    %c8_245 = arith.constant 8 : index
    %c0_246 = arith.constant 0 : index
    %c0_247 = arith.constant 0 : index
    %235 = vector.load %arg13[%c8_245, %c0_246, %c0_247] : memref<9x4x4xf32, #tpu.memory_space<vmem>>, vector<1x4x4xf32>
    %236 = vector.shape_cast %235 : vector<1x4x4xf32> to vector<4x4xf32>
    %cst_248 = arith.constant dense<0.000000e+00> : vector<4x64xf32>
    %237 = tpu.matmul %236, %179, %cst_248 {dimension_numbers = #tpu.dot_dimension_numbers<[1], [0], [0], [1], [0, 0, 1, 1], [], []>} : vector<4x4xf32>, vector<4x64xf32>, vector<4x64xf32> -> vector<4x64xf32>
    %c8_249 = arith.constant 8 : index
    %c0_250 = arith.constant 0 : index
    %c0_251 = arith.constant 0 : index
    %238 = vector.load %arg12[%c8_249, %c0_250, %c0_251] : memref<9x64x128xf32, #tpu.memory_space<vmem>>, vector<1x64x128xf32>
    %239 = vector.shape_cast %238 : vector<1x64x128xf32> to vector<64x128xf32>
    %cst_252 = arith.constant dense<0.000000e+00> : vector<4x128xf32>
    %240 = tpu.matmul %237, %239, %cst_252 {dimension_numbers = #tpu.dot_dimension_numbers<[1], [0], [0], [1], [0, 0, 1, 1], [], []>} : vector<4x64xf32>, vector<64x128xf32>, vector<4x128xf32> -> vector<4x128xf32>
    %241 = arith.addf %234, %240 : vector<4x128xf32>
    %c0_253 = arith.constant 0 : index
    %c0_254 = arith.constant 0 : index
    %242 = vector.load %arg15[%c0_253, %c0_254] : memref<1x128xf32, #tpu.memory_space<vmem>>, vector<1x128xf32>
    %243 = vector.broadcast %242 : vector<1x128xf32> to vector<4x128xf32>
    %244 = arith.addf %241, %243 : vector<4x128xf32>
    %c0_255 = arith.constant 0 : index
    %c0_256 = arith.constant 0 : index
    %c0_257 = arith.constant 0 : index
    %245 = vector.load %arg14[%c0_255, %c0_256, %c0_257] : memref<4x1x4xf32, #tpu.memory_space<vmem>>, vector<1x1x4xf32>
    %246 = vector.shape_cast %245 : vector<1x1x4xf32> to vector<1x4xf32>
    %cst_258 = arith.constant dense<0.000000e+00> : vector<1x128xf32>
    %247 = tpu.matmul %246, %244, %cst_258 {dimension_numbers = #tpu.dot_dimension_numbers<[1], [0], [0], [1], [0, 0, 1, 1], [], []>} : vector<1x4xf32>, vector<4x128xf32>, vector<1x128xf32> -> vector<1x128xf32>
    %c1_259 = arith.constant 1 : index
    %c0_260 = arith.constant 0 : index
    %c0_261 = arith.constant 0 : index
    %248 = vector.load %arg14[%c1_259, %c0_260, %c0_261] : memref<4x1x4xf32, #tpu.memory_space<vmem>>, vector<1x1x4xf32>
    %249 = vector.shape_cast %248 : vector<1x1x4xf32> to vector<1x4xf32>
    %cst_262 = arith.constant dense<0.000000e+00> : vector<1x128xf32>
    %250 = tpu.matmul %249, %244, %cst_262 {dimension_numbers = #tpu.dot_dimension_numbers<[1], [0], [0], [1], [0, 0, 1, 1], [], []>} : vector<1x4xf32>, vector<4x128xf32>, vector<1x128xf32> -> vector<1x128xf32>
    %251 = arith.maximumf %247, %250 : vector<1x128xf32>
    %c2_263 = arith.constant 2 : index
    %c0_264 = arith.constant 0 : index
    %c0_265 = arith.constant 0 : index
    %252 = vector.load %arg14[%c2_263, %c0_264, %c0_265] : memref<4x1x4xf32, #tpu.memory_space<vmem>>, vector<1x1x4xf32>
    %253 = vector.shape_cast %252 : vector<1x1x4xf32> to vector<1x4xf32>
    %cst_266 = arith.constant dense<0.000000e+00> : vector<1x128xf32>
    %254 = tpu.matmul %253, %244, %cst_266 {dimension_numbers = #tpu.dot_dimension_numbers<[1], [0], [0], [1], [0, 0, 1, 1], [], []>} : vector<1x4xf32>, vector<4x128xf32>, vector<1x128xf32> -> vector<1x128xf32>
    %255 = arith.maximumf %251, %254 : vector<1x128xf32>
    %c3_267 = arith.constant 3 : index
    %c0_268 = arith.constant 0 : index
    %c0_269 = arith.constant 0 : index
    %256 = vector.load %arg14[%c3_267, %c0_268, %c0_269] : memref<4x1x4xf32, #tpu.memory_space<vmem>>, vector<1x1x4xf32>
    %257 = vector.shape_cast %256 : vector<1x1x4xf32> to vector<1x4xf32>
    %cst_270 = arith.constant dense<0.000000e+00> : vector<1x128xf32>
    %258 = tpu.matmul %257, %244, %cst_270 {dimension_numbers = #tpu.dot_dimension_numbers<[1], [0], [0], [1], [0, 0, 1, 1], [], []>} : vector<1x4xf32>, vector<4x128xf32>, vector<1x128xf32> -> vector<1x128xf32>
    %259 = arith.maximumf %255, %258 : vector<1x128xf32>
    %cst_271 = arith.constant 0.000000e+00 : f32
    %260 = vector.broadcast %cst_271 : f32 to vector<1x128xf32>
    %261 = arith.maximumf %259, %260 : vector<1x128xf32>
    %c0_272 = arith.constant 0 : index
    %c0_273 = arith.constant 0 : index
    %262 = vector.load %arg16[%c0_272, %c0_273] : memref<128x512xf32, #tpu.memory_space<vmem>>, vector<128x512xf32>
    %cst_274 = arith.constant dense<0.000000e+00> : vector<1x512xf32>
    %263 = tpu.matmul %261, %262, %cst_274 {dimension_numbers = #tpu.dot_dimension_numbers<[1], [0], [0], [1], [0, 0, 1, 1], [], []>} : vector<1x128xf32>, vector<128x512xf32>, vector<1x512xf32> -> vector<1x512xf32>
    %c0_275 = arith.constant 0 : index
    %c0_276 = arith.constant 0 : index
    %264 = vector.load %arg17[%c0_275, %c0_276] : memref<1x512xf32, #tpu.memory_space<vmem>>, vector<1x512xf32>
    %265 = arith.addf %263, %264 : vector<1x512xf32>
    %cst_277 = arith.constant 0.000000e+00 : f32
    %266 = vector.broadcast %cst_277 : f32 to vector<1x512xf32>
    %267 = arith.maximumf %265, %266 : vector<1x512xf32>
    %c0_278 = arith.constant 0 : index
    %c0_279 = arith.constant 0 : index
    %c0_280 = arith.constant 0 : index
    %268 = vector.load %arg18[%c0_278, %c0_279, %c0_280] : memref<1x1x512xf32, #tpu.memory_space<vmem>>, vector<1x1x512xf32>
    %269 = vector.shape_cast %268 : vector<1x1x512xf32> to vector<1x512xf32>
    %270 = vector.shape_cast %267 : vector<1x512xf32> to vector<1x1x512xf32>
    tpu.vector_store %arg18[%c0_278, %c0_279, %c0_280], %270 {strides = array<i32>} : memref<1x1x512xf32, #tpu.memory_space<vmem>>, vector<1x1x512xf32>,
    return
  }
  func.func @transform_0(%arg0: i32) -> (i32, i32, i32) {
    %c0_i32 = arith.constant 0 : i32
    %c0_i32_0 = arith.constant 0 : i32
    %c0_i32_1 = arith.constant 0 : i32
    return %arg0, %c0_i32, %c0_i32_0 : i32, i32, i32
  }
  func.func @transform_1(%arg0: i32) -> (i32, i32) {
    %c0_i32 = arith.constant 0 : i32
    %c0_i32_0 = arith.constant 0 : i32
    %c0_i32_1 = arith.constant 0 : i32
    return %c0_i32, %c0_i32_0 : i32, i32
  }
  func.func @transform_2(%arg0: i32) -> (i32, i32) {
    %c0_i32 = arith.constant 0 : i32
    %c0_i32_0 = arith.constant 0 : i32
    %c0_i32_1 = arith.constant 0 : i32
    return %c0_i32, %c0_i32_0 : i32, i32
  }
  func.func @transform_3(%arg0: i32) -> (i32, i32, i32) {
    %c0_i32 = arith.constant 0 : i32
    %c0_i32_0 = arith.constant 0 : i32
    %c0_i32_1 = arith.constant 0 : i32
    %c0_i32_2 = arith.constant 0 : i32
    return %c0_i32, %c0_i32_0, %c0_i32_1 : i32, i32, i32
  }
  func.func @transform_4(%arg0: i32) -> (i32, i32, i32) {
    %c0_i32 = arith.constant 0 : i32
    %c0_i32_0 = arith.constant 0 : i32
    %c0_i32_1 = arith.constant 0 : i32
    %c0_i32_2 = arith.constant 0 : i32
    return %c0_i32, %c0_i32_0, %c0_i32_1 : i32, i32, i32
  }
  func.func @transform_5(%arg0: i32) -> (i32, i32, i32) {
    %c0_i32 = arith.constant 0 : i32
    %c0_i32_0 = arith.constant 0 : i32
    %c0_i32_1 = arith.constant 0 : i32
    %c0_i32_2 = arith.constant 0 : i32
    return %c0_i32, %c0_i32_0, %c0_i32_1 : i32, i32, i32
  }
  func.func @transform_6(%arg0: i32) -> (i32, i32) {
    %c0_i32 = arith.constant 0 : i32
    %c0_i32_0 = arith.constant 0 : i32
    %c0_i32_1 = arith.constant 0 : i32
    return %c0_i32, %c0_i32_0 : i32, i32
  }
  func.func @transform_7(%arg0: i32) -> (i32, i32, i32) {
    %c0_i32 = arith.constant 0 : i32
    %c0_i32_0 = arith.constant 0 : i32
    %c0_i32_1 = arith.constant 0 : i32
    %c0_i32_2 = arith.constant 0 : i32
    return %c0_i32, %c0_i32_0, %c0_i32_1 : i32, i32, i32
  }
  func.func @transform_8(%arg0: i32) -> (i32, i32, i32) {
    %c0_i32 = arith.constant 0 : i32
    %c0_i32_0 = arith.constant 0 : i32
    %c0_i32_1 = arith.constant 0 : i32
    %c0_i32_2 = arith.constant 0 : i32
    return %c0_i32, %c0_i32_0, %c0_i32_1 : i32, i32, i32
  }
  func.func @transform_9(%arg0: i32) -> (i32, i32, i32) {
    %c0_i32 = arith.constant 0 : i32
    %c0_i32_0 = arith.constant 0 : i32
    %c0_i32_1 = arith.constant 0 : i32
    %c0_i32_2 = arith.constant 0 : i32
    return %c0_i32, %c0_i32_0, %c0_i32_1 : i32, i32, i32
  }
  func.func @transform_10(%arg0: i32) -> (i32, i32) {
    %c0_i32 = arith.constant 0 : i32
    %c0_i32_0 = arith.constant 0 : i32
    %c0_i32_1 = arith.constant 0 : i32
    return %c0_i32, %c0_i32_0 : i32, i32
  }
  func.func @transform_11(%arg0: i32) -> (i32, i32, i32) {
    %c0_i32 = arith.constant 0 : i32
    %c0_i32_0 = arith.constant 0 : i32
    %c0_i32_1 = arith.constant 0 : i32
    %c0_i32_2 = arith.constant 0 : i32
    return %c0_i32, %c0_i32_0, %c0_i32_1 : i32, i32, i32
  }
  func.func @transform_12(%arg0: i32) -> (i32, i32, i32) {
    %c0_i32 = arith.constant 0 : i32
    %c0_i32_0 = arith.constant 0 : i32
    %c0_i32_1 = arith.constant 0 : i32
    %c0_i32_2 = arith.constant 0 : i32
    return %c0_i32, %c0_i32_0, %c0_i32_1 : i32, i32, i32
  }
  func.func @transform_13(%arg0: i32) -> (i32, i32, i32) {
    %c0_i32 = arith.constant 0 : i32
    %c0_i32_0 = arith.constant 0 : i32
    %c0_i32_1 = arith.constant 0 : i32
    %c0_i32_2 = arith.constant 0 : i32
    return %c0_i32, %c0_i32_0, %c0_i32_1 : i32, i32, i32
  }
  func.func @transform_14(%arg0: i32) -> (i32, i32) {
    %c0_i32 = arith.constant 0 : i32
    %c0_i32_0 = arith.constant 0 : i32
    %c0_i32_1 = arith.constant 0 : i32
    return %c0_i32, %c0_i32_0 : i32, i32
  }
  func.func @transform_15(%arg0: i32) -> (i32, i32) {
    %c0_i32 = arith.constant 0 : i32
    %c0_i32_0 = arith.constant 0 : i32
    %c0_i32_1 = arith.constant 0 : i32
    return %c0_i32, %c0_i32_0 : i32, i32
  }
  func.func @transform_16(%arg0: i32) -> (i32, i32) {
    %c0_i32 = arith.constant 0 : i32
    %c0_i32_0 = arith.constant 0 : i32
    %c0_i32_1 = arith.constant 0 : i32
    return %c0_i32, %c0_i32_0 : i32, i32
  }
  func.func @transform_17(%arg0: i32) -> (i32, i32, i32) {
    %c0_i32 = arith.constant 0 : i32
    %c0_i32_0 = arith.constant 0 : i32
    %c0_i32_1 = arith.constant 0 : i32
    return %arg0, %c0_i32, %c0_i32_0 : i32, i32, i32
  }
}

</mosaic_0001>

<llo_original>
// kernel: naive_cnn_forward.1
$region0: #{naive_cnn_forward.1}
  #allocation0 [shape = 'u32[]', space=smem, size = 0x4, offset = 0x4, fixed_abs, tag = 'smem constant byte address 0x4 - core index']
  #allocation1 [shape = 'u32[144,128]{1,0:T(1,128)}', space=vmem, size = 0x12000, scoped, tag = 'internal scratch']
  %s0 = inlined_call_operand.vmem [shape: f32[2,1024,27], index: 0, kind: input, shape index: {}]
  %s1 = inlined_call_operand.vmem [shape: f32[27,16], index: 1, kind: input, shape index: {}]
  %s2 = inlined_call_operand.vmem [shape: f32[1,16], index: 2, kind: input, shape index: {}]
  %s3 = inlined_call_operand.vmem [shape: f32[9,16,32], index: 3, kind: input, shape index: {}]
  %s4 = inlined_call_operand.vmem [shape: f32[9,64,256], index: 4, kind: input, shape index: {}]
  %s5 = inlined_call_operand.vmem [shape: f32[4,16,64], index: 5, kind: input, shape index: {}]
  %s6 = inlined_call_operand.vmem [shape: f32[1,32], index: 6, kind: input, shape index: {}]
  %s7 = inlined_call_operand.vmem [shape: f32[9,32,64], index: 7, kind: input, shape index: {}]
  %s8 = inlined_call_operand.vmem [shape: f32[9,16,16], index: 8, kind: input, shape index: {}]
  %s9 = inlined_call_operand.vmem [shape: f32[4,4,16], index: 9, kind: input, shape index: {}]
  %s10 = inlined_call_operand.vmem [shape: f32[1,64], index: 10, kind: input, shape index: {}]
  %s11 = inlined_call_operand.vmem [shape: f32[9,64,128], index: 11, kind: input, shape index: {}]
  %s12 = inlined_call_operand.vmem [shape: f32[9,4,4], index: 12, kind: input, shape index: {}]
  %s13 = inlined_call_operand.vmem [shape: f32[4,1,4], index: 13, kind: input, shape index: {}]
  %s14 = inlined_call_operand.vmem [shape: f32[1,128], index: 14, kind: input, shape index: {}]
  %s15 = inlined_call_operand.vmem [shape: f32[128,512], index: 15, kind: input, shape index: {}]
  %s16 = inlined_call_operand.vmem [shape: f32[1,512], index: 16, kind: input, shape index: {}]
  %s17 = inlined_call_operand.vmem [shape: f32[2,1,512], index: 17, kind: output, shape index: {}]
  %s18 = sld [smem:[#allocation0]]
  $region101: #{naive_cnn_forward.1} parent=0
    _
  %s20 = ssub.s32 1, %s18
  %s21 = scalar_select 0, %s20, %s18
  loop: start=0, step=1, limit=4
  $region2: #{naive_cnn_forward.1} parent=0 // loop_pre_header
    _
  $region3: #{naive_cnn_forward.1} parent=0 // loop_header
    %s23 = sphi 0, %s27
    %p24 = scmp.ge.s32.totalorder %s23, 4
    %s33 = sphi 0, %s35
    %s36 = sphi 0, %s33
    %s37 = sphi 0, %s36
    %s53 = sphi 0, %s37
    %s57 = sphi 0, %s57
    %s59 = sphi 0, %s57
    %s60 = sphi 0, %s59
    %s74 = sphi 0, %s60
    %s78 = sphi 0, %s78
    %s80 = sphi 0, %s78
    %s81 = sphi 0, %s80
    %s95 = sphi 0, %s81
    %s99 = sphi 0, %s99
    %s101 = sphi 0, %s99
    %s102 = sphi 0, %s101
    %s116 = sphi 0, %s102
    %s120 = sphi 0, %s120
    %s122 = sphi 0, %s120
    %s123 = sphi 0, %s122
    %s137 = sphi 0, %s123
    %s141 = sphi 0, %s141
    %s143 = sphi 0, %s141
    %s144 = sphi 0, %s143
    %s158 = sphi 0, %s144
    %s162 = sphi 0, %s162
    %s164 = sphi 0, %s162
    %s165 = sphi 0, %s164
    %s179 = sphi 0, %s165
    %s183 = sphi 0, %s183
    %s185 = sphi 0, %s183
    %s186 = sphi 0, %s185
    %s200 = sphi 0, %s186
    %s204 = sphi 0, %s204
    %s206 = sphi 0, %s204
    %s207 = sphi 0, %s206
    %s221 = sphi 0, %s207
    %s225 = sphi 0, %s225
    %s227 = sphi 0, %s225
    %s228 = sphi 0, %s227
    %s242 = sphi 0, %s228
    %s246 = sphi 0, %s246
    %s248 = sphi 0, %s246
    %s249 = sphi 0, %s248
    %s263 = sphi 0, %s249
    %s267 = sphi 0, %s267
    %s269 = sphi 0, %s267
    %s270 = sphi 0, %s269
    %s284 = sphi 0, %s270
    %s288 = sphi 0, %s288
    %s290 = sphi 0, %s288
    %s291 = sphi 0, %s290
    %s305 = sphi 0, %s291
    %s309 = sphi 0, %s309
    %s311 = sphi 0, %s309
    %s312 = sphi 0, %s311
    %s326 = sphi 0, %s312
    %s330 = sphi 0, %s330
    %s332 = sphi 0, %s330
    %s333 = sphi 0, %s332
    %s347 = sphi 0, %s333
    %s351 = sphi 0, %s351
    %s353 = sphi 0, %s351
    %s354 = sphi 0, %s353
    %s368 = sphi 0, %s354
    %s372 = sphi 0, %s372
    %s374 = sphi 0, %s372
    %s375 = sphi 0, %s374
    %s389 = sphi 0, %s375
    %s395 = sphi 0, %s397
    %s398 = sphi 0, %s395
    %s399 = sphi 0, %s398
    %s415 = sphi 0, %s399
  $region4: #{naive_cnn_forward.1} parent=0 // loop_header_branch
    %26 = sbr.rel (%p24) target = $region8
  $region5: #{naive_cnn_forward.1} parent=0 // loop_body
    %s28 = ssub.s32 %s23, 1
    %s29 = ssub.s32 %s23, 2
    %s30 = sadd.s32 %s23, 1
    %s31 = ssub.s32 %s23, %s30
    %p32 = scmp.eq.s32.totalorder %s31, 0
    %s34 = sadd.s32 %s33, 1
    %s35 = scalar_select %p32, %s33, %s34
    %p38 = pneg %p32
    %p39 = scmp.eq.s32.totalorder %s23, 1
    %p40 = por %p38, %p39
    %p41 = scmp.ne.s32.totalorder %s33, %s36
    %p42 = scmp.eq.s32.totalorder %s23, 0
    %p43 = por %p41, %p42
    %p44 = scmp.ne.s32.totalorder %s33, %s36
    %p45 = scmp.eq.s32.totalorder %s28, 1
    %p46 = por %p44, %p45
    %p47 = scmp.ne.s32.totalorder %s36, %s37
    %p48 = scmp.eq.s32.totalorder %s28, 0
    %p49 = por %p47, %p48
    %p50 = scmp.ne.s32.totalorder %s36, %s37
    %p51 = scmp.eq.s32.totalorder %s29, 1
    %p52 = por %p50, %p51
    %p54 = scmp.ne.s32.totalorder %s37, %s53
    %p55 = scmp.eq.s32.totalorder %s29, 0
    %p56 = por %p54, %p55
    %s58 = sadd.s32 %s57, 1
    %p61 = scmp.eq.s32.totalorder %s23, 1
    %p62 = scmp.ne.s32.totalorder %s57, %s59
    %p63 = scmp.eq.s32.totalorder %s23, 0
    %p64 = por %p62, %p63
    %p65 = scmp.ne.s32.totalorder %s57, %s59
    %p66 = scmp.eq.s32.totalorder %s28, 1
    %p67 = por %p65, %p66
    %p68 = scmp.ne.s32.totalorder %s59, %s60
    %p69 = scmp.eq.s32.totalorder %s28, 0
    %p70 = por %p68, %p69
    %p71 = scmp.ne.s32.totalorder %s59, %s60
    %p72 = scmp.eq.s32.totalorder %s29, 1
    %p73 = por %p71, %p72
    %p75 = scmp.ne.s32.totalorder %s60, %s74
    %p76 = scmp.eq.s32.totalorder %s29, 0
    %p77 = por %p75, %p76
    %s79 = sadd.s32 %s78, 1
    %p82 = scmp.eq.s32.totalorder %s23, 1
    %p83 = scmp.ne.s32.totalorder %s78, %s80
    %p84 = scmp.eq.s32.totalorder %s23, 0
    %p85 = por %p83, %p84
    %p86 = scmp.ne.s32.totalorder %s78, %s80
    %p87 = scmp.eq.s32.totalorder %s28, 1
    %p88 = por %p86, %p87
    %p89 = scmp.ne.s32.totalorder %s80, %s81
    %p90 = scmp.eq.s32.totalorder %s28, 0
    %p91 = por %p89, %p90
    %p92 = scmp.ne.s32.totalorder %s80, %s81
    %p93 = scmp.eq.s32.totalorder %s29, 1
    %p94 = por %p92, %p93
    %p96 = scmp.ne.s32.totalorder %s81, %s95
    %p97 = scmp.eq.s32.totalorder %s29, 0
    %p98 = por %p96, %p97
    %s100 = sadd.s32 %s99, 1
    %p103 = scmp.eq.s32.totalorder %s23, 1
    %p104 = scmp.ne.s32.totalorder %s99, %s101
    %p105 = scmp.eq.s32.totalorder %s23, 0
    %p106 = por %p104, %p105
    %p107 = scmp.ne.s32.totalorder %s99, %s101
    %p108 = scmp.eq.s32.totalorder %s28, 1
    %p109 = por %p107, %p108
    %p110 = scmp.ne.s32.totalorder %s101, %s102
    %p111 = scmp.eq.s32.totalorder %s28, 0
    %p112 = por %p110, %p111
    %p113 = scmp.ne.s32.totalorder %s101, %s102
    %p114 = scmp.eq.s32.totalorder %s29, 1
    %p115 = por %p113, %p114
    %p117 = scmp.ne.s32.totalorder %s102, %s116
    %p118 = scmp.eq.s32.totalorder %s29, 0
    %p119 = por %p117, %p118
    %s121 = sadd.s32 %s120, 1
    %p124 = scmp.eq.s32.totalorder %s23, 1
    %p125 = scmp.ne.s32.totalorder %s120, %s122
    %p126 = scmp.eq.s32.totalorder %s23, 0
    %p127 = por %p125, %p126
    %p128 = scmp.ne.s32.totalorder %s120, %s122
    %p129 = scmp.eq.s32.totalorder %s28, 1
    %p130 = por %p128, %p129
    %p131 = scmp.ne.s32.totalorder %s122, %s123
    %p132 = scmp.eq.s32.totalorder %s28, 0
    %p133 = por %p131, %p132
    %p134 = scmp.ne.s32.totalorder %s122, %s123
    %p135 = scmp.eq.s32.totalorder %s29, 1
    %p136 = por %p134, %p135
    %p138 = scmp.ne.s32.totalorder %s123, %s137
    %p139 = scmp.eq.s32.totalorder %s29, 0
    %p140 = por %p138, %p139
    %s142 = sadd.s32 %s141, 1
    %p145 = scmp.eq.s32.totalorder %s23, 1
    %p146 = scmp.ne.s32.totalorder %s141, %s143
    %p147 = scmp.eq.s32.totalorder %s23, 0
    %p148 = por %p146, %p147
    %p149 = scmp.ne.s32.totalorder %s141, %s143
    %p150 = scmp.eq.s32.totalorder %s28, 1
    %p151 = por %p149, %p150
    %p152 = scmp.ne.s32.totalorder %s143, %s144
    %p153 = scmp.eq.s32.totalorder %s28, 0
    %p154 = por %p152, %p153
    %p155 = scmp.ne.s32.totalorder %s143, %s144
    %p156 = scmp.eq.s32.totalorder %s29, 1
    %p157 = por %p155, %p156
    %p159 = scmp.ne.s32.totalorder %s144, %s158
    %p160 = scmp.eq.s32.totalorder %s29, 0
    %p161 = por %p159, %p160
    %s163 = sadd.s32 %s162, 1
    %p166 = scmp.eq.s32.totalorder %s23, 1
    %p167 = scmp.ne.s32.totalorder %s162, %s164
    %p168 = scmp.eq.s32.totalorder %s23, 0
    %p169 = por %p167, %p168
    %p170 = scmp.ne.s32.totalorder %s162, %s164
    %p171 = scmp.eq.s32.totalorder %s28, 1
    %p172 = por %p170, %p171
    %p173 = scmp.ne.s32.totalorder %s164, %s165
    %p174 = scmp.eq.s32.totalorder %s28, 0
    %p175 = por %p173, %p174
    %p176 = scmp.ne.s32.totalorder %s164, %s165
    %p177 = scmp.eq.s32.totalorder %s29, 1
    %p178 = por %p176, %p177
    %p180 = scmp.ne.s32.totalorder %s165, %s179
    %p181 = scmp.eq.s32.totalorder %s29, 0
    %p182 = por %p180, %p181
    %s184 = sadd.s32 %s183, 1
    %p187 = scmp.eq.s32.totalorder %s23, 1
    %p188 = scmp.ne.s32.totalorder %s183, %s185
    %p189 = scmp.eq.s32.totalorder %s23, 0
    %p190 = por %p188, %p189
    %p191 = scmp.ne.s32.totalorder %s183, %s185
    %p192 = scmp.eq.s32.totalorder %s28, 1
    %p193 = por %p191, %p192
    %p194 = scmp.ne.s32.totalorder %s185, %s186
    %p195 = scmp.eq.s32.totalorder %s28, 0
    %p196 = por %p194, %p195
    %p197 = scmp.ne.s32.totalorder %s185, %s186
    %p198 = scmp.eq.s32.totalorder %s29, 1
    %p199 = por %p197, %p198
    %p201 = scmp.ne.s32.totalorder %s186, %s200
    %p202 = scmp.eq.s32.totalorder %s29, 0
    %p203 = por %p201, %p202
    %s205 = sadd.s32 %s204, 1
    %p208 = scmp.eq.s32.totalorder %s23, 1
    %p209 = scmp.ne.s32.totalorder %s204, %s206
    %p210 = scmp.eq.s32.totalorder %s23, 0
    %p211 = por %p209, %p210
    %p212 = scmp.ne.s32.totalorder %s204, %s206
    %p213 = scmp.eq.s32.totalorder %s28, 1
    %p214 = por %p212, %p213
    %p215 = scmp.ne.s32.totalorder %s206, %s207
    %p216 = scmp.eq.s32.totalorder %s28, 0
    %p217 = por %p215, %p216
    %p218 = scmp.ne.s32.totalorder %s206, %s207
    %p219 = scmp.eq.s32.totalorder %s29, 1
    %p220 = por %p218, %p219
    %p222 = scmp.ne.s32.totalorder %s207, %s221
    %p223 = scmp.eq.s32.totalorder %s29, 0
    %p224 = por %p222, %p223
    %s226 = sadd.s32 %s225, 1
    %p229 = scmp.eq.s32.totalorder %s23, 1
    %p230 = scmp.ne.s32.totalorder %s225, %s227
    %p231 = scmp.eq.s32.totalorder %s23, 0
    %p232 = por %p230, %p231
    %p233 = scmp.ne.s32.totalorder %s225, %s227
    %p234 = scmp.eq.s32.totalorder %s28, 1
    %p235 = por %p233, %p234
    %p236 = scmp.ne.s32.totalorder %s227, %s228
    %p237 = scmp.eq.s32.totalorder %s28, 0
    %p238 = por %p236, %p237
    %p239 = scmp.ne.s32.totalorder %s227, %s228
    %p240 = scmp.eq.s32.totalorder %s29, 1
    %p241 = por %p239, %p240
    %p243 = scmp.ne.s32.totalorder %s228, %s242
    %p244 = scmp.eq.s32.totalorder %s29, 0
    %p245 = por %p243, %p244
    %s247 = sadd.s32 %s246, 1
    %p250 = scmp.eq.s32.totalorder %s23, 1
    %p251 = scmp.ne.s32.totalorder %s246, %s248
    %p252 = scmp.eq.s32.totalorder %s23, 0
    %p253 = por %p251, %p252
    %p254 = scmp.ne.s32.totalorder %s246, %s248
    %p255 = scmp.eq.s32.totalorder %s28, 1
    %p256 = por %p254, %p255
    %p257 = scmp.ne.s32.totalorder %s248, %s249
    %p258 = scmp.eq.s32.totalorder %s28, 0
    %p259 = por %p257, %p258
    %p260 = scmp.ne.s32.totalorder %s248, %s249
    %p261 = scmp.eq.s32.totalorder %s29, 1
    %p262 = por %p260, %p261
    %p264 = scmp.ne.s32.totalorder %s249, %s263
    %p265 = scmp.eq.s32.totalorder %s29, 0
    %p266 = por %p264, %p265
    %s268 = sadd.s32 %s267, 1
    %p271 = scmp.eq.s32.totalorder %s23, 1
    %p272 = scmp.ne.s32.totalorder %s267, %s269
    %p273 = scmp.eq.s32.totalorder %s23, 0
    %p274 = por %p272, %p273
    %p275 = scmp.ne.s32.totalorder %s267, %s269
    %p276 = scmp.eq.s32.totalorder %s28, 1
    %p277 = por %p275, %p276
    %p278 = scmp.ne.s32.totalorder %s269, %s270
    %p279 = scmp.eq.s32.totalorder %s28, 0
    %p280 = por %p278, %p279
    %p281 = scmp.ne.s32.totalorder %s269, %s270
    %p282 = scmp.eq.s32.totalorder %s29, 1
    %p283 = por %p281, %p282
    %p285 = scmp.ne.s32.totalorder %s270, %s284
    %p286 = scmp.eq.s32.totalorder %s29, 0
    %p287 = por %p285, %p286
    %s289 = sadd.s32 %s288, 1
    %p292 = scmp.eq.s32.totalorder %s23, 1
    %p293 = scmp.ne.s32.totalorder %s288, %s290
    %p294 = scmp.eq.s32.totalorder %s23, 0
    %p295 = por %p293, %p294
    %p296 = scmp.ne.s32.totalorder %s288, %s290
    %p297 = scmp.eq.s32.totalorder %s28, 1
    %p298 = por %p296, %p297
    %p299 = scmp.ne.s32.totalorder %s290, %s291
    %p300 = scmp.eq.s32.totalorder %s28, 0
    %p301 = por %p299, %p300
    %p302 = scmp.ne.s32.totalorder %s290, %s291
    %p303 = scmp.eq.s32.totalorder %s29, 1
    %p304 = por %p302, %p303
    %p306 = scmp.ne.s32.totalorder %s291, %s305
    %p307 = scmp.eq.s32.totalorder %s29, 0
    %p308 = por %p306, %p307
    %s310 = sadd.s32 %s309, 1
    %p313 = scmp.eq.s32.totalorder %s23, 1
    %p314 = scmp.ne.s32.totalorder %s309, %s311
    %p315 = scmp.eq.s32.totalorder %s23, 0
    %p316 = por %p314, %p315
    %p317 = scmp.ne.s32.totalorder %s309, %s311
    %p318 = scmp.eq.s32.totalorder %s28, 1
    %p319 = por %p317, %p318
    %p320 = scmp.ne.s32.totalorder %s311, %s312
    %p321 = scmp.eq.s32.totalorder %s28, 0
    %p322 = por %p320, %p321
    %p323 = scmp.ne.s32.totalorder %s311, %s312
    %p324 = scmp.eq.s32.totalorder %s29, 1
    %p325 = por %p323, %p324
    %p327 = scmp.ne.s32.totalorder %s312, %s326
    %p328 = scmp.eq.s32.totalorder %s29, 0
    %p329 = por %p327, %p328
    %s331 = sadd.s32 %s330, 1
    %p334 = scmp.eq.s32.totalorder %s23, 1
    %p335 = scmp.ne.s32.totalorder %s330, %s332
    %p336 = scmp.eq.s32.totalorder %s23, 0
    %p337 = por %p335, %p336
    %p338 = scmp.ne.s32.totalorder %s330, %s332
    %p339 = scmp.eq.s32.totalorder %s28, 1
    %p340 = por %p338, %p339
    %p341 = scmp.ne.s32.totalorder %s332, %s333
    %p342 = scmp.eq.s32.totalorder %s28, 0
    %p343 = por %p341, %p342
    %p344 = scmp.ne.s32.totalorder %s332, %s333
    %p345 = scmp.eq.s32.totalorder %s29, 1
    %p346 = por %p344, %p345
    %p348 = scmp.ne.s32.totalorder %s333, %s347
    %p349 = scmp.eq.s32.totalorder %s29, 0
    %p350 = por %p348, %p349
    %s352 = sadd.s32 %s351, 1
    %p355 = scmp.eq.s32.totalorder %s23, 1
    %p356 = scmp.ne.s32.totalorder %s351, %s353
    %p357 = scmp.eq.s32.totalorder %s23, 0
    %p358 = por %p356, %p357
    %p359 = scmp.ne.s32.totalorder %s351, %s353
    %p360 = scmp.eq.s32.totalorder %s28, 1
    %p361 = por %p359, %p360
    %p362 = scmp.ne.s32.totalorder %s353, %s354
    %p363 = scmp.eq.s32.totalorder %s28, 0
    %p364 = por %p362, %p363
    %p365 = scmp.ne.s32.totalorder %s353, %s354
    %p366 = scmp.eq.s32.totalorder %s29, 1
    %p367 = por %p365, %p366
    %p369 = scmp.ne.s32.totalorder %s354, %s368
    %p370 = scmp.eq.s32.totalorder %s29, 0
    %p371 = por %p369, %p370
    %s373 = sadd.s32 %s372, 1
    %p376 = scmp.eq.s32.totalorder %s23, 1
    %p377 = scmp.ne.s32.totalorder %s372, %s374
    %p378 = scmp.eq.s32.totalorder %s23, 0
    %p379 = por %p377, %p378
    %p380 = scmp.ne.s32.totalorder %s372, %s374
    %p381 = scmp.eq.s32.totalorder %s28, 1
    %p382 = por %p380, %p381
    %p383 = scmp.ne.s32.totalorder %s374, %s375
    %p384 = scmp.eq.s32.totalorder %s28, 0
    %p385 = por %p383, %p384
    %p386 = scmp.ne.s32.totalorder %s374, %s375
    %p387 = scmp.eq.s32.totalorder %s29, 1
    %p388 = por %p386, %p387
    %p390 = scmp.ne.s32.totalorder %s375, %s389
    %p391 = scmp.eq.s32.totalorder %s29, 0
    %p392 = por %p390, %p391
    %s393 = ssub.s32 %s23, %s30
    %p394 = scmp.eq.s32.totalorder %s393, 0
    %s396 = sadd.s32 %s395, 1
    %s397 = scalar_select %p394, %s395, %s396
    %p400 = pneg %p394
    %p401 = scmp.eq.s32.totalorder %s23, 1
    %p402 = por %p400, %p401
    %p403 = scmp.ne.s32.totalorder %s395, %s398
    %p404 = scmp.eq.s32.totalorder %s23, 0
    %p405 = por %p403, %p404
    %p406 = scmp.ne.s32.totalorder %s395, %s398
    %p407 = scmp.eq.s32.totalorder %s28, 1
    %p408 = por %p406, %p407
    %p409 = scmp.ne.s32.totalorder %s398, %s399
    %p410 = scmp.eq.s32.totalorder %s28, 0
    %p411 = por %p409, %p410
    %p412 = scmp.ne.s32.totalorder %s398, %s399
    %p413 = scmp.eq.s32.totalorder %s29, 1
    %p414 = por %p412, %p413
    %p416 = scmp.ne.s32.totalorder %s399, %s415
    %p417 = scmp.eq.s32.totalorder %s29, 0
    %p418 = por %p416, %p417
    %p419 = scmp.le.s32.totalorder 1, %s23
    %p420 = scmp.lt.s32.totalorder %s23, 3
    %p421 = pnand %p419, %p420
    %p422 = pneg %p421
    // Predicated region
    $region9: #{naive_cnn_forward.1} parent=5 // pred_check
      _
    $region10: #{naive_cnn_forward.1} parent=5 // pred_check_branch
      %424 = sbr.rel (%p421) target = $region12
    $region11: #{naive_cnn_forward.1} parent=5 // pred_region
      %s425 = ssub.s32 %s23, 1
      // Predicated region
      $region13: #{naive_cnn_forward.1} parent=11 // pred_check
        %p426 = pneg %p70
      $region14: #{naive_cnn_forward.1} parent=11 // pred_check_branch
        %428 = sbr.rel (%p426) target = $region16
      $region15: #{naive_cnn_forward.1} parent=11 // pred_region
        _
      $region16: #{naive_cnn_forward.1} parent=11 // pred_fallthru
        _
      // Predicated region
      $region17: #{naive_cnn_forward.1} parent=11 // pred_check
        %p429 = pneg %p91
      $region18: #{naive_cnn_forward.1} parent=11 // pred_check_branch
        %431 = sbr.rel (%p429) target = $region20
      $region19: #{naive_cnn_forward.1} parent=11 // pred_region
        _
      $region20: #{naive_cnn_forward.1} parent=11 // pred_fallthru
        _
      // Predicated region
      $region21: #{naive_cnn_forward.1} parent=11 // pred_check
        %p432 = pneg %p112
      $region22: #{naive_cnn_forward.1} parent=11 // pred_check_branch
        %434 = sbr.rel (%p432) target = $region24
      $region23: #{naive_cnn_forward.1} parent=11 // pred_region
        _
      $region24: #{naive_cnn_forward.1} parent=11 // pred_fallthru
        _
      // Predicated region
      $region25: #{naive_cnn_forward.1} parent=11 // pred_check
        %p435 = pneg %p133
      $region26: #{naive_cnn_forward.1} parent=11 // pred_check_branch
        %437 = sbr.rel (%p435) target = $region28
      $region27: #{naive_cnn_forward.1} parent=11 // pred_region
        _
      $region28: #{naive_cnn_forward.1} parent=11 // pred_fallthru
        _
      // Predicated region
      $region29: #{naive_cnn_forward.1} parent=11 // pred_check
        %p438 = pneg %p154
      $region30: #{naive_cnn_forward.1} parent=11 // pred_check_branch
        %440 = sbr.rel (%p438) target = $region32
      $region31: #{naive_cnn_forward.1} parent=11 // pred_region
        _
      $region32: #{naive_cnn_forward.1} parent=11 // pred_fallthru
        _
      // Predicated region
      $region33: #{naive_cnn_forward.1} parent=11 // pred_check
        %p441 = pneg %p175
      $region34: #{naive_cnn_forward.1} parent=11 // pred_check_branch
        %443 = sbr.rel (%p441) target = $region36
      $region35: #{naive_cnn_forward.1} parent=11 // pred_region
        _
      $region36: #{naive_cnn_forward.1} parent=11 // pred_fallthru
        _
      // Predicated region
      $region37: #{naive_cnn_forward.1} parent=11 // pred_check
        %p444 = pneg %p196
      $region38: #{naive_cnn_forward.1} parent=11 // pred_check_branch
        %446 = sbr.rel (%p444) target = $region40
      $region39: #{naive_cnn_forward.1} parent=11 // pred_region
        _
      $region40: #{naive_cnn_forward.1} parent=11 // pred_fallthru
        _
      // Predicated region
      $region41: #{naive_cnn_forward.1} parent=11 // pred_check
        %p447 = pneg %p217
      $region42: #{naive_cnn_forward.1} parent=11 // pred_check_branch
        %449 = sbr.rel (%p447) target = $region44
      $region43: #{naive_cnn_forward.1} parent=11 // pred_region
        _
      $region44: #{naive_cnn_forward.1} parent=11 // pred_fallthru
        _
      // Predicated region
      $region45: #{naive_cnn_forward.1} parent=11 // pred_check
        %p450 = pneg %p238
      $region46: #{naive_cnn_forward.1} parent=11 // pred_check_branch
        %452 = sbr.rel (%p450) target = $region48
      $region47: #{naive_cnn_forward.1} parent=11 // pred_region
        _
      $region48: #{naive_cnn_forward.1} parent=11 // pred_fallthru
        _
      // Predicated region
      $region49: #{naive_cnn_forward.1} parent=11 // pred_check
        %p453 = pneg %p259
      $region50: #{naive_cnn_forward.1} parent=11 // pred_check_branch
        %455 = sbr.rel (%p453) target = $region52
      $region51: #{naive_cnn_forward.1} parent=11 // pred_region
        _
      $region52: #{naive_cnn_forward.1} parent=11 // pred_fallthru
        _
      // Predicated region
      $region53: #{naive_cnn_forward.1} parent=11 // pred_check
        %p456 = pneg %p280
      $region54: #{naive_cnn_forward.1} parent=11 // pred_check_branch
        %458 = sbr.rel (%p456) target = $region56
      $region55: #{naive_cnn_forward.1} parent=11 // pred_region
        _
      $region56: #{naive_cnn_forward.1} parent=11 // pred_fallthru
        _
      // Predicated region
      $region57: #{naive_cnn_forward.1} parent=11 // pred_check
        %p459 = pneg %p301
      $region58: #{naive_cnn_forward.1} parent=11 // pred_check_branch
        %461 = sbr.rel (%p459) target = $region60
      $region59: #{naive_cnn_forward.1} parent=11 // pred_region
        _
      $region60: #{naive_cnn_forward.1} parent=11 // pred_fallthru
        _
      // Predicated region
      $region61: #{naive_cnn_forward.1} parent=11 // pred_check
        %p462 = pneg %p322
      $region62: #{naive_cnn_forward.1} parent=11 // pred_check_branch
        %464 = sbr.rel (%p462) target = $region64
      $region63: #{naive_cnn_forward.1} parent=11 // pred_region
        _
      $region64: #{naive_cnn_forward.1} parent=11 // pred_fallthru
        _
      // Predicated region
      $region65: #{naive_cnn_forward.1} parent=11 // pred_check
        %p465 = pneg %p343
      $region66: #{naive_cnn_forward.1} parent=11 // pred_check_branch
        %467 = sbr.rel (%p465) target = $region68
      $region67: #{naive_cnn_forward.1} parent=11 // pred_region
        _
      $region68: #{naive_cnn_forward.1} parent=11 // pred_fallthru
        _
      // Predicated region
      $region69: #{naive_cnn_forward.1} parent=11 // pred_check
        %p468 = pneg %p364
      $region70: #{naive_cnn_forward.1} parent=11 // pred_check_branch
        %470 = sbr.rel (%p468) target = $region72
      $region71: #{naive_cnn_forward.1} parent=11 // pred_region
        _
      $region72: #{naive_cnn_forward.1} parent=11 // pred_fallthru
        _
      // Predicated region
      $region73: #{naive_cnn_forward.1} parent=11 // pred_check
        %p471 = pneg %p385
      $region74: #{naive_cnn_forward.1} parent=11 // pred_check_branch
        %473 = sbr.rel (%p471) target = $region76
      $region75: #{naive_cnn_forward.1} parent=11 // pred_region
        _
      $region76: #{naive_cnn_forward.1} parent=11 // pred_fallthru
        _
    $region12: #{naive_cnn_forward.1} parent=5 // pred_fallthru
      _
    %p474 = scmp.lt.s32.totalorder %s23, 2
    // Predicated region
    $region77: #{naive_cnn_forward.1} parent=5 // pred_check
      %p475 = pneg %p474
    $region78: #{naive_cnn_forward.1} parent=5 // pred_check_branch
      %477 = sbr.rel (%p475) target = $region80
    $region79: #{naive_cnn_forward.1} parent=5 // pred_region
      // Predicated region
      $region81: #{naive_cnn_forward.1} parent=79 // pred_check
        %p478 = pneg %p43
      $region82: #{naive_cnn_forward.1} parent=79 // pred_check_branch
        %480 = sbr.rel (%p478) target = $region84
      $region83: #{naive_cnn_forward.1} parent=79 // pred_region
        %p481 = scmp.lt.s32.totalorder %s23, 1
        %s482 = scalar_select %p481, %s23, 1
        %s483 = smul.addr %s482, 128
        %s484 = smul.addr %s483, 8
        %s485 = scalar_lea.vmem %s0, %s484
      $region84: #{naive_cnn_forward.1} parent=79 // pred_fallthru
        _
    $region80: #{naive_cnn_forward.1} parent=5 // pred_fallthru
      _
    %p486 = scmp.le.s32.totalorder 1, %s23
    %p487 = scmp.lt.s32.totalorder %s23, 3
    %p488 = pnand %p486, %p487
    %p489 = pneg %p488
    // Predicated region
    $region85: #{naive_cnn_forward.1} parent=5 // pred_check
      _
    $region86: #{naive_cnn_forward.1} parent=5 // pred_check_branch
      %491 = sbr.rel (%p488) target = $region88
    $region87: #{naive_cnn_forward.1} parent=5 // pred_region
      %s492 = ssub.s32 %s23, 1
      %p493 = scmp.lt.s32.totalorder %s28, 1
      %s494 = scalar_select %p493, %s28, 1
      %s495 = smul.addr %s494, 128
      %s496 = smul.addr %s495, 8
      %s497 = scalar_lea.vmem %s0, %s496
      %p498 = pneg %p49
      %p499 = pneg %p46
      %p500 = pneg %p70
      %p501 = pneg %p67
      %p502 = pneg %p91
      %p503 = pneg %p88
      %p504 = pneg %p112
      %p505 = pneg %p109
      %p506 = pneg %p133
      %p507 = pneg %p130
      %p508 = pneg %p154
      %p509 = pneg %p151
      %p510 = pneg %p175
      %p511 = pneg %p172
      %p512 = pneg %p196
      %p513 = pneg %p193
      %p514 = pneg %p217
      %p515 = pneg %p214
      %p516 = pneg %p238
      %p517 = pneg %p235
      %p518 = pneg %p259
      %p519 = pneg %p256
      %p520 = pneg %p280
      %p521 = pneg %p277
      %p522 = pneg %p301
      %p523 = pneg %p298
      %p524 = pneg %p322
      %p525 = pneg %p319
      %p526 = pneg %p343
      %p527 = pneg %p340
      %p528 = pneg %p364
      %p529 = pneg %p361
      %p530 = pneg %p385
      %p531 = pneg %p382
      %p532 = pneg %p411
      %p533 = pneg %p408
      %p534 = scmp.lt.s32.totalorder %s28, 1
      %s535 = scalar_select %p534, %s28, 1
      %s536 = smul.addr %s535, 4
      %s537 = scalar_lea.vmem %s17, %s536
      %p538 = scmp.lt.s32.totalorder %s28, 1
      %s539 = scalar_select %p538, %s28, 1
      %s540 = smul.addr %s539, 128
      %s541 = smul.addr %s540, 8
      %s542 = scalar_lea.vmem %s0, %s541
      %p543 = scmp.lt.s32.totalorder %s28, 1
      %s544 = scalar_select %p543, %s28, 1
      %s545 = smul.addr %s544, 4
      %s546 = scalar_lea.vmem %s17, %s545
      %v547 = vld [vmem:[%s542] sm:$0xff]
      %v548 = vld [vmem:[%s542 + $0x8] sm:$0xff]
      %v549 = vld [vmem:[%s542 + $0x10] sm:$0xff]
      %v550 = vld [vmem:[%s542 + $0x18] sm:$0xff]
      %v551 = vld [vmem:[%s542 + $0x20] sm:$0xff]
      %v552 = vld [vmem:[%s542 + $0x28] sm:$0xff]
      %v553 = vld [vmem:[%s542 + $0x30] sm:$0xff]
      %v554 = vld [vmem:[%s542 + $0x38] sm:$0xff]
      %v555 = vld [vmem:[%s542 + $0x40] sm:$0xff]
      %v556 = vld [vmem:[%s542 + $0x48] sm:$0xff]
      %v557 = vld [vmem:[%s542 + $0x50] sm:$0xff]
      %v558 = vld [vmem:[%s542 + $0x58] sm:$0xff]
      %v559 = vld [vmem:[%s542 + $0x60] sm:$0xff]
      %v560 = vld [vmem:[%s542 + $0x68] sm:$0xff]
      %v561 = vld [vmem:[%s542 + $0x70] sm:$0xff]
      %v562 = vld [vmem:[%s542 + $0x78] sm:$0xff]
      %v563 = vld [vmem:[%s542 + $0x80] sm:$0xff]
      %v564 = vld [vmem:[%s542 + $0x88] sm:$0xff]
      %v565 = vld [vmem:[%s542 + $0x90] sm:$0xff]
      %v566 = vld [vmem:[%s542 + $0x98] sm:$0xff]
      %v567 = vld [vmem:[%s542 + $0xa0] sm:$0xff]
      %v568 = vld [vmem:[%s542 + $0xa8] sm:$0xff]
      %v569 = vld [vmem:[%s542 + $0xb0] sm:$0xff]
      %v570 = vld [vmem:[%s542 + $0xb8] sm:$0xff]
      %v571 = vld [vmem:[%s542 + $0xc0] sm:$0xff]
      %v572 = vld [vmem:[%s542 + $0xc8] sm:$0xff]
      %v573 = vld [vmem:[%s542 + $0xd0] sm:$0xff]
      %v574 = vld [vmem:[%s542 + $0xd8] sm:$0xff]
      %v575 = vld [vmem:[%s542 + $0xe0] sm:$0xff]
      %v576 = vld [vmem:[%s542 + $0xe8] sm:$0xff]
      %v577 = vld [vmem:[%s542 + $0xf0] sm:$0xff]
      %v578 = vld [vmem:[%s542 + $0xf8] sm:$0xff]
      %v579 = vld [vmem:[%s542 + $0x100] sm:$0xff]
      %v580 = vld [vmem:[%s542 + $0x108] sm:$0xff]
      %v581 = vld [vmem:[%s542 + $0x110] sm:$0xff]
      %v582 = vld [vmem:[%s542 + $0x118] sm:$0xff]
      %v583 = vld [vmem:[%s542 + $0x120] sm:$0xff]
      %v584 = vld [vmem:[%s542 + $0x128] sm:$0xff]
      %v585 = vld [vmem:[%s542 + $0x130] sm:$0xff]
      %v586 = vld [vmem:[%s542 + $0x138] sm:$0xff]
      %v587 = vld [vmem:[%s542 + $0x140] sm:$0xff]
      %v588 = vld [vmem:[%s542 + $0x148] sm:$0xff]
      %v589 = vld [vmem:[%s542 + $0x150] sm:$0xff]
      %v590 = vld [vmem:[%s542 + $0x158] sm:$0xff]
      %v591 = vld [vmem:[%s542 + $0x160] sm:$0xff]
      %v592 = vld [vmem:[%s542 + $0x168] sm:$0xff]
      %v593 = vld [vmem:[%s542 + $0x170] sm:$0xff]
      %v594 = vld [vmem:[%s542 + $0x178] sm:$0xff]
      %v595 = vld [vmem:[%s542 + $0x180] sm:$0xff]
      %v596 = vld [vmem:[%s542 + $0x188] sm:$0xff]
      %v597 = vld [vmem:[%s542 + $0x190] sm:$0xff]
      %v598 = vld [vmem:[%s542 + $0x198] sm:$0xff]
      %v599 = vld [vmem:[%s542 + $0x1a0] sm:$0xff]
      %v600 = vld [vmem:[%s542 + $0x1a8] sm:$0xff]
      %v601 = vld [vmem:[%s542 + $0x1b0] sm:$0xff]
      %v602 = vld [vmem:[%s542 + $0x1b8] sm:$0xff]
      %v603 = vld [vmem:[%s542 + $0x1c0] sm:$0xff]
      %v604 = vld [vmem:[%s542 + $0x1c8] sm:$0xff]
      %v605 = vld [vmem:[%s542 + $0x1d0] sm:$0xff]
      %v606 = vld [vmem:[%s542 + $0x1d8] sm:$0xff]
      %v607 = vld [vmem:[%s542 + $0x1e0] sm:$0xff]
      %v608 = vld [vmem:[%s542 + $0x1e8] sm:$0xff]
      %v609 = vld [vmem:[%s542 + $0x1f0] sm:$0xff]
      %v610 = vld [vmem:[%s542 + $0x1f8] sm:$0xff]
      %v611 = vld [vmem:[%s542 + $0x200] sm:$0xff]
      %v612 = vld [vmem:[%s542 + $0x208] sm:$0xff]
      %v613 = vld [vmem:[%s542 + $0x210] sm:$0xff]
      %v614 = vld [vmem:[%s542 + $0x218] sm:$0xff]
      %v615 = vld [vmem:[%s542 + $0x220] sm:$0xff]
      %v616 = vld [vmem:[%s542 + $0x228] sm:$0xff]
      %v617 = vld [vmem:[%s542 + $0x230] sm:$0xff]
      %v618 = vld [vmem:[%s542 + $0x238] sm:$0xff]
      %v619 = vld [vmem:[%s542 + $0x240] sm:$0xff]
      %v620 = vld [vmem:[%s542 + $0x248] sm:$0xff]
      %v621 = vld [vmem:[%s542 + $0x250] sm:$0xff]
      %v622 = vld [vmem:[%s542 + $0x258] sm:$0xff]
      %v623 = vld [vmem:[%s542 + $0x260] sm:$0xff]
      %v624 = vld [vmem:[%s542 + $0x268] sm:$0xff]
      %v625 = vld [vmem:[%s542 + $0x270] sm:$0xff]
      %v626 = vld [vmem:[%s542 + $0x278] sm:$0xff]
      %v627 = vld [vmem:[%s542 + $0x280] sm:$0xff]
      %v628 = vld [vmem:[%s542 + $0x288] sm:$0xff]
      %v629 = vld [vmem:[%s542 + $0x290] sm:$0xff]
      %v630 = vld [vmem:[%s542 + $0x298] sm:$0xff]
      %v631 = vld [vmem:[%s542 + $0x2a0] sm:$0xff]
      %v632 = vld [vmem:[%s542 + $0x2a8] sm:$0xff]
      %v633 = vld [vmem:[%s542 + $0x2b0] sm:$0xff]
      %v634 = vld [vmem:[%s542 + $0x2b8] sm:$0xff]
      %v635 = vld [vmem:[%s542 + $0x2c0] sm:$0xff]
      %v636 = vld [vmem:[%s542 + $0x2c8] sm:$0xff]
      %v637 = vld [vmem:[%s542 + $0x2d0] sm:$0xff]
      %v638 = vld [vmem:[%s542 + $0x2d8] sm:$0xff]
      %v639 = vld [vmem:[%s542 + $0x2e0] sm:$0xff]
      %v640 = vld [vmem:[%s542 + $0x2e8] sm:$0xff]
      %v641 = vld [vmem:[%s542 + $0x2f0] sm:$0xff]
      %v642 = vld [vmem:[%s542 + $0x2f8] sm:$0xff]
      %v643 = vld [vmem:[%s542 + $0x300] sm:$0xff]
      %v644 = vld [vmem:[%s542 + $0x308] sm:$0xff]
      %v645 = vld [vmem:[%s542 + $0x310] sm:$0xff]
      %v646 = vld [vmem:[%s542 + $0x318] sm:$0xff]
      %v647 = vld [vmem:[%s542 + $0x320] sm:$0xff]
      %v648 = vld [vmem:[%s542 + $0x328] sm:$0xff]
      %v649 = vld [vmem:[%s542 + $0x330] sm:$0xff]
      %v650 = vld [vmem:[%s542 + $0x338] sm:$0xff]
      %v651 = vld [vmem:[%s542 + $0x340] sm:$0xff]
      %v652 = vld [vmem:[%s542 + $0x348] sm:$0xff]
      %v653 = vld [vmem:[%s542 + $0x350] sm:$0xff]
      %v654 = vld [vmem:[%s542 + $0x358] sm:$0xff]
      %v655 = vld [vmem:[%s542 + $0x360] sm:$0xff]
      %v656 = vld [vmem:[%s542 + $0x368] sm:$0xff]
      %v657 = vld [vmem:[%s542 + $0x370] sm:$0xff]
      %v658 = vld [vmem:[%s542 + $0x378] sm:$0xff]
      %v659 = vld [vmem:[%s542 + $0x380] sm:$0xff]
      %v660 = vld [vmem:[%s542 + $0x388] sm:$0xff]
      %v661 = vld [vmem:[%s542 + $0x390] sm:$0xff]
      %v662 = vld [vmem:[%s542 + $0x398] sm:$0xff]
      %v663 = vld [vmem:[%s542 + $0x3a0] sm:$0xff]
      %v664 = vld [vmem:[%s542 + $0x3a8] sm:$0xff]
      %v665 = vld [vmem:[%s542 + $0x3b0] sm:$0xff]
      %v666 = vld [vmem:[%s542 + $0x3b8] sm:$0xff]
      %v667 = vld [vmem:[%s542 + $0x3c0] sm:$0xff]
      %v668 = vld [vmem:[%s542 + $0x3c8] sm:$0xff]
      %v669 = vld [vmem:[%s542 + $0x3d0] sm:$0xff]
      %v670 = vld [vmem:[%s542 + $0x3d8] sm:$0xff]
      %v671 = vld [vmem:[%s542 + $0x3e0] sm:$0xff]
      %v672 = vld [vmem:[%s542 + $0x3e8] sm:$0xff]
      %v673 = vld [vmem:[%s542 + $0x3f0] sm:$0xff]
      %v674 = vld [vmem:[%s542 + $0x3f8] sm:$0xff]
      %v675 = vld [vmem:[%s1] sm:$0xff]
      %v676 = vld [vmem:[%s1 + $0x8] sm:$0xff]
      %v677 = vld [vmem:[%s1 + $0x10] sm:$0xff]
      %v678 = vld [vmem:[%s1 + $0x18] sm:$0x7]
      %v679 = vld [vmem:[%s2] sm:$0x1]
      %v681 = vlaneseq
      %v682 = vshrl.u32 %v681, 7
      %v683 = vsub.s32 0, %v682
      %v684 = vrot.slane %v679, %v683
      %vm686 = vcmask 220160
      %v688 = vsel %vm686, %v547, 0
      %v691 = vsel %vm686, %v548, 0
      %v694 = vsel %vm686, %v549, 0
      %v697 = vsel %vm686, %v550, 0
      %v700 = vsel %vm686, %v551, 0
      %v703 = vsel %vm686, %v552, 0
      %v706 = vsel %vm686, %v553, 0
      %v709 = vsel %vm686, %v554, 0
      %v712 = vsel %vm686, %v555, 0
      %v715 = vsel %vm686, %v556, 0
      %v718 = vsel %vm686, %v557, 0
      %v721 = vsel %vm686, %v558, 0
      %v724 = vsel %vm686, %v559, 0
      %v727 = vsel %vm686, %v560, 0
      %v730 = vsel %vm686, %v561, 0
      %v733 = vsel %vm686, %v562, 0
      %v736 = vsel %vm686, %v563, 0
      %v739 = vsel %vm686, %v564, 0
      %v742 = vsel %vm686, %v565, 0
      %v745 = vsel %vm686, %v566, 0
      %v748 = vsel %vm686, %v567, 0
      %v751 = vsel %vm686, %v568, 0
      %v754 = vsel %vm686, %v569, 0
      %v757 = vsel %vm686, %v570, 0
      %v760 = vsel %vm686, %v571, 0
      %v763 = vsel %vm686, %v572, 0
      %v766 = vsel %vm686, %v573, 0
      %v769 = vsel %vm686, %v574, 0
      %v772 = vsel %vm686, %v575, 0
      %v775 = vsel %vm686, %v576, 0
      %v778 = vsel %vm686, %v577, 0
      %v781 = vsel %vm686, %v578, 0
      %v784 = vsel %vm686, %v579, 0
      %v787 = vsel %vm686, %v580, 0
      %v790 = vsel %vm686, %v581, 0
      %v793 = vsel %vm686, %v582, 0
      %v796 = vsel %vm686, %v583, 0
      %v799 = vsel %vm686, %v584, 0
      %v802 = vsel %vm686, %v585, 0
      %v805 = vsel %vm686, %v586, 0
      %v808 = vsel %vm686, %v587, 0
      %v811 = vsel %vm686, %v588, 0
      %v814 = vsel %vm686, %v589, 0
      %v817 = vsel %vm686, %v590, 0
      %v820 = vsel %vm686, %v591, 0
      %v823 = vsel %vm686, %v592, 0
      %v826 = vsel %vm686, %v593, 0
      %v829 = vsel %vm686, %v594, 0
      %v832 = vsel %vm686, %v595, 0
      %v835 = vsel %vm686, %v596, 0
      %v838 = vsel %vm686, %v597, 0
      %v841 = vsel %vm686, %v598, 0
      %v844 = vsel %vm686, %v599, 0
      %v847 = vsel %vm686, %v600, 0
      %v850 = vsel %vm686, %v601, 0
      %v853 = vsel %vm686, %v602, 0
      %v856 = vsel %vm686, %v603, 0
      %v859 = vsel %vm686, %v604, 0
      %v862 = vsel %vm686, %v605, 0
      %v865 = vsel %vm686, %v606, 0
      %v868 = vsel %vm686, %v607, 0
      %v871 = vsel %vm686, %v608, 0
      %v874 = vsel %vm686, %v609, 0
      %v877 = vsel %vm686, %v610, 0
      %v880 = vsel %vm686, %v611, 0
      %v883 = vsel %vm686, %v612, 0
      %v886 = vsel %vm686, %v613, 0
      %v889 = vsel %vm686, %v614, 0
      %v892 = vsel %vm686, %v615, 0
      %v895 = vsel %vm686, %v616, 0
      %v898 = vsel %vm686, %v617, 0
      %v901 = vsel %vm686, %v618, 0
      %v904 = vsel %vm686, %v619, 0
      %v907 = vsel %vm686, %v620, 0
      %v910 = vsel %vm686, %v621, 0
      %v913 = vsel %vm686, %v622, 0
      %v916 = vsel %vm686, %v623, 0
      %v919 = vsel %vm686, %v624, 0
      %v922 = vsel %vm686, %v625, 0
      %v925 = vsel %vm686, %v626, 0
      %v928 = vsel %vm686, %v627, 0
      %v931 = vsel %vm686, %v628, 0
      %v934 = vsel %vm686, %v629, 0
      %v937 = vsel %vm686, %v630, 0
      %v940 = vsel %vm686, %v631, 0
      %v943 = vsel %vm686, %v632, 0
      %v946 = vsel %vm686, %v633, 0
      %v949 = vsel %vm686, %v634, 0
      %v952 = vsel %vm686, %v635, 0
      %v955 = vsel %vm686, %v636, 0
      %v958 = vsel %vm686, %v637, 0
      %v961 = vsel %vm686, %v638, 0
      %v964 = vsel %vm686, %v639, 0
      %v967 = vsel %vm686, %v640, 0
      %v970 = vsel %vm686, %v641, 0
      %v973 = vsel %vm686, %v642, 0
      %v976 = vsel %vm686, %v643, 0
      %v979 = vsel %vm686, %v644, 0
      %v982 = vsel %vm686, %v645, 0
      %v985 = vsel %vm686, %v646, 0
      %v988 = vsel %vm686, %v647, 0
      %v991 = vsel %vm686, %v648, 0
      %v994 = vsel %vm686, %v649, 0
      %v997 = vsel %vm686, %v650, 0
      %v1000 = vsel %vm686, %v651, 0
      %v1003 = vsel %vm686, %v652, 0
      %v1006 = vsel %vm686, %v653, 0
      %v1009 = vsel %vm686, %v654, 0
      %v1012 = vsel %vm686, %v655, 0
      %v1015 = vsel %vm686, %v656, 0
      %v1018 = vsel %vm686, %v657, 0
      %v1021 = vsel %vm686, %v658, 0
      %v1024 = vsel %vm686, %v659, 0
      %v1027 = vsel %vm686, %v660, 0
      %v1030 = vsel %vm686, %v661, 0
      %v1033 = vsel %vm686, %v662, 0
      %v1036 = vsel %vm686, %v663, 0
      %v1039 = vsel %vm686, %v664, 0
      %v1042 = vsel %vm686, %v665, 0
      %v1045 = vsel %vm686, %v666, 0
      %v1048 = vsel %vm686, %v667, 0
      %v1051 = vsel %vm686, %v668, 0
      %v1054 = vsel %vm686, %v669, 0
      %v1057 = vsel %vm686, %v670, 0
      %v1060 = vsel %vm686, %v671, 0
      %v1063 = vsel %vm686, %v672, 0
      %v1066 = vsel %vm686, %v673, 0
      %v1069 = vsel %vm686, %v674, 0
      %vm1071 = vcmask 1042432
      %v1073 = vsel %vm1071, %v678, 0
      %1075 = vmatprep.subr.mxu0 0.0
      %1076 = vmatpush1.msra.mxu0 %v675
      %1077 = vmatprep.subr.mxu0 0.0
      %1078 = vmatpush1.msra.mxu0 %v676
      %1079 = vmatprep.subr.mxu0 0.0
      %1080 = vmatpush1.msra.mxu0 %v677
      %1081 = vmatprep.subr.mxu0 0.0
      %1082 = vmatpush1.msra.mxu0 %v1073
      %1083 = vmatprep.subr.mxu0 0.0
      %1084 = vmatpush1.msra.mxu0 0.0
      %1085 = vmatprep.subr.mxu0 0.0
      %1086 = vmatpush1.msra.mxu0 0.0
      %1087 = vmatprep.subr.mxu0 0.0
      %1088 = vmatpush1.msra.mxu0 0.0
      %1089 = vmatprep.subr.mxu0 0.0
      %1090 = vmatpush1.msra.mxu0 0.0
      %1091 = vmatprep.subr.mxu0 0.0
      %1092 = vmatpush1.msra.mxu0 0.0
      %1093 = vmatprep.subr.mxu0 0.0
      %1094 = vmatpush1.msra.mxu0 0.0
      %1095 = vmatprep.subr.mxu0 0.0
      %1096 = vmatpush1.msra.mxu0 0.0
      %1097 = vmatprep.subr.mxu0 0.0
      %1098 = vmatpush1.msra.mxu0 0.0
      %1099 = vmatprep.subr.mxu0 0.0
      %1100 = vmatpush1.msra.mxu0 0.0
      %1101 = vmatprep.subr.mxu0 0.0
      %1102 = vmatpush1.msra.mxu0 0.0
      %1103 = vmatprep.subr.mxu0 0.0
      %1104 = vmatpush1.msra.mxu0 0.0
      %1105 = vmatprep.subr.mxu0 0.0
      %1106 = vmatpush1.msra.mxu0 0.0
      %1107 = vmatprep.subr.mxu0 0.0
      %1108 = vmatpush1.msra.mxu0 0.0
      %1109 = vmatprep.subr.mxu0 0.0
      %1110 = vmatpush1.msra.mxu0 0.0
      %1111 = vmatprep.subr.mxu0 0.0
      %1112 = vmatpush1.msra.mxu0 0.0
      %1113 = vmatprep.subr.mxu0 0.0
      %1114 = vmatpush1.msra.mxu0 0.0
      %1115 = vmatprep.subr.mxu0 0.0
      %1116 = vmatpush1.msra.mxu0 0.0
      %1117 = vmatprep.subr.mxu0 0.0
      %1118 = vmatpush1.msra.mxu0 0.0
      %1119 = vmatprep.subr.mxu0 0.0
      %1120 = vmatpush1.msra.mxu0 0.0
      %1121 = vmatprep.subr.mxu0 0.0
      %1122 = vmatpush1.msra.mxu0 0.0
      %1123 = vmatprep.subr.mxu0 0.0
      %1124 = vmatpush1.msra.mxu0 0.0
      %1125 = vmatprep.subr.mxu0 0.0
      %1126 = vmatpush1.msra.mxu0 0.0
      %1127 = vmatprep.subr.mxu0 0.0
      %1128 = vmatpush1.msra.mxu0 0.0
      %1129 = vmatprep.subr.mxu0 0.0
      %1130 = vmatpush1.msra.mxu0 0.0
      %1131 = vmatprep.subr.mxu0 0.0
      %1132 = vmatpush1.msra.mxu0 0.0
      %1133 = vmatprep.subr.mxu0 0.0
      %1134 = vmatpush1.msra.mxu0 0.0
      %1135 = vmatprep.subr.mxu0 0.0
      %1136 = vmatpush1.msra.mxu0 0.0
      %1137 = vmatprep.subr.mxu0 0.0
      %1138 = vmatpush1.msra.mxu0 0.0
      %1139 = vmatprep.mubr.f32.mxu0 0.0
      %1140 = vmatmul.mubr.f32.gmra.mrb[0].mxu0 %v688
      %v1141 = vpop.f32.mrb[0].mxu0
      %v1142 = vadd.f32 %v684, %v1141
      %v1143 = vpop.f32.mrb[0].mxu0
      %1144 = vmatprep.mubr.f32.mxu0 0.0
      %1145 = vmatmul.mubr.f32.gmra.mrb[0].mxu0 %v691
      %v1146 = vpop.f32.mrb[0].mxu0
      %v1147 = vadd.f32 %v684, %v1146
      %v1148 = vpop.f32.mrb[0].mxu0
      %1149 = vmatprep.mubr.f32.mxu0 0.0
      %1150 = vmatmul.mubr.f32.gmra.mrb[0].mxu0 %v694
      %v1151 = vpop.f32.mrb[0].mxu0
      %v1152 = vadd.f32 %v684, %v1151
      %v1153 = vpop.f32.mrb[0].mxu0
      %1154 = vmatprep.mubr.f32.mxu0 0.0
      %1155 = vmatmul.mubr.f32.gmra.mrb[0].mxu0 %v697
      %v1156 = vpop.f32.mrb[0].mxu0
      %v1157 = vadd.f32 %v684, %v1156
      %v1158 = vpop.f32.mrb[0].mxu0
      %1159 = vmatprep.mubr.f32.mxu0 0.0
      %1160 = vmatmul.mubr.f32.gmra.mrb[0].mxu0 %v700
      %v1161 = vpop.f32.mrb[0].mxu0
      %v1162 = vadd.f32 %v684, %v1161
      %v1163 = vpop.f32.mrb[0].mxu0
      %1164 = vmatprep.mubr.f32.mxu0 0.0
      %1165 = vmatmul.mubr.f32.gmra.mrb[0].mxu0 %v703
      %v1166 = vpop.f32.mrb[0].mxu0
      %v1167 = vadd.f32 %v684, %v1166
      %v1168 = vpop.f32.mrb[0].mxu0
      %1169 = vmatprep.mubr.f32.mxu0 0.0
      %1170 = vmatmul.mubr.f32.gmra.mrb[0].mxu0 %v706
      %v1171 = vpop.f32.mrb[0].mxu0
      %v1172 = vadd.f32 %v684, %v1171
      %v1173 = vpop.f32.mrb[0].mxu0
      %1174 = vmatprep.mubr.f32.mxu0 0.0
      %1175 = vmatmul.mubr.f32.gmra.mrb[0].mxu0 %v709
      %v1176 = vpop.f32.mrb[0].mxu0
      %v1177 = vadd.f32 %v684, %v1176
      %v1178 = vpop.f32.mrb[0].mxu0
      %1179 = vmatprep.mubr.f32.mxu0 0.0
      %1180 = vmatmul.mubr.f32.gmra.mrb[0].mxu0 %v712
      %v1181 = vpop.f32.mrb[0].mxu0
      %v1182 = vadd.f32 %v684, %v1181
      %v1183 = vpop.f32.mrb[0].mxu0
      %1184 = vmatprep.mubr.f32.mxu0 0.0
      %1185 = vmatmul.mubr.f32.gmra.mrb[0].mxu0 %v715
      %v1186 = vpop.f32.mrb[0].mxu0
      %v1187 = vadd.f32 %v684, %v1186
      %v1188 = vpop.f32.mrb[0].mxu0
      %1189 = vmatprep.mubr.f32.mxu0 0.0
      %1190 = vmatmul.mubr.f32.gmra.mrb[0].mxu0 %v718
      %v1191 = vpop.f32.mrb[0].mxu0
      %v1192 = vadd.f32 %v684, %v1191
      %v1193 = vpop.f32.mrb[0].mxu0
      %1194 = vmatprep.mubr.f32.mxu0 0.0
      %1195 = vmatmul.mubr.f32.gmra.mrb[0].mxu0 %v721
      %v1196 = vpop.f32.mrb[0].mxu0
      %v1197 = vadd.f32 %v684, %v1196
      %v1198 = vpop.f32.mrb[0].mxu0
      %1199 = vmatprep.mubr.f32.mxu0 0.0
      %1200 = vmatmul.mubr.f32.gmra.mrb[0].mxu0 %v724
      %v1201 = vpop.f32.mrb[0].mxu0
      %v1202 = vadd.f32 %v684, %v1201
      %v1203 = vpop.f32.mrb[0].mxu0
      %1204 = vmatprep.mubr.f32.mxu0 0.0
      %1205 = vmatmul.mubr.f32.gmra.mrb[0].mxu0 %v727
      %v1206 = vpop.f32.mrb[0].mxu0
      %v1207 = vadd.f32 %v684, %v1206
      %v1208 = vpop.f32.mrb[0].mxu0
      %1209 = vmatprep.mubr.f32.mxu0 0.0
      %1210 = vmatmul.mubr.f32.gmra.mrb[0].mxu0 %v730
      %v1211 = vpop.f32.mrb[0].mxu0
      %v1212 = vadd.f32 %v684, %v1211
      %v1213 = vpop.f32.mrb[0].mxu0
      %1214 = vmatprep.mubr.f32.mxu0 0.0
      %1215 = vmatmul.mubr.f32.gmra.mrb[0].mxu0 %v733
      %v1216 = vpop.f32.mrb[0].mxu0
      %v1217 = vadd.f32 %v684, %v1216
      %v1218 = vpop.f32.mrb[0].mxu0
      %1219 = vmatprep.mubr.f32.mxu0 0.0
      %1220 = vmatmul.mubr.f32.gmra.mrb[0].mxu0 %v736
      %v1221 = vpop.f32.mrb[0].mxu0
      %v1222 = vadd.f32 %v684, %v1221
      %v1223 = vpop.f32.mrb[0].mxu0
      %1224 = vmatprep.mubr.f32.mxu0 0.0
      %1225 = vmatmul.mubr.f32.gmra.mrb[0].mxu0 %v739
      %v1226 = vpop.f32.mrb[0].mxu0
      %v1227 = vadd.f32 %v684, %v1226
      %v1228 = vpop.f32.mrb[0].mxu0
      %1229 = vmatprep.mubr.f32.mxu0 0.0
      %1230 = vmatmul.mubr.f32.gmra.mrb[0].mxu0 %v742
      %v1231 = vpop.f32.mrb[0].mxu0
      %v1232 = vadd.f32 %v684, %v1231
      %v1233 = vpop.f32.mrb[0].mxu0
      %1234 = vmatprep.mubr.f32.mxu0 0.0
      %1235 = vmatmul.mubr.f32.gmra.mrb[0].mxu0 %v745
      %v1236 = vpop.f32.mrb[0].mxu0
      %v1237 = vadd.f32 %v684, %v1236
      %v1238 = vpop.f32.mrb[0].mxu0
      %1239 = vmatprep.mubr.f32.mxu0 0.0
      %1240 = vmatmul.mubr.f32.gmra.mrb[0].mxu0 %v748
      %v1241 = vpop.f32.mrb[0].mxu0
      %v1242 = vadd.f32 %v684, %v1241
      %v1243 = vpop.f32.mrb[0].mxu0
      %1244 = vmatprep.mubr.f32.mxu0 0.0
      %1245 = vmatmul.mubr.f32.gmra.mrb[0].mxu0 %v751
      %v1246 = vpop.f32.mrb[0].mxu0
      %v1247 = vadd.f32 %v684, %v1246
      %v1248 = vpop.f32.mrb[0].mxu0
      %1249 = vmatprep.mubr.f32.mxu0 0.0
      %1250 = vmatmul.mubr.f32.gmra.mrb[0].mxu0 %v754
      %v1251 = vpop.f32.mrb[0].mxu0
      %v1252 = vadd.f32 %v684, %v1251
      %v1253 = vpop.f32.mrb[0].mxu0
      %1254 = vmatprep.mubr.f32.mxu0 0.0
      %1255 = vmatmul.mubr.f32.gmra.mrb[0].mxu0 %v757
      %v1256 = vpop.f32.mrb[0].mxu0
      %v1257 = vadd.f32 %v684, %v1256
      %v1258 = vpop.f32.mrb[0].mxu0
      %1259 = vmatprep.mubr.f32.mxu0 0.0
      %1260 = vmatmul.mubr.f32.gmra.mrb[0].mxu0 %v760
      %v1261 = vpop.f32.mrb[0].mxu0
      %v1262 = vadd.f32 %v684, %v1261
      %v1263 = vpop.f32.mrb[0].mxu0
      %1264 = vmatprep.mubr.f32.mxu0 0.0
      %1265 = vmatmul.mubr.f32.gmra.mrb[0].mxu0 %v763
      %v1266 = vpop.f32.mrb[0].mxu0
      %v1267 = vadd.f32 %v684, %v1266
      %v1268 = vpop.f32.mrb[0].mxu0
      %1269 = vmatprep.mubr.f32.mxu0 0.0
      %1270 = vmatmul.mubr.f32.gmra.mrb[0].mxu0 %v766
      %v1271 = vpop.f32.mrb[0].mxu0
      %v1272 = vadd.f32 %v684, %v1271
      %v1273 = vpop.f32.mrb[0].mxu0
      %1274 = vmatprep.mubr.f32.mxu0 0.0
      %1275 = vmatmul.mubr.f32.gmra.mrb[0].mxu0 %v769
      %v1276 = vpop.f32.mrb[0].mxu0
      %v1277 = vadd.f32 %v684, %v1276
      %v1278 = vpop.f32.mrb[0].mxu0
      %1279 = vmatprep.mubr.f32.mxu0 0.0
      %1280 = vmatmul.mubr.f32.gmra.mrb[0].mxu0 %v772
      %v1281 = vpop.f32.mrb[0].mxu0
      %v1282 = vadd.f32 %v684, %v1281
      %v1283 = vpop.f32.mrb[0].mxu0
      %1284 = vmatprep.mubr.f32.mxu0 0.0
      %1285 = vmatmul.mubr.f32.gmra.mrb[0].mxu0 %v775
      %v1286 = vpop.f32.mrb[0].mxu0
      %v1287 = vadd.f32 %v684, %v1286
      %v1288 = vpop.f32.mrb[0].mxu0
      %1289 = vmatprep.mubr.f32.mxu0 0.0
      %1290 = vmatmul.mubr.f32.gmra.mrb[0].mxu0 %v778
      %v1291 = vpop.f32.mrb[0].mxu0
      %v1292 = vadd.f32 %v684, %v1291
      %v1293 = vpop.f32.mrb[0].mxu0
      %1294 = vmatprep.mubr.f32.mxu0 0.0
      %1295 = vmatmul.mubr.f32.gmra.mrb[0].mxu0 %v781
      %v1296 = vpop.f32.mrb[0].mxu0
      %v1297 = vadd.f32 %v684, %v1296
      %v1298 = vpop.f32.mrb[0].mxu0
      %1299 = vmatprep.mubr.f32.mxu0 0.0
      %1300 = vmatmul.mubr.f32.gmra.mrb[0].mxu0 %v784
      %v1301 = vpop.f32.mrb[0].mxu0
      %v1302 = vadd.f32 %v684, %v1301
      %v1303 = vpop.f32.mrb[0].mxu0
      %1304 = vmatprep.mubr.f32.mxu0 0.0
      %1305 = vmatmul.mubr.f32.gmra.mrb[0].mxu0 %v787
      %v1306 = vpop.f32.mrb[0].mxu0
      %v1307 = vadd.f32 %v684, %v1306
      %v1308 = vpop.f32.mrb[0].mxu0
      %1309 = vmatprep.mubr.f32.mxu0 0.0
      %1310 = vmatmul.mubr.f32.gmra.mrb[0].mxu0 %v790
      %v1311 = vpop.f32.mrb[0].mxu0
      %v1312 = vadd.f32 %v684, %v1311
      %v1313 = vpop.f32.mrb[0].mxu0
      %1314 = vmatprep.mubr.f32.mxu0 0.0
      %1315 = vmatmul.mubr.f32.gmra.mrb[0].mxu0 %v793
      %v1316 = vpop.f32.mrb[0].mxu0
      %v1317 = vadd.f32 %v684, %v1316
      %v1318 = vpop.f32.mrb[0].mxu0
      %1319 = vmatprep.mubr.f32.mxu0 0.0
      %1320 = vmatmul.mubr.f32.gmra.mrb[0].mxu0 %v796
      %v1321 = vpop.f32.mrb[0].mxu0
      %v1322 = vadd.f32 %v684, %v1321
      %v1323 = vpop.f32.mrb[0].mxu0
      %1324 = vmatprep.mubr.f32.mxu0 0.0
      %1325 = vmatmul.mubr.f32.gmra.mrb[0].mxu0 %v799
      %v1326 = vpop.f32.mrb[0].mxu0
      %v1327 = vadd.f32 %v684, %v1326
      %v1328 = vpop.f32.mrb[0].mxu0
      %1329 = vmatprep.mubr.f32.mxu0 0.0
      %1330 = vmatmul.mubr.f32.gmra.mrb[0].mxu0 %v802
      %v1331 = vpop.f32.mrb[0].mxu0
      %v1332 = vadd.f32 %v684, %v1331
      %v1333 = vpop.f32.mrb[0].mxu0
      %1334 = vmatprep.mubr.f32.mxu0 0.0
      %1335 = vmatmul.mubr.f32.gmra.mrb[0].mxu0 %v805
      %v1336 = vpop.f32.mrb[0].mxu0
      %v1337 = vadd.f32 %v684, %v1336
      %v1338 = vpop.f32.mrb[0].mxu0
      %1339 = vmatprep.mubr.f32.mxu0 0.0
      %1340 = vmatmul.mubr.f32.gmra.mrb[0].mxu0 %v808
      %v1341 = vpop.f32.mrb[0].mxu0
      %v1342 = vadd.f32 %v684, %v1341
      %v1343 = vpop.f32.mrb[0].mxu0
      %1344 = vmatprep.mubr.f32.mxu0 0.0
      %1345 = vmatmul.mubr.f32.gmra.mrb[0].mxu0 %v811
      %v1346 = vpop.f32.mrb[0].mxu0
      %v1347 = vadd.f32 %v684, %v1346
      %v1348 = vpop.f32.mrb[0].mxu0
      %1349 = vmatprep.mubr.f32.mxu0 0.0
      %1350 = vmatmul.mubr.f32.gmra.mrb[0].mxu0 %v814
      %v1351 = vpop.f32.mrb[0].mxu0
      %v1352 = vadd.f32 %v684, %v1351
      %v1353 = vpop.f32.mrb[0].mxu0
      %1354 = vmatprep.mubr.f32.mxu0 0.0
      %1355 = vmatmul.mubr.f32.gmra.mrb[0].mxu0 %v817
      %v1356 = vpop.f32.mrb[0].mxu0
      %v1357 = vadd.f32 %v684, %v1356
      %v1358 = vpop.f32.mrb[0].mxu0
      %1359 = vmatprep.mubr.f32.mxu0 0.0
      %1360 = vmatmul.mubr.f32.gmra.mrb[0].mxu0 %v820
      %v1361 = vpop.f32.mrb[0].mxu0
      %v1362 = vadd.f32 %v684, %v1361
      %v1363 = vpop.f32.mrb[0].mxu0
      %1364 = vmatprep.mubr.f32.mxu0 0.0
      %1365 = vmatmul.mubr.f32.gmra.mrb[0].mxu0 %v823
      %v1366 = vpop.f32.mrb[0].mxu0
      %v1367 = vadd.f32 %v684, %v1366
      %v1368 = vpop.f32.mrb[0].mxu0
      %1369 = vmatprep.mubr.f32.mxu0 0.0
      %1370 = vmatmul.mubr.f32.gmra.mrb[0].mxu0 %v826
      %v1371 = vpop.f32.mrb[0].mxu0
      %v1372 = vadd.f32 %v684, %v1371
      %v1373 = vpop.f32.mrb[0].mxu0
      %1374 = vmatprep.mubr.f32.mxu0 0.0
      %1375 = vmatmul.mubr.f32.gmra.mrb[0].mxu0 %v829
      %v1376 = vpop.f32.mrb[0].mxu0
      %v1377 = vadd.f32 %v684, %v1376
      %v1378 = vpop.f32.mrb[0].mxu0
      %1379 = vmatprep.mubr.f32.mxu0 0.0
      %1380 = vmatmul.mubr.f32.gmra.mrb[0].mxu0 %v832
      %v1381 = vpop.f32.mrb[0].mxu0
      %v1382 = vadd.f32 %v684, %v1381
      %v1383 = vpop.f32.mrb[0].mxu0
      %1384 = vmatprep.mubr.f32.mxu0 0.0
      %1385 = vmatmul.mubr.f32.gmra.mrb[0].mxu0 %v835
      %v1386 = vpop.f32.mrb[0].mxu0
      %v1387 = vadd.f32 %v684, %v1386
      %v1388 = vpop.f32.mrb[0].mxu0
      %1389 = vmatprep.mubr.f32.mxu0 0.0
      %1390 = vmatmul.mubr.f32.gmra.mrb[0].mxu0 %v838
      %v1391 = vpop.f32.mrb[0].mxu0
      %v1392 = vadd.f32 %v684, %v1391
      %v1393 = vpop.f32.mrb[0].mxu0
      %1394 = vmatprep.mubr.f32.mxu0 0.0
      %1395 = vmatmul.mubr.f32.gmra.mrb[0].mxu0 %v841
      %v1396 = vpop.f32.mrb[0].mxu0
      %v1397 = vadd.f32 %v684, %v1396
      %v1398 = vpop.f32.mrb[0].mxu0
      %1399 = vmatprep.mubr.f32.mxu0 0.0
      %1400 = vmatmul.mubr.f32.gmra.mrb[0].mxu0 %v844
      %v1401 = vpop.f32.mrb[0].mxu0
      %v1402 = vadd.f32 %v684, %v1401
      %v1403 = vpop.f32.mrb[0].mxu0
      %1404 = vmatprep.mubr.f32.mxu0 0.0
      %1405 = vmatmul.mubr.f32.gmra.mrb[0].mxu0 %v847
      %v1406 = vpop.f32.mrb[0].mxu0
      %v1407 = vadd.f32 %v684, %v1406
      %v1408 = vpop.f32.mrb[0].mxu0
      %1409 = vmatprep.mubr.f32.mxu0 0.0
      %1410 = vmatmul.mubr.f32.gmra.mrb[0].mxu0 %v850
      %v1411 = vpop.f32.mrb[0].mxu0
      %v1412 = vadd.f32 %v684, %v1411
      %v1413 = vpop.f32.mrb[0].mxu0
      %1414 = vmatprep.mubr.f32.mxu0 0.0
      %1415 = vmatmul.mubr.f32.gmra.mrb[0].mxu0 %v853
      %v1416 = vpop.f32.mrb[0].mxu0
      %v1417 = vadd.f32 %v684, %v1416
      %v1418 = vpop.f32.mrb[0].mxu0
      %1419 = vmatprep.mubr.f32.mxu0 0.0
      %1420 = vmatmul.mubr.f32.gmra.mrb[0].mxu0 %v856
      %v1421 = vpop.f32.mrb[0].mxu0
      %v1422 = vadd.f32 %v684, %v1421
      %v1423 = vpop.f32.mrb[0].mxu0
      %1424 = vmatprep.mubr.f32.mxu0 0.0
      %1425 = vmatmul.mubr.f32.gmra.mrb[0].mxu0 %v859
      %v1426 = vpop.f32.mrb[0].mxu0
      %v1427 = vadd.f32 %v684, %v1426
      %v1428 = vpop.f32.mrb[0].mxu0
      %1429 = vmatprep.mubr.f32.mxu0 0.0
      %1430 = vmatmul.mubr.f32.gmra.mrb[0].mxu0 %v862
      %v1431 = vpop.f32.mrb[0].mxu0
      %v1432 = vadd.f32 %v684, %v1431
      %v1433 = vpop.f32.mrb[0].mxu0
      %1434 = vmatprep.mubr.f32.mxu0 0.0
      %1435 = vmatmul.mubr.f32.gmra.mrb[0].mxu0 %v865
      %v1436 = vpop.f32.mrb[0].mxu0
      %v1437 = vadd.f32 %v684, %v1436
      %v1438 = vpop.f32.mrb[0].mxu0
      %1439 = vmatprep.mubr.f32.mxu0 0.0
      %1440 = vmatmul.mubr.f32.gmra.mrb[0].mxu0 %v868
      %v1441 = vpop.f32.mrb[0].mxu0
      %v1442 = vadd.f32 %v684, %v1441
      %v1443 = vpop.f32.mrb[0].mxu0
      %1444 = vmatprep.mubr.f32.mxu0 0.0
      %1445 = vmatmul.mubr.f32.gmra.mrb[0].mxu0 %v871
      %v1446 = vpop.f32.mrb[0].mxu0
      %v1447 = vadd.f32 %v684, %v1446
      %v1448 = vpop.f32.mrb[0].mxu0
      %1449 = vmatprep.mubr.f32.mxu0 0.0
      %1450 = vmatmul.mubr.f32.gmra.mrb[0].mxu0 %v874
      %v1451 = vpop.f32.mrb[0].mxu0
      %v1452 = vadd.f32 %v684, %v1451
      %v1453 = vpop.f32.mrb[0].mxu0
      %1454 = vmatprep.mubr.f32.mxu0 0.0
      %1455 = vmatmul.mubr.f32.gmra.mrb[0].mxu0 %v877
      %v1456 = vpop.f32.mrb[0].mxu0
      %v1457 = vadd.f32 %v684, %v1456
      %v1458 = vpop.f32.mrb[0].mxu0
      %1459 = vmatprep.mubr.f32.mxu0 0.0
      %1460 = vmatmul.mubr.f32.gmra.mrb[0].mxu0 %v880
      %v1461 = vpop.f32.mrb[0].mxu0
      %v1462 = vadd.f32 %v684, %v1461
      %v1463 = vpop.f32.mrb[0].mxu0
      %1464 = vmatprep.mubr.f32.mxu0 0.0
      %1465 = vmatmul.mubr.f32.gmra.mrb[0].mxu0 %v883
      %v1466 = vpop.f32.mrb[0].mxu0
      %v1467 = vadd.f32 %v684, %v1466
      %v1468 = vpop.f32.mrb[0].mxu0
      %1469 = vmatprep.mubr.f32.mxu0 0.0
      %1470 = vmatmul.mubr.f32.gmra.mrb[0].mxu0 %v886
      %v1471 = vpop.f32.mrb[0].mxu0
      %v1472 = vadd.f32 %v684, %v1471
      %v1473 = vpop.f32.mrb[0].mxu0
      %1474 = vmatprep.mubr.f32.mxu0 0.0
      %1475 = vmatmul.mubr.f32.gmra.mrb[0].mxu0 %v889
      %v1476 = vpop.f32.mrb[0].mxu0
      %v1477 = vadd.f32 %v684, %v1476
      %v1478 = vpop.f32.mrb[0].mxu0
      %1479 = vmatprep.mubr.f32.mxu0 0.0
      %1480 = vmatmul.mubr.f32.gmra.mrb[0].mxu0 %v892
      %v1481 = vpop.f32.mrb[0].mxu0
      %v1482 = vadd.f32 %v684, %v1481
      %v1483 = vpop.f32.mrb[0].mxu0
      %1484 = vmatprep.mubr.f32.mxu0 0.0
      %1485 = vmatmul.mubr.f32.gmra.mrb[0].mxu0 %v895
      %v1486 = vpop.f32.mrb[0].mxu0
      %v1487 = vadd.f32 %v684, %v1486
      %v1488 = vpop.f32.mrb[0].mxu0
      %1489 = vmatprep.mubr.f32.mxu0 0.0
      %1490 = vmatmul.mubr.f32.gmra.mrb[0].mxu0 %v898
      %v1491 = vpop.f32.mrb[0].mxu0
      %v1492 = vadd.f32 %v684, %v1491
      %v1493 = vpop.f32.mrb[0].mxu0
      %1494 = vmatprep.mubr.f32.mxu0 0.0
      %1495 = vmatmul.mubr.f32.gmra.mrb[0].mxu0 %v901
      %v1496 = vpop.f32.mrb[0].mxu0
      %v1497 = vadd.f32 %v684, %v1496
      %v1498 = vpop.f32.mrb[0].mxu0
      %1499 = vmatprep.mubr.f32.mxu0 0.0
      %1500 = vmatmul.mubr.f32.gmra.mrb[0].mxu0 %v904
      %v1501 = vpop.f32.mrb[0].mxu0
      %v1502 = vadd.f32 %v684, %v1501
      %v1503 = vpop.f32.mrb[0].mxu0
      %1504 = vmatprep.mubr.f32.mxu0 0.0
      %1505 = vmatmul.mubr.f32.gmra.mrb[0].mxu0 %v907
      %v1506 = vpop.f32.mrb[0].mxu0
      %v1507 = vadd.f32 %v684, %v1506
      %v1508 = vpop.f32.mrb[0].mxu0
      %1509 = vmatprep.mubr.f32.mxu0 0.0
      %1510 = vmatmul.mubr.f32.gmra.mrb[0].mxu0 %v910
      %v1511 = vpop.f32.mrb[0].mxu0
      %v1512 = vadd.f32 %v684, %v1511
      %v1513 = vpop.f32.mrb[0].mxu0
      %1514 = vmatprep.mubr.f32.mxu0 0.0
      %1515 = vmatmul.mubr.f32.gmra.mrb[0].mxu0 %v913
      %v1516 = vpop.f32.mrb[0].mxu0
      %v1517 = vadd.f32 %v684, %v1516
      %v1518 = vpop.f32.mrb[0].mxu0
      %1519 = vmatprep.mubr.f32.mxu0 0.0
      %1520 = vmatmul.mubr.f32.gmra.mrb[0].mxu0 %v916
      %v1521 = vpop.f32.mrb[0].mxu0
      %v1522 = vadd.f32 %v684, %v1521
      %v1523 = vpop.f32.mrb[0].mxu0
      %1524 = vmatprep.mubr.f32.mxu0 0.0
      %1525 = vmatmul.mubr.f32.gmra.mrb[0].mxu0 %v919
      %v1526 = vpop.f32.mrb[0].mxu0
      %v1527 = vadd.f32 %v684, %v1526
      %v1528 = vpop.f32.mrb[0].mxu0
      %1529 = vmatprep.mubr.f32.mxu0 0.0
      %1530 = vmatmul.mubr.f32.gmra.mrb[0].mxu0 %v922
      %v1531 = vpop.f32.mrb[0].mxu0
      %v1532 = vadd.f32 %v684, %v1531
      %v1533 = vpop.f32.mrb[0].mxu0
      %1534 = vmatprep.mubr.f32.mxu0 0.0
      %1535 = vmatmul.mubr.f32.gmra.mrb[0].mxu0 %v925
      %v1536 = vpop.f32.mrb[0].mxu0
      %v1537 = vadd.f32 %v684, %v1536
      %v1538 = vpop.f32.mrb[0].mxu0
      %1539 = vmatprep.mubr.f32.mxu0 0.0
      %1540 = vmatmul.mubr.f32.gmra.mrb[0].mxu0 %v928
      %v1541 = vpop.f32.mrb[0].mxu0
      %v1542 = vadd.f32 %v684, %v1541
      %v1543 = vpop.f32.mrb[0].mxu0
      %1544 = vmatprep.mubr.f32.mxu0 0.0
      %1545 = vmatmul.mubr.f32.gmra.mrb[0].mxu0 %v931
      %v1546 = vpop.f32.mrb[0].mxu0
      %v1547 = vadd.f32 %v684, %v1546
      %v1548 = vpop.f32.mrb[0].mxu0
      %1549 = vmatprep.mubr.f32.mxu0 0.0
      %1550 = vmatmul.mubr.f32.gmra.mrb[0].mxu0 %v934
      %v1551 = vpop.f32.mrb[0].mxu0
      %v1552 = vadd.f32 %v684, %v1551
      %v1553 = vpop.f32.mrb[0].mxu0
      %1554 = vmatprep.mubr.f32.mxu0 0.0
      %1555 = vmatmul.mubr.f32.gmra.mrb[0].mxu0 %v937
      %v1556 = vpop.f32.mrb[0].mxu0
      %v1557 = vadd.f32 %v684, %v1556
      %v1558 = vpop.f32.mrb[0].mxu0
      %1559 = vmatprep.mubr.f32.mxu0 0.0
      %1560 = vmatmul.mubr.f32.gmra.mrb[0].mxu0 %v940
      %v1561 = vpop.f32.mrb[0].mxu0
      %v1562 = vadd.f32 %v684, %v1561
      %v1563 = vpop.f32.mrb[0].mxu0
      %1564 = vmatprep.mubr.f32.mxu0 0.0
      %1565 = vmatmul.mubr.f32.gmra.mrb[0].mxu0 %v943
      %v1566 = vpop.f32.mrb[0].mxu0
      %v1567 = vadd.f32 %v684, %v1566
      %v1568 = vpop.f32.mrb[0].mxu0
      %1569 = vmatprep.mubr.f32.mxu0 0.0
      %1570 = vmatmul.mubr.f32.gmra.mrb[0].mxu0 %v946
      %v1571 = vpop.f32.mrb[0].mxu0
      %v1572 = vadd.f32 %v684, %v1571
      %v1573 = vpop.f32.mrb[0].mxu0
      %1574 = vmatprep.mubr.f32.mxu0 0.0
      %1575 = vmatmul.mubr.f32.gmra.mrb[0].mxu0 %v949
      %v1576 = vpop.f32.mrb[0].mxu0
      %v1577 = vadd.f32 %v684, %v1576
      %v1578 = vpop.f32.mrb[0].mxu0
      %1579 = vmatprep.mubr.f32.mxu0 0.0
      %1580 = vmatmul.mubr.f32.gmra.mrb[0].mxu0 %v952
      %v1581 = vpop.f32.mrb[0].mxu0
      %v1582 = vadd.f32 %v684, %v1581
      %v1583 = vpop.f32.mrb[0].mxu0
      %1584 = vmatprep.mubr.f32.mxu0 0.0
      %1585 = vmatmul.mubr.f32.gmra.mrb[0].mxu0 %v955
      %v1586 = vpop.f32.mrb[0].mxu0
      %v1587 = vadd.f32 %v684, %v1586
      %v1588 = vpop.f32.mrb[0].mxu0
      %1589 = vmatprep.mubr.f32.mxu0 0.0
      %1590 = vmatmul.mubr.f32.gmra.mrb[0].mxu0 %v958
      %v1591 = vpop.f32.mrb[0].mxu0
      %v1592 = vadd.f32 %v684, %v1591
      %v1593 = vpop.f32.mrb[0].mxu0
      %1594 = vmatprep.mubr.f32.mxu0 0.0
      %1595 = vmatmul.mubr.f32.gmra.mrb[0].mxu0 %v961
      %v1596 = vpop.f32.mrb[0].mxu0
      %v1597 = vadd.f32 %v684, %v1596
      %v1598 = vpop.f32.mrb[0].mxu0
      %1599 = vmatprep.mubr.f32.mxu0 0.0
      %1600 = vmatmul.mubr.f32.gmra.mrb[0].mxu0 %v964
      %v1601 = vpop.f32.mrb[0].mxu0
      %v1602 = vadd.f32 %v684, %v1601
      %v1603 = vpop.f32.mrb[0].mxu0
      %1604 = vmatprep.mubr.f32.mxu0 0.0
      %1605 = vmatmul.mubr.f32.gmra.mrb[0].mxu0 %v967
      %v1606 = vpop.f32.mrb[0].mxu0
      %v1607 = vadd.f32 %v684, %v1606
      %v1608 = vpop.f32.mrb[0].mxu0
      %1609 = vmatprep.mubr.f32.mxu0 0.0
      %1610 = vmatmul.mubr.f32.gmra.mrb[0].mxu0 %v970
      %v1611 = vpop.f32.mrb[0].mxu0
      %v1612 = vadd.f32 %v684, %v1611
      %v1613 = vpop.f32.mrb[0].mxu0
      %1614 = vmatprep.mubr.f32.mxu0 0.0
      %1615 = vmatmul.mubr.f32.gmra.mrb[0].mxu0 %v973
      %v1616 = vpop.f32.mrb[0].mxu0
      %v1617 = vadd.f32 %v684, %v1616
      %v1618 = vpop.f32.mrb[0].mxu0
      %1619 = vmatprep.mubr.f32.mxu0 0.0
      %1620 = vmatmul.mubr.f32.gmra.mrb[0].mxu0 %v976
      %v1621 = vpop.f32.mrb[0].mxu0
      %v1622 = vadd.f32 %v684, %v1621
      %v1623 = vpop.f32.mrb[0].mxu0
      %1624 = vmatprep.mubr.f32.mxu0 0.0
      %1625 = vmatmul.mubr.f32.gmra.mrb[0].mxu0 %v979
      %v1626 = vpop.f32.mrb[0].mxu0
      %v1627 = vadd.f32 %v684, %v1626
      %v1628 = vpop.f32.mrb[0].mxu0
      %1629 = vmatprep.mubr.f32.mxu0 0.0
      %1630 = vmatmul.mubr.f32.gmra.mrb[0].mxu0 %v982
      %v1631 = vpop.f32.mrb[0].mxu0
      %v1632 = vadd.f32 %v684, %v1631
      %v1633 = vpop.f32.mrb[0].mxu0
      %1634 = vmatprep.mubr.f32.mxu0 0.0
      %1635 = vmatmul.mubr.f32.gmra.mrb[0].mxu0 %v985
      %v1636 = vpop.f32.mrb[0].mxu0
      %v1637 = vadd.f32 %v684, %v1636
      %v1638 = vpop.f32.mrb[0].mxu0
      %1639 = vmatprep.mubr.f32.mxu0 0.0
      %1640 = vmatmul.mubr.f32.gmra.mrb[0].mxu0 %v988
      %v1641 = vpop.f32.mrb[0].mxu0
      %v1642 = vadd.f32 %v684, %v1641
      %v1643 = vpop.f32.mrb[0].mxu0
      %1644 = vmatprep.mubr.f32.mxu0 0.0
      %1645 = vmatmul.mubr.f32.gmra.mrb[0].mxu0 %v991
      %v1646 = vpop.f32.mrb[0].mxu0
      %v1647 = vadd.f32 %v684, %v1646
      %v1648 = vpop.f32.mrb[0].mxu0
      %1649 = vmatprep.mubr.f32.mxu0 0.0
      %1650 = vmatmul.mubr.f32.gmra.mrb[0].mxu0 %v994
      %v1651 = vpop.f32.mrb[0].mxu0
      %v1652 = vadd.f32 %v684, %v1651
      %v1653 = vpop.f32.mrb[0].mxu0
      %1654 = vmatprep.mubr.f32.mxu0 0.0
      %1655 = vmatmul.mubr.f32.gmra.mrb[0].mxu0 %v997
      %v1656 = vpop.f32.mrb[0].mxu0
      %v1657 = vadd.f32 %v684, %v1656
      %v1658 = vpop.f32.mrb[0].mxu0
      %1659 = vmatprep.mubr.f32.mxu0 0.0
      %1660 = vmatmul.mubr.f32.gmra.mrb[0].mxu0 %v1000
      %v1661 = vpop.f32.mrb[0].mxu0
      %v1662 = vadd.f32 %v684, %v1661
      %v1663 = vpop.f32.mrb[0].mxu0
      %1664 = vmatprep.mubr.f32.mxu0 0.0
      %1665 = vmatmul.mubr.f32.gmra.mrb[0].mxu0 %v1003
      %v1666 = vpop.f32.mrb[0].mxu0
      %v1667 = vadd.f32 %v684, %v1666
      %v1668 = vpop.f32.mrb[0].mxu0
      %1669 = vmatprep.mubr.f32.mxu0 0.0
      %1670 = vmatmul.mubr.f32.gmra.mrb[0].mxu0 %v1006
      %v1671 = vpop.f32.mrb[0].mxu0
      %v1672 = vadd.f32 %v684, %v1671
      %v1673 = vpop.f32.mrb[0].mxu0
      %1674 = vmatprep.mubr.f32.mxu0 0.0
      %1675 = vmatmul.mubr.f32.gmra.mrb[0].mxu0 %v1009
      %v1676 = vpop.f32.mrb[0].mxu0
      %v1677 = vadd.f32 %v684, %v1676
      %v1678 = vpop.f32.mrb[0].mxu0
      %1679 = vmatprep.mubr.f32.mxu0 0.0
      %1680 = vmatmul.mubr.f32.gmra.mrb[0].mxu0 %v1012
      %v1681 = vpop.f32.mrb[0].mxu0
      %v1682 = vadd.f32 %v684, %v1681
      %v1683 = vpop.f32.mrb[0].mxu0
      %1684 = vmatprep.mubr.f32.mxu0 0.0
      %1685 = vmatmul.mubr.f32.gmra.mrb[0].mxu0 %v1015
      %v1686 = vpop.f32.mrb[0].mxu0
      %v1687 = vadd.f32 %v684, %v1686
      %v1688 = vpop.f32.mrb[0].mxu0
      %1689 = vmatprep.mubr.f32.mxu0 0.0
      %1690 = vmatmul.mubr.f32.gmra.mrb[0].mxu0 %v1018
      %v1691 = vpop.f32.mrb[0].mxu0
      %v1692 = vadd.f32 %v684, %v1691
      %v1693 = vpop.f32.mrb[0].mxu0
      %1694 = vmatprep.mubr.f32.mxu0 0.0
      %1695 = vmatmul.mubr.f32.gmra.mrb[0].mxu0 %v1021
      %v1696 = vpop.f32.mrb[0].mxu0
      %v1697 = vadd.f32 %v684, %v1696
      %v1698 = vpop.f32.mrb[0].mxu0
      %1699 = vmatprep.mubr.f32.mxu0 0.0
      %1700 = vmatmul.mubr.f32.gmra.mrb[0].mxu0 %v1024
      %v1701 = vpop.f32.mrb[0].mxu0
      %v1702 = vadd.f32 %v684, %v1701
      %v1703 = vpop.f32.mrb[0].mxu0
      %1704 = vmatprep.mubr.f32.mxu0 0.0
      %1705 = vmatmul.mubr.f32.gmra.mrb[0].mxu0 %v1027
      %v1706 = vpop.f32.mrb[0].mxu0
      %v1707 = vadd.f32 %v684, %v1706
      %v1708 = vpop.f32.mrb[0].mxu0
      %1709 = vmatprep.mubr.f32.mxu0 0.0
      %1710 = vmatmul.mubr.f32.gmra.mrb[0].mxu0 %v1030
      %v1711 = vpop.f32.mrb[0].mxu0
      %v1712 = vadd.f32 %v684, %v1711
      %v1713 = vpop.f32.mrb[0].mxu0
      %1714 = vmatprep.mubr.f32.mxu0 0.0
      %1715 = vmatmul.mubr.f32.gmra.mrb[0].mxu0 %v1033
      %v1716 = vpop.f32.mrb[0].mxu0
      %v1717 = vadd.f32 %v684, %v1716
      %v1718 = vpop.f32.mrb[0].mxu0
      %1719 = vmatprep.mubr.f32.mxu0 0.0
      %1720 = vmatmul.mubr.f32.gmra.mrb[0].mxu0 %v1036
      %v1721 = vpop.f32.mrb[0].mxu0
      %v1722 = vadd.f32 %v684, %v1721
      %v1723 = vpop.f32.mrb[0].mxu0
      %1724 = vmatprep.mubr.f32.mxu0 0.0
      %1725 = vmatmul.mubr.f32.gmra.mrb[0].mxu0 %v1039
      %v1726 = vpop.f32.mrb[0].mxu0
      %v1727 = vadd.f32 %v684, %v1726
      %v1728 = vpop.f32.mrb[0].mxu0
      %1729 = vmatprep.mubr.f32.mxu0 0.0
      %1730 = vmatmul.mubr.f32.gmra.mrb[0].mxu0 %v1042
      %v1731 = vpop.f32.mrb[0].mxu0
      %v1732 = vadd.f32 %v684, %v1731
      %v1733 = vpop.f32.mrb[0].mxu0
      %1734 = vmatprep.mubr.f32.mxu0 0.0
      %1735 = vmatmul.mubr.f32.gmra.mrb[0].mxu0 %v1045
      %v1736 = vpop.f32.mrb[0].mxu0
      %v1737 = vadd.f32 %v684, %v1736
      %v1738 = vpop.f32.mrb[0].mxu0
      %1739 = vmatprep.mubr.f32.mxu0 0.0
      %1740 = vmatmul.mubr.f32.gmra.mrb[0].mxu0 %v1048
      %v1741 = vpop.f32.mrb[0].mxu0
      %v1742 = vadd.f32 %v684, %v1741
      %v1743 = vpop.f32.mrb[0].mxu0
      %1744 = vmatprep.mubr.f32.mxu0 0.0
      %1745 = vmatmul.mubr.f32.gmra.mrb[0].mxu0 %v1051
      %v1746 = vpop.f32.mrb[0].mxu0
      %v1747 = vadd.f32 %v684, %v1746
      %v1748 = vpop.f32.mrb[0].mxu0
      %1749 = vmatprep.mubr.f32.mxu0 0.0
      %1750 = vmatmul.mubr.f32.gmra.mrb[0].mxu0 %v1054
      %v1751 = vpop.f32.mrb[0].mxu0
      %v1752 = vadd.f32 %v684, %v1751
      %v1753 = vpop.f32.mrb[0].mxu0
      %1754 = vmatprep.mubr.f32.mxu0 0.0
      %1755 = vmatmul.mubr.f32.gmra.mrb[0].mxu0 %v1057
      %v1756 = vpop.f32.mrb[0].mxu0
      %v1757 = vadd.f32 %v684, %v1756
      %v1758 = vpop.f32.mrb[0].mxu0
      %1759 = vmatprep.mubr.f32.mxu0 0.0
      %1760 = vmatmul.mubr.f32.gmra.mrb[0].mxu0 %v1060
      %v1761 = vpop.f32.mrb[0].mxu0
      %v1762 = vadd.f32 %v684, %v1761
      %v1763 = vpop.f32.mrb[0].mxu0
      %1764 = vmatprep.mubr.f32.mxu0 0.0
      %1765 = vmatmul.mubr.f32.gmra.mrb[0].mxu0 %v1063
      %v1766 = vpop.f32.mrb[0].mxu0
      %v1767 = vadd.f32 %v684, %v1766
      %v1768 = vpop.f32.mrb[0].mxu0
      %1769 = vmatprep.mubr.f32.mxu0 0.0
      %1770 = vmatmul.mubr.f32.gmra.mrb[0].mxu0 %v1066
      %v1771 = vpop.f32.mrb[0].mxu0
      %v1772 = vadd.f32 %v684, %v1771
      %v1773 = vpop.f32.mrb[0].mxu0
      %1774 = vmatprep.mubr.f32.mxu0 0.0
      %1775 = vmatmul.mubr.f32.gmra.mrb[0].mxu0 %v1069
      %v1776 = vpop.f32.mrb[0].mxu0
      %v1777 = vadd.f32 %v684, %v1776
      %v1778 = vpop.f32.mrb[0].mxu0
      %1779 = vdwg.mxu0
      %v1780 = vmax.f32 %v1142, %v1302
      %v1781 = vmax.f32 %v1147, %v1307
      %v1782 = vmax.f32 %v1152, %v1312
      %v1783 = vmax.f32 %v1157, %v1317
      %v1784 = vmax.f32 %v1162, %v1322
      %v1785 = vmax.f32 %v1167, %v1327
      %v1786 = vmax.f32 %v1172, %v1332
      %v1787 = vmax.f32 %v1177, %v1337
      %v1788 = vmax.f32 %v1182, %v1342
      %v1789 = vmax.f32 %v1187, %v1347
      %v1790 = vmax.f32 %v1192, %v1352
      %v1791 = vmax.f32 %v1197, %v1357
      %v1792 = vmax.f32 %v1202, %v1362
      %v1793 = vmax.f32 %v1207, %v1367
      %v1794 = vmax.f32 %v1212, %v1372
      %v1795 = vmax.f32 %v1217, %v1377
      %v1796 = vmax.f32 %v1222, %v1382
      %v1797 = vmax.f32 %v1227, %v1387
      %v1798 = vmax.f32 %v1232, %v1392
      %v1799 = vmax.f32 %v1237, %v1397
      %v1800 = vmax.f32 %v1242, %v1402
      %v1801 = vmax.f32 %v1247, %v1407
      %v1802 = vmax.f32 %v1252, %v1412
      %v1803 = vmax.f32 %v1257, %v1417
      %v1804 = vmax.f32 %v1262, %v1422
      %v1805 = vmax.f32 %v1267, %v1427
      %v1806 = vmax.f32 %v1272, %v1432
      %v1807 = vmax.f32 %v1277, %v1437
      %v1808 = vmax.f32 %v1282, %v1442
      %v1809 = vmax.f32 %v1287, %v1447
      %v1810 = vmax.f32 %v1292, %v1452
      %v1811 = vmax.f32 %v1297, %v1457
      %v1812 = vmax.f32 %v1462, %v1622
      %v1813 = vmax.f32 %v1467, %v1627
      %v1814 = vmax.f32 %v1472, %v1632
      %v1815 = vmax.f32 %v1477, %v1637
      %v1816 = vmax.f32 %v1482, %v1642
      %v1817 = vmax.f32 %v1487, %v1647
      %v1818 = vmax.f32 %v1492, %v1652
      %v1819 = vmax.f32 %v1497, %v1657
      %v1820 = vmax.f32 %v1502, %v1662
      %v1821 = vmax.f32 %v1507, %v1667
      %v1822 = vmax.f32 %v1512, %v1672
      %v1823 = vmax.f32 %v1517, %v1677
      %v1824 = vmax.f32 %v1522, %v1682
      %v1825 = vmax.f32 %v1527, %v1687
      %v1826 = vmax.f32 %v1532, %v1692
      %v1827 = vmax.f32 %v1537, %v1697
      %v1828 = vmax.f32 %v1542, %v1702
      %v1829 = vmax.f32 %v1547, %v1707
      %v1830 = vmax.f32 %v1552, %v1712
      %v1831 = vmax.f32 %v1557, %v1717
      %v1832 = vmax.f32 %v1562, %v1722
      %v1833 = vmax.f32 %v1567, %v1727
      %v1834 = vmax.f32 %v1572, %v1732
      %v1835 = vmax.f32 %v1577, %v1737
      %v1836 = vmax.f32 %v1582, %v1742
      %v1837 = vmax.f32 %v1587, %v1747
      %v1838 = vmax.f32 %v1592, %v1752
      %v1839 = vmax.f32 %v1597, %v1757
      %v1840 = vmax.f32 %v1602, %v1762
      %v1841 = vmax.f32 %v1607, %v1767
      %v1842 = vmax.f32 %v1612, %v1772
      %v1843 = vmax.f32 %v1617, %v1777
      %v1844 = vmax.f32 %v1780, %v1812
      %v1845 = vmax.f32 %v1781, %v1813
      %v1846 = vmax.f32 %v1782, %v1814
      %v1847 = vmax.f32 %v1783, %v1815
      %v1848 = vmax.f32 %v1784, %v1816
      %v1849 = vmax.f32 %v1785, %v1817
      %v1850 = vmax.f32 %v1786, %v1818
      %v1851 = vmax.f32 %v1787, %v1819
      %v1852 = vmax.f32 %v1788, %v1820
      %v1853 = vmax.f32 %v1789, %v1821
      %v1854 = vmax.f32 %v1790, %v1822
      %v1855 = vmax.f32 %v1791, %v1823
      %v1856 = vmax.f32 %v1792, %v1824
      %v1857 = vmax.f32 %v1793, %v1825
      %v1858 = vmax.f32 %v1794, %v1826
      %v1859 = vmax.f32 %v1795, %v1827
      %v1860 = vmax.f32 %v1796, %v1828
      %v1861 = vmax.f32 %v1797, %v1829
      %v1862 = vmax.f32 %v1798, %v1830
      %v1863 = vmax.f32 %v1799, %v1831
      %v1864 = vmax.f32 %v1800, %v1832
      %v1865 = vmax.f32 %v1801, %v1833
      %v1866 = vmax.f32 %v1802, %v1834
      %v1867 = vmax.f32 %v1803, %v1835
      %v1868 = vmax.f32 %v1804, %v1836
      %v1869 = vmax.f32 %v1805, %v1837
      %v1870 = vmax.f32 %v1806, %v1838
      %v1871 = vmax.f32 %v1807, %v1839
      %v1872 = vmax.f32 %v1808, %v1840
      %v1873 = vmax.f32 %v1809, %v1841
      %v1874 = vmax.f32 %v1810, %v1842
      %v1875 = vmax.f32 %v1811, %v1843
      %v1876 = vmax.f32 %v1844, 0.0
      %v1877 = vmax.f32 %v1845, 0.0
      %v1878 = vmax.f32 %v1846, 0.0
      %v1879 = vmax.f32 %v1847, 0.0
      %v1880 = vmax.f32 %v1848, 0.0
      %v1881 = vmax.f32 %v1849, 0.0
      %v1882 = vmax.f32 %v1850, 0.0
      %v1883 = vmax.f32 %v1851, 0.0
      %v1884 = vmax.f32 %v1852, 0.0
      %v1885 = vmax.f32 %v1853, 0.0
      %v1886 = vmax.f32 %v1854, 0.0
      %v1887 = vmax.f32 %v1855, 0.0
      %v1888 = vmax.f32 %v1856, 0.0
      %v1889 = vmax.f32 %v1857, 0.0
      %v1890 = vmax.f32 %v1858, 0.0
      %v1891 = vmax.f32 %v1859, 0.0
      %v1892 = vmax.f32 %v1860, 0.0
      %v1893 = vmax.f32 %v1861, 0.0
      %v1894 = vmax.f32 %v1862, 0.0
      %v1895 = vmax.f32 %v1863, 0.0
      %v1896 = vmax.f32 %v1864, 0.0
      %v1897 = vmax.f32 %v1865, 0.0
      %v1898 = vmax.f32 %v1866, 0.0
      %v1899 = vmax.f32 %v1867, 0.0
      %v1900 = vmax.f32 %v1868, 0.0
      %v1901 = vmax.f32 %v1869, 0.0
      %v1902 = vmax.f32 %v1870, 0.0
      %v1903 = vmax.f32 %v1871, 0.0
      %v1904 = vmax.f32 %v1872, 0.0
      %v1905 = vmax.f32 %v1873, 0.0
      %v1906 = vmax.f32 %v1874, 0.0
      %v1907 = vmax.f32 %v1875, 0.0
      %v1908 = vld [vmem:[%s4] sm:$0xff]
      %v1909 = vld [vmem:[%s4 + $0x8] sm:$0xff]
      %v1910 = vld [vmem:[%s4 + $0x10] sm:$0xff]
      %v1911 = vld [vmem:[%s4 + $0x18] sm:$0xff]
      %v1912 = vld [vmem:[%s4 + $0x20] sm:$0xff]
      %v1913 = vld [vmem:[%s4 + $0x28] sm:$0xff]
      %v1914 = vld [vmem:[%s4 + $0x30] sm:$0xff]
      %v1915 = vld [vmem:[%s4 + $0x38] sm:$0xff]
      %v1916 = vld [vmem:[%s4 + $0x40] sm:$0xff]
      %v1917 = vld [vmem:[%s4 + $0x48] sm:$0xff]
      %v1918 = vld [vmem:[%s4 + $0x50] sm:$0xff]
      %v1919 = vld [vmem:[%s4 + $0x58] sm:$0xff]
      %v1920 = vld [vmem:[%s4 + $0x60] sm:$0xff]
      %v1921 = vld [vmem:[%s4 + $0x68] sm:$0xff]
      %v1922 = vld [vmem:[%s4 + $0x70] sm:$0xff]
      %v1923 = vld [vmem:[%s4 + $0x78] sm:$0xff]
      %1924 = vmatprep.subr.mxu0 0.0
      %1925 = vmatpush1.msra.mxu0 %v1876
      %1926 = vmatprep.subr.mxu0 0.0
      %1927 = vmatpush1.msra.mxu0 %v1877
      %1928 = vmatprep.subr.mxu0 0.0
      %1929 = vmatpush1.msra.mxu0 %v1878
      %1930 = vmatprep.subr.mxu0 0.0
      %1931 = vmatpush1.msra.mxu0 %v1879
      %1932 = vmatprep.subr.mxu0 0.0
      %1933 = vmatpush1.msra.mxu0 %v1880
      %1934 = vmatprep.subr.mxu0 0.0
      %1935 = vmatpush1.msra.mxu0 %v1881
      %1936 = vmatprep.subr.mxu0 0.0
      %1937 = vmatpush1.msra.mxu0 %v1882
      %1938 = vmatprep.subr.mxu0 0.0
      %1939 = vmatpush1.msra.mxu0 %v1883
      %1940 = vmatprep.subr.mxu0 0.0
      %1941 = vmatpush1.msra.mxu0 %v1884
      %1942 = vmatprep.subr.mxu0 0.0
      %1943 = vmatpush1.msra.mxu0 %v1885
      %1944 = vmatprep.subr.mxu0 0.0
      %1945 = vmatpush1.msra.mxu0 %v1886
      %1946 = vmatprep.subr.mxu0 0.0
      %1947 = vmatpush1.msra.mxu0 %v1887
      %1948 = vmatprep.subr.mxu0 0.0
      %1949 = vmatpush1.msra.mxu0 %v1888
      %1950 = vmatprep.subr.mxu0 0.0
      %1951 = vmatpush1.msra.mxu0 %v1889
      %1952 = vmatprep.subr.mxu0 0.0
      %1953 = vmatpush1.msra.mxu0 %v1890
      %1954 = vmatprep.subr.mxu0 0.0
      %1955 = vmatpush1.msra.mxu0 %v1891
      %1956 = vmatprep.subr.mxu0 0.0
      %1957 = vmatpush1.msra.mxu0 %v1892
      %1958 = vmatprep.subr.mxu0 0.0
      %1959 = vmatpush1.msra.mxu0 %v1893
      %1960 = vmatprep.subr.mxu0 0.0
      %1961 = vmatpush1.msra.mxu0 %v1894
      %1962 = vmatprep.subr.mxu0 0.0
      %1963 = vmatpush1.msra.mxu0 %v1895
      %1964 = vmatprep.subr.mxu0 0.0
      %1965 = vmatpush1.msra.mxu0 %v1896
      %1966 = vmatprep.subr.mxu0 0.0
      %1967 = vmatpush1.msra.mxu0 %v1897
      %1968 = vmatprep.subr.mxu0 0.0
      %1969 = vmatpush1.msra.mxu0 %v1898
      %1970 = vmatprep.subr.mxu0 0.0
      %1971 = vmatpush1.msra.mxu0 %v1899
      %1972 = vmatprep.subr.mxu0 0.0
      %1973 = vmatpush1.msra.mxu0 %v1900
      %1974 = vmatprep.subr.mxu0 0.0
      %1975 = vmatpush1.msra.mxu0 %v1901
      %1976 = vmatprep.subr.mxu0 0.0
      %1977 = vmatpush1.msra.mxu0 %v1902
      %1978 = vmatprep.subr.mxu0 0.0
      %1979 = vmatpush1.msra.mxu0 %v1903
      %1980 = vmatprep.subr.mxu0 0.0
      %1981 = vmatpush1.msra.mxu0 %v1904
      %1982 = vmatprep.subr.mxu0 0.0
      %1983 = vmatpush1.msra.mxu0 %v1905
      %1984 = vmatprep.subr.mxu0 0.0
      %1985 = vmatpush1.msra.mxu0 %v1906
      %1986 = vmatprep.subr.mxu0 0.0
      %1987 = vmatpush1.msra.mxu0 %v1907
      %1988 = vmatprep.mubr.f32.mxu0 %v1909
      %1989 = vmatmul.mubr.f32.gmra.mrb[0].mxu0 %v1908
      %v1990 = vpop.f32.mrb[0].mxu0
      %v1991 = vadd.f32 0.0, %v1990
      %v1992 = vpop.f32.mrb[0].mxu0
      %1993 = vmatprep.mubr.f32.mxu0 %v1911
      %1994 = vmatmul.mubr.f32.gmra.mrb[0].mxu0 %v1910
      %v1995 = vpop.f32.mrb[0].mxu0
      %v1996 = vadd.f32 0.0, %v1995
      %v1997 = vpop.f32.mrb[0].mxu0
      %1998 = vmatprep.mubr.f32.mxu0 %v1913
      %1999 = vmatmul.mubr.f32.gmra.mrb[0].mxu0 %v1912
      %v2000 = vpop.f32.mrb[0].mxu0
      %v2001 = vadd.f32 0.0, %v2000
      %v2002 = vpop.f32.mrb[0].mxu0
      %2003 = vmatprep.mubr.f32.mxu0 %v1915
      %2004 = vmatmul.mubr.f32.gmra.mrb[0].mxu0 %v1914
      %v2005 = vpop.f32.mrb[0].mxu0
      %v2006 = vadd.f32 0.0, %v2005
      %v2007 = vpop.f32.mrb[0].mxu0
      %2008 = vmatprep.mubr.f32.mxu0 %v1917
      %2009 = vmatmul.mubr.f32.gmra.mrb[0].mxu0 %v1916
      %v2010 = vpop.f32.mrb[0].mxu0
      %v2011 = vadd.f32 0.0, %v2010
      %v2012 = vpop.f32.mrb[0].mxu0
      %2013 = vmatprep.mubr.f32.mxu0 %v1919
      %2014 = vmatmul.mubr.f32.gmra.mrb[0].mxu0 %v1918
      %v2015 = vpop.f32.mrb[0].mxu0
      %v2016 = vadd.f32 0.0, %v2015
      %v2017 = vpop.f32.mrb[0].mxu0
      %2018 = vmatprep.mubr.f32.mxu0 %v1921
      %2019 = vmatmul.mubr.f32.gmra.mrb[0].mxu0 %v1920
      %v2020 = vpop.f32.mrb[0].mxu0
      %v2021 = vadd.f32 0.0, %v2020
      %v2022 = vpop.f32.mrb[0].mxu0
      %2023 = vmatprep.mubr.f32.mxu0 %v1923
      %2024 = vmatmul.mubr.f32.gmra.mrb[0].mxu0 %v1922
      %v2025 = vpop.f32.mrb[0].mxu0
      %v2026 = vadd.f32 0.0, %v2025
      %v2027 = vpop.f32.mrb[0].mxu0
      %2028 = vdwg.mxu0
      %v2029 = vld [vmem:[%s3] sm:$0xff]
      %v2030 = vld [vmem:[%s3 + $0x8] sm:$0xff]
      %s2031 = scalar_lea.vmem %s4, 128
      %v2032 = vld [vmem:[%s2031] sm:$0xff]
      %v2033 = vld [vmem:[%s2031 + $0x8] sm:$0xff]
      %v2034 = vld [vmem:[%s2031 + $0x10] sm:$0xff]
      %v2035 = vld [vmem:[%s2031 + $0x18] sm:$0xff]
      %v2036 = vld [vmem:[%s2031 + $0x20] sm:$0xff]
      %v2037 = vld [vmem:[%s2031 + $0x28] sm:$0xff]
      %v2038 = vld [vmem:[%s2031 + $0x30] sm:$0xff]
      %v2039 = vld [vmem:[%s2031 + $0x38] sm:$0xff]
      %v2040 = vld [vmem:[%s2031 + $0x40] sm:$0xff]
      %v2041 = vld [vmem:[%s2031 + $0x48] sm:$0xff]
      %v2042 = vld [vmem:[%s2031 + $0x50] sm:$0xff]
      %v2043 = vld [vmem:[%s2031 + $0x58] sm:$0xff]
      %v2044 = vld [vmem:[%s2031 + $0x60] sm:$0xff]
      %v2045 = vld [vmem:[%s2031 + $0x68] sm:$0xff]
      %v2046 = vld [vmem:[%s2031 + $0x70] sm:$0xff]
      %v2047 = vld [vmem:[%s2031 + $0x78] sm:$0xff]
      %2048 = vmatprep.subr.mxu0 0.0
      %2049 = vmatpush1.msra.mxu0 %v1876
      %2050 = vmatprep.subr.mxu0 0.0
      %2051 = vmatpush1.msra.mxu0 %v1877
      %2052 = vmatprep.subr.mxu0 0.0
      %2053 = vmatpush1.msra.mxu0 %v1878
      %2054 = vmatprep.subr.mxu0 0.0
      %2055 = vmatpush1.msra.mxu0 %v1879
      %2056 = vmatprep.subr.mxu0 0.0
      %2057 = vmatpush1.msra.mxu0 %v1880
      %2058 = vmatprep.subr.mxu0 0.0
      %2059 = vmatpush1.msra.mxu0 %v1881
      %2060 = vmatprep.subr.mxu0 0.0
      %2061 = vmatpush1.msra.mxu0 %v1882
      %2062 = vmatprep.subr.mxu0 0.0
      %2063 = vmatpush1.msra.mxu0 %v1883
      %2064 = vmatprep.subr.mxu0 0.0
      %2065 = vmatpush1.msra.mxu0 %v1884
      %2066 = vmatprep.subr.mxu0 0.0
      %2067 = vmatpush1.msra.mxu0 %v1885
      %2068 = vmatprep.subr.mxu0 0.0
      %2069 = vmatpush1.msra.mxu0 %v1886
      %2070 = vmatprep.subr.mxu0 0.0
      %2071 = vmatpush1.msra.mxu0 %v1887
      %2072 = vmatprep.subr.mxu0 0.0
      %2073 = vmatpush1.msra.mxu0 %v1888
      %2074 = vmatprep.subr.mxu0 0.0
      %2075 = vmatpush1.msra.mxu0 %v1889
      %2076 = vmatprep.subr.mxu0 0.0
      %2077 = vmatpush1.msra.mxu0 %v1890
      %2078 = vmatprep.subr.mxu0 0.0
      %2079 = vmatpush1.msra.mxu0 %v1891
      %2080 = vmatprep.subr.mxu0 0.0
      %2081 = vmatpush1.msra.mxu0 %v1892
      %2082 = vmatprep.subr.mxu0 0.0
      %2083 = vmatpush1.msra.mxu0 %v1893
      %2084 = vmatprep.subr.mxu0 0.0
      %2085 = vmatpush1.msra.mxu0 %v1894
      %2086 = vmatprep.subr.mxu0 0.0
      %2087 = vmatpush1.msra.mxu0 %v1895
      %2088 = vmatprep.subr.mxu0 0.0
      %2089 = vmatpush1.msra.mxu0 %v1896
      %2090 = vmatprep.subr.mxu0 0.0
      %2091 = vmatpush1.msra.mxu0 %v1897
      %2092 = vmatprep.subr.mxu0 0.0
      %2093 = vmatpush1.msra.mxu0 %v1898
      %2094 = vmatprep.subr.mxu0 0.0
      %2095 = vmatpush1.msra.mxu0 %v1899
      %2096 = vmatprep.subr.mxu0 0.0
      %2097 = vmatpush1.msra.mxu0 %v1900
      %2098 = vmatprep.subr.mxu0 0.0
      %2099 = vmatpush1.msra.mxu0 %v1901
      %2100 = vmatprep.subr.mxu0 0.0
      %2101 = vmatpush1.msra.mxu0 %v1902
      %2102 = vmatprep.subr.mxu0 0.0
      %2103 = vmatpush1.msra.mxu0 %v1903
      %2104 = vmatprep.subr.mxu0 0.0
      %2105 = vmatpush1.msra.mxu0 %v1904
      %2106 = vmatprep.subr.mxu0 0.0
      %2107 = vmatpush1.msra.mxu0 %v1905
      %2108 = vmatprep.subr.mxu0 0.0
      %2109 = vmatpush1.msra.mxu0 %v1906
      %2110 = vmatprep.subr.mxu0 0.0
      %2111 = vmatpush1.msra.mxu0 %v1907
      %2112 = vmatprep.mubr.f32.mxu0 %v2033
      %2113 = vmatmul.mubr.f32.gmra.mrb[0].mxu0 %v2032
      %v2114 = vpop.f32.mrb[0].mxu0
      %v2115 = vadd.f32 0.0, %v2114
      %v2116 = vpop.f32.mrb[0].mxu0
      %2117 = vmatprep.mubr.f32.mxu0 %v2035
      %2118 = vmatmul.mubr.f32.gmra.mrb[0].mxu0 %v2034
      %v2119 = vpop.f32.mrb[0].mxu0
      %v2120 = vadd.f32 0.0, %v2119
      %v2121 = vpop.f32.mrb[0].mxu0
      %2122 = vmatprep.mubr.f32.mxu0 %v2037
      %2123 = vmatmul.mubr.f32.gmra.mrb[0].mxu0 %v2036
      %v2124 = vpop.f32.mrb[0].mxu0
      %v2125 = vadd.f32 0.0, %v2124
      %v2126 = vpop.f32.mrb[0].mxu0
      %2127 = vmatprep.mubr.f32.mxu0 %v2039
      %2128 = vmatmul.mubr.f32.gmra.mrb[0].mxu0 %v2038
      %v2129 = vpop.f32.mrb[0].mxu0
      %v2130 = vadd.f32 0.0, %v2129
      %v2131 = vpop.f32.mrb[0].mxu0
      %2132 = vmatprep.mubr.f32.mxu0 %v2041
      %2133 = vmatmul.mubr.f32.gmra.mrb[0].mxu0 %v2040
      %v2134 = vpop.f32.mrb[0].mxu0
      %v2135 = vadd.f32 0.0, %v2134
      %v2136 = vpop.f32.mrb[0].mxu0
      %2137 = vmatprep.mubr.f32.mxu0 %v2043
      %2138 = vmatmul.mubr.f32.gmra.mrb[0].mxu0 %v2042
      %v2139 = vpop.f32.mrb[0].mxu0
      %v2140 = vadd.f32 0.0, %v2139
      %v2141 = vpop.f32.mrb[0].mxu0
      %2142 = vmatprep.mubr.f32.mxu0 %v2045
      %2143 = vmatmul.mubr.f32.gmra.mrb[0].mxu0 %v2044
      %v2144 = vpop.f32.mrb[0].mxu0
      %v2145 = vadd.f32 0.0, %v2144
      %v2146 = vpop.f32.mrb[0].mxu0
      %2147 = vmatprep.mubr.f32.mxu0 %v2047
      %2148 = vmatmul.mubr.f32.gmra.mrb[0].mxu0 %v2046
      %v2149 = vpop.f32.mrb[0].mxu0
      %v2150 = vadd.f32 0.0, %v2149
      %v2151 = vpop.f32.mrb[0].mxu0
      %2152 = vdwg.mxu0
      %s2153 = scalar_lea.vmem %s3, 16
      %v2154 = vld [vmem:[%s2153] sm:$0xff]
      %v2155 = vld [vmem:[%s2153 + $0x8] sm:$0xff]
      %vm2156 = vcmask 130048
      %v2158 = vsel %vm2156, %v2115, 0
      %v2161 = vsel %vm2156, %v2120, 0
      %v2164 = vsel %vm2156, %v2125, 0
      %v2167 = vsel %vm2156, %v2130, 0
      %v2170 = vsel %vm2156, %v2135, 0
      %v2173 = vsel %vm2156, %v2140, 0
      %v2176 = vsel %vm2156, %v2145, 0
      %v2179 = vsel %vm2156, %v2150, 0
      %2181 = vmatprep.subr.mxu0 0.0
      %2182 = vmatpush1.msra.mxu0 %v2154
      %2183 = vmatprep.subr.mxu0 0.0
      %2184 = vmatpush1.msra.mxu0 %v2155
      %2185 = vmatprep.subr.mxu0 0.0
      %2186 = vmatpush1.msra.mxu0 0.0
      %2187 = vmatprep.subr.mxu0 0.0
      %2188 = vmatpush1.msra.mxu0 0.0
      %2189 = vmatprep.subr.mxu0 0.0
      %2190 = vmatpush1.msra.mxu0 0.0
      %2191 = vmatprep.subr.mxu0 0.0
      %2192 = vmatpush1.msra.mxu0 0.0
      %2193 = vmatprep.subr.mxu0 0.0
      %2194 = vmatpush1.msra.mxu0 0.0
      %2195 = vmatprep.subr.mxu0 0.0
      %2196 = vmatpush1.msra.mxu0 0.0
      %2197 = vmatprep.subr.mxu0 0.0
      %2198 = vmatpush1.msra.mxu0 0.0
      %2199 = vmatprep.subr.mxu0 0.0
      %2200 = vmatpush1.msra.mxu0 0.0
      %2201 = vmatprep.subr.mxu0 0.0
      %2202 = vmatpush1.msra.mxu0 0.0
      %2203 = vmatprep.subr.mxu0 0.0
      %2204 = vmatpush1.msra.mxu0 0.0
      %2205 = vmatprep.subr.mxu0 0.0
      %2206 = vmatpush1.msra.mxu0 0.0
      %2207 = vmatprep.subr.mxu0 0.0
      %2208 = vmatpush1.msra.mxu0 0.0
      %2209 = vmatprep.subr.mxu0 0.0
      %2210 = vmatpush1.msra.mxu0 0.0
      %2211 = vmatprep.subr.mxu0 0.0
      %2212 = vmatpush1.msra.mxu0 0.0
      %2213 = vmatprep.subr.mxu0 0.0
      %2214 = vmatpush1.msra.mxu0 0.0
      %2215 = vmatprep.subr.mxu0 0.0
      %2216 = vmatpush1.msra.mxu0 0.0
      %2217 = vmatprep.subr.mxu0 0.0
      %2218 = vmatpush1.msra.mxu0 0.0
      %2219 = vmatprep.subr.mxu0 0.0
      %2220 = vmatpush1.msra.mxu0 0.0
      %2221 = vmatprep.subr.mxu0 0.0
      %2222 = vmatpush1.msra.mxu0 0.0
      %2223 = vmatprep.subr.mxu0 0.0
      %2224 = vmatpush1.msra.mxu0 0.0
      %2225 = vmatprep.subr.mxu0 0.0
      %2226 = vmatpush1.msra.mxu0 0.0
      %2227 = vmatprep.subr.mxu0 0.0
      %2228 = vmatpush1.msra.mxu0 0.0
      %2229 = vmatprep.subr.mxu0 0.0
      %2230 = vmatpush1.msra.mxu0 0.0
      %2231 = vmatprep.subr.mxu0 0.0
      %2232 = vmatpush1.msra.mxu0 0.0
      %2233 = vmatprep.subr.mxu0 0.0
      %2234 = vmatpush1.msra.mxu0 0.0
      %2235 = vmatprep.subr.mxu0 0.0
      %2236 = vmatpush1.msra.mxu0 0.0
      %2237 = vmatprep.subr.mxu0 0.0
      %2238 = vmatpush1.msra.mxu0 0.0
      %2239 = vmatprep.subr.mxu0 0.0
      %2240 = vmatpush1.msra.mxu0 0.0
      %2241 = vmatprep.subr.mxu0 0.0
      %2242 = vmatpush1.msra.mxu0 0.0
      %2243 = vmatprep.subr.mxu0 0.0
      %2244 = vmatpush1.msra.mxu0 0.0
      %2245 = vmatprep.mubr.f32.mxu0 0.0
      %2246 = vmatmul.mubr.f32.gmra.mrb[0].mxu0 %v2158
      %v2247 = vpop.f32.mrb[0].mxu0
      %v2248 = vadd.f32 0.0, %v2247
      %v2249 = vpop.f32.mrb[0].mxu0
      %2250 = vmatprep.mubr.f32.mxu0 0.0
      %2251 = vmatmul.mubr.f32.gmra.mrb[0].mxu0 %v2161
      %v2252 = vpop.f32.mrb[0].mxu0
      %v2253 = vadd.f32 0.0, %v2252
      %v2254 = vpop.f32.mrb[0].mxu0
      %2255 = vmatprep.mubr.f32.mxu0 0.0
      %2256 = vmatmul.mubr.f32.gmra.mrb[0].mxu0 %v2164
      %v2257 = vpop.f32.mrb[0].mxu0
      %v2258 = vadd.f32 0.0, %v2257
      %v2259 = vpop.f32.mrb[0].mxu0
      %2260 = vmatprep.mubr.f32.mxu0 0.0
      %2261 = vmatmul.mubr.f32.gmra.mrb[0].mxu0 %v2167
      %v2262 = vpop.f32.mrb[0].mxu0
      %v2263 = vadd.f32 0.0, %v2262
      %v2264 = vpop.f32.mrb[0].mxu0
      %2265 = vmatprep.mubr.f32.mxu0 0.0
      %2266 = vmatmul.mubr.f32.gmra.mrb[0].mxu0 %v2170
      %v2267 = vpop.f32.mrb[0].mxu0
      %v2268 = vadd.f32 0.0, %v2267
      %v2269 = vpop.f32.mrb[0].mxu0
      %2270 = vmatprep.mubr.f32.mxu0 0.0
      %2271 = vmatmul.mubr.f32.gmra.mrb[0].mxu0 %v2173
      %v2272 = vpop.f32.mrb[0].mxu0
      %v2273 = vadd.f32 0.0, %v2272
      %v2274 = vpop.f32.mrb[0].mxu0
      %2275 = vmatprep.mubr.f32.mxu0 0.0
      %2276 = vmatmul.mubr.f32.gmra.mrb[0].mxu0 %v2176
      %v2277 = vpop.f32.mrb[0].mxu0
      %v2278 = vadd.f32 0.0, %v2277
      %v2279 = vpop.f32.mrb[0].mxu0
      %2280 = vmatprep.mubr.f32.mxu0 0.0
      %2281 = vmatmul.mubr.f32.gmra.mrb[0].mxu0 %v2179
      %v2282 = vpop.f32.mrb[0].mxu0
      %v2283 = vadd.f32 0.0, %v2282
      %v2284 = vpop.f32.mrb[0].mxu0
      %2285 = vdwg.mxu0
      %v2287 = vsel %vm2156, %v1991, 0
      %v2290 = vsel %vm2156, %v1996, 0
      %v2293 = vsel %vm2156, %v2001, 0
      %v2296 = vsel %vm2156, %v2006, 0
      %v2299 = vsel %vm2156, %v2011, 0
      %v2302 = vsel %vm2156, %v2016, 0
      %v2305 = vsel %vm2156, %v2021, 0
      %v2308 = vsel %vm2156, %v2026, 0
      %2310 = vmatprep.subr.mxu0 0.0
      %2311 = vmatpush1.msra.mxu0 %v2029
      %2312 = vmatprep.subr.mxu0 0.0
      %2313 = vmatpush1.msra.mxu0 %v2030
      %2314 = vmatprep.subr.mxu0 0.0
      %2315 = vmatpush1.msra.mxu0 0.0
      %2316 = vmatprep.subr.mxu0 0.0
      %2317 = vmatpush1.msra.mxu0 0.0
      %2318 = vmatprep.subr.mxu0 0.0
      %2319 = vmatpush1.msra.mxu0 0.0
      %2320 = vmatprep.subr.mxu0 0.0
      %2321 = vmatpush1.msra.mxu0 0.0
      %2322 = vmatprep.subr.mxu0 0.0
      %2323 = vmatpush1.msra.mxu0 0.0
      %2324 = vmatprep.subr.mxu0 0.0
      %2325 = vmatpush1.msra.mxu0 0.0
      %2326 = vmatprep.subr.mxu0 0.0
      %2327 = vmatpush1.msra.mxu0 0.0
      %2328 = vmatprep.subr.mxu0 0.0
      %2329 = vmatpush1.msra.mxu0 0.0
      %2330 = vmatprep.subr.mxu0 0.0
      %2331 = vmatpush1.msra.mxu0 0.0
      %2332 = vmatprep.subr.mxu0 0.0
      %2333 = vmatpush1.msra.mxu0 0.0
      %2334 = vmatprep.subr.mxu0 0.0
      %2335 = vmatpush1.msra.mxu0 0.0
      %2336 = vmatprep.subr.mxu0 0.0
      %2337 = vmatpush1.msra.mxu0 0.0
      %2338 = vmatprep.subr.mxu0 0.0
      %2339 = vmatpush1.msra.mxu0 0.0
      %2340 = vmatprep.subr.mxu0 0.0
      %2341 = vmatpush1.msra.mxu0 0.0
      %2342 = vmatprep.subr.mxu0 0.0
      %2343 = vmatpush1.msra.mxu0 0.0
      %2344 = vmatprep.subr.mxu0 0.0
      %2345 = vmatpush1.msra.mxu0 0.0
      %2346 = vmatprep.subr.mxu0 0.0
      %2347 = vmatpush1.msra.mxu0 0.0
      %2348 = vmatprep.subr.mxu0 0.0
      %2349 = vmatpush1.msra.mxu0 0.0
      %2350 = vmatprep.subr.mxu0 0.0
      %2351 = vmatpush1.msra.mxu0 0.0
      %2352 = vmatprep.subr.mxu0 0.0
      %2353 = vmatpush1.msra.mxu0 0.0
      %2354 = vmatprep.subr.mxu0 0.0
      %2355 = vmatpush1.msra.mxu0 0.0
      %2356 = vmatprep.subr.mxu0 0.0
      %2357 = vmatpush1.msra.mxu0 0.0
      %2358 = vmatprep.subr.mxu0 0.0
      %2359 = vmatpush1.msra.mxu0 0.0
      %2360 = vmatprep.subr.mxu0 0.0
      %2361 = vmatpush1.msra.mxu0 0.0
      %2362 = vmatprep.subr.mxu0 0.0
      %2363 = vmatpush1.msra.mxu0 0.0
      %2364 = vmatprep.subr.mxu0 0.0
      %2365 = vmatpush1.msra.mxu0 0.0
      %2366 = vmatprep.subr.mxu0 0.0
      %2367 = vmatpush1.msra.mxu0 0.0
      %2368 = vmatprep.subr.mxu0 0.0
      %2369 = vmatpush1.msra.mxu0 0.0
      %2370 = vmatprep.subr.mxu0 0.0
      %2371 = vmatpush1.msra.mxu0 0.0
      %2372 = vmatprep.subr.mxu0 0.0
      %2373 = vmatpush1.msra.mxu0 0.0
      %2374 = vmatprep.mubr.f32.mxu0 0.0
      %2375 = vmatmul.mubr.f32.gmra.mrb[0].mxu0 %v2287
      %v2376 = vpop.f32.mrb[0].mxu0
      %v2377 = vadd.f32 %v2248, %v2376
      %v2378 = vpop.f32.mrb[0].mxu0
      %2379 = vmatprep.mubr.f32.mxu0 0.0
      %2380 = vmatmul.mubr.f32.gmra.mrb[0].mxu0 %v2290
      %v2381 = vpop.f32.mrb[0].mxu0
      %v2382 = vadd.f32 %v2253, %v2381
      %v2383 = vpop.f32.mrb[0].mxu0
      %2384 = vmatprep.mubr.f32.mxu0 0.0
      %2385 = vmatmul.mubr.f32.gmra.mrb[0].mxu0 %v2293
      %v2386 = vpop.f32.mrb[0].mxu0
      %v2387 = vadd.f32 %v2258, %v2386
      %v2388 = vpop.f32.mrb[0].mxu0
      %2389 = vmatprep.mubr.f32.mxu0 0.0
      %2390 = vmatmul.mubr.f32.gmra.mrb[0].mxu0 %v2296
      %v2391 = vpop.f32.mrb[0].mxu0
      %v2392 = vadd.f32 %v2263, %v2391
      %v2393 = vpop.f32.mrb[0].mxu0
      %2394 = vmatprep.mubr.f32.mxu0 0.0
      %2395 = vmatmul.mubr.f32.gmra.mrb[0].mxu0 %v2299
      %v2396 = vpop.f32.mrb[0].mxu0
      %v2397 = vadd.f32 %v2268, %v2396
      %v2398 = vpop.f32.mrb[0].mxu0
      %2399 = vmatprep.mubr.f32.mxu0 0.0
      %2400 = vmatmul.mubr.f32.gmra.mrb[0].mxu0 %v2302
      %v2401 = vpop.f32.mrb[0].mxu0
      %v2402 = vadd.f32 %v2273, %v2401
      %v2403 = vpop.f32.mrb[0].mxu0
      %2404 = vmatprep.mubr.f32.mxu0 0.0
      %2405 = vmatmul.mubr.f32.gmra.mrb[0].mxu0 %v2305
      %v2406 = vpop.f32.mrb[0].mxu0
      %v2407 = vadd.f32 %v2278, %v2406
      %v2408 = vpop.f32.mrb[0].mxu0
      %2409 = vmatprep.mubr.f32.mxu0 0.0
      %2410 = vmatmul.mubr.f32.gmra.mrb[0].mxu0 %v2308
      %v2411 = vpop.f32.mrb[0].mxu0
      %v2412 = vadd.f32 %v2283, %v2411
      %v2413 = vpop.f32.mrb[0].mxu0
      %2414 = vdwg.mxu0
      %s2415 = scalar_lea.vmem %s4, 256
      %v2416 = vld [vmem:[%s2415] sm:$0xff]
      %v2417 = vld [vmem:[%s2415 + $0x8] sm:$0xff]
      %v2418 = vld [vmem:[%s2415 + $0x10] sm:$0xff]
      %v2419 = vld [vmem:[%s2415 + $0x18] sm:$0xff]
      %v2420 = vld [vmem:[%s2415 + $0x20] sm:$0xff]
      %v2421 = vld [vmem:[%s2415 + $0x28] sm:$0xff]
      %v2422 = vld [vmem:[%s2415 + $0x30] sm:$0xff]
      %v2423 = vld [vmem:[%s2415 + $0x38] sm:$0xff]
      %v2424 = vld [vmem:[%s2415 + $0x40] sm:$0xff]
      %v2425 = vld [vmem:[%s2415 + $0x48] sm:$0xff]
      %v2426 = vld [vmem:[%s2415 + $0x50] sm:$0xff]
      %v2427 = vld [vmem:[%s2415 + $0x58] sm:$0xff]
      %v2428 = vld [vmem:[%s2415 + $0x60] sm:$0xff]
      %v2429 = vld [vmem:[%s2415 + $0x68] sm:$0xff]
      %v2430 = vld [vmem:[%s2415 + $0x70] sm:$0xff]
      %v2431 = vld [vmem:[%s2415 + $0x78] sm:$0xff]
      %2432 = vmatprep.subr.mxu0 0.0
      %2433 = vmatpush1.msra.mxu0 %v1876
      %2434 = vmatprep.subr.mxu0 0.0
      %2435 = vmatpush1.msra.mxu0 %v1877
      %2436 = vmatprep.subr.mxu0 0.0
      %2437 = vmatpush1.msra.mxu0 %v1878
      %2438 = vmatprep.subr.mxu0 0.0
      %2439 = vmatpush1.msra.mxu0 %v1879
      %2440 = vmatprep.subr.mxu0 0.0
      %2441 = vmatpush1.msra.mxu0 %v1880
      %2442 = vmatprep.subr.mxu0 0.0
      %2443 = vmatpush1.msra.mxu0 %v1881
      %2444 = vmatprep.subr.mxu0 0.0
      %2445 = vmatpush1.msra.mxu0 %v1882
      %2446 = vmatprep.subr.mxu0 0.0
      %2447 = vmatpush1.msra.mxu0 %v1883
      %2448 = vmatprep.subr.mxu0 0.0
      %2449 = vmatpush1.msra.mxu0 %v1884
      %2450 = vmatprep.subr.mxu0 0.0
      %2451 = vmatpush1.msra.mxu0 %v1885
      %2452 = vmatprep.subr.mxu0 0.0
      %2453 = vmatpush1.msra.mxu0 %v1886
      %2454 = vmatprep.subr.mxu0 0.0
      %2455 = vmatpush1.msra.mxu0 %v1887
      %2456 = vmatprep.subr.mxu0 0.0
      %2457 = vmatpush1.msra.mxu0 %v1888
      %2458 = vmatprep.subr.mxu0 0.0
      %2459 = vmatpush1.msra.mxu0 %v1889
      %2460 = vmatprep.subr.mxu0 0.0
      %2461 = vmatpush1.msra.mxu0 %v1890
      %2462 = vmatprep.subr.mxu0 0.0
      %2463 = vmatpush1.msra.mxu0 %v1891
      %2464 = vmatprep.subr.mxu0 0.0
      %2465 = vmatpush1.msra.mxu0 %v1892
      %2466 = vmatprep.subr.mxu0 0.0
      %2467 = vmatpush1.msra.mxu0 %v1893
      %2468 = vmatprep.subr.mxu0 0.0
      %2469 = vmatpush1.msra.mxu0 %v1894
      %2470 = vmatprep.subr.mxu0 0.0
      %2471 = vmatpush1.msra.mxu0 %v1895
      %2472 = vmatprep.subr.mxu0 0.0
      %2473 = vmatpush1.msra.mxu0 %v1896
      %2474 = vmatprep.subr.mxu0 0.0
      %2475 = vmatpush1.msra.mxu0 %v1897
      %2476 = vmatprep.subr.mxu0 0.0
      %2477 = vmatpush1.msra.mxu0 %v1898
      %2478 = vmatprep.subr.mxu0 0.0
      %2479 = vmatpush1.msra.mxu0 %v1899
      %2480 = vmatprep.subr.mxu0 0.0
      %2481 = vmatpush1.msra.mxu0 %v1900
      %2482 = vmatprep.subr.mxu0 0.0
      %2483 = vmatpush1.msra.mxu0 %v1901
      %2484 = vmatprep.subr.mxu0 0.0
      %2485 = vmatpush1.msra.mxu0 %v1902
      %2486 = vmatprep.subr.mxu0 0.0
      %2487 = vmatpush1.msra.mxu0 %v1903
      %2488 = vmatprep.subr.mxu0 0.0
      %2489 = vmatpush1.msra.mxu0 %v1904
      %2490 = vmatprep.subr.mxu0 0.0
      %2491 = vmatpush1.msra.mxu0 %v1905
      %2492 = vmatprep.subr.mxu0 0.0
      %2493 = vmatpush1.msra.mxu0 %v1906
      %2494 = vmatprep.subr.mxu0 0.0
      %2495 = vmatpush1.msra.mxu0 %v1907
      %2496 = vmatprep.mubr.f32.mxu0 %v2417
      %2497 = vmatmul.mubr.f32.gmra.mrb[0].mxu0 %v2416
      %v2498 = vpop.f32.mrb[0].mxu0
      %v2499 = vadd.f32 0.0, %v2498
      %v2500 = vpop.f32.mrb[0].mxu0
      %2501 = vmatprep.mubr.f32.mxu0 %v2419
      %2502 = vmatmul.mubr.f32.gmra.mrb[0].mxu0 %v2418
      %v2503 = vpop.f32.mrb[0].mxu0
      %v2504 = vadd.f32 0.0, %v2503
      %v2505 = vpop.f32.mrb[0].mxu0
      %2506 = vmatprep.mubr.f32.mxu0 %v2421
      %2507 = vmatmul.mubr.f32.gmra.mrb[0].mxu0 %v2420
      %v2508 = vpop.f32.mrb[0].mxu0
      %v2509 = vadd.f32 0.0, %v2508
      %v2510 = vpop.f32.mrb[0].mxu0
      %2511 = vmatprep.mubr.f32.mxu0 %v2423
      %2512 = vmatmul.mubr.f32.gmra.mrb[0].mxu0 %v2422
      %v2513 = vpop.f32.mrb[0].mxu0
      %v2514 = vadd.f32 0.0, %v2513
      %v2515 = vpop.f32.mrb[0].mxu0
      %2516 = vmatprep.mubr.f32.mxu0 %v2425
      %2517 = vmatmul.mubr.f32.gmra.mrb[0].mxu0 %v2424
      %v2518 = vpop.f32.mrb[0].mxu0
      %v2519 = vadd.f32 0.0, %v2518
      %v2520 = vpop.f32.mrb[0].mxu0
      %2521 = vmatprep.mubr.f32.mxu0 %v2427
      %2522 = vmatmul.mubr.f32.gmra.mrb[0].mxu0 %v2426
      %v2523 = vpop.f32.mrb[0].mxu0
      %v2524 = vadd.f32 0.0, %v2523
      %v2525 = vpop.f32.mrb[0].mxu0
      %2526 = vmatprep.mubr.f32.mxu0 %v2429
      %2527 = vmatmul.mubr.f32.gmra.mrb[0].mxu0 %v2428
      %v2528 = vpop.f32.mrb[0].mxu0
      %v2529 = vadd.f32 0.0, %v2528
      %v2530 = vpop.f32.mrb[0].mxu0
      %2531 = vmatprep.mubr.f32.mxu0 %v2431
      %2532 = vmatmul.mubr.f32.gmra.mrb[0].mxu0 %v2430
      %v2533 = vpop.f32.mrb[0].mxu0
      %v2534 = vadd.f32 0.0, %v2533
      %v2535 = vpop.f32.mrb[0].mxu0
      %2536 = vdwg.mxu0
      %s2537 = scalar_lea.vmem %s3, 32
      %v2538 = vld [vmem:[%s2537] sm:$0xff]
      %v2539 = vld [vmem:[%s2537 + $0x8] sm:$0xff]
      %v2541 = vsel %vm2156, %v2499, 0
      %v2544 = vsel %vm2156, %v2504, 0
      %v2547 = vsel %vm2156, %v2509, 0
      %v2550 = vsel %vm2156, %v2514, 0
      %v2553 = vsel %vm2156, %v2519, 0
      %v2556 = vsel %vm2156, %v2524, 0
      %v2559 = vsel %vm2156, %v2529, 0
      %v2562 = vsel %vm2156, %v2534, 0
      %2564 = vmatprep.subr.mxu0 0.0
      %2565 = vmatpush1.msra.mxu0 %v2538
      %2566 = vmatprep.subr.mxu0 0.0
      %2567 = vmatpush1.msra.mxu0 %v2539
      %2568 = vmatprep.subr.mxu0 0.0
      %2569 = vmatpush1.msra.mxu0 0.0
      %2570 = vmatprep.subr.mxu0 0.0
      %2571 = vmatpush1.msra.mxu0 0.0
      %2572 = vmatprep.subr.mxu0 0.0
      %2573 = vmatpush1.msra.mxu0 0.0
      %2574 = vmatprep.subr.mxu0 0.0
      %2575 = vmatpush1.msra.mxu0 0.0
      %2576 = vmatprep.subr.mxu0 0.0
      %2577 = vmatpush1.msra.mxu0 0.0
      %2578 = vmatprep.subr.mxu0 0.0
      %2579 = vmatpush1.msra.mxu0 0.0
      %2580 = vmatprep.subr.mxu0 0.0
      %2581 = vmatpush1.msra.mxu0 0.0
      %2582 = vmatprep.subr.mxu0 0.0
      %2583 = vmatpush1.msra.mxu0 0.0
      %2584 = vmatprep.subr.mxu0 0.0
      %2585 = vmatpush1.msra.mxu0 0.0
      %2586 = vmatprep.subr.mxu0 0.0
      %2587 = vmatpush1.msra.mxu0 0.0
      %2588 = vmatprep.subr.mxu0 0.0
      %2589 = vmatpush1.msra.mxu0 0.0
      %2590 = vmatprep.subr.mxu0 0.0
      %2591 = vmatpush1.msra.mxu0 0.0
      %2592 = vmatprep.subr.mxu0 0.0
      %2593 = vmatpush1.msra.mxu0 0.0
      %2594 = vmatprep.subr.mxu0 0.0
      %2595 = vmatpush1.msra.mxu0 0.0
      %2596 = vmatprep.subr.mxu0 0.0
      %2597 = vmatpush1.msra.mxu0 0.0
      %2598 = vmatprep.subr.mxu0 0.0
      %2599 = vmatpush1.msra.mxu0 0.0
      %2600 = vmatprep.subr.mxu0 0.0
      %2601 = vmatpush1.msra.mxu0 0.0
      %2602 = vmatprep.subr.mxu0 0.0
      %2603 = vmatpush1.msra.mxu0 0.0
      %2604 = vmatprep.subr.mxu0 0.0
      %2605 = vmatpush1.msra.mxu0 0.0
      %2606 = vmatprep.subr.mxu0 0.0
      %2607 = vmatpush1.msra.mxu0 0.0
      %2608 = vmatprep.subr.mxu0 0.0
      %2609 = vmatpush1.msra.mxu0 0.0
      %2610 = vmatprep.subr.mxu0 0.0
      %2611 = vmatpush1.msra.mxu0 0.0
      %2612 = vmatprep.subr.mxu0 0.0
      %2613 = vmatpush1.msra.mxu0 0.0
      %2614 = vmatprep.subr.mxu0 0.0
      %2615 = vmatpush1.msra.mxu0 0.0
      %2616 = vmatprep.subr.mxu0 0.0
      %2617 = vmatpush1.msra.mxu0 0.0
      %2618 = vmatprep.subr.mxu0 0.0
      %2619 = vmatpush1.msra.mxu0 0.0
      %2620 = vmatprep.subr.mxu0 0.0
      %2621 = vmatpush1.msra.mxu0 0.0
      %2622 = vmatprep.subr.mxu0 0.0
      %2623 = vmatpush1.msra.mxu0 0.0
      %2624 = vmatprep.subr.mxu0 0.0
      %2625 = vmatpush1.msra.mxu0 0.0
      %2626 = vmatprep.subr.mxu0 0.0
      %2627 = vmatpush1.msra.mxu0 0.0
      %2628 = vmatprep.mubr.f32.mxu0 0.0
      %2629 = vmatmul.mubr.f32.gmra.mrb[0].mxu0 %v2541
      %v2630 = vpop.f32.mrb[0].mxu0
      %v2631 = vadd.f32 0.0, %v2630
      %v2632 = vpop.f32.mrb[0].mxu0
      %2633 = vmatprep.mubr.f32.mxu0 0.0
      %2634 = vmatmul.mubr.f32.gmra.mrb[0].mxu0 %v2544
      %v2635 = vpop.f32.mrb[0].mxu0
      %v2636 = vadd.f32 0.0, %v2635
      %v2637 = vpop.f32.mrb[0].mxu0
      %2638 = vmatprep.mubr.f32.mxu0 0.0
      %2639 = vmatmul.mubr.f32.gmra.mrb[0].mxu0 %v2547
      %v2640 = vpop.f32.mrb[0].mxu0
      %v2641 = vadd.f32 0.0, %v2640
      %v2642 = vpop.f32.mrb[0].mxu0
      %2643 = vmatprep.mubr.f32.mxu0 0.0
      %2644 = vmatmul.mubr.f32.gmra.mrb[0].mxu0 %v2550
      %v2645 = vpop.f32.mrb[0].mxu0
      %v2646 = vadd.f32 0.0, %v2645
      %v2647 = vpop.f32.mrb[0].mxu0
      %2648 = vmatprep.mubr.f32.mxu0 0.0
      %2649 = vmatmul.mubr.f32.gmra.mrb[0].mxu0 %v2553
      %v2650 = vpop.f32.mrb[0].mxu0
      %v2651 = vadd.f32 0.0, %v2650
      %v2652 = vpop.f32.mrb[0].mxu0
      %2653 = vmatprep.mubr.f32.mxu0 0.0
      %2654 = vmatmul.mubr.f32.gmra.mrb[0].mxu0 %v2556
      %v2655 = vpop.f32.mrb[0].mxu0
      %v2656 = vadd.f32 0.0, %v2655
      %v2657 = vpop.f32.mrb[0].mxu0
      %2658 = vmatprep.mubr.f32.mxu0 0.0
      %2659 = vmatmul.mubr.f32.gmra.mrb[0].mxu0 %v2559
      %v2660 = vpop.f32.mrb[0].mxu0
      %v2661 = vadd.f32 0.0, %v2660
      %v2662 = vpop.f32.mrb[0].mxu0
      %2663 = vmatprep.mubr.f32.mxu0 0.0
      %2664 = vmatmul.mubr.f32.gmra.mrb[0].mxu0 %v2562
      %v2665 = vpop.f32.mrb[0].mxu0
      %v2666 = vadd.f32 0.0, %v2665
      %v2667 = vpop.f32.mrb[0].mxu0
      %2668 = vdwg.mxu0
      %v2669 = vadd.f32 %v2377, %v2631
      %v2670 = vadd.f32 %v2382, %v2636
      %v2671 = vadd.f32 %v2387, %v2641
      %v2672 = vadd.f32 %v2392, %v2646
      %v2673 = vadd.f32 %v2397, %v2651
      %v2674 = vadd.f32 %v2402, %v2656
      %v2675 = vadd.f32 %v2407, %v2661
      %v2676 = vadd.f32 %v2412, %v2666
      %s2677 = scalar_lea.vmem %s4, 384
      %v2678 = vld [vmem:[%s2677] sm:$0xff]
      %v2679 = vld [vmem:[%s2677 + $0x8] sm:$0xff]
      %v2680 = vld [vmem:[%s2677 + $0x10] sm:$0xff]
      %v2681 = vld [vmem:[%s2677 + $0x18] sm:$0xff]
      %v2682 = vld [vmem:[%s2677 + $0x20] sm:$0xff]
      %v2683 = vld [vmem:[%s2677 + $0x28] sm:$0xff]
      %v2684 = vld [vmem:[%s2677 + $0x30] sm:$0xff]
      %v2685 = vld [vmem:[%s2677 + $0x38] sm:$0xff]
      %v2686 = vld [vmem:[%s2677 + $0x40] sm:$0xff]
      %v2687 = vld [vmem:[%s2677 + $0x48] sm:$0xff]
      %v2688 = vld [vmem:[%s2677 + $0x50] sm:$0xff]
      %v2689 = vld [vmem:[%s2677 + $0x58] sm:$0xff]
      %v2690 = vld [vmem:[%s2677 + $0x60] sm:$0xff]
      %v2691 = vld [vmem:[%s2677 + $0x68] sm:$0xff]
      %v2692 = vld [vmem:[%s2677 + $0x70] sm:$0xff]
      %v2693 = vld [vmem:[%s2677 + $0x78] sm:$0xff]
      %2694 = vmatprep.subr.mxu0 0.0
      %2695 = vmatpush1.msra.mxu0 %v1876
      %2696 = vmatprep.subr.mxu0 0.0
      %2697 = vmatpush1.msra.mxu0 %v1877
      %2698 = vmatprep.subr.mxu0 0.0
      %2699 = vmatpush1.msra.mxu0 %v1878
      %2700 = vmatprep.subr.mxu0 0.0
      %2701 = vmatpush1.msra.mxu0 %v1879
      %2702 = vmatprep.subr.mxu0 0.0
      %2703 = vmatpush1.msra.mxu0 %v1880
      %2704 = vmatprep.subr.mxu0 0.0
      %2705 = vmatpush1.msra.mxu0 %v1881
      %2706 = vmatprep.subr.mxu0 0.0
      %2707 = vmatpush1.msra.mxu0 %v1882
      %2708 = vmatprep.subr.mxu0 0.0
      %2709 = vmatpush1.msra.mxu0 %v1883
      %2710 = vmatprep.subr.mxu0 0.0
      %2711 = vmatpush1.msra.mxu0 %v1884
      %2712 = vmatprep.subr.mxu0 0.0
      %2713 = vmatpush1.msra.mxu0 %v1885
      %2714 = vmatprep.subr.mxu0 0.0
      %2715 = vmatpush1.msra.mxu0 %v1886
      %2716 = vmatprep.subr.mxu0 0.0
      %2717 = vmatpush1.msra.mxu0 %v1887
      %2718 = vmatprep.subr.mxu0 0.0
      %2719 = vmatpush1.msra.mxu0 %v1888
      %2720 = vmatprep.subr.mxu0 0.0
      %2721 = vmatpush1.msra.mxu0 %v1889
      %2722 = vmatprep.subr.mxu0 0.0
      %2723 = vmatpush1.msra.mxu0 %v1890
      %2724 = vmatprep.subr.mxu0 0.0
      %2725 = vmatpush1.msra.mxu0 %v1891
      %2726 = vmatprep.subr.mxu0 0.0
      %2727 = vmatpush1.msra.mxu0 %v1892
      %2728 = vmatprep.subr.mxu0 0.0
      %2729 = vmatpush1.msra.mxu0 %v1893
      %2730 = vmatprep.subr.mxu0 0.0
      %2731 = vmatpush1.msra.mxu0 %v1894
      %2732 = vmatprep.subr.mxu0 0.0
      %2733 = vmatpush1.msra.mxu0 %v1895
      %2734 = vmatprep.subr.mxu0 0.0
      %2735 = vmatpush1.msra.mxu0 %v1896
      %2736 = vmatprep.subr.mxu0 0.0
      %2737 = vmatpush1.msra.mxu0 %v1897
      %2738 = vmatprep.subr.mxu0 0.0
      %2739 = vmatpush1.msra.mxu0 %v1898
      %2740 = vmatprep.subr.mxu0 0.0
      %2741 = vmatpush1.msra.mxu0 %v1899
      %2742 = vmatprep.subr.mxu0 0.0
      %2743 = vmatpush1.msra.mxu0 %v1900
      %2744 = vmatprep.subr.mxu0 0.0
      %2745 = vmatpush1.msra.mxu0 %v1901
      %2746 = vmatprep.subr.mxu0 0.0
      %2747 = vmatpush1.msra.mxu0 %v1902
      %2748 = vmatprep.subr.mxu0 0.0
      %2749 = vmatpush1.msra.mxu0 %v1903
      %2750 = vmatprep.subr.mxu0 0.0
      %2751 = vmatpush1.msra.mxu0 %v1904
      %2752 = vmatprep.subr.mxu0 0.0
      %2753 = vmatpush1.msra.mxu0 %v1905
      %2754 = vmatprep.subr.mxu0 0.0
      %2755 = vmatpush1.msra.mxu0 %v1906
      %2756 = vmatprep.subr.mxu0 0.0
      %2757 = vmatpush1.msra.mxu0 %v1907
      %2758 = vmatprep.mubr.f32.mxu0 %v2679
      %2759 = vmatmul.mubr.f32.gmra.mrb[0].mxu0 %v2678
      %v2760 = vpop.f32.mrb[0].mxu0
      %v2761 = vadd.f32 0.0, %v2760
      %v2762 = vpop.f32.mrb[0].mxu0
      %2763 = vmatprep.mubr.f32.mxu0 %v2681
      %2764 = vmatmul.mubr.f32.gmra.mrb[0].mxu0 %v2680
      %v2765 = vpop.f32.mrb[0].mxu0
      %v2766 = vadd.f32 0.0, %v2765
      %v2767 = vpop.f32.mrb[0].mxu0
      %2768 = vmatprep.mubr.f32.mxu0 %v2683
      %2769 = vmatmul.mubr.f32.gmra.mrb[0].mxu0 %v2682
      %v2770 = vpop.f32.mrb[0].mxu0
      %v2771 = vadd.f32 0.0, %v2770
      %v2772 = vpop.f32.mrb[0].mxu0
      %2773 = vmatprep.mubr.f32.mxu0 %v2685
      %2774 = vmatmul.mubr.f32.gmra.mrb[0].mxu0 %v2684
      %v2775 = vpop.f32.mrb[0].mxu0
      %v2776 = vadd.f32 0.0, %v2775
      %v2777 = vpop.f32.mrb[0].mxu0
      %2778 = vmatprep.mubr.f32.mxu0 %v2687
      %2779 = vmatmul.mubr.f32.gmra.mrb[0].mxu0 %v2686
      %v2780 = vpop.f32.mrb[0].mxu0
      %v2781 = vadd.f32 0.0, %v2780
      %v2782 = vpop.f32.mrb[0].mxu0
      %2783 = vmatprep.mubr.f32.mxu0 %v2689
      %2784 = vmatmul.mubr.f32.gmra.mrb[0].mxu0 %v2688
      %v2785 = vpop.f32.mrb[0].mxu0
      %v2786 = vadd.f32 0.0, %v2785
      %v2787 = vpop.f32.mrb[0].mxu0
      %2788 = vmatprep.mubr.f32.mxu0 %v2691
      %2789 = vmatmul.mubr.f32.gmra.mrb[0].mxu0 %v2690
      %v2790 = vpop.f32.mrb[0].mxu0
      %v2791 = vadd.f32 0.0, %v2790
      %v2792 = vpop.f32.mrb[0].mxu0
      %2793 = vmatprep.mubr.f32.mxu0 %v2693
      %2794 = vmatmul.mubr.f32.gmra.mrb[0].mxu0 %v2692
      %v2795 = vpop.f32.mrb[0].mxu0
      %v2796 = vadd.f32 0.0, %v2795
      %v2797 = vpop.f32.mrb[0].mxu0
      %2798 = vdwg.mxu0
      %s2799 = scalar_lea.vmem %s3, 48
      %v2800 = vld [vmem:[%s2799] sm:$0xff]
      %v2801 = vld [vmem:[%s2799 + $0x8] sm:$0xff]
      %v2803 = vsel %vm2156, %v2761, 0
      %v2806 = vsel %vm2156, %v2766, 0
      %v2809 = vsel %vm2156, %v2771, 0
      %v2812 = vsel %vm2156, %v2776, 0
      %v2815 = vsel %vm2156, %v2781, 0
      %v2818 = vsel %vm2156, %v2786, 0
      %v2821 = vsel %vm2156, %v2791, 0
      %v2824 = vsel %vm2156, %v2796, 0
      %2826 = vmatprep.subr.mxu0 0.0
      %2827 = vmatpush1.msra.mxu0 %v2800
      %2828 = vmatprep.subr.mxu0 0.0
      %2829 = vmatpush1.msra.mxu0 %v2801
      %2830 = vmatprep.subr.mxu0 0.0
      %2831 = vmatpush1.msra.mxu0 0.0
      %2832 = vmatprep.subr.mxu0 0.0
      %2833 = vmatpush1.msra.mxu0 0.0
      %2834 = vmatprep.subr.mxu0 0.0
      %2835 = vmatpush1.msra.mxu0 0.0
      %2836 = vmatprep.subr.mxu0 0.0
      %2837 = vmatpush1.msra.mxu0 0.0
      %2838 = vmatprep.subr.mxu0 0.0
      %2839 = vmatpush1.msra.mxu0 0.0
      %2840 = vmatprep.subr.mxu0 0.0
      %2841 = vmatpush1.msra.mxu0 0.0
      %2842 = vmatprep.subr.mxu0 0.0
      %2843 = vmatpush1.msra.mxu0 0.0
      %2844 = vmatprep.subr.mxu0 0.0
      %2845 = vmatpush1.msra.mxu0 0.0
      %2846 = vmatprep.subr.mxu0 0.0
      %2847 = vmatpush1.msra.mxu0 0.0
      %2848 = vmatprep.subr.mxu0 0.0
      %2849 = vmatpush1.msra.mxu0 0.0
      %2850 = vmatprep.subr.mxu0 0.0
      %2851 = vmatpush1.msra.mxu0 0.0
      %2852 = vmatprep.subr.mxu0 0.0
      %2853 = vmatpush1.msra.mxu0 0.0
      %2854 = vmatprep.subr.mxu0 0.0
      %2855 = vmatpush1.msra.mxu0 0.0
      %2856 = vmatprep.subr.mxu0 0.0
      %2857 = vmatpush1.msra.mxu0 0.0
      %2858 = vmatprep.subr.mxu0 0.0
      %2859 = vmatpush1.msra.mxu0 0.0
      %2860 = vmatprep.subr.mxu0 0.0
      %2861 = vmatpush1.msra.mxu0 0.0
      %2862 = vmatprep.subr.mxu0 0.0
      %2863 = vmatpush1.msra.mxu0 0.0
      %2864 = vmatprep.subr.mxu0 0.0
      %2865 = vmatpush1.msra.mxu0 0.0
      %2866 = vmatprep.subr.mxu0 0.0
      %2867 = vmatpush1.msra.mxu0 0.0
      %2868 = vmatprep.subr.mxu0 0.0
      %2869 = vmatpush1.msra.mxu0 0.0
      %2870 = vmatprep.subr.mxu0 0.0
      %2871 = vmatpush1.msra.mxu0 0.0
      %2872 = vmatprep.subr.mxu0 0.0
      %2873 = vmatpush1.msra.mxu0 0.0
      %2874 = vmatprep.subr.mxu0 0.0
      %2875 = vmatpush1.msra.mxu0 0.0
      %2876 = vmatprep.subr.mxu0 0.0
      %2877 = vmatpush1.msra.mxu0 0.0
      %2878 = vmatprep.subr.mxu0 0.0
      %2879 = vmatpush1.msra.mxu0 0.0
      %2880 = vmatprep.subr.mxu0 0.0
      %2881 = vmatpush1.msra.mxu0 0.0
      %2882 = vmatprep.subr.mxu0 0.0
      %2883 = vmatpush1.msra.mxu0 0.0
      %2884 = vmatprep.subr.mxu0 0.0
      %2885 = vmatpush1.msra.mxu0 0.0
      %2886 = vmatprep.subr.mxu0 0.0
      %2887 = vmatpush1.msra.mxu0 0.0
      %2888 = vmatprep.subr.mxu0 0.0
      %2889 = vmatpush1.msra.mxu0 0.0
      %2890 = vmatprep.mubr.f32.mxu0 0.0
      %2891 = vmatmul.mubr.f32.gmra.mrb[0].mxu0 %v2803
      %v2892 = vpop.f32.mrb[0].mxu0
      %v2893 = vadd.f32 0.0, %v2892
      %v2894 = vpop.f32.mrb[0].mxu0
      %2895 = vmatprep.mubr.f32.mxu0 0.0
      %2896 = vmatmul.mubr.f32.gmra.mrb[0].mxu0 %v2806
      %v2897 = vpop.f32.mrb[0].mxu0
      %v2898 = vadd.f32 0.0, %v2897
      %v2899 = vpop.f32.mrb[0].mxu0
      %2900 = vmatprep.mubr.f32.mxu0 0.0
      %2901 = vmatmul.mubr.f32.gmra.mrb[0].mxu0 %v2809
      %v2902 = vpop.f32.mrb[0].mxu0
      %v2903 = vadd.f32 0.0, %v2902
      %v2904 = vpop.f32.mrb[0].mxu0
      %2905 = vmatprep.mubr.f32.mxu0 0.0
      %2906 = vmatmul.mubr.f32.gmra.mrb[0].mxu0 %v2812
      %v2907 = vpop.f32.mrb[0].mxu0
      %v2908 = vadd.f32 0.0, %v2907
      %v2909 = vpop.f32.mrb[0].mxu0
      %2910 = vmatprep.mubr.f32.mxu0 0.0
      %2911 = vmatmul.mubr.f32.gmra.mrb[0].mxu0 %v2815
      %v2912 = vpop.f32.mrb[0].mxu0
      %v2913 = vadd.f32 0.0, %v2912
      %v2914 = vpop.f32.mrb[0].mxu0
      %2915 = vmatprep.mubr.f32.mxu0 0.0
      %2916 = vmatmul.mubr.f32.gmra.mrb[0].mxu0 %v2818
      %v2917 = vpop.f32.mrb[0].mxu0
      %v2918 = vadd.f32 0.0, %v2917
      %v2919 = vpop.f32.mrb[0].mxu0
      %2920 = vmatprep.mubr.f32.mxu0 0.0
      %2921 = vmatmul.mubr.f32.gmra.mrb[0].mxu0 %v2821
      %v2922 = vpop.f32.mrb[0].mxu0
      %v2923 = vadd.f32 0.0, %v2922
      %v2924 = vpop.f32.mrb[0].mxu0
      %2925 = vmatprep.mubr.f32.mxu0 0.0
      %2926 = vmatmul.mubr.f32.gmra.mrb[0].mxu0 %v2824
      %v2927 = vpop.f32.mrb[0].mxu0
      %v2928 = vadd.f32 0.0, %v2927
      %v2929 = vpop.f32.mrb[0].mxu0
      %2930 = vdwg.mxu0
      %v2931 = vadd.f32 %v2669, %v2893
      %v2932 = vadd.f32 %v2670, %v2898
      %v2933 = vadd.f32 %v2671, %v2903
      %v2934 = vadd.f32 %v2672, %v2908
      %v2935 = vadd.f32 %v2673, %v2913
      %v2936 = vadd.f32 %v2674, %v2918
      %v2937 = vadd.f32 %v2675, %v2923
      %v2938 = vadd.f32 %v2676, %v2928
      %s2939 = scalar_lea.vmem %s4, 512
      %v2940 = vld [vmem:[%s2939] sm:$0xff]
      %v2941 = vld [vmem:[%s2939 + $0x8] sm:$0xff]
      %v2942 = vld [vmem:[%s2939 + $0x10] sm:$0xff]
      %v2943 = vld [vmem:[%s2939 + $0x18] sm:$0xff]
      %v2944 = vld [vmem:[%s2939 + $0x20] sm:$0xff]
      %v2945 = vld [vmem:[%s2939 + $0x28] sm:$0xff]
      %v2946 = vld [vmem:[%s2939 + $0x30] sm:$0xff]
      %v2947 = vld [vmem:[%s2939 + $0x38] sm:$0xff]
      %v2948 = vld [vmem:[%s2939 + $0x40] sm:$0xff]
      %v2949 = vld [vmem:[%s2939 + $0x48] sm:$0xff]
      %v2950 = vld [vmem:[%s2939 + $0x50] sm:$0xff]
      %v2951 = vld [vmem:[%s2939 + $0x58] sm:$0xff]
      %v2952 = vld [vmem:[%s2939 + $0x60] sm:$0xff]
      %v2953 = vld [vmem:[%s2939 + $0x68] sm:$0xff]
      %v2954 = vld [vmem:[%s2939 + $0x70] sm:$0xff]
      %v2955 = vld [vmem:[%s2939 + $0x78] sm:$0xff]
      %2956 = vmatprep.subr.mxu0 0.0
      %2957 = vmatpush1.msra.mxu0 %v1876
      %2958 = vmatprep.subr.mxu0 0.0
      %2959 = vmatpush1.msra.mxu0 %v1877
      %2960 = vmatprep.subr.mxu0 0.0
      %2961 = vmatpush1.msra.mxu0 %v1878
      %2962 = vmatprep.subr.mxu0 0.0
      %2963 = vmatpush1.msra.mxu0 %v1879
      %2964 = vmatprep.subr.mxu0 0.0
      %2965 = vmatpush1.msra.mxu0 %v1880
      %2966 = vmatprep.subr.mxu0 0.0
      %2967 = vmatpush1.msra.mxu0 %v1881
      %2968 = vmatprep.subr.mxu0 0.0
      %2969 = vmatpush1.msra.mxu0 %v1882
      %2970 = vmatprep.subr.mxu0 0.0
      %2971 = vmatpush1.msra.mxu0 %v1883
      %2972 = vmatprep.subr.mxu0 0.0
      %2973 = vmatpush1.msra.mxu0 %v1884
      %2974 = vmatprep.subr.mxu0 0.0
      %2975 = vmatpush1.msra.mxu0 %v1885
      %2976 = vmatprep.subr.mxu0 0.0
      %2977 = vmatpush1.msra.mxu0 %v1886
      %2978 = vmatprep.subr.mxu0 0.0
      %2979 = vmatpush1.msra.mxu0 %v1887
      %2980 = vmatprep.subr.mxu0 0.0
      %2981 = vmatpush1.msra.mxu0 %v1888
      %2982 = vmatprep.subr.mxu0 0.0
      %2983 = vmatpush1.msra.mxu0 %v1889
      %2984 = vmatprep.subr.mxu0 0.0
      %2985 = vmatpush1.msra.mxu0 %v1890
      %2986 = vmatprep.subr.mxu0 0.0
      %2987 = vmatpush1.msra.mxu0 %v1891
      %2988 = vmatprep.subr.mxu0 0.0
      %2989 = vmatpush1.msra.mxu0 %v1892
      %2990 = vmatprep.subr.mxu0 0.0
      %2991 = vmatpush1.msra.mxu0 %v1893
      %2992 = vmatprep.subr.mxu0 0.0
      %2993 = vmatpush1.msra.mxu0 %v1894
      %2994 = vmatprep.subr.mxu0 0.0
      %2995 = vmatpush1.msra.mxu0 %v1895
      %2996 = vmatprep.subr.mxu0 0.0
      %2997 = vmatpush1.msra.mxu0 %v1896
      %2998 = vmatprep.subr.mxu0 0.0
      %2999 = vmatpush1.msra.mxu0 %v1897
      %3000 = vmatprep.subr.mxu0 0.0
      %3001 = vmatpush1.msra.mxu0 %v1898
      %3002 = vmatprep.subr.mxu0 0.0
      %3003 = vmatpush1.msra.mxu0 %v1899
      %3004 = vmatprep.subr.mxu0 0.0
      %3005 = vmatpush1.msra.mxu0 %v1900
      %3006 = vmatprep.subr.mxu0 0.0
      %3007 = vmatpush1.msra.mxu0 %v1901
      %3008 = vmatprep.subr.mxu0 0.0
      %3009 = vmatpush1.msra.mxu0 %v1902
      %3010 = vmatprep.subr.mxu0 0.0
      %3011 = vmatpush1.msra.mxu0 %v1903
      %3012 = vmatprep.subr.mxu0 0.0
      %3013 = vmatpush1.msra.mxu0 %v1904
      %3014 = vmatprep.subr.mxu0 0.0
      %3015 = vmatpush1.msra.mxu0 %v1905
      %3016 = vmatprep.subr.mxu0 0.0
      %3017 = vmatpush1.msra.mxu0 %v1906
      %3018 = vmatprep.subr.mxu0 0.0
      %3019 = vmatpush1.msra.mxu0 %v1907
      %3020 = vmatprep.mubr.f32.mxu0 %v2941
      %3021 = vmatmul.mubr.f32.gmra.mrb[0].mxu0 %v2940
      %v3022 = vpop.f32.mrb[0].mxu0
      %v3023 = vadd.f32 0.0, %v3022
      %v3024 = vpop.f32.mrb[0].mxu0
      %3025 = vmatprep.mubr.f32.mxu0 %v2943
      %3026 = vmatmul.mubr.f32.gmra.mrb[0].mxu0 %v2942
      %v3027 = vpop.f32.mrb[0].mxu0
      %v3028 = vadd.f32 0.0, %v3027
      %v3029 = vpop.f32.mrb[0].mxu0
      %3030 = vmatprep.mubr.f32.mxu0 %v2945
      %3031 = vmatmul.mubr.f32.gmra.mrb[0].mxu0 %v2944
      %v3032 = vpop.f32.mrb[0].mxu0
      %v3033 = vadd.f32 0.0, %v3032
      %v3034 = vpop.f32.mrb[0].mxu0
      %3035 = vmatprep.mubr.f32.mxu0 %v2947
      %3036 = vmatmul.mubr.f32.gmra.mrb[0].mxu0 %v2946
      %v3037 = vpop.f32.mrb[0].mxu0
      %v3038 = vadd.f32 0.0, %v3037
      %v3039 = vpop.f32.mrb[0].mxu0
      %3040 = vmatprep.mubr.f32.mxu0 %v2949
      %3041 = vmatmul.mubr.f32.gmra.mrb[0].mxu0 %v2948
      %v3042 = vpop.f32.mrb[0].mxu0
      %v3043 = vadd.f32 0.0, %v3042
      %v3044 = vpop.f32.mrb[0].mxu0
      %3045 = vmatprep.mubr.f32.mxu0 %v2951
      %3046 = vmatmul.mubr.f32.gmra.mrb[0].mxu0 %v2950
      %v3047 = vpop.f32.mrb[0].mxu0
      %v3048 = vadd.f32 0.0, %v3047
      %v3049 = vpop.f32.mrb[0].mxu0
      %3050 = vmatprep.mubr.f32.mxu0 %v2953
      %3051 = vmatmul.mubr.f32.gmra.mrb[0].mxu0 %v2952
      %v3052 = vpop.f32.mrb[0].mxu0
      %v3053 = vadd.f32 0.0, %v3052
      %v3054 = vpop.f32.mrb[0].mxu0
      %3055 = vmatprep.mubr.f32.mxu0 %v2955
      %3056 = vmatmul.mubr.f32.gmra.mrb[0].mxu0 %v2954
      %v3057 = vpop.f32.mrb[0].mxu0
      %v3058 = vadd.f32 0.0, %v3057
      %v3059 = vpop.f32.mrb[0].mxu0
      %3060 = vdwg.mxu0
      %s3061 = scalar_lea.vmem %s3, 64
      %v3062 = vld [vmem:[%s3061] sm:$0xff]
      %v3063 = vld [vmem:[%s3061 + $0x8] sm:$0xff]
      %v3065 = vsel %vm2156, %v3023, 0
      %v3068 = vsel %vm2156, %v3028, 0
      %v3071 = vsel %vm2156, %v3033, 0
      %v3074 = vsel %vm2156, %v3038, 0
      %v3077 = vsel %vm2156, %v3043, 0
      %v3080 = vsel %vm2156, %v3048, 0
      %v3083 = vsel %vm2156, %v3053, 0
      %v3086 = vsel %vm2156, %v3058, 0
      %3088 = vmatprep.subr.mxu0 0.0
      %3089 = vmatpush1.msra.mxu0 %v3062
      %3090 = vmatprep.subr.mxu0 0.0
      %3091 = vmatpush1.msra.mxu0 %v3063
      %3092 = vmatprep.subr.mxu0 0.0
      %3093 = vmatpush1.msra.mxu0 0.0
      %3094 = vmatprep.subr.mxu0 0.0
      %3095 = vmatpush1.msra.mxu0 0.0
      %3096 = vmatprep.subr.mxu0 0.0
      %3097 = vmatpush1.msra.mxu0 0.0
      %3098 = vmatprep.subr.mxu0 0.0
      %3099 = vmatpush1.msra.mxu0 0.0
      %3100 = vmatprep.subr.mxu0 0.0
      %3101 = vmatpush1.msra.mxu0 0.0
      %3102 = vmatprep.subr.mxu0 0.0
      %3103 = vmatpush1.msra.mxu0 0.0
      %3104 = vmatprep.subr.mxu0 0.0
      %3105 = vmatpush1.msra.mxu0 0.0
      %3106 = vmatprep.subr.mxu0 0.0
      %3107 = vmatpush1.msra.mxu0 0.0
      %3108 = vmatprep.subr.mxu0 0.0
      %3109 = vmatpush1.msra.mxu0 0.0
      %3110 = vmatprep.subr.mxu0 0.0
      %3111 = vmatpush1.msra.mxu0 0.0
      %3112 = vmatprep.subr.mxu0 0.0
      %3113 = vmatpush1.msra.mxu0 0.0
      %3114 = vmatprep.subr.mxu0 0.0
      %3115 = vmatpush1.msra.mxu0 0.0
      %3116 = vmatprep.subr.mxu0 0.0
      %3117 = vmatpush1.msra.mxu0 0.0
      %3118 = vmatprep.subr.mxu0 0.0
      %3119 = vmatpush1.msra.mxu0 0.0
      %3120 = vmatprep.subr.mxu0 0.0
      %3121 = vmatpush1.msra.mxu0 0.0
      %3122 = vmatprep.subr.mxu0 0.0
      %3123 = vmatpush1.msra.mxu0 0.0
      %3124 = vmatprep.subr.mxu0 0.0
      %3125 = vmatpush1.msra.mxu0 0.0
      %3126 = vmatprep.subr.mxu0 0.0
      %3127 = vmatpush1.msra.mxu0 0.0
      %3128 = vmatprep.subr.mxu0 0.0
      %3129 = vmatpush1.msra.mxu0 0.0
      %3130 = vmatprep.subr.mxu0 0.0
      %3131 = vmatpush1.msra.mxu0 0.0
      %3132 = vmatprep.subr.mxu0 0.0
      %3133 = vmatpush1.msra.mxu0 0.0
      %3134 = vmatprep.subr.mxu0 0.0
      %3135 = vmatpush1.msra.mxu0 0.0
      %3136 = vmatprep.subr.mxu0 0.0
      %3137 = vmatpush1.msra.mxu0 0.0
      %3138 = vmatprep.subr.mxu0 0.0
      %3139 = vmatpush1.msra.mxu0 0.0
      %3140 = vmatprep.subr.mxu0 0.0
      %3141 = vmatpush1.msra.mxu0 0.0
      %3142 = vmatprep.subr.mxu0 0.0
      %3143 = vmatpush1.msra.mxu0 0.0
      %3144 = vmatprep.subr.mxu0 0.0
      %3145 = vmatpush1.msra.mxu0 0.0
      %3146 = vmatprep.subr.mxu0 0.0
      %3147 = vmatpush1.msra.mxu0 0.0
      %3148 = vmatprep.subr.mxu0 0.0
      %3149 = vmatpush1.msra.mxu0 0.0
      %3150 = vmatprep.subr.mxu0 0.0
      %3151 = vmatpush1.msra.mxu0 0.0
      %3152 = vmatprep.mubr.f32.mxu0 0.0
      %3153 = vmatmul.mubr.f32.gmra.mrb[0].mxu0 %v3065
      %v3154 = vpop.f32.mrb[0].mxu0
      %v3155 = vadd.f32 0.0, %v3154
      %v3156 = vpop.f32.mrb[0].mxu0
      %3157 = vmatprep.mubr.f32.mxu0 0.0
      %3158 = vmatmul.mubr.f32.gmra.mrb[0].mxu0 %v3068
      %v3159 = vpop.f32.mrb[0].mxu0
      %v3160 = vadd.f32 0.0, %v3159
      %v3161 = vpop.f32.mrb[0].mxu0
      %3162 = vmatprep.mubr.f32.mxu0 0.0
      %3163 = vmatmul.mubr.f32.gmra.mrb[0].mxu0 %v3071
      %v3164 = vpop.f32.mrb[0].mxu0
      %v3165 = vadd.f32 0.0, %v3164
      %v3166 = vpop.f32.mrb[0].mxu0
      %3167 = vmatprep.mubr.f32.mxu0 0.0
      %3168 = vmatmul.mubr.f32.gmra.mrb[0].mxu0 %v3074
      %v3169 = vpop.f32.mrb[0].mxu0
      %v3170 = vadd.f32 0.0, %v3169
      %v3171 = vpop.f32.mrb[0].mxu0
      %3172 = vmatprep.mubr.f32.mxu0 0.0
      %3173 = vmatmul.mubr.f32.gmra.mrb[0].mxu0 %v3077
      %v3174 = vpop.f32.mrb[0].mxu0
      %v3175 = vadd.f32 0.0, %v3174
      %v3176 = vpop.f32.mrb[0].mxu0
      %3177 = vmatprep.mubr.f32.mxu0 0.0
      %3178 = vmatmul.mubr.f32.gmra.mrb[0].mxu0 %v3080
      %v3179 = vpop.f32.mrb[0].mxu0
      %v3180 = vadd.f32 0.0, %v3179
      %v3181 = vpop.f32.mrb[0].mxu0
      %3182 = vmatprep.mubr.f32.mxu0 0.0
      %3183 = vmatmul.mubr.f32.gmra.mrb[0].mxu0 %v3083
      %v3184 = vpop.f32.mrb[0].mxu0
      %v3185 = vadd.f32 0.0, %v3184
      %v3186 = vpop.f32.mrb[0].mxu0
      %3187 = vmatprep.mubr.f32.mxu0 0.0
      %3188 = vmatmul.mubr.f32.gmra.mrb[0].mxu0 %v3086
      %v3189 = vpop.f32.mrb[0].mxu0
      %v3190 = vadd.f32 0.0, %v3189
      %v3191 = vpop.f32.mrb[0].mxu0
      %3192 = vdwg.mxu0
      %v3193 = vadd.f32 %v2931, %v3155
      %v3194 = vadd.f32 %v2932, %v3160
      %v3195 = vadd.f32 %v2933, %v3165
      %v3196 = vadd.f32 %v2934, %v3170
      %v3197 = vadd.f32 %v2935, %v3175
      %v3198 = vadd.f32 %v2936, %v3180
      %v3199 = vadd.f32 %v2937, %v3185
      %v3200 = vadd.f32 %v2938, %v3190
      %s3201 = scalar_lea.vmem %s4, 640
      %v3202 = vld [vmem:[%s3201] sm:$0xff]
      %v3203 = vld [vmem:[%s3201 + $0x8] sm:$0xff]
      %v3204 = vld [vmem:[%s3201 + $0x10] sm:$0xff]
      %v3205 = vld [vmem:[%s3201 + $0x18] sm:$0xff]
      %v3206 = vld [vmem:[%s3201 + $0x20] sm:$0xff]
      %v3207 = vld [vmem:[%s3201 + $0x28] sm:$0xff]
      %v3208 = vld [vmem:[%s3201 + $0x30] sm:$0xff]
      %v3209 = vld [vmem:[%s3201 + $0x38] sm:$0xff]
      %v3210 = vld [vmem:[%s3201 + $0x40] sm:$0xff]
      %v3211 = vld [vmem:[%s3201 + $0x48] sm:$0xff]
      %v3212 = vld [vmem:[%s3201 + $0x50] sm:$0xff]
      %v3213 = vld [vmem:[%s3201 + $0x58] sm:$0xff]
      %v3214 = vld [vmem:[%s3201 + $0x60] sm:$0xff]
      %v3215 = vld [vmem:[%s3201 + $0x68] sm:$0xff]
      %v3216 = vld [vmem:[%s3201 + $0x70] sm:$0xff]
      %v3217 = vld [vmem:[%s3201 + $0x78] sm:$0xff]
      %3218 = vmatprep.subr.mxu0 0.0
      %3219 = vmatpush1.msra.mxu0 %v1876
      %3220 = vmatprep.subr.mxu0 0.0
      %3221 = vmatpush1.msra.mxu0 %v1877
      %3222 = vmatprep.subr.mxu0 0.0
      %3223 = vmatpush1.msra.mxu0 %v1878
      %3224 = vmatprep.subr.mxu0 0.0
      %3225 = vmatpush1.msra.mxu0 %v1879
      %3226 = vmatprep.subr.mxu0 0.0
      %3227 = vmatpush1.msra.mxu0 %v1880
      %3228 = vmatprep.subr.mxu0 0.0
      %3229 = vmatpush1.msra.mxu0 %v1881
      %3230 = vmatprep.subr.mxu0 0.0
      %3231 = vmatpush1.msra.mxu0 %v1882
      %3232 = vmatprep.subr.mxu0 0.0
      %3233 = vmatpush1.msra.mxu0 %v1883
      %3234 = vmatprep.subr.mxu0 0.0
      %3235 = vmatpush1.msra.mxu0 %v1884
      %3236 = vmatprep.subr.mxu0 0.0
      %3237 = vmatpush1.msra.mxu0 %v1885
      %3238 = vmatprep.subr.mxu0 0.0
      %3239 = vmatpush1.msra.mxu0 %v1886
      %3240 = vmatprep.subr.mxu0 0.0
      %3241 = vmatpush1.msra.mxu0 %v1887
      %3242 = vmatprep.subr.mxu0 0.0
      %3243 = vmatpush1.msra.mxu0 %v1888
      %3244 = vmatprep.subr.mxu0 0.0
      %3245 = vmatpush1.msra.mxu0 %v1889
      %3246 = vmatprep.subr.mxu0 0.0
      %3247 = vmatpush1.msra.mxu0 %v1890
      %3248 = vmatprep.subr.mxu0 0.0
      %3249 = vmatpush1.msra.mxu0 %v1891
      %3250 = vmatprep.subr.mxu0 0.0
      %3251 = vmatpush1.msra.mxu0 %v1892
      %3252 = vmatprep.subr.mxu0 0.0
      %3253 = vmatpush1.msra.mxu0 %v1893
      %3254 = vmatprep.subr.mxu0 0.0
      %3255 = vmatpush1.msra.mxu0 %v1894
      %3256 = vmatprep.subr.mxu0 0.0
      %3257 = vmatpush1.msra.mxu0 %v1895
      %3258 = vmatprep.subr.mxu0 0.0
      %3259 = vmatpush1.msra.mxu0 %v1896
      %3260 = vmatprep.subr.mxu0 0.0
      %3261 = vmatpush1.msra.mxu0 %v1897
      %3262 = vmatprep.subr.mxu0 0.0
      %3263 = vmatpush1.msra.mxu0 %v1898
      %3264 = vmatprep.subr.mxu0 0.0
      %3265 = vmatpush1.msra.mxu0 %v1899
      %3266 = vmatprep.subr.mxu0 0.0
      %3267 = vmatpush1.msra.mxu0 %v1900
      %3268 = vmatprep.subr.mxu0 0.0
      %3269 = vmatpush1.msra.mxu0 %v1901
      %3270 = vmatprep.subr.mxu0 0.0
      %3271 = vmatpush1.msra.mxu0 %v1902
      %3272 = vmatprep.subr.mxu0 0.0
      %3273 = vmatpush1.msra.mxu0 %v1903
      %3274 = vmatprep.subr.mxu0 0.0
      %3275 = vmatpush1.msra.mxu0 %v1904
      %3276 = vmatprep.subr.mxu0 0.0
      %3277 = vmatpush1.msra.mxu0 %v1905
      %3278 = vmatprep.subr.mxu0 0.0
      %3279 = vmatpush1.msra.mxu0 %v1906
      %3280 = vmatprep.subr.mxu0 0.0
      %3281 = vmatpush1.msra.mxu0 %v1907
      %3282 = vmatprep.mubr.f32.mxu0 %v3203
      %3283 = vmatmul.mubr.f32.gmra.mrb[0].mxu0 %v3202
      %v3284 = vpop.f32.mrb[0].mxu0
      %v3285 = vadd.f32 0.0, %v3284
      %v3286 = vpop.f32.mrb[0].mxu0
      %3287 = vmatprep.mubr.f32.mxu0 %v3205
      %3288 = vmatmul.mubr.f32.gmra.mrb[0].mxu0 %v3204
      %v3289 = vpop.f32.mrb[0].mxu0
      %v3290 = vadd.f32 0.0, %v3289
      %v3291 = vpop.f32.mrb[0].mxu0
      %3292 = vmatprep.mubr.f32.mxu0 %v3207
      %3293 = vmatmul.mubr.f32.gmra.mrb[0].mxu0 %v3206
      %v3294 = vpop.f32.mrb[0].mxu0
      %v3295 = vadd.f32 0.0, %v3294
      %v3296 = vpop.f32.mrb[0].mxu0
      %3297 = vmatprep.mubr.f32.mxu0 %v3209
      %3298 = vmatmul.mubr.f32.gmra.mrb[0].mxu0 %v3208
      %v3299 = vpop.f32.mrb[0].mxu0
      %v3300 = vadd.f32 0.0, %v3299
      %v3301 = vpop.f32.mrb[0].mxu0
      %3302 = vmatprep.mubr.f32.mxu0 %v3211
      %3303 = vmatmul.mubr.f32.gmra.mrb[0].mxu0 %v3210
      %v3304 = vpop.f32.mrb[0].mxu0
      %v3305 = vadd.f32 0.0, %v3304
      %v3306 = vpop.f32.mrb[0].mxu0
      %3307 = vmatprep.mubr.f32.mxu0 %v3213
      %3308 = vmatmul.mubr.f32.gmra.mrb[0].mxu0 %v3212
      %v3309 = vpop.f32.mrb[0].mxu0
      %v3310 = vadd.f32 0.0, %v3309
      %v3311 = vpop.f32.mrb[0].mxu0
      %3312 = vmatprep.mubr.f32.mxu0 %v3215
      %3313 = vmatmul.mubr.f32.gmra.mrb[0].mxu0 %v3214
      %v3314 = vpop.f32.mrb[0].mxu0
      %v3315 = vadd.f32 0.0, %v3314
      %v3316 = vpop.f32.mrb[0].mxu0
      %3317 = vmatprep.mubr.f32.mxu0 %v3217
      %3318 = vmatmul.mubr.f32.gmra.mrb[0].mxu0 %v3216
      %v3319 = vpop.f32.mrb[0].mxu0
      %v3320 = vadd.f32 0.0, %v3319
      %v3321 = vpop.f32.mrb[0].mxu0
      %3322 = vdwg.mxu0
      %s3323 = scalar_lea.vmem %s3, 80
      %v3324 = vld [vmem:[%s3323] sm:$0xff]
      %v3325 = vld [vmem:[%s3323 + $0x8] sm:$0xff]
      %v3327 = vsel %vm2156, %v3285, 0
      %v3330 = vsel %vm2156, %v3290, 0
      %v3333 = vsel %vm2156, %v3295, 0
      %v3336 = vsel %vm2156, %v3300, 0
      %v3339 = vsel %vm2156, %v3305, 0
      %v3342 = vsel %vm2156, %v3310, 0
      %v3345 = vsel %vm2156, %v3315, 0
      %v3348 = vsel %vm2156, %v3320, 0
      %3350 = vmatprep.subr.mxu0 0.0
      %3351 = vmatpush1.msra.mxu0 %v3324
      %3352 = vmatprep.subr.mxu0 0.0
      %3353 = vmatpush1.msra.mxu0 %v3325
      %3354 = vmatprep.subr.mxu0 0.0
      %3355 = vmatpush1.msra.mxu0 0.0
      %3356 = vmatprep.subr.mxu0 0.0
      %3357 = vmatpush1.msra.mxu0 0.0
      %3358 = vmatprep.subr.mxu0 0.0
      %3359 = vmatpush1.msra.mxu0 0.0
      %3360 = vmatprep.subr.mxu0 0.0
      %3361 = vmatpush1.msra.mxu0 0.0
      %3362 = vmatprep.subr.mxu0 0.0
      %3363 = vmatpush1.msra.mxu0 0.0
      %3364 = vmatprep.subr.mxu0 0.0
      %3365 = vmatpush1.msra.mxu0 0.0
      %3366 = vmatprep.subr.mxu0 0.0
      %3367 = vmatpush1.msra.mxu0 0.0
      %3368 = vmatprep.subr.mxu0 0.0
      %3369 = vmatpush1.msra.mxu0 0.0
      %3370 = vmatprep.subr.mxu0 0.0
      %3371 = vmatpush1.msra.mxu0 0.0
      %3372 = vmatprep.subr.mxu0 0.0
      %3373 = vmatpush1.msra.mxu0 0.0
      %3374 = vmatprep.subr.mxu0 0.0
      %3375 = vmatpush1.msra.mxu0 0.0
      %3376 = vmatprep.subr.mxu0 0.0
      %3377 = vmatpush1.msra.mxu0 0.0
      %3378 = vmatprep.subr.mxu0 0.0
      %3379 = vmatpush1.msra.mxu0 0.0
      %3380 = vmatprep.subr.mxu0 0.0
      %3381 = vmatpush1.msra.mxu0 0.0
      %3382 = vmatprep.subr.mxu0 0.0
      %3383 = vmatpush1.msra.mxu0 0.0
      %3384 = vmatprep.subr.mxu0 0.0
      %3385 = vmatpush1.msra.mxu0 0.0
      %3386 = vmatprep.subr.mxu0 0.0
      %3387 = vmatpush1.msra.mxu0 0.0
      %3388 = vmatprep.subr.mxu0 0.0
      %3389 = vmatpush1.msra.mxu0 0.0
      %3390 = vmatprep.subr.mxu0 0.0
      %3391 = vmatpush1.msra.mxu0 0.0
      %3392 = vmatprep.subr.mxu0 0.0
      %3393 = vmatpush1.msra.mxu0 0.0
      %3394 = vmatprep.subr.mxu0 0.0
      %3395 = vmatpush1.msra.mxu0 0.0
      %3396 = vmatprep.subr.mxu0 0.0
      %3397 = vmatpush1.msra.mxu0 0.0
      %3398 = vmatprep.subr.mxu0 0.0
      %3399 = vmatpush1.msra.mxu0 0.0
      %3400 = vmatprep.subr.mxu0 0.0
      %3401 = vmatpush1.msra.mxu0 0.0
      %3402 = vmatprep.subr.mxu0 0.0
      %3403 = vmatpush1.msra.mxu0 0.0
      %3404 = vmatprep.subr.mxu0 0.0
      %3405 = vmatpush1.msra.mxu0 0.0
      %3406 = vmatprep.subr.mxu0 0.0
      %3407 = vmatpush1.msra.mxu0 0.0
      %3408 = vmatprep.subr.mxu0 0.0
      %3409 = vmatpush1.msra.mxu0 0.0
      %3410 = vmatprep.subr.mxu0 0.0
      %3411 = vmatpush1.msra.mxu0 0.0
      %3412 = vmatprep.subr.mxu0 0.0
      %3413 = vmatpush1.msra.mxu0 0.0
      %3414 = vmatprep.mubr.f32.mxu0 0.0
      %3415 = vmatmul.mubr.f32.gmra.mrb[0].mxu0 %v3327
      %v3416 = vpop.f32.mrb[0].mxu0
      %v3417 = vadd.f32 0.0, %v3416
      %v3418 = vpop.f32.mrb[0].mxu0
      %3419 = vmatprep.mubr.f32.mxu0 0.0
      %3420 = vmatmul.mubr.f32.gmra.mrb[0].mxu0 %v3330
      %v3421 = vpop.f32.mrb[0].mxu0
      %v3422 = vadd.f32 0.0, %v3421
      %v3423 = vpop.f32.mrb[0].mxu0
      %3424 = vmatprep.mubr.f32.mxu0 0.0
      %3425 = vmatmul.mubr.f32.gmra.mrb[0].mxu0 %v3333
      %v3426 = vpop.f32.mrb[0].mxu0
      %v3427 = vadd.f32 0.0, %v3426
      %v3428 = vpop.f32.mrb[0].mxu0
      %3429 = vmatprep.mubr.f32.mxu0 0.0
      %3430 = vmatmul.mubr.f32.gmra.mrb[0].mxu0 %v3336
      %v3431 = vpop.f32.mrb[0].mxu0
      %v3432 = vadd.f32 0.0, %v3431
      %v3433 = vpop.f32.mrb[0].mxu0
      %3434 = vmatprep.mubr.f32.mxu0 0.0
      %3435 = vmatmul.mubr.f32.gmra.mrb[0].mxu0 %v3339
      %v3436 = vpop.f32.mrb[0].mxu0
      %v3437 = vadd.f32 0.0, %v3436
      %v3438 = vpop.f32.mrb[0].mxu0
      %3439 = vmatprep.mubr.f32.mxu0 0.0
      %3440 = vmatmul.mubr.f32.gmra.mrb[0].mxu0 %v3342
      %v3441 = vpop.f32.mrb[0].mxu0
      %v3442 = vadd.f32 0.0, %v3441
      %v3443 = vpop.f32.mrb[0].mxu0
      %3444 = vmatprep.mubr.f32.mxu0 0.0
      %3445 = vmatmul.mubr.f32.gmra.mrb[0].mxu0 %v3345
      %v3446 = vpop.f32.mrb[0].mxu0
      %v3447 = vadd.f32 0.0, %v3446
      %v3448 = vpop.f32.mrb[0].mxu0
      %3449 = vmatprep.mubr.f32.mxu0 0.0
      %3450 = vmatmul.mubr.f32.gmra.mrb[0].mxu0 %v3348
      %v3451 = vpop.f32.mrb[0].mxu0
      %v3452 = vadd.f32 0.0, %v3451
      %v3453 = vpop.f32.mrb[0].mxu0
      %3454 = vdwg.mxu0
      %v3455 = vadd.f32 %v3193, %v3417
      %v3456 = vadd.f32 %v3194, %v3422
      %v3457 = vadd.f32 %v3195, %v3427
      %v3458 = vadd.f32 %v3196, %v3432
      %v3459 = vadd.f32 %v3197, %v3437
      %v3460 = vadd.f32 %v3198, %v3442
      %v3461 = vadd.f32 %v3199, %v3447
      %v3462 = vadd.f32 %v3200, %v3452
      %s3463 = scalar_lea.vmem %s4, 768
      %v3464 = vld [vmem:[%s3463] sm:$0xff]
      %v3465 = vld [vmem:[%s3463 + $0x8] sm:$0xff]
      %v3466 = vld [vmem:[%s3463 + $0x10] sm:$0xff]
      %v3467 = vld [vmem:[%s3463 + $0x18] sm:$0xff]
      %v3468 = vld [vmem:[%s3463 + $0x20] sm:$0xff]
      %v3469 = vld [vmem:[%s3463 + $0x28] sm:$0xff]
      %v3470 = vld [vmem:[%s3463 + $0x30] sm:$0xff]
      %v3471 = vld [vmem:[%s3463 + $0x38] sm:$0xff]
      %v3472 = vld [vmem:[%s3463 + $0x40] sm:$0xff]
      %v3473 = vld [vmem:[%s3463 + $0x48] sm:$0xff]
      %v3474 = vld [vmem:[%s3463 + $0x50] sm:$0xff]
      %v3475 = vld [vmem:[%s3463 + $0x58] sm:$0xff]
      %v3476 = vld [vmem:[%s3463 + $0x60] sm:$0xff]
      %v3477 = vld [vmem:[%s3463 + $0x68] sm:$0xff]
      %v3478 = vld [vmem:[%s3463 + $0x70] sm:$0xff]
      %v3479 = vld [vmem:[%s3463 + $0x78] sm:$0xff]
      %3480 = vmatprep.subr.mxu0 0.0
      %3481 = vmatpush1.msra.mxu0 %v1876
      %3482 = vmatprep.subr.mxu0 0.0
      %3483 = vmatpush1.msra.mxu0 %v1877
      %3484 = vmatprep.subr.mxu0 0.0
      %3485 = vmatpush1.msra.mxu0 %v1878
      %3486 = vmatprep.subr.mxu0 0.0
      %3487 = vmatpush1.msra.mxu0 %v1879
      %3488 = vmatprep.subr.mxu0 0.0
      %3489 = vmatpush1.msra.mxu0 %v1880
      %3490 = vmatprep.subr.mxu0 0.0
      %3491 = vmatpush1.msra.mxu0 %v1881
      %3492 = vmatprep.subr.mxu0 0.0
      %3493 = vmatpush1.msra.mxu0 %v1882
      %3494 = vmatprep.subr.mxu0 0.0
      %3495 = vmatpush1.msra.mxu0 %v1883
      %3496 = vmatprep.subr.mxu0 0.0
      %3497 = vmatpush1.msra.mxu0 %v1884
      %3498 = vmatprep.subr.mxu0 0.0
      %3499 = vmatpush1.msra.mxu0 %v1885
      %3500 = vmatprep.subr.mxu0 0.0
      %3501 = vmatpush1.msra.mxu0 %v1886
      %3502 = vmatprep.subr.mxu0 0.0
      %3503 = vmatpush1.msra.mxu0 %v1887
      %3504 = vmatprep.subr.mxu0 0.0
      %3505 = vmatpush1.msra.mxu0 %v1888
      %3506 = vmatprep.subr.mxu0 0.0
      %3507 = vmatpush1.msra.mxu0 %v1889
      %3508 = vmatprep.subr.mxu0 0.0
      %3509 = vmatpush1.msra.mxu0 %v1890
      %3510 = vmatprep.subr.mxu0 0.0
      %3511 = vmatpush1.msra.mxu0 %v1891
      %3512 = vmatprep.subr.mxu0 0.0
      %3513 = vmatpush1.msra.mxu0 %v1892
      %3514 = vmatprep.subr.mxu0 0.0
      %3515 = vmatpush1.msra.mxu0 %v1893
      %3516 = vmatprep.subr.mxu0 0.0
      %3517 = vmatpush1.msra.mxu0 %v1894
      %3518 = vmatprep.subr.mxu0 0.0
      %3519 = vmatpush1.msra.mxu0 %v1895
      %3520 = vmatprep.subr.mxu0 0.0
      %3521 = vmatpush1.msra.mxu0 %v1896
      %3522 = vmatprep.subr.mxu0 0.0
      %3523 = vmatpush1.msra.mxu0 %v1897
      %3524 = vmatprep.subr.mxu0 0.0
      %3525 = vmatpush1.msra.mxu0 %v1898
      %3526 = vmatprep.subr.mxu0 0.0
      %3527 = vmatpush1.msra.mxu0 %v1899
      %3528 = vmatprep.subr.mxu0 0.0
      %3529 = vmatpush1.msra.mxu0 %v1900
      %3530 = vmatprep.subr.mxu0 0.0
      %3531 = vmatpush1.msra.mxu0 %v1901
      %3532 = vmatprep.subr.mxu0 0.0
      %3533 = vmatpush1.msra.mxu0 %v1902
      %3534 = vmatprep.subr.mxu0 0.0
      %3535 = vmatpush1.msra.mxu0 %v1903
      %3536 = vmatprep.subr.mxu0 0.0
      %3537 = vmatpush1.msra.mxu0 %v1904
      %3538 = vmatprep.subr.mxu0 0.0
      %3539 = vmatpush1.msra.mxu0 %v1905
      %3540 = vmatprep.subr.mxu0 0.0
      %3541 = vmatpush1.msra.mxu0 %v1906
      %3542 = vmatprep.subr.mxu0 0.0
      %3543 = vmatpush1.msra.mxu0 %v1907
      %3544 = vmatprep.mubr.f32.mxu0 %v3465
      %3545 = vmatmul.mubr.f32.gmra.mrb[0].mxu0 %v3464
      %v3546 = vpop.f32.mrb[0].mxu0
      %v3547 = vadd.f32 0.0, %v3546
      %v3548 = vpop.f32.mrb[0].mxu0
      %3549 = vmatprep.mubr.f32.mxu0 %v3467
      %3550 = vmatmul.mubr.f32.gmra.mrb[0].mxu0 %v3466
      %v3551 = vpop.f32.mrb[0].mxu0
      %v3552 = vadd.f32 0.0, %v3551
      %v3553 = vpop.f32.mrb[0].mxu0
      %3554 = vmatprep.mubr.f32.mxu0 %v3469
      %3555 = vmatmul.mubr.f32.gmra.mrb[0].mxu0 %v3468
      %v3556 = vpop.f32.mrb[0].mxu0
      %v3557 = vadd.f32 0.0, %v3556
      %v3558 = vpop.f32.mrb[0].mxu0
      %3559 = vmatprep.mubr.f32.mxu0 %v3471
      %3560 = vmatmul.mubr.f32.gmra.mrb[0].mxu0 %v3470
      %v3561 = vpop.f32.mrb[0].mxu0
      %v3562 = vadd.f32 0.0, %v3561
      %v3563 = vpop.f32.mrb[0].mxu0
      %3564 = vmatprep.mubr.f32.mxu0 %v3473
      %3565 = vmatmul.mubr.f32.gmra.mrb[0].mxu0 %v3472
      %v3566 = vpop.f32.mrb[0].mxu0
      %v3567 = vadd.f32 0.0, %v3566
      %v3568 = vpop.f32.mrb[0].mxu0
      %3569 = vmatprep.mubr.f32.mxu0 %v3475
      %3570 = vmatmul.mubr.f32.gmra.mrb[0].mxu0 %v3474
      %v3571 = vpop.f32.mrb[0].mxu0
      %v3572 = vadd.f32 0.0, %v3571
      %v3573 = vpop.f32.mrb[0].mxu0
      %3574 = vmatprep.mubr.f32.mxu0 %v3477
      %3575 = vmatmul.mubr.f32.gmra.mrb[0].mxu0 %v3476
      %v3576 = vpop.f32.mrb[0].mxu0
      %v3577 = vadd.f32 0.0, %v3576
      %v3578 = vpop.f32.mrb[0].mxu0
      %3579 = vmatprep.mubr.f32.mxu0 %v3479
      %3580 = vmatmul.mubr.f32.gmra.mrb[0].mxu0 %v3478
      %v3581 = vpop.f32.mrb[0].mxu0
      %v3582 = vadd.f32 0.0, %v3581
      %v3583 = vpop.f32.mrb[0].mxu0
      %3584 = vdwg.mxu0
      %s3585 = scalar_lea.vmem %s3, 96
      %v3586 = vld [vmem:[%s3585] sm:$0xff]
      %v3587 = vld [vmem:[%s3585 + $0x8] sm:$0xff]
      %v3589 = vsel %vm2156, %v3547, 0
      %v3592 = vsel %vm2156, %v3552, 0
      %v3595 = vsel %vm2156, %v3557, 0
      %v3598 = vsel %vm2156, %v3562, 0
      %v3601 = vsel %vm2156, %v3567, 0
      %v3604 = vsel %vm2156, %v3572, 0
      %v3607 = vsel %vm2156, %v3577, 0
      %v3610 = vsel %vm2156, %v3582, 0
      %3612 = vmatprep.subr.mxu0 0.0
      %3613 = vmatpush1.msra.mxu0 %v3586
      %3614 = vmatprep.subr.mxu0 0.0
      %3615 = vmatpush1.msra.mxu0 %v3587
      %3616 = vmatprep.subr.mxu0 0.0
      %3617 = vmatpush1.msra.mxu0 0.0
      %3618 = vmatprep.subr.mxu0 0.0
      %3619 = vmatpush1.msra.mxu0 0.0
      %3620 = vmatprep.subr.mxu0 0.0
      %3621 = vmatpush1.msra.mxu0 0.0
      %3622 = vmatprep.subr.mxu0 0.0
      %3623 = vmatpush1.msra.mxu0 0.0
      %3624 = vmatprep.subr.mxu0 0.0
      %3625 = vmatpush1.msra.mxu0 0.0
      %3626 = vmatprep.subr.mxu0 0.0
      %3627 = vmatpush1.msra.mxu0 0.0
      %3628 = vmatprep.subr.mxu0 0.0
      %3629 = vmatpush1.msra.mxu0 0.0
      %3630 = vmatprep.subr.mxu0 0.0
      %3631 = vmatpush1.msra.mxu0 0.0
      %3632 = vmatprep.subr.mxu0 0.0
      %3633 = vmatpush1.msra.mxu0 0.0
      %3634 = vmatprep.subr.mxu0 0.0
      %3635 = vmatpush1.msra.mxu0 0.0
      %3636 = vmatprep.subr.mxu0 0.0
      %3637 = vmatpush1.msra.mxu0 0.0
      %3638 = vmatprep.subr.mxu0 0.0
      %3639 = vmatpush1.msra.mxu0 0.0
      %3640 = vmatprep.subr.mxu0 0.0
      %3641 = vmatpush1.msra.mxu0 0.0
      %3642 = vmatprep.subr.mxu0 0.0
      %3643 = vmatpush1.msra.mxu0 0.0
      %3644 = vmatprep.subr.mxu0 0.0
      %3645 = vmatpush1.msra.mxu0 0.0
      %3646 = vmatprep.subr.mxu0 0.0
      %3647 = vmatpush1.msra.mxu0 0.0
      %3648 = vmatprep.subr.mxu0 0.0
      %3649 = vmatpush1.msra.mxu0 0.0
      %3650 = vmatprep.subr.mxu0 0.0
      %3651 = vmatpush1.msra.mxu0 0.0
      %3652 = vmatprep.subr.mxu0 0.0
      %3653 = vmatpush1.msra.mxu0 0.0
      %3654 = vmatprep.subr.mxu0 0.0
      %3655 = vmatpush1.msra.mxu0 0.0
      %3656 = vmatprep.subr.mxu0 0.0
      %3657 = vmatpush1.msra.mxu0 0.0
      %3658 = vmatprep.subr.mxu0 0.0
      %3659 = vmatpush1.msra.mxu0 0.0
      %3660 = vmatprep.subr.mxu0 0.0
      %3661 = vmatpush1.msra.mxu0 0.0
      %3662 = vmatprep.subr.mxu0 0.0
      %3663 = vmatpush1.msra.mxu0 0.0
      %3664 = vmatprep.subr.mxu0 0.0
      %3665 = vmatpush1.msra.mxu0 0.0
      %3666 = vmatprep.subr.mxu0 0.0
      %3667 = vmatpush1.msra.mxu0 0.0
      %3668 = vmatprep.subr.mxu0 0.0
      %3669 = vmatpush1.msra.mxu0 0.0
      %3670 = vmatprep.subr.mxu0 0.0
      %3671 = vmatpush1.msra.mxu0 0.0
      %3672 = vmatprep.subr.mxu0 0.0
      %3673 = vmatpush1.msra.mxu0 0.0
      %3674 = vmatprep.subr.mxu0 0.0
      %3675 = vmatpush1.msra.mxu0 0.0
      %3676 = vmatprep.mubr.f32.mxu0 0.0
      %3677 = vmatmul.mubr.f32.gmra.mrb[0].mxu0 %v3589
      %v3678 = vpop.f32.mrb[0].mxu0
      %v3679 = vadd.f32 0.0, %v3678
      %v3680 = vpop.f32.mrb[0].mxu0
      %3681 = vmatprep.mubr.f32.mxu0 0.0
      %3682 = vmatmul.mubr.f32.gmra.mrb[0].mxu0 %v3592
      %v3683 = vpop.f32.mrb[0].mxu0
      %v3684 = vadd.f32 0.0, %v3683
      %v3685 = vpop.f32.mrb[0].mxu0
      %3686 = vmatprep.mubr.f32.mxu0 0.0
      %3687 = vmatmul.mubr.f32.gmra.mrb[0].mxu0 %v3595
      %v3688 = vpop.f32.mrb[0].mxu0
      %v3689 = vadd.f32 0.0, %v3688
      %v3690 = vpop.f32.mrb[0].mxu0
      %3691 = vmatprep.mubr.f32.mxu0 0.0
      %3692 = vmatmul.mubr.f32.gmra.mrb[0].mxu0 %v3598
      %v3693 = vpop.f32.mrb[0].mxu0
      %v3694 = vadd.f32 0.0, %v3693
      %v3695 = vpop.f32.mrb[0].mxu0
      %3696 = vmatprep.mubr.f32.mxu0 0.0
      %3697 = vmatmul.mubr.f32.gmra.mrb[0].mxu0 %v3601
      %v3698 = vpop.f32.mrb[0].mxu0
      %v3699 = vadd.f32 0.0, %v3698
      %v3700 = vpop.f32.mrb[0].mxu0
      %3701 = vmatprep.mubr.f32.mxu0 0.0
      %3702 = vmatmul.mubr.f32.gmra.mrb[0].mxu0 %v3604
      %v3703 = vpop.f32.mrb[0].mxu0
      %v3704 = vadd.f32 0.0, %v3703
      %v3705 = vpop.f32.mrb[0].mxu0
      %3706 = vmatprep.mubr.f32.mxu0 0.0
      %3707 = vmatmul.mubr.f32.gmra.mrb[0].mxu0 %v3607
      %v3708 = vpop.f32.mrb[0].mxu0
      %v3709 = vadd.f32 0.0, %v3708
      %v3710 = vpop.f32.mrb[0].mxu0
      %3711 = vmatprep.mubr.f32.mxu0 0.0
      %3712 = vmatmul.mubr.f32.gmra.mrb[0].mxu0 %v3610
      %v3713 = vpop.f32.mrb[0].mxu0
      %v3714 = vadd.f32 0.0, %v3713
      %v3715 = vpop.f32.mrb[0].mxu0
      %3716 = vdwg.mxu0
      %v3717 = vadd.f32 %v3455, %v3679
      %v3718 = vadd.f32 %v3456, %v3684
      %v3719 = vadd.f32 %v3457, %v3689
      %v3720 = vadd.f32 %v3458, %v3694
      %v3721 = vadd.f32 %v3459, %v3699
      %v3722 = vadd.f32 %v3460, %v3704
      %v3723 = vadd.f32 %v3461, %v3709
      %v3724 = vadd.f32 %v3462, %v3714
      %s3725 = scalar_lea.vmem %s4, 896
      %v3726 = vld [vmem:[%s3725] sm:$0xff]
      %v3727 = vld [vmem:[%s3725 + $0x8] sm:$0xff]
      %v3728 = vld [vmem:[%s3725 + $0x10] sm:$0xff]
      %v3729 = vld [vmem:[%s3725 + $0x18] sm:$0xff]
      %v3730 = vld [vmem:[%s3725 + $0x20] sm:$0xff]
      %v3731 = vld [vmem:[%s3725 + $0x28] sm:$0xff]
      %v3732 = vld [vmem:[%s3725 + $0x30] sm:$0xff]
      %v3733 = vld [vmem:[%s3725 + $0x38] sm:$0xff]
      %v3734 = vld [vmem:[%s3725 + $0x40] sm:$0xff]
      %v3735 = vld [vmem:[%s3725 + $0x48] sm:$0xff]
      %v3736 = vld [vmem:[%s3725 + $0x50] sm:$0xff]
      %v3737 = vld [vmem:[%s3725 + $0x58] sm:$0xff]
      %v3738 = vld [vmem:[%s3725 + $0x60] sm:$0xff]
      %v3739 = vld [vmem:[%s3725 + $0x68] sm:$0xff]
      %v3740 = vld [vmem:[%s3725 + $0x70] sm:$0xff]
      %v3741 = vld [vmem:[%s3725 + $0x78] sm:$0xff]
      %3742 = vmatprep.subr.mxu0 0.0
      %3743 = vmatpush1.msra.mxu0 %v1876
      %3744 = vmatprep.subr.mxu0 0.0
      %3745 = vmatpush1.msra.mxu0 %v1877
      %3746 = vmatprep.subr.mxu0 0.0
      %3747 = vmatpush1.msra.mxu0 %v1878
      %3748 = vmatprep.subr.mxu0 0.0
      %3749 = vmatpush1.msra.mxu0 %v1879
      %3750 = vmatprep.subr.mxu0 0.0
      %3751 = vmatpush1.msra.mxu0 %v1880
      %3752 = vmatprep.subr.mxu0 0.0
      %3753 = vmatpush1.msra.mxu0 %v1881
      %3754 = vmatprep.subr.mxu0 0.0
      %3755 = vmatpush1.msra.mxu0 %v1882
      %3756 = vmatprep.subr.mxu0 0.0
      %3757 = vmatpush1.msra.mxu0 %v1883
      %3758 = vmatprep.subr.mxu0 0.0
      %3759 = vmatpush1.msra.mxu0 %v1884
      %3760 = vmatprep.subr.mxu0 0.0
      %3761 = vmatpush1.msra.mxu0 %v1885
      %3762 = vmatprep.subr.mxu0 0.0
      %3763 = vmatpush1.msra.mxu0 %v1886
      %3764 = vmatprep.subr.mxu0 0.0
      %3765 = vmatpush1.msra.mxu0 %v1887
      %3766 = vmatprep.subr.mxu0 0.0
      %3767 = vmatpush1.msra.mxu0 %v1888
      %3768 = vmatprep.subr.mxu0 0.0
      %3769 = vmatpush1.msra.mxu0 %v1889
      %3770 = vmatprep.subr.mxu0 0.0
      %3771 = vmatpush1.msra.mxu0 %v1890
      %3772 = vmatprep.subr.mxu0 0.0
      %3773 = vmatpush1.msra.mxu0 %v1891
      %3774 = vmatprep.subr.mxu0 0.0
      %3775 = vmatpush1.msra.mxu0 %v1892
      %3776 = vmatprep.subr.mxu0 0.0
      %3777 = vmatpush1.msra.mxu0 %v1893
      %3778 = vmatprep.subr.mxu0 0.0
      %3779 = vmatpush1.msra.mxu0 %v1894
      %3780 = vmatprep.subr.mxu0 0.0
      %3781 = vmatpush1.msra.mxu0 %v1895
      %3782 = vmatprep.subr.mxu0 0.0
      %3783 = vmatpush1.msra.mxu0 %v1896
      %3784 = vmatprep.subr.mxu0 0.0
      %3785 = vmatpush1.msra.mxu0 %v1897
      %3786 = vmatprep.subr.mxu0 0.0
      %3787 = vmatpush1.msra.mxu0 %v1898
      %3788 = vmatprep.subr.mxu0 0.0
      %3789 = vmatpush1.msra.mxu0 %v1899
      %3790 = vmatprep.subr.mxu0 0.0
      %3791 = vmatpush1.msra.mxu0 %v1900
      %3792 = vmatprep.subr.mxu0 0.0
      %3793 = vmatpush1.msra.mxu0 %v1901
      %3794 = vmatprep.subr.mxu0 0.0
      %3795 = vmatpush1.msra.mxu0 %v1902
      %3796 = vmatprep.subr.mxu0 0.0
      %3797 = vmatpush1.msra.mxu0 %v1903
      %3798 = vmatprep.subr.mxu0 0.0
      %3799 = vmatpush1.msra.mxu0 %v1904
      %3800 = vmatprep.subr.mxu0 0.0
      %3801 = vmatpush1.msra.mxu0 %v1905
      %3802 = vmatprep.subr.mxu0 0.0
      %3803 = vmatpush1.msra.mxu0 %v1906
      %3804 = vmatprep.subr.mxu0 0.0
      %3805 = vmatpush1.msra.mxu0 %v1907
      %3806 = vmatprep.mubr.f32.mxu0 %v3727
      %3807 = vmatmul.mubr.f32.gmra.mrb[0].mxu0 %v3726
      %v3808 = vpop.f32.mrb[0].mxu0
      %v3809 = vadd.f32 0.0, %v3808
      %v3810 = vpop.f32.mrb[0].mxu0
      %3811 = vmatprep.mubr.f32.mxu0 %v3729
      %3812 = vmatmul.mubr.f32.gmra.mrb[0].mxu0 %v3728
      %v3813 = vpop.f32.mrb[0].mxu0
      %v3814 = vadd.f32 0.0, %v3813
      %v3815 = vpop.f32.mrb[0].mxu0
      %3816 = vmatprep.mubr.f32.mxu0 %v3731
      %3817 = vmatmul.mubr.f32.gmra.mrb[0].mxu0 %v3730
      %v3818 = vpop.f32.mrb[0].mxu0
      %v3819 = vadd.f32 0.0, %v3818
      %v3820 = vpop.f32.mrb[0].mxu0
      %3821 = vmatprep.mubr.f32.mxu0 %v3733
      %3822 = vmatmul.mubr.f32.gmra.mrb[0].mxu0 %v3732
      %v3823 = vpop.f32.mrb[0].mxu0
      %v3824 = vadd.f32 0.0, %v3823
      %v3825 = vpop.f32.mrb[0].mxu0
      %3826 = vmatprep.mubr.f32.mxu0 %v3735
      %3827 = vmatmul.mubr.f32.gmra.mrb[0].mxu0 %v3734
      %v3828 = vpop.f32.mrb[0].mxu0
      %v3829 = vadd.f32 0.0, %v3828
      %v3830 = vpop.f32.mrb[0].mxu0
      %3831 = vmatprep.mubr.f32.mxu0 %v3737
      %3832 = vmatmul.mubr.f32.gmra.mrb[0].mxu0 %v3736
      %v3833 = vpop.f32.mrb[0].mxu0
      %v3834 = vadd.f32 0.0, %v3833
      %v3835 = vpop.f32.mrb[0].mxu0
      %3836 = vmatprep.mubr.f32.mxu0 %v3739
      %3837 = vmatmul.mubr.f32.gmra.mrb[0].mxu0 %v3738
      %v3838 = vpop.f32.mrb[0].mxu0
      %v3839 = vadd.f32 0.0, %v3838
      %v3840 = vpop.f32.mrb[0].mxu0
      %3841 = vmatprep.mubr.f32.mxu0 %v3741
      %3842 = vmatmul.mubr.f32.gmra.mrb[0].mxu0 %v3740
      %v3843 = vpop.f32.mrb[0].mxu0
      %v3844 = vadd.f32 0.0, %v3843
      %v3845 = vpop.f32.mrb[0].mxu0
      %3846 = vdwg.mxu0
      %s3847 = scalar_lea.vmem %s3, 112
      %v3848 = vld [vmem:[%s3847] sm:$0xff]
      %v3849 = vld [vmem:[%s3847 + $0x8] sm:$0xff]
      %v3851 = vsel %vm2156, %v3809, 0
      %v3854 = vsel %vm2156, %v3814, 0
      %v3857 = vsel %vm2156, %v3819, 0
      %v3860 = vsel %vm2156, %v3824, 0
      %v3863 = vsel %vm2156, %v3829, 0
      %v3866 = vsel %vm2156, %v3834, 0
      %v3869 = vsel %vm2156, %v3839, 0
      %v3872 = vsel %vm2156, %v3844, 0
      %3874 = vmatprep.subr.mxu0 0.0
      %3875 = vmatpush1.msra.mxu0 %v3848
      %3876 = vmatprep.subr.mxu0 0.0
      %3877 = vmatpush1.msra.mxu0 %v3849
      %3878 = vmatprep.subr.mxu0 0.0
      %3879 = vmatpush1.msra.mxu0 0.0
      %3880 = vmatprep.subr.mxu0 0.0
      %3881 = vmatpush1.msra.mxu0 0.0
      %3882 = vmatprep.subr.mxu0 0.0
      %3883 = vmatpush1.msra.mxu0 0.0
      %3884 = vmatprep.subr.mxu0 0.0
      %3885 = vmatpush1.msra.mxu0 0.0
      %3886 = vmatprep.subr.mxu0 0.0
      %3887 = vmatpush1.msra.mxu0 0.0
      %3888 = vmatprep.subr.mxu0 0.0
      %3889 = vmatpush1.msra.mxu0 0.0
      %3890 = vmatprep.subr.mxu0 0.0
      %3891 = vmatpush1.msra.mxu0 0.0
      %3892 = vmatprep.subr.mxu0 0.0
      %3893 = vmatpush1.msra.mxu0 0.0
      %3894 = vmatprep.subr.mxu0 0.0
      %3895 = vmatpush1.msra.mxu0 0.0
      %3896 = vmatprep.subr.mxu0 0.0
      %3897 = vmatpush1.msra.mxu0 0.0
      %3898 = vmatprep.subr.mxu0 0.0
      %3899 = vmatpush1.msra.mxu0 0.0
      %3900 = vmatprep.subr.mxu0 0.0
      %3901 = vmatpush1.msra.mxu0 0.0
      %3902 = vmatprep.subr.mxu0 0.0
      %3903 = vmatpush1.msra.mxu0 0.0
      %3904 = vmatprep.subr.mxu0 0.0
      %3905 = vmatpush1.msra.mxu0 0.0
      %3906 = vmatprep.subr.mxu0 0.0
      %3907 = vmatpush1.msra.mxu0 0.0
      %3908 = vmatprep.subr.mxu0 0.0
      %3909 = vmatpush1.msra.mxu0 0.0
      %3910 = vmatprep.subr.mxu0 0.0
      %3911 = vmatpush1.msra.mxu0 0.0
      %3912 = vmatprep.subr.mxu0 0.0
      %3913 = vmatpush1.msra.mxu0 0.0
      %3914 = vmatprep.subr.mxu0 0.0
      %3915 = vmatpush1.msra.mxu0 0.0
      %3916 = vmatprep.subr.mxu0 0.0
      %3917 = vmatpush1.msra.mxu0 0.0
      %3918 = vmatprep.subr.mxu0 0.0
      %3919 = vmatpush1.msra.mxu0 0.0
      %3920 = vmatprep.subr.mxu0 0.0
      %3921 = vmatpush1.msra.mxu0 0.0
      %3922 = vmatprep.subr.mxu0 0.0
      %3923 = vmatpush1.msra.mxu0 0.0
      %3924 = vmatprep.subr.mxu0 0.0
      %3925 = vmatpush1.msra.mxu0 0.0
      %3926 = vmatprep.subr.mxu0 0.0
      %3927 = vmatpush1.msra.mxu0 0.0
      %3928 = vmatprep.subr.mxu0 0.0
      %3929 = vmatpush1.msra.mxu0 0.0
      %3930 = vmatprep.subr.mxu0 0.0
      %3931 = vmatpush1.msra.mxu0 0.0
      %3932 = vmatprep.subr.mxu0 0.0
      %3933 = vmatpush1.msra.mxu0 0.0
      %3934 = vmatprep.subr.mxu0 0.0
      %3935 = vmatpush1.msra.mxu0 0.0
      %3936 = vmatprep.subr.mxu0 0.0
      %3937 = vmatpush1.msra.mxu0 0.0
      %3938 = vmatprep.mubr.f32.mxu0 0.0
      %3939 = vmatmul.mubr.f32.gmra.mrb[0].mxu0 %v3851
      %v3940 = vpop.f32.mrb[0].mxu0
      %v3941 = vadd.f32 0.0, %v3940
      %v3942 = vpop.f32.mrb[0].mxu0
      %3943 = vmatprep.mubr.f32.mxu0 0.0
      %3944 = vmatmul.mubr.f32.gmra.mrb[0].mxu0 %v3854
      %v3945 = vpop.f32.mrb[0].mxu0
      %v3946 = vadd.f32 0.0, %v3945
      %v3947 = vpop.f32.mrb[0].mxu0
      %3948 = vmatprep.mubr.f32.mxu0 0.0
      %3949 = vmatmul.mubr.f32.gmra.mrb[0].mxu0 %v3857
      %v3950 = vpop.f32.mrb[0].mxu0
      %v3951 = vadd.f32 0.0, %v3950
      %v3952 = vpop.f32.mrb[0].mxu0
      %3953 = vmatprep.mubr.f32.mxu0 0.0
      %3954 = vmatmul.mubr.f32.gmra.mrb[0].mxu0 %v3860
      %v3955 = vpop.f32.mrb[0].mxu0
      %v3956 = vadd.f32 0.0, %v3955
      %v3957 = vpop.f32.mrb[0].mxu0
      %3958 = vmatprep.mubr.f32.mxu0 0.0
      %3959 = vmatmul.mubr.f32.gmra.mrb[0].mxu0 %v3863
      %v3960 = vpop.f32.mrb[0].mxu0
      %v3961 = vadd.f32 0.0, %v3960
      %v3962 = vpop.f32.mrb[0].mxu0
      %3963 = vmatprep.mubr.f32.mxu0 0.0
      %3964 = vmatmul.mubr.f32.gmra.mrb[0].mxu0 %v3866
      %v3965 = vpop.f32.mrb[0].mxu0
      %v3966 = vadd.f32 0.0, %v3965
      %v3967 = vpop.f32.mrb[0].mxu0
      %3968 = vmatprep.mubr.f32.mxu0 0.0
      %3969 = vmatmul.mubr.f32.gmra.mrb[0].mxu0 %v3869
      %v3970 = vpop.f32.mrb[0].mxu0
      %v3971 = vadd.f32 0.0, %v3970
      %v3972 = vpop.f32.mrb[0].mxu0
      %3973 = vmatprep.mubr.f32.mxu0 0.0
      %3974 = vmatmul.mubr.f32.gmra.mrb[0].mxu0 %v3872
      %v3975 = vpop.f32.mrb[0].mxu0
      %v3976 = vadd.f32 0.0, %v3975
      %v3977 = vpop.f32.mrb[0].mxu0
      %3978 = vdwg.mxu0
      %v3979 = vadd.f32 %v3717, %v3941
      %v3980 = vadd.f32 %v3718, %v3946
      %v3981 = vadd.f32 %v3719, %v3951
      %v3982 = vadd.f32 %v3720, %v3956
      %v3983 = vadd.f32 %v3721, %v3961
      %v3984 = vadd.f32 %v3722, %v3966
      %v3985 = vadd.f32 %v3723, %v3971
      %v3986 = vadd.f32 %v3724, %v3976
      %s3987 = scalar_lea.vmem %s4, 1024
      %v3988 = vld [vmem:[%s3987] sm:$0xff]
      %v3989 = vld [vmem:[%s3987 + $0x8] sm:$0xff]
      %v3990 = vld [vmem:[%s3987 + $0x10] sm:$0xff]
      %v3991 = vld [vmem:[%s3987 + $0x18] sm:$0xff]
      %v3992 = vld [vmem:[%s3987 + $0x20] sm:$0xff]
      %v3993 = vld [vmem:[%s3987 + $0x28] sm:$0xff]
      %v3994 = vld [vmem:[%s3987 + $0x30] sm:$0xff]
      %v3995 = vld [vmem:[%s3987 + $0x38] sm:$0xff]
      %v3996 = vld [vmem:[%s3987 + $0x40] sm:$0xff]
      %v3997 = vld [vmem:[%s3987 + $0x48] sm:$0xff]
      %v3998 = vld [vmem:[%s3987 + $0x50] sm:$0xff]
      %v3999 = vld [vmem:[%s3987 + $0x58] sm:$0xff]
      %v4000 = vld [vmem:[%s3987 + $0x60] sm:$0xff]
      %v4001 = vld [vmem:[%s3987 + $0x68] sm:$0xff]
      %v4002 = vld [vmem:[%s3987 + $0x70] sm:$0xff]
      %v4003 = vld [vmem:[%s3987 + $0x78] sm:$0xff]
      %4004 = vmatprep.subr.mxu0 0.0
      %4005 = vmatpush1.msra.mxu0 %v1876
      %4006 = vmatprep.subr.mxu0 0.0
      %4007 = vmatpush1.msra.mxu0 %v1877
      %4008 = vmatprep.subr.mxu0 0.0
      %4009 = vmatpush1.msra.mxu0 %v1878
      %4010 = vmatprep.subr.mxu0 0.0
      %4011 = vmatpush1.msra.mxu0 %v1879
      %4012 = vmatprep.subr.mxu0 0.0
      %4013 = vmatpush1.msra.mxu0 %v1880
      %4014 = vmatprep.subr.mxu0 0.0
      %4015 = vmatpush1.msra.mxu0 %v1881
      %4016 = vmatprep.subr.mxu0 0.0
      %4017 = vmatpush1.msra.mxu0 %v1882
      %4018 = vmatprep.subr.mxu0 0.0
      %4019 = vmatpush1.msra.mxu0 %v1883
      %4020 = vmatprep.subr.mxu0 0.0
      %4021 = vmatpush1.msra.mxu0 %v1884
      %4022 = vmatprep.subr.mxu0 0.0
      %4023 = vmatpush1.msra.mxu0 %v1885
      %4024 = vmatprep.subr.mxu0 0.0
      %4025 = vmatpush1.msra.mxu0 %v1886
      %4026 = vmatprep.subr.mxu0 0.0
      %4027 = vmatpush1.msra.mxu0 %v1887
      %4028 = vmatprep.subr.mxu0 0.0
      %4029 = vmatpush1.msra.mxu0 %v1888
      %4030 = vmatprep.subr.mxu0 0.0
      %4031 = vmatpush1.msra.mxu0 %v1889
      %4032 = vmatprep.subr.mxu0 0.0
      %4033 = vmatpush1.msra.mxu0 %v1890
      %4034 = vmatprep.subr.mxu0 0.0
      %4035 = vmatpush1.msra.mxu0 %v1891
      %4036 = vmatprep.subr.mxu0 0.0
      %4037 = vmatpush1.msra.mxu0 %v1892
      %4038 = vmatprep.subr.mxu0 0.0
      %4039 = vmatpush1.msra.mxu0 %v1893
      %4040 = vmatprep.subr.mxu0 0.0
      %4041 = vmatpush1.msra.mxu0 %v1894
      %4042 = vmatprep.subr.mxu0 0.0
      %4043 = vmatpush1.msra.mxu0 %v1895
      %4044 = vmatprep.subr.mxu0 0.0
      %4045 = vmatpush1.msra.mxu0 %v1896
      %4046 = vmatprep.subr.mxu0 0.0
      %4047 = vmatpush1.msra.mxu0 %v1897
      %4048 = vmatprep.subr.mxu0 0.0
      %4049 = vmatpush1.msra.mxu0 %v1898
      %4050 = vmatprep.subr.mxu0 0.0
      %4051 = vmatpush1.msra.mxu0 %v1899
      %4052 = vmatprep.subr.mxu0 0.0
      %4053 = vmatpush1.msra.mxu0 %v1900
      %4054 = vmatprep.subr.mxu0 0.0
      %4055 = vmatpush1.msra.mxu0 %v1901
      %4056 = vmatprep.subr.mxu0 0.0
      %4057 = vmatpush1.msra.mxu0 %v1902
      %4058 = vmatprep.subr.mxu0 0.0
      %4059 = vmatpush1.msra.mxu0 %v1903
      %4060 = vmatprep.subr.mxu0 0.0
      %4061 = vmatpush1.msra.mxu0 %v1904
      %4062 = vmatprep.subr.mxu0 0.0
      %4063 = vmatpush1.msra.mxu0 %v1905
      %4064 = vmatprep.subr.mxu0 0.0
      %4065 = vmatpush1.msra.mxu0 %v1906
      %4066 = vmatprep.subr.mxu0 0.0
      %4067 = vmatpush1.msra.mxu0 %v1907
      %4068 = vmatprep.mubr.f32.mxu0 %v3989
      %4069 = vmatmul.mubr.f32.gmra.mrb[0].mxu0 %v3988
      %v4070 = vpop.f32.mrb[0].mxu0
      %v4071 = vadd.f32 0.0, %v4070
      %v4072 = vpop.f32.mrb[0].mxu0
      %4073 = vmatprep.mubr.f32.mxu0 %v3991
      %4074 = vmatmul.mubr.f32.gmra.mrb[0].mxu0 %v3990
      %v4075 = vpop.f32.mrb[0].mxu0
      %v4076 = vadd.f32 0.0, %v4075
      %v4077 = vpop.f32.mrb[0].mxu0
      %4078 = vmatprep.mubr.f32.mxu0 %v3993
      %4079 = vmatmul.mubr.f32.gmra.mrb[0].mxu0 %v3992
      %v4080 = vpop.f32.mrb[0].mxu0
      %v4081 = vadd.f32 0.0, %v4080
      %v4082 = vpop.f32.mrb[0].mxu0
      %4083 = vmatprep.mubr.f32.mxu0 %v3995
      %4084 = vmatmul.mubr.f32.gmra.mrb[0].mxu0 %v3994
      %v4085 = vpop.f32.mrb[0].mxu0
      %v4086 = vadd.f32 0.0, %v4085
      %v4087 = vpop.f32.mrb[0].mxu0
      %4088 = vmatprep.mubr.f32.mxu0 %v3997
      %4089 = vmatmul.mubr.f32.gmra.mrb[0].mxu0 %v3996
      %v4090 = vpop.f32.mrb[0].mxu0
      %v4091 = vadd.f32 0.0, %v4090
      %v4092 = vpop.f32.mrb[0].mxu0
      %4093 = vmatprep.mubr.f32.mxu0 %v3999
      %4094 = vmatmul.mubr.f32.gmra.mrb[0].mxu0 %v3998
      %v4095 = vpop.f32.mrb[0].mxu0
      %v4096 = vadd.f32 0.0, %v4095
      %v4097 = vpop.f32.mrb[0].mxu0
      %4098 = vmatprep.mubr.f32.mxu0 %v4001
      %4099 = vmatmul.mubr.f32.gmra.mrb[0].mxu0 %v4000
      %v4100 = vpop.f32.mrb[0].mxu0
      %v4101 = vadd.f32 0.0, %v4100
      %v4102 = vpop.f32.mrb[0].mxu0
      %4103 = vmatprep.mubr.f32.mxu0 %v4003
      %4104 = vmatmul.mubr.f32.gmra.mrb[0].mxu0 %v4002
      %v4105 = vpop.f32.mrb[0].mxu0
      %v4106 = vadd.f32 0.0, %v4105
      %v4107 = vpop.f32.mrb[0].mxu0
      %4108 = vdwg.mxu0
      %s4109 = scalar_lea.vmem %s3, 128
      %v4110 = vld [vmem:[%s4109] sm:$0xff]
      %v4111 = vld [vmem:[%s4109 + $0x8] sm:$0xff]
      %v4113 = vsel %vm2156, %v4071, 0
      %v4116 = vsel %vm2156, %v4076, 0
      %v4119 = vsel %vm2156, %v4081, 0
      %v4122 = vsel %vm2156, %v4086, 0
      %v4125 = vsel %vm2156, %v4091, 0
      %v4128 = vsel %vm2156, %v4096, 0
      %v4131 = vsel %vm2156, %v4101, 0
      %v4134 = vsel %vm2156, %v4106, 0
      %4136 = vmatprep.subr.mxu0 0.0
      %4137 = vmatpush1.msra.mxu0 %v4110
      %4138 = vmatprep.subr.mxu0 0.0
      %4139 = vmatpush1.msra.mxu0 %v4111
      %4140 = vmatprep.subr.mxu0 0.0
      %4141 = vmatpush1.msra.mxu0 0.0
      %4142 = vmatprep.subr.mxu0 0.0
      %4143 = vmatpush1.msra.mxu0 0.0
      %4144 = vmatprep.subr.mxu0 0.0
      %4145 = vmatpush1.msra.mxu0 0.0
      %4146 = vmatprep.subr.mxu0 0.0
      %4147 = vmatpush1.msra.mxu0 0.0
      %4148 = vmatprep.subr.mxu0 0.0
      %4149 = vmatpush1.msra.mxu0 0.0
      %4150 = vmatprep.subr.mxu0 0.0
      %4151 = vmatpush1.msra.mxu0 0.0
      %4152 = vmatprep.subr.mxu0 0.0
      %4153 = vmatpush1.msra.mxu0 0.0
      %4154 = vmatprep.subr.mxu0 0.0
      %4155 = vmatpush1.msra.mxu0 0.0
      %4156 = vmatprep.subr.mxu0 0.0
      %4157 = vmatpush1.msra.mxu0 0.0
      %4158 = vmatprep.subr.mxu0 0.0
      %4159 = vmatpush1.msra.mxu0 0.0
      %4160 = vmatprep.subr.mxu0 0.0
      %4161 = vmatpush1.msra.mxu0 0.0
      %4162 = vmatprep.subr.mxu0 0.0
      %4163 = vmatpush1.msra.mxu0 0.0
      %4164 = vmatprep.subr.mxu0 0.0
      %4165 = vmatpush1.msra.mxu0 0.0
      %4166 = vmatprep.subr.mxu0 0.0
      %4167 = vmatpush1.msra.mxu0 0.0
      %4168 = vmatprep.subr.mxu0 0.0
      %4169 = vmatpush1.msra.mxu0 0.0
      %4170 = vmatprep.subr.mxu0 0.0
      %4171 = vmatpush1.msra.mxu0 0.0
      %4172 = vmatprep.subr.mxu0 0.0
      %4173 = vmatpush1.msra.mxu0 0.0
      %4174 = vmatprep.subr.mxu0 0.0
      %4175 = vmatpush1.msra.mxu0 0.0
      %4176 = vmatprep.subr.mxu0 0.0
      %4177 = vmatpush1.msra.mxu0 0.0
      %4178 = vmatprep.subr.mxu0 0.0
      %4179 = vmatpush1.msra.mxu0 0.0
      %4180 = vmatprep.subr.mxu0 0.0
      %4181 = vmatpush1.msra.mxu0 0.0
      %4182 = vmatprep.subr.mxu0 0.0
      %4183 = vmatpush1.msra.mxu0 0.0
      %4184 = vmatprep.subr.mxu0 0.0
      %4185 = vmatpush1.msra.mxu0 0.0
      %4186 = vmatprep.subr.mxu0 0.0
      %4187 = vmatpush1.msra.mxu0 0.0
      %4188 = vmatprep.subr.mxu0 0.0
      %4189 = vmatpush1.msra.mxu0 0.0
      %4190 = vmatprep.subr.mxu0 0.0
      %4191 = vmatpush1.msra.mxu0 0.0
      %4192 = vmatprep.subr.mxu0 0.0
      %4193 = vmatpush1.msra.mxu0 0.0
      %4194 = vmatprep.subr.mxu0 0.0
      %4195 = vmatpush1.msra.mxu0 0.0
      %4196 = vmatprep.subr.mxu0 0.0
      %4197 = vmatpush1.msra.mxu0 0.0
      %4198 = vmatprep.subr.mxu0 0.0
      %4199 = vmatpush1.msra.mxu0 0.0
      %4200 = vmatprep.mubr.f32.mxu0 0.0
      %4201 = vmatmul.mubr.f32.gmra.mrb[0].mxu0 %v4113
      %v4202 = vpop.f32.mrb[0].mxu0
      %v4203 = vadd.f32 0.0, %v4202
      %v4204 = vpop.f32.mrb[0].mxu0
      %4205 = vmatprep.mubr.f32.mxu0 0.0
      %4206 = vmatmul.mubr.f32.gmra.mrb[0].mxu0 %v4116
      %v4207 = vpop.f32.mrb[0].mxu0
      %v4208 = vadd.f32 0.0, %v4207
      %v4209 = vpop.f32.mrb[0].mxu0
      %4210 = vmatprep.mubr.f32.mxu0 0.0
      %4211 = vmatmul.mubr.f32.gmra.mrb[0].mxu0 %v4119
      %v4212 = vpop.f32.mrb[0].mxu0
      %v4213 = vadd.f32 0.0, %v4212
      %v4214 = vpop.f32.mrb[0].mxu0
      %4215 = vmatprep.mubr.f32.mxu0 0.0
      %4216 = vmatmul.mubr.f32.gmra.mrb[0].mxu0 %v4122
      %v4217 = vpop.f32.mrb[0].mxu0
      %v4218 = vadd.f32 0.0, %v4217
      %v4219 = vpop.f32.mrb[0].mxu0
      %4220 = vmatprep.mubr.f32.mxu0 0.0
      %4221 = vmatmul.mubr.f32.gmra.mrb[0].mxu0 %v4125
      %v4222 = vpop.f32.mrb[0].mxu0
      %v4223 = vadd.f32 0.0, %v4222
      %v4224 = vpop.f32.mrb[0].mxu0
      %4225 = vmatprep.mubr.f32.mxu0 0.0
      %4226 = vmatmul.mubr.f32.gmra.mrb[0].mxu0 %v4128
      %v4227 = vpop.f32.mrb[0].mxu0
      %v4228 = vadd.f32 0.0, %v4227
      %v4229 = vpop.f32.mrb[0].mxu0
      %4230 = vmatprep.mubr.f32.mxu0 0.0
      %4231 = vmatmul.mubr.f32.gmra.mrb[0].mxu0 %v4131
      %v4232 = vpop.f32.mrb[0].mxu0
      %v4233 = vadd.f32 0.0, %v4232
      %v4234 = vpop.f32.mrb[0].mxu0
      %4235 = vmatprep.mubr.f32.mxu0 0.0
      %4236 = vmatmul.mubr.f32.gmra.mrb[0].mxu0 %v4134
      %v4237 = vpop.f32.mrb[0].mxu0
      %v4238 = vadd.f32 0.0, %v4237
      %v4239 = vpop.f32.mrb[0].mxu0
      %4240 = vdwg.mxu0
      %v4241 = vadd.f32 %v3979, %v4203
      %v4242 = vadd.f32 %v3980, %v4208
      %v4243 = vadd.f32 %v3981, %v4213
      %v4244 = vadd.f32 %v3982, %v4218
      %v4245 = vadd.f32 %v3983, %v4223
      %v4246 = vadd.f32 %v3984, %v4228
      %v4247 = vadd.f32 %v3985, %v4233
      %v4248 = vadd.f32 %v3986, %v4238
      %v4249 = vld [vmem:[%s6] sm:$0x1]
      %v4251 = vlaneseq
      %v4252 = vshrl.u32 %v4251, 7
      %v4253 = vsub.s32 0, %v4252
      %v4254 = vrot.slane %v4249, %v4253
      %v4256 = vadd.f32 %v4241, %v4254
      %v4257 = vadd.f32 %v4242, %v4254
      %v4258 = vadd.f32 %v4243, %v4254
      %v4259 = vadd.f32 %v4244, %v4254
      %v4260 = vadd.f32 %v4245, %v4254
      %v4261 = vadd.f32 %v4246, %v4254
      %v4262 = vadd.f32 %v4247, %v4254
      %v4263 = vadd.f32 %v4248, %v4254
      %v4264 = vld [vmem:[%s5] sm:$0xff]
      %v4265 = vld [vmem:[%s5 + $0x8] sm:$0xff]
      %vm4266 = vcmask 523264
      %v4268 = vsel %vm4266, %v4264, 0
      %v4271 = vsel %vm4266, %v4265, 0
      %4273 = vmatprep.subr.mxu0 0.0
      %4274 = vmatpush1.msra.mxu0 %v4256
      %4275 = vmatprep.subr.mxu0 0.0
      %4276 = vmatpush1.msra.mxu0 %v4257
      %4277 = vmatprep.subr.mxu0 0.0
      %4278 = vmatpush1.msra.mxu0 %v4258
      %4279 = vmatprep.subr.mxu0 0.0
      %4280 = vmatpush1.msra.mxu0 %v4259
      %4281 = vmatprep.subr.mxu0 0.0
      %4282 = vmatpush1.msra.mxu0 %v4260
      %4283 = vmatprep.subr.mxu0 0.0
      %4284 = vmatpush1.msra.mxu0 %v4261
      %4285 = vmatprep.subr.mxu0 0.0
      %4286 = vmatpush1.msra.mxu0 %v4262
      %4287 = vmatprep.subr.mxu0 0.0
      %4288 = vmatpush1.msra.mxu0 %v4263
      %4289 = vmatprep.subr.mxu0 0.0
      %4290 = vmatpush1.msra.mxu0 0.0
      %4291 = vmatprep.subr.mxu0 0.0
      %4292 = vmatpush1.msra.mxu0 0.0
      %4293 = vmatprep.subr.mxu0 0.0
      %4294 = vmatpush1.msra.mxu0 0.0
      %4295 = vmatprep.subr.mxu0 0.0
      %4296 = vmatpush1.msra.mxu0 0.0
      %4297 = vmatprep.subr.mxu0 0.0
      %4298 = vmatpush1.msra.mxu0 0.0
      %4299 = vmatprep.subr.mxu0 0.0
      %4300 = vmatpush1.msra.mxu0 0.0
      %4301 = vmatprep.subr.mxu0 0.0
      %4302 = vmatpush1.msra.mxu0 0.0
      %4303 = vmatprep.subr.mxu0 0.0
      %4304 = vmatpush1.msra.mxu0 0.0
      %4305 = vmatprep.subr.mxu0 0.0
      %4306 = vmatpush1.msra.mxu0 0.0
      %4307 = vmatprep.subr.mxu0 0.0
      %4308 = vmatpush1.msra.mxu0 0.0
      %4309 = vmatprep.subr.mxu0 0.0
      %4310 = vmatpush1.msra.mxu0 0.0
      %4311 = vmatprep.subr.mxu0 0.0
      %4312 = vmatpush1.msra.mxu0 0.0
      %4313 = vmatprep.subr.mxu0 0.0
      %4314 = vmatpush1.msra.mxu0 0.0
      %4315 = vmatprep.subr.mxu0 0.0
      %4316 = vmatpush1.msra.mxu0 0.0
      %4317 = vmatprep.subr.mxu0 0.0
      %4318 = vmatpush1.msra.mxu0 0.0
      %4319 = vmatprep.subr.mxu0 0.0
      %4320 = vmatpush1.msra.mxu0 0.0
      %4321 = vmatprep.subr.mxu0 0.0
      %4322 = vmatpush1.msra.mxu0 0.0
      %4323 = vmatprep.subr.mxu0 0.0
      %4324 = vmatpush1.msra.mxu0 0.0
      %4325 = vmatprep.subr.mxu0 0.0
      %4326 = vmatpush1.msra.mxu0 0.0
      %4327 = vmatprep.subr.mxu0 0.0
      %4328 = vmatpush1.msra.mxu0 0.0
      %4329 = vmatprep.subr.mxu0 0.0
      %4330 = vmatpush1.msra.mxu0 0.0
      %4331 = vmatprep.subr.mxu0 0.0
      %4332 = vmatpush1.msra.mxu0 0.0
      %4333 = vmatprep.subr.mxu0 0.0
      %4334 = vmatpush1.msra.mxu0 0.0
      %4335 = vmatprep.subr.mxu0 0.0
      %4336 = vmatpush1.msra.mxu0 0.0
      %4337 = vmatprep.mubr.f32.mxu0 0.0
      %4338 = vmatmul.mubr.f32.gmra.mrb[0].mxu0 %v4268
      %v4339 = vpop.f32.mrb[0].mxu0
      %v4340 = vadd.f32 0.0, %v4339
      %v4341 = vpop.f32.mrb[0].mxu0
      %4342 = vmatprep.mubr.f32.mxu0 0.0
      %4343 = vmatmul.mubr.f32.gmra.mrb[0].mxu0 %v4271
      %v4344 = vpop.f32.mrb[0].mxu0
      %v4345 = vadd.f32 0.0, %v4344
      %v4346 = vpop.f32.mrb[0].mxu0
      %4347 = vdwg.mxu0
      %s4348 = scalar_lea.vmem %s5, 16
      %v4349 = vld [vmem:[%s4348] sm:$0xff]
      %v4350 = vld [vmem:[%s4348 + $0x8] sm:$0xff]
      %v4352 = vsel %vm4266, %v4349, 0
      %v4355 = vsel %vm4266, %v4350, 0
      %4357 = vmatprep.subr.mxu0 0.0
      %4358 = vmatpush1.msra.mxu0 %v4256
      %4359 = vmatprep.subr.mxu0 0.0
      %4360 = vmatpush1.msra.mxu0 %v4257
      %4361 = vmatprep.subr.mxu0 0.0
      %4362 = vmatpush1.msra.mxu0 %v4258
      %4363 = vmatprep.subr.mxu0 0.0
      %4364 = vmatpush1.msra.mxu0 %v4259
      %4365 = vmatprep.subr.mxu0 0.0
      %4366 = vmatpush1.msra.mxu0 %v4260
      %4367 = vmatprep.subr.mxu0 0.0
      %4368 = vmatpush1.msra.mxu0 %v4261
      %4369 = vmatprep.subr.mxu0 0.0
      %4370 = vmatpush1.msra.mxu0 %v4262
      %4371 = vmatprep.subr.mxu0 0.0
      %4372 = vmatpush1.msra.mxu0 %v4263
      %4373 = vmatprep.subr.mxu0 0.0
      %4374 = vmatpush1.msra.mxu0 0.0
      %4375 = vmatprep.subr.mxu0 0.0
      %4376 = vmatpush1.msra.mxu0 0.0
      %4377 = vmatprep.subr.mxu0 0.0
      %4378 = vmatpush1.msra.mxu0 0.0
      %4379 = vmatprep.subr.mxu0 0.0
      %4380 = vmatpush1.msra.mxu0 0.0
      %4381 = vmatprep.subr.mxu0 0.0
      %4382 = vmatpush1.msra.mxu0 0.0
      %4383 = vmatprep.subr.mxu0 0.0
      %4384 = vmatpush1.msra.mxu0 0.0
      %4385 = vmatprep.subr.mxu0 0.0
      %4386 = vmatpush1.msra.mxu0 0.0
      %4387 = vmatprep.subr.mxu0 0.0
      %4388 = vmatpush1.msra.mxu0 0.0
      %4389 = vmatprep.subr.mxu0 0.0
      %4390 = vmatpush1.msra.mxu0 0.0
      %4391 = vmatprep.subr.mxu0 0.0
      %4392 = vmatpush1.msra.mxu0 0.0
      %4393 = vmatprep.subr.mxu0 0.0
      %4394 = vmatpush1.msra.mxu0 0.0
      %4395 = vmatprep.subr.mxu0 0.0
      %4396 = vmatpush1.msra.mxu0 0.0
      %4397 = vmatprep.subr.mxu0 0.0
      %4398 = vmatpush1.msra.mxu0 0.0
      %4399 = vmatprep.subr.mxu0 0.0
      %4400 = vmatpush1.msra.mxu0 0.0
      %4401 = vmatprep.subr.mxu0 0.0
      %4402 = vmatpush1.msra.mxu0 0.0
      %4403 = vmatprep.subr.mxu0 0.0
      %4404 = vmatpush1.msra.mxu0 0.0
      %4405 = vmatprep.subr.mxu0 0.0
      %4406 = vmatpush1.msra.mxu0 0.0
      %4407 = vmatprep.subr.mxu0 0.0
      %4408 = vmatpush1.msra.mxu0 0.0
      %4409 = vmatprep.subr.mxu0 0.0
      %4410 = vmatpush1.msra.mxu0 0.0
      %4411 = vmatprep.subr.mxu0 0.0
      %4412 = vmatpush1.msra.mxu0 0.0
      %4413 = vmatprep.subr.mxu0 0.0
      %4414 = vmatpush1.msra.mxu0 0.0
      %4415 = vmatprep.subr.mxu0 0.0
      %4416 = vmatpush1.msra.mxu0 0.0
      %4417 = vmatprep.subr.mxu0 0.0
      %4418 = vmatpush1.msra.mxu0 0.0
      %4419 = vmatprep.subr.mxu0 0.0
      %4420 = vmatpush1.msra.mxu0 0.0
      %4421 = vmatprep.mubr.f32.mxu0 0.0
      %4422 = vmatmul.mubr.f32.gmra.mrb[0].mxu0 %v4352
      %v4423 = vpop.f32.mrb[0].mxu0
      %v4424 = vadd.f32 0.0, %v4423
      %v4425 = vpop.f32.mrb[0].mxu0
      %4426 = vmatprep.mubr.f32.mxu0 0.0
      %4427 = vmatmul.mubr.f32.gmra.mrb[0].mxu0 %v4355
      %v4428 = vpop.f32.mrb[0].mxu0
      %v4429 = vadd.f32 0.0, %v4428
      %v4430 = vpop.f32.mrb[0].mxu0
      %4431 = vdwg.mxu0
      %v4432 = vmax.f32 %v4340, %v4424
      %v4433 = vmax.f32 %v4345, %v4429
      %s4434 = scalar_lea.vmem %s5, 32
      %v4435 = vld [vmem:[%s4434] sm:$0xff]
      %v4436 = vld [vmem:[%s4434 + $0x8] sm:$0xff]
      %v4438 = vsel %vm4266, %v4435, 0
      %v4441 = vsel %vm4266, %v4436, 0
      %4443 = vmatprep.subr.mxu0 0.0
      %4444 = vmatpush1.msra.mxu0 %v4256
      %4445 = vmatprep.subr.mxu0 0.0
      %4446 = vmatpush1.msra.mxu0 %v4257
      %4447 = vmatprep.subr.mxu0 0.0
      %4448 = vmatpush1.msra.mxu0 %v4258
      %4449 = vmatprep.subr.mxu0 0.0
      %4450 = vmatpush1.msra.mxu0 %v4259
      %4451 = vmatprep.subr.mxu0 0.0
      %4452 = vmatpush1.msra.mxu0 %v4260
      %4453 = vmatprep.subr.mxu0 0.0
      %4454 = vmatpush1.msra.mxu0 %v4261
      %4455 = vmatprep.subr.mxu0 0.0
      %4456 = vmatpush1.msra.mxu0 %v4262
      %4457 = vmatprep.subr.mxu0 0.0
      %4458 = vmatpush1.msra.mxu0 %v4263
      %4459 = vmatprep.subr.mxu0 0.0
      %4460 = vmatpush1.msra.mxu0 0.0
      %4461 = vmatprep.subr.mxu0 0.0
      %4462 = vmatpush1.msra.mxu0 0.0
      %4463 = vmatprep.subr.mxu0 0.0
      %4464 = vmatpush1.msra.mxu0 0.0
      %4465 = vmatprep.subr.mxu0 0.0
      %4466 = vmatpush1.msra.mxu0 0.0
      %4467 = vmatprep.subr.mxu0 0.0
      %4468 = vmatpush1.msra.mxu0 0.0
      %4469 = vmatprep.subr.mxu0 0.0
      %4470 = vmatpush1.msra.mxu0 0.0
      %4471 = vmatprep.subr.mxu0 0.0
      %4472 = vmatpush1.msra.mxu0 0.0
      %4473 = vmatprep.subr.mxu0 0.0
      %4474 = vmatpush1.msra.mxu0 0.0
      %4475 = vmatprep.subr.mxu0 0.0
      %4476 = vmatpush1.msra.mxu0 0.0
      %4477 = vmatprep.subr.mxu0 0.0
      %4478 = vmatpush1.msra.mxu0 0.0
      %4479 = vmatprep.subr.mxu0 0.0
      %4480 = vmatpush1.msra.mxu0 0.0
      %4481 = vmatprep.subr.mxu0 0.0
      %4482 = vmatpush1.msra.mxu0 0.0
      %4483 = vmatprep.subr.mxu0 0.0
      %4484 = vmatpush1.msra.mxu0 0.0
      %4485 = vmatprep.subr.mxu0 0.0
      %4486 = vmatpush1.msra.mxu0 0.0
      %4487 = vmatprep.subr.mxu0 0.0
      %4488 = vmatpush1.msra.mxu0 0.0
      %4489 = vmatprep.subr.mxu0 0.0
      %4490 = vmatpush1.msra.mxu0 0.0
      %4491 = vmatprep.subr.mxu0 0.0
      %4492 = vmatpush1.msra.mxu0 0.0
      %4493 = vmatprep.subr.mxu0 0.0
      %4494 = vmatpush1.msra.mxu0 0.0
      %4495 = vmatprep.subr.mxu0 0.0
      %4496 = vmatpush1.msra.mxu0 0.0
      %4497 = vmatprep.subr.mxu0 0.0
      %4498 = vmatpush1.msra.mxu0 0.0
      %4499 = vmatprep.subr.mxu0 0.0
      %4500 = vmatpush1.msra.mxu0 0.0
      %4501 = vmatprep.subr.mxu0 0.0
      %4502 = vmatpush1.msra.mxu0 0.0
      %4503 = vmatprep.subr.mxu0 0.0
      %4504 = vmatpush1.msra.mxu0 0.0
      %4505 = vmatprep.subr.mxu0 0.0
      %4506 = vmatpush1.msra.mxu0 0.0
      %4507 = vmatprep.mubr.f32.mxu0 0.0
      %4508 = vmatmul.mubr.f32.gmra.mrb[0].mxu0 %v4438
      %v4509 = vpop.f32.mrb[0].mxu0
      %v4510 = vadd.f32 0.0, %v4509
      %v4511 = vpop.f32.mrb[0].mxu0
      %4512 = vmatprep.mubr.f32.mxu0 0.0
      %4513 = vmatmul.mubr.f32.gmra.mrb[0].mxu0 %v4441
      %v4514 = vpop.f32.mrb[0].mxu0
      %v4515 = vadd.f32 0.0, %v4514
      %v4516 = vpop.f32.mrb[0].mxu0
      %4517 = vdwg.mxu0
      %v4518 = vmax.f32 %v4432, %v4510
      %v4519 = vmax.f32 %v4433, %v4515
      %s4520 = scalar_lea.vmem %s5, 48
      %v4521 = vld [vmem:[%s4520] sm:$0xff]
      %v4522 = vld [vmem:[%s4520 + $0x8] sm:$0xff]
      %v4524 = vsel %vm4266, %v4521, 0
      %v4527 = vsel %vm4266, %v4522, 0
      %4529 = vmatprep.subr.mxu0 0.0
      %4530 = vmatpush1.msra.mxu0 %v4256
      %4531 = vmatprep.subr.mxu0 0.0
      %4532 = vmatpush1.msra.mxu0 %v4257
      %4533 = vmatprep.subr.mxu0 0.0
      %4534 = vmatpush1.msra.mxu0 %v4258
      %4535 = vmatprep.subr.mxu0 0.0
      %4536 = vmatpush1.msra.mxu0 %v4259
      %4537 = vmatprep.subr.mxu0 0.0
      %4538 = vmatpush1.msra.mxu0 %v4260
      %4539 = vmatprep.subr.mxu0 0.0
      %4540 = vmatpush1.msra.mxu0 %v4261
      %4541 = vmatprep.subr.mxu0 0.0
      %4542 = vmatpush1.msra.mxu0 %v4262
      %4543 = vmatprep.subr.mxu0 0.0
      %4544 = vmatpush1.msra.mxu0 %v4263
      %4545 = vmatprep.subr.mxu0 0.0
      %4546 = vmatpush1.msra.mxu0 0.0
      %4547 = vmatprep.subr.mxu0 0.0
      %4548 = vmatpush1.msra.mxu0 0.0
      %4549 = vmatprep.subr.mxu0 0.0
      %4550 = vmatpush1.msra.mxu0 0.0
      %4551 = vmatprep.subr.mxu0 0.0
      %4552 = vmatpush1.msra.mxu0 0.0
      %4553 = vmatprep.subr.mxu0 0.0
      %4554 = vmatpush1.msra.mxu0 0.0
      %4555 = vmatprep.subr.mxu0 0.0
      %4556 = vmatpush1.msra.mxu0 0.0
      %4557 = vmatprep.subr.mxu0 0.0
      %4558 = vmatpush1.msra.mxu0 0.0
      %4559 = vmatprep.subr.mxu0 0.0
      %4560 = vmatpush1.msra.mxu0 0.0
      %4561 = vmatprep.subr.mxu0 0.0
      %4562 = vmatpush1.msra.mxu0 0.0
      %4563 = vmatprep.subr.mxu0 0.0
      %4564 = vmatpush1.msra.mxu0 0.0
      %4565 = vmatprep.subr.mxu0 0.0
      %4566 = vmatpush1.msra.mxu0 0.0
      %4567 = vmatprep.subr.mxu0 0.0
      %4568 = vmatpush1.msra.mxu0 0.0
      %4569 = vmatprep.subr.mxu0 0.0
      %4570 = vmatpush1.msra.mxu0 0.0
      %4571 = vmatprep.subr.mxu0 0.0
      %4572 = vmatpush1.msra.mxu0 0.0
      %4573 = vmatprep.subr.mxu0 0.0
      %4574 = vmatpush1.msra.mxu0 0.0
      %4575 = vmatprep.subr.mxu0 0.0
      %4576 = vmatpush1.msra.mxu0 0.0
      %4577 = vmatprep.subr.mxu0 0.0
      %4578 = vmatpush1.msra.mxu0 0.0
      %4579 = vmatprep.subr.mxu0 0.0
      %4580 = vmatpush1.msra.mxu0 0.0
      %4581 = vmatprep.subr.mxu0 0.0
      %4582 = vmatpush1.msra.mxu0 0.0
      %4583 = vmatprep.subr.mxu0 0.0
      %4584 = vmatpush1.msra.mxu0 0.0
      %4585 = vmatprep.subr.mxu0 0.0
      %4586 = vmatpush1.msra.mxu0 0.0
      %4587 = vmatprep.subr.mxu0 0.0
      %4588 = vmatpush1.msra.mxu0 0.0
      %4589 = vmatprep.subr.mxu0 0.0
      %4590 = vmatpush1.msra.mxu0 0.0
      %4591 = vmatprep.subr.mxu0 0.0
      %4592 = vmatpush1.msra.mxu0 0.0
      %4593 = vmatprep.mubr.f32.mxu0 0.0
      %4594 = vmatmul.mubr.f32.gmra.mrb[0].mxu0 %v4524
      %v4595 = vpop.f32.mrb[0].mxu0
      %v4596 = vadd.f32 0.0, %v4595
      %v4597 = vpop.f32.mrb[0].mxu0
      %4598 = vmatprep.mubr.f32.mxu0 0.0
      %4599 = vmatmul.mubr.f32.gmra.mrb[0].mxu0 %v4527
      %v4600 = vpop.f32.mrb[0].mxu0
      %v4601 = vadd.f32 0.0, %v4600
      %v4602 = vpop.f32.mrb[0].mxu0
      %4603 = vdwg.mxu0
      %v4604 = vmax.f32 %v4518, %v4596
      %v4605 = vmax.f32 %v4519, %v4601
      %v4606 = vmax.f32 %v4604, 0.0
      %v4607 = vmax.f32 %v4605, 0.0
      %v4608 = vld [vmem:[%s8] sm:$0xff]
      %v4609 = vld [vmem:[%s8 + $0x8] sm:$0xff]
      %v4611 = vsel %vm2156, %v4608, 0
      %v4614 = vsel %vm2156, %v4609, 0
      %4616 = vmatprep.subr.mxu0 0.0
      %4617 = vmatpush1.msra.mxu0 %v4606
      %4618 = vmatprep.subr.mxu0 0.0
      %4619 = vmatpush1.msra.mxu0 %v4607
      %4620 = vmatprep.subr.mxu0 0.0
      %4621 = vmatpush1.msra.mxu0 0.0
      %4622 = vmatprep.subr.mxu0 0.0
      %4623 = vmatpush1.msra.mxu0 0.0
      %4624 = vmatprep.subr.mxu0 0.0
      %4625 = vmatpush1.msra.mxu0 0.0
      %4626 = vmatprep.subr.mxu0 0.0
      %4627 = vmatpush1.msra.mxu0 0.0
      %4628 = vmatprep.subr.mxu0 0.0
      %4629 = vmatpush1.msra.mxu0 0.0
      %4630 = vmatprep.subr.mxu0 0.0
      %4631 = vmatpush1.msra.mxu0 0.0
      %4632 = vmatprep.subr.mxu0 0.0
      %4633 = vmatpush1.msra.mxu0 0.0
      %4634 = vmatprep.subr.mxu0 0.0
      %4635 = vmatpush1.msra.mxu0 0.0
      %4636 = vmatprep.subr.mxu0 0.0
      %4637 = vmatpush1.msra.mxu0 0.0
      %4638 = vmatprep.subr.mxu0 0.0
      %4639 = vmatpush1.msra.mxu0 0.0
      %4640 = vmatprep.subr.mxu0 0.0
      %4641 = vmatpush1.msra.mxu0 0.0
      %4642 = vmatprep.subr.mxu0 0.0
      %4643 = vmatpush1.msra.mxu0 0.0
      %4644 = vmatprep.subr.mxu0 0.0
      %4645 = vmatpush1.msra.mxu0 0.0
      %4646 = vmatprep.subr.mxu0 0.0
      %4647 = vmatpush1.msra.mxu0 0.0
      %4648 = vmatprep.subr.mxu0 0.0
      %4649 = vmatpush1.msra.mxu0 0.0
      %4650 = vmatprep.subr.mxu0 0.0
      %4651 = vmatpush1.msra.mxu0 0.0
      %4652 = vmatprep.subr.mxu0 0.0
      %4653 = vmatpush1.msra.mxu0 0.0
      %4654 = vmatprep.subr.mxu0 0.0
      %4655 = vmatpush1.msra.mxu0 0.0
      %4656 = vmatprep.subr.mxu0 0.0
      %4657 = vmatpush1.msra.mxu0 0.0
      %4658 = vmatprep.subr.mxu0 0.0
      %4659 = vmatpush1.msra.mxu0 0.0
      %4660 = vmatprep.subr.mxu0 0.0
      %4661 = vmatpush1.msra.mxu0 0.0
      %4662 = vmatprep.subr.mxu0 0.0
      %4663 = vmatpush1.msra.mxu0 0.0
      %4664 = vmatprep.subr.mxu0 0.0
      %4665 = vmatpush1.msra.mxu0 0.0
      %4666 = vmatprep.subr.mxu0 0.0
      %4667 = vmatpush1.msra.mxu0 0.0
      %4668 = vmatprep.subr.mxu0 0.0
      %4669 = vmatpush1.msra.mxu0 0.0
      %4670 = vmatprep.subr.mxu0 0.0
      %4671 = vmatpush1.msra.mxu0 0.0
      %4672 = vmatprep.subr.mxu0 0.0
      %4673 = vmatpush1.msra.mxu0 0.0
      %4674 = vmatprep.subr.mxu0 0.0
      %4675 = vmatpush1.msra.mxu0 0.0
      %4676 = vmatprep.subr.mxu0 0.0
      %4677 = vmatpush1.msra.mxu0 0.0
      %4678 = vmatprep.subr.mxu0 0.0
      %4679 = vmatpush1.msra.mxu0 0.0
      %4680 = vmatprep.mubr.f32.mxu0 0.0
      %4681 = vmatmul.mubr.f32.gmra.mrb[0].mxu0 %v4611
      %v4682 = vpop.f32.mrb[0].mxu0
      %v4683 = vadd.f32 0.0, %v4682
      %v4684 = vpop.f32.mrb[0].mxu0
      %4685 = vmatprep.mubr.f32.mxu0 0.0
      %4686 = vmatmul.mubr.f32.gmra.mrb[0].mxu0 %v4614
      %v4687 = vpop.f32.mrb[0].mxu0
      %v4688 = vadd.f32 0.0, %v4687
      %v4689 = vpop.f32.mrb[0].mxu0
      %4690 = vdwg.mxu0
      %v4691 = vld [vmem:[%s7] sm:$0xff]
      %v4692 = vld [vmem:[%s7 + $0x8] sm:$0xff]
      %v4693 = vld [vmem:[%s7 + $0x10] sm:$0xff]
      %v4694 = vld [vmem:[%s7 + $0x18] sm:$0xff]
      %s4695 = scalar_lea.vmem %s8, 16
      %v4696 = vld [vmem:[%s4695] sm:$0xff]
      %v4697 = vld [vmem:[%s4695 + $0x8] sm:$0xff]
      %v4699 = vsel %vm2156, %v4696, 0
      %v4702 = vsel %vm2156, %v4697, 0
      %4704 = vmatprep.subr.mxu0 0.0
      %4705 = vmatpush1.msra.mxu0 %v4606
      %4706 = vmatprep.subr.mxu0 0.0
      %4707 = vmatpush1.msra.mxu0 %v4607
      %4708 = vmatprep.subr.mxu0 0.0
      %4709 = vmatpush1.msra.mxu0 0.0
      %4710 = vmatprep.subr.mxu0 0.0
      %4711 = vmatpush1.msra.mxu0 0.0
      %4712 = vmatprep.subr.mxu0 0.0
      %4713 = vmatpush1.msra.mxu0 0.0
      %4714 = vmatprep.subr.mxu0 0.0
      %4715 = vmatpush1.msra.mxu0 0.0
      %4716 = vmatprep.subr.mxu0 0.0
      %4717 = vmatpush1.msra.mxu0 0.0
      %4718 = vmatprep.subr.mxu0 0.0
      %4719 = vmatpush1.msra.mxu0 0.0
      %4720 = vmatprep.subr.mxu0 0.0
      %4721 = vmatpush1.msra.mxu0 0.0
      %4722 = vmatprep.subr.mxu0 0.0
      %4723 = vmatpush1.msra.mxu0 0.0
      %4724 = vmatprep.subr.mxu0 0.0
      %4725 = vmatpush1.msra.mxu0 0.0
      %4726 = vmatprep.subr.mxu0 0.0
      %4727 = vmatpush1.msra.mxu0 0.0
      %4728 = vmatprep.subr.mxu0 0.0
      %4729 = vmatpush1.msra.mxu0 0.0
      %4730 = vmatprep.subr.mxu0 0.0
      %4731 = vmatpush1.msra.mxu0 0.0
      %4732 = vmatprep.subr.mxu0 0.0
      %4733 = vmatpush1.msra.mxu0 0.0
      %4734 = vmatprep.subr.mxu0 0.0
      %4735 = vmatpush1.msra.mxu0 0.0
      %4736 = vmatprep.subr.mxu0 0.0
      %4737 = vmatpush1.msra.mxu0 0.0
      %4738 = vmatprep.subr.mxu0 0.0
      %4739 = vmatpush1.msra.mxu0 0.0
      %4740 = vmatprep.subr.mxu0 0.0
      %4741 = vmatpush1.msra.mxu0 0.0
      %4742 = vmatprep.subr.mxu0 0.0
      %4743 = vmatpush1.msra.mxu0 0.0
      %4744 = vmatprep.subr.mxu0 0.0
      %4745 = vmatpush1.msra.mxu0 0.0
      %4746 = vmatprep.subr.mxu0 0.0
      %4747 = vmatpush1.msra.mxu0 0.0
      %4748 = vmatprep.subr.mxu0 0.0
      %4749 = vmatpush1.msra.mxu0 0.0
      %4750 = vmatprep.subr.mxu0 0.0
      %4751 = vmatpush1.msra.mxu0 0.0
      %4752 = vmatprep.subr.mxu0 0.0
      %4753 = vmatpush1.msra.mxu0 0.0
      %4754 = vmatprep.subr.mxu0 0.0
      %4755 = vmatpush1.msra.mxu0 0.0
      %4756 = vmatprep.subr.mxu0 0.0
      %4757 = vmatpush1.msra.mxu0 0.0
      %4758 = vmatprep.subr.mxu0 0.0
      %4759 = vmatpush1.msra.mxu0 0.0
      %4760 = vmatprep.subr.mxu0 0.0
      %4761 = vmatpush1.msra.mxu0 0.0
      %4762 = vmatprep.subr.mxu0 0.0
      %4763 = vmatpush1.msra.mxu0 0.0
      %4764 = vmatprep.subr.mxu0 0.0
      %4765 = vmatpush1.msra.mxu0 0.0
      %4766 = vmatprep.subr.mxu0 0.0
      %4767 = vmatpush1.msra.mxu0 0.0
      %4768 = vmatprep.mubr.f32.mxu0 0.0
      %4769 = vmatmul.mubr.f32.gmra.mrb[0].mxu0 %v4699
      %v4770 = vpop.f32.mrb[0].mxu0
      %v4771 = vadd.f32 0.0, %v4770
      %v4772 = vpop.f32.mrb[0].mxu0
      %4773 = vmatprep.mubr.f32.mxu0 0.0
      %4774 = vmatmul.mubr.f32.gmra.mrb[0].mxu0 %v4702
      %v4775 = vpop.f32.mrb[0].mxu0
      %v4776 = vadd.f32 0.0, %v4775
      %v4777 = vpop.f32.mrb[0].mxu0
      %4778 = vdwg.mxu0
      %s4779 = scalar_lea.vmem %s7, 32
      %v4780 = vld [vmem:[%s4779] sm:$0xff]
      %v4781 = vld [vmem:[%s4779 + $0x8] sm:$0xff]
      %v4782 = vld [vmem:[%s4779 + $0x10] sm:$0xff]
      %v4783 = vld [vmem:[%s4779 + $0x18] sm:$0xff]
      %vm4784 = vcmask 261120
      %v4786 = vsel %vm4784, %v4771, 0
      %v4789 = vsel %vm4784, %v4776, 0
      %4791 = vmatprep.subr.mxu0 0.0
      %4792 = vmatpush1.msra.mxu0 %v4780
      %4793 = vmatprep.subr.mxu0 0.0
      %4794 = vmatpush1.msra.mxu0 %v4781
      %4795 = vmatprep.subr.mxu0 0.0
      %4796 = vmatpush1.msra.mxu0 %v4782
      %4797 = vmatprep.subr.mxu0 0.0
      %4798 = vmatpush1.msra.mxu0 %v4783
      %4799 = vmatprep.subr.mxu0 0.0
      %4800 = vmatpush1.msra.mxu0 0.0
      %4801 = vmatprep.subr.mxu0 0.0
      %4802 = vmatpush1.msra.mxu0 0.0
      %4803 = vmatprep.subr.mxu0 0.0
      %4804 = vmatpush1.msra.mxu0 0.0
      %4805 = vmatprep.subr.mxu0 0.0
      %4806 = vmatpush1.msra.mxu0 0.0
      %4807 = vmatprep.subr.mxu0 0.0
      %4808 = vmatpush1.msra.mxu0 0.0
      %4809 = vmatprep.subr.mxu0 0.0
      %4810 = vmatpush1.msra.mxu0 0.0
      %4811 = vmatprep.subr.mxu0 0.0
      %4812 = vmatpush1.msra.mxu0 0.0
      %4813 = vmatprep.subr.mxu0 0.0
      %4814 = vmatpush1.msra.mxu0 0.0
      %4815 = vmatprep.subr.mxu0 0.0
      %4816 = vmatpush1.msra.mxu0 0.0
      %4817 = vmatprep.subr.mxu0 0.0
      %4818 = vmatpush1.msra.mxu0 0.0
      %4819 = vmatprep.subr.mxu0 0.0
      %4820 = vmatpush1.msra.mxu0 0.0
      %4821 = vmatprep.subr.mxu0 0.0
      %4822 = vmatpush1.msra.mxu0 0.0
      %4823 = vmatprep.subr.mxu0 0.0
      %4824 = vmatpush1.msra.mxu0 0.0
      %4825 = vmatprep.subr.mxu0 0.0
      %4826 = vmatpush1.msra.mxu0 0.0
      %4827 = vmatprep.subr.mxu0 0.0
      %4828 = vmatpush1.msra.mxu0 0.0
      %4829 = vmatprep.subr.mxu0 0.0
      %4830 = vmatpush1.msra.mxu0 0.0
      %4831 = vmatprep.subr.mxu0 0.0
      %4832 = vmatpush1.msra.mxu0 0.0
      %4833 = vmatprep.subr.mxu0 0.0
      %4834 = vmatpush1.msra.mxu0 0.0
      %4835 = vmatprep.subr.mxu0 0.0
      %4836 = vmatpush1.msra.mxu0 0.0
      %4837 = vmatprep.subr.mxu0 0.0
      %4838 = vmatpush1.msra.mxu0 0.0
      %4839 = vmatprep.subr.mxu0 0.0
      %4840 = vmatpush1.msra.mxu0 0.0
      %4841 = vmatprep.subr.mxu0 0.0
      %4842 = vmatpush1.msra.mxu0 0.0
      %4843 = vmatprep.subr.mxu0 0.0
      %4844 = vmatpush1.msra.mxu0 0.0
      %4845 = vmatprep.subr.mxu0 0.0
      %4846 = vmatpush1.msra.mxu0 0.0
      %4847 = vmatprep.subr.mxu0 0.0
      %4848 = vmatpush1.msra.mxu0 0.0
      %4849 = vmatprep.subr.mxu0 0.0
      %4850 = vmatpush1.msra.mxu0 0.0
      %4851 = vmatprep.subr.mxu0 0.0
      %4852 = vmatpush1.msra.mxu0 0.0
      %4853 = vmatprep.subr.mxu0 0.0
      %4854 = vmatpush1.msra.mxu0 0.0
      %4855 = vmatprep.mubr.f32.mxu0 0.0
      %4856 = vmatmul.mubr.f32.gmra.mrb[0].mxu0 %v4786
      %v4857 = vpop.f32.mrb[0].mxu0
      %v4858 = vadd.f32 0.0, %v4857
      %v4859 = vpop.f32.mrb[0].mxu0
      %4860 = vmatprep.mubr.f32.mxu0 0.0
      %4861 = vmatmul.mubr.f32.gmra.mrb[0].mxu0 %v4789
      %v4862 = vpop.f32.mrb[0].mxu0
      %v4863 = vadd.f32 0.0, %v4862
      %v4864 = vpop.f32.mrb[0].mxu0
      %4865 = vdwg.mxu0
      %v4867 = vsel %vm4784, %v4683, 0
      %v4870 = vsel %vm4784, %v4688, 0
      %4872 = vmatprep.subr.mxu0 0.0
      %4873 = vmatpush1.msra.mxu0 %v4691
      %4874 = vmatprep.subr.mxu0 0.0
      %4875 = vmatpush1.msra.mxu0 %v4692
      %4876 = vmatprep.subr.mxu0 0.0
      %4877 = vmatpush1.msra.mxu0 %v4693
      %4878 = vmatprep.subr.mxu0 0.0
      %4879 = vmatpush1.msra.mxu0 %v4694
      %4880 = vmatprep.subr.mxu0 0.0
      %4881 = vmatpush1.msra.mxu0 0.0
      %4882 = vmatprep.subr.mxu0 0.0
      %4883 = vmatpush1.msra.mxu0 0.0
      %4884 = vmatprep.subr.mxu0 0.0
      %4885 = vmatpush1.msra.mxu0 0.0
      %4886 = vmatprep.subr.mxu0 0.0
      %4887 = vmatpush1.msra.mxu0 0.0
      %4888 = vmatprep.subr.mxu0 0.0
      %4889 = vmatpush1.msra.mxu0 0.0
      %4890 = vmatprep.subr.mxu0 0.0
      %4891 = vmatpush1.msra.mxu0 0.0
      %4892 = vmatprep.subr.mxu0 0.0
      %4893 = vmatpush1.msra.mxu0 0.0
      %4894 = vmatprep.subr.mxu0 0.0
      %4895 = vmatpush1.msra.mxu0 0.0
      %4896 = vmatprep.subr.mxu0 0.0
      %4897 = vmatpush1.msra.mxu0 0.0
      %4898 = vmatprep.subr.mxu0 0.0
      %4899 = vmatpush1.msra.mxu0 0.0
      %4900 = vmatprep.subr.mxu0 0.0
      %4901 = vmatpush1.msra.mxu0 0.0
      %4902 = vmatprep.subr.mxu0 0.0
      %4903 = vmatpush1.msra.mxu0 0.0
      %4904 = vmatprep.subr.mxu0 0.0
      %4905 = vmatpush1.msra.mxu0 0.0
      %4906 = vmatprep.subr.mxu0 0.0
      %4907 = vmatpush1.msra.mxu0 0.0
      %4908 = vmatprep.subr.mxu0 0.0
      %4909 = vmatpush1.msra.mxu0 0.0
      %4910 = vmatprep.subr.mxu0 0.0
      %4911 = vmatpush1.msra.mxu0 0.0
      %4912 = vmatprep.subr.mxu0 0.0
      %4913 = vmatpush1.msra.mxu0 0.0
      %4914 = vmatprep.subr.mxu0 0.0
      %4915 = vmatpush1.msra.mxu0 0.0
      %4916 = vmatprep.subr.mxu0 0.0
      %4917 = vmatpush1.msra.mxu0 0.0
      %4918 = vmatprep.subr.mxu0 0.0
      %4919 = vmatpush1.msra.mxu0 0.0
      %4920 = vmatprep.subr.mxu0 0.0
      %4921 = vmatpush1.msra.mxu0 0.0
      %4922 = vmatprep.subr.mxu0 0.0
      %4923 = vmatpush1.msra.mxu0 0.0
      %4924 = vmatprep.subr.mxu0 0.0
      %4925 = vmatpush1.msra.mxu0 0.0
      %4926 = vmatprep.subr.mxu0 0.0
      %4927 = vmatpush1.msra.mxu0 0.0
      %4928 = vmatprep.subr.mxu0 0.0
      %4929 = vmatpush1.msra.mxu0 0.0
      %4930 = vmatprep.subr.mxu0 0.0
      %4931 = vmatpush1.msra.mxu0 0.0
      %4932 = vmatprep.subr.mxu0 0.0
      %4933 = vmatpush1.msra.mxu0 0.0
      %4934 = vmatprep.subr.mxu0 0.0
      %4935 = vmatpush1.msra.mxu0 0.0
      %4936 = vmatprep.mubr.f32.mxu0 0.0
      %4937 = vmatmul.mubr.f32.gmra.mrb[0].mxu0 %v4867
      %v4938 = vpop.f32.mrb[0].mxu0
      %v4939 = vadd.f32 %v4858, %v4938
      %v4940 = vpop.f32.mrb[0].mxu0
      %4941 = vmatprep.mubr.f32.mxu0 0.0
      %4942 = vmatmul.mubr.f32.gmra.mrb[0].mxu0 %v4870
      %v4943 = vpop.f32.mrb[0].mxu0
      %v4944 = vadd.f32 %v4863, %v4943
      %v4945 = vpop.f32.mrb[0].mxu0
      %4946 = vdwg.mxu0
      %s4947 = scalar_lea.vmem %s8, 32
      %v4948 = vld [vmem:[%s4947] sm:$0xff]
      %v4949 = vld [vmem:[%s4947 + $0x8] sm:$0xff]
      %v4951 = vsel %vm2156, %v4948, 0
      %v4954 = vsel %vm2156, %v4949, 0
      %4956 = vmatprep.subr.mxu0 0.0
      %4957 = vmatpush1.msra.mxu0 %v4606
      %4958 = vmatprep.subr.mxu0 0.0
      %4959 = vmatpush1.msra.mxu0 %v4607
      %4960 = vmatprep.subr.mxu0 0.0
      %4961 = vmatpush1.msra.mxu0 0.0
      %4962 = vmatprep.subr.mxu0 0.0
      %4963 = vmatpush1.msra.mxu0 0.0
      %4964 = vmatprep.subr.mxu0 0.0
      %4965 = vmatpush1.msra.mxu0 0.0
      %4966 = vmatprep.subr.mxu0 0.0
      %4967 = vmatpush1.msra.mxu0 0.0
      %4968 = vmatprep.subr.mxu0 0.0
      %4969 = vmatpush1.msra.mxu0 0.0
      %4970 = vmatprep.subr.mxu0 0.0
      %4971 = vmatpush1.msra.mxu0 0.0
      %4972 = vmatprep.subr.mxu0 0.0
      %4973 = vmatpush1.msra.mxu0 0.0
      %4974 = vmatprep.subr.mxu0 0.0
      %4975 = vmatpush1.msra.mxu0 0.0
      %4976 = vmatprep.subr.mxu0 0.0
      %4977 = vmatpush1.msra.mxu0 0.0
      %4978 = vmatprep.subr.mxu0 0.0
      %4979 = vmatpush1.msra.mxu0 0.0
      %4980 = vmatprep.subr.mxu0 0.0
      %4981 = vmatpush1.msra.mxu0 0.0
      %4982 = vmatprep.subr.mxu0 0.0
      %4983 = vmatpush1.msra.mxu0 0.0
      %4984 = vmatprep.subr.mxu0 0.0
      %4985 = vmatpush1.msra.mxu0 0.0
      %4986 = vmatprep.subr.mxu0 0.0
      %4987 = vmatpush1.msra.mxu0 0.0
      %4988 = vmatprep.subr.mxu0 0.0
      %4989 = vmatpush1.msra.mxu0 0.0
      %4990 = vmatprep.subr.mxu0 0.0
      %4991 = vmatpush1.msra.mxu0 0.0
      %4992 = vmatprep.subr.mxu0 0.0
      %4993 = vmatpush1.msra.mxu0 0.0
      %4994 = vmatprep.subr.mxu0 0.0
      %4995 = vmatpush1.msra.mxu0 0.0
      %4996 = vmatprep.subr.mxu0 0.0
      %4997 = vmatpush1.msra.mxu0 0.0
      %4998 = vmatprep.subr.mxu0 0.0
      %4999 = vmatpush1.msra.mxu0 0.0
      %5000 = vmatprep.subr.mxu0 0.0
      %5001 = vmatpush1.msra.mxu0 0.0
      %5002 = vmatprep.subr.mxu0 0.0
      %5003 = vmatpush1.msra.mxu0 0.0
      %5004 = vmatprep.subr.mxu0 0.0
      %5005 = vmatpush1.msra.mxu0 0.0
      %5006 = vmatprep.subr.mxu0 0.0
      %5007 = vmatpush1.msra.mxu0 0.0
      %5008 = vmatprep.subr.mxu0 0.0
      %5009 = vmatpush1.msra.mxu0 0.0
      %5010 = vmatprep.subr.mxu0 0.0
      %5011 = vmatpush1.msra.mxu0 0.0
      %5012 = vmatprep.subr.mxu0 0.0
      %5013 = vmatpush1.msra.mxu0 0.0
      %5014 = vmatprep.subr.mxu0 0.0
      %5015 = vmatpush1.msra.mxu0 0.0
      %5016 = vmatprep.subr.mxu0 0.0
      %5017 = vmatpush1.msra.mxu0 0.0
      %5018 = vmatprep.subr.mxu0 0.0
      %5019 = vmatpush1.msra.mxu0 0.0
      %5020 = vmatprep.mubr.f32.mxu0 0.0
      %5021 = vmatmul.mubr.f32.gmra.mrb[0].mxu0 %v4951
      %v5022 = vpop.f32.mrb[0].mxu0
      %v5023 = vadd.f32 0.0, %v5022
      %v5024 = vpop.f32.mrb[0].mxu0
      %5025 = vmatprep.mubr.f32.mxu0 0.0
      %5026 = vmatmul.mubr.f32.gmra.mrb[0].mxu0 %v4954
      %v5027 = vpop.f32.mrb[0].mxu0
      %v5028 = vadd.f32 0.0, %v5027
      %v5029 = vpop.f32.mrb[0].mxu0
      %5030 = vdwg.mxu0
      %s5031 = scalar_lea.vmem %s7, 64
      %v5032 = vld [vmem:[%s5031] sm:$0xff]
      %v5033 = vld [vmem:[%s5031 + $0x8] sm:$0xff]
      %v5034 = vld [vmem:[%s5031 + $0x10] sm:$0xff]
      %v5035 = vld [vmem:[%s5031 + $0x18] sm:$0xff]
      %v5037 = vsel %vm4784, %v5023, 0
      %v5040 = vsel %vm4784, %v5028, 0
      %5042 = vmatprep.subr.mxu0 0.0
      %5043 = vmatpush1.msra.mxu0 %v5032
      %5044 = vmatprep.subr.mxu0 0.0
      %5045 = vmatpush1.msra.mxu0 %v5033
      %5046 = vmatprep.subr.mxu0 0.0
      %5047 = vmatpush1.msra.mxu0 %v5034
      %5048 = vmatprep.subr.mxu0 0.0
      %5049 = vmatpush1.msra.mxu0 %v5035
      %5050 = vmatprep.subr.mxu0 0.0
      %5051 = vmatpush1.msra.mxu0 0.0
      %5052 = vmatprep.subr.mxu0 0.0
      %5053 = vmatpush1.msra.mxu0 0.0
      %5054 = vmatprep.subr.mxu0 0.0
      %5055 = vmatpush1.msra.mxu0 0.0
      %5056 = vmatprep.subr.mxu0 0.0
      %5057 = vmatpush1.msra.mxu0 0.0
      %5058 = vmatprep.subr.mxu0 0.0
      %5059 = vmatpush1.msra.mxu0 0.0
      %5060 = vmatprep.subr.mxu0 0.0
      %5061 = vmatpush1.msra.mxu0 0.0
      %5062 = vmatprep.subr.mxu0 0.0
      %5063 = vmatpush1.msra.mxu0 0.0
      %5064 = vmatprep.subr.mxu0 0.0
      %5065 = vmatpush1.msra.mxu0 0.0
      %5066 = vmatprep.subr.mxu0 0.0
      %5067 = vmatpush1.msra.mxu0 0.0
      %5068 = vmatprep.subr.mxu0 0.0
      %5069 = vmatpush1.msra.mxu0 0.0
      %5070 = vmatprep.subr.mxu0 0.0
      %5071 = vmatpush1.msra.mxu0 0.0
      %5072 = vmatprep.subr.mxu0 0.0
      %5073 = vmatpush1.msra.mxu0 0.0
      %5074 = vmatprep.subr.mxu0 0.0
      %5075 = vmatpush1.msra.mxu0 0.0
      %5076 = vmatprep.subr.mxu0 0.0
      %5077 = vmatpush1.msra.mxu0 0.0
      %5078 = vmatprep.subr.mxu0 0.0
      %5079 = vmatpush1.msra.mxu0 0.0
      %5080 = vmatprep.subr.mxu0 0.0
      %5081 = vmatpush1.msra.mxu0 0.0
      %5082 = vmatprep.subr.mxu0 0.0
      %5083 = vmatpush1.msra.mxu0 0.0
      %5084 = vmatprep.subr.mxu0 0.0
      %5085 = vmatpush1.msra.mxu0 0.0
      %5086 = vmatprep.subr.mxu0 0.0
      %5087 = vmatpush1.msra.mxu0 0.0
      %5088 = vmatprep.subr.mxu0 0.0
      %5089 = vmatpush1.msra.mxu0 0.0
      %5090 = vmatprep.subr.mxu0 0.0
      %5091 = vmatpush1.msra.mxu0 0.0
      %5092 = vmatprep.subr.mxu0 0.0
      %5093 = vmatpush1.msra.mxu0 0.0
      %5094 = vmatprep.subr.mxu0 0.0
      %5095 = vmatpush1.msra.mxu0 0.0
      %5096 = vmatprep.subr.mxu0 0.0
      %5097 = vmatpush1.msra.mxu0 0.0
      %5098 = vmatprep.subr.mxu0 0.0
      %5099 = vmatpush1.msra.mxu0 0.0
      %5100 = vmatprep.subr.mxu0 0.0
      %5101 = vmatpush1.msra.mxu0 0.0
      %5102 = vmatprep.subr.mxu0 0.0
      %5103 = vmatpush1.msra.mxu0 0.0
      %5104 = vmatprep.subr.mxu0 0.0
      %5105 = vmatpush1.msra.mxu0 0.0
      %5106 = vmatprep.mubr.f32.mxu0 0.0
      %5107 = vmatmul.mubr.f32.gmra.mrb[0].mxu0 %v5037
      %v5108 = vpop.f32.mrb[0].mxu0
      %v5109 = vadd.f32 0.0, %v5108
      %v5110 = vpop.f32.mrb[0].mxu0
      %5111 = vmatprep.mubr.f32.mxu0 0.0
      %5112 = vmatmul.mubr.f32.gmra.mrb[0].mxu0 %v5040
      %v5113 = vpop.f32.mrb[0].mxu0
      %v5114 = vadd.f32 0.0, %v5113
      %v5115 = vpop.f32.mrb[0].mxu0
      %5116 = vdwg.mxu0
      %v5117 = vadd.f32 %v4939, %v5109
      %v5118 = vadd.f32 %v4944, %v5114
      %s5119 = scalar_lea.vmem %s8, 48
      %v5120 = vld [vmem:[%s5119] sm:$0xff]
      %v5121 = vld [vmem:[%s5119 + $0x8] sm:$0xff]
      %v5123 = vsel %vm2156, %v5120, 0
      %v5126 = vsel %vm2156, %v5121, 0
      %5128 = vmatprep.subr.mxu0 0.0
      %5129 = vmatpush1.msra.mxu0 %v4606
      %5130 = vmatprep.subr.mxu0 0.0
      %5131 = vmatpush1.msra.mxu0 %v4607
      %5132 = vmatprep.subr.mxu0 0.0
      %5133 = vmatpush1.msra.mxu0 0.0
      %5134 = vmatprep.subr.mxu0 0.0
      %5135 = vmatpush1.msra.mxu0 0.0
      %5136 = vmatprep.subr.mxu0 0.0
      %5137 = vmatpush1.msra.mxu0 0.0
      %5138 = vmatprep.subr.mxu0 0.0
      %5139 = vmatpush1.msra.mxu0 0.0
      %5140 = vmatprep.subr.mxu0 0.0
      %5141 = vmatpush1.msra.mxu0 0.0
      %5142 = vmatprep.subr.mxu0 0.0
      %5143 = vmatpush1.msra.mxu0 0.0
      %5144 = vmatprep.subr.mxu0 0.0
      %5145 = vmatpush1.msra.mxu0 0.0
      %5146 = vmatprep.subr.mxu0 0.0
      %5147 = vmatpush1.msra.mxu0 0.0
      %5148 = vmatprep.subr.mxu0 0.0
      %5149 = vmatpush1.msra.mxu0 0.0
      %5150 = vmatprep.subr.mxu0 0.0
      %5151 = vmatpush1.msra.mxu0 0.0
      %5152 = vmatprep.subr.mxu0 0.0
      %5153 = vmatpush1.msra.mxu0 0.0
      %5154 = vmatprep.subr.mxu0 0.0
      %5155 = vmatpush1.msra.mxu0 0.0
      %5156 = vmatprep.subr.mxu0 0.0
      %5157 = vmatpush1.msra.mxu0 0.0
      %5158 = vmatprep.subr.mxu0 0.0
      %5159 = vmatpush1.msra.mxu0 0.0
      %5160 = vmatprep.subr.mxu0 0.0
      %5161 = vmatpush1.msra.mxu0 0.0
      %5162 = vmatprep.subr.mxu0 0.0
      %5163 = vmatpush1.msra.mxu0 0.0
      %5164 = vmatprep.subr.mxu0 0.0
      %5165 = vmatpush1.msra.mxu0 0.0
      %5166 = vmatprep.subr.mxu0 0.0
      %5167 = vmatpush1.msra.mxu0 0.0
      %5168 = vmatprep.subr.mxu0 0.0
      %5169 = vmatpush1.msra.mxu0 0.0
      %5170 = vmatprep.subr.mxu0 0.0
      %5171 = vmatpush1.msra.mxu0 0.0
      %5172 = vmatprep.subr.mxu0 0.0
      %5173 = vmatpush1.msra.mxu0 0.0
      %5174 = vmatprep.subr.mxu0 0.0
      %5175 = vmatpush1.msra.mxu0 0.0
      %5176 = vmatprep.subr.mxu0 0.0
      %5177 = vmatpush1.msra.mxu0 0.0
      %5178 = vmatprep.subr.mxu0 0.0
      %5179 = vmatpush1.msra.mxu0 0.0
      %5180 = vmatprep.subr.mxu0 0.0
      %5181 = vmatpush1.msra.mxu0 0.0
      %5182 = vmatprep.subr.mxu0 0.0
      %5183 = vmatpush1.msra.mxu0 0.0
      %5184 = vmatprep.subr.mxu0 0.0
      %5185 = vmatpush1.msra.mxu0 0.0
      %5186 = vmatprep.subr.mxu0 0.0
      %5187 = vmatpush1.msra.mxu0 0.0
      %5188 = vmatprep.subr.mxu0 0.0
      %5189 = vmatpush1.msra.mxu0 0.0
      %5190 = vmatprep.subr.mxu0 0.0
      %5191 = vmatpush1.msra.mxu0 0.0
      %5192 = vmatprep.mubr.f32.mxu0 0.0
      %5193 = vmatmul.mubr.f32.gmra.mrb[0].mxu0 %v5123
      %v5194 = vpop.f32.mrb[0].mxu0
      %v5195 = vadd.f32 0.0, %v5194
      %v5196 = vpop.f32.mrb[0].mxu0
      %5197 = vmatprep.mubr.f32.mxu0 0.0
      %5198 = vmatmul.mubr.f32.gmra.mrb[0].mxu0 %v5126
      %v5199 = vpop.f32.mrb[0].mxu0
      %v5200 = vadd.f32 0.0, %v5199
      %v5201 = vpop.f32.mrb[0].mxu0
      %5202 = vdwg.mxu0
      %s5203 = scalar_lea.vmem %s7, 96
      %v5204 = vld [vmem:[%s5203] sm:$0xff]
      %v5205 = vld [vmem:[%s5203 + $0x8] sm:$0xff]
      %v5206 = vld [vmem:[%s5203 + $0x10] sm:$0xff]
      %v5207 = vld [vmem:[%s5203 + $0x18] sm:$0xff]
      %v5209 = vsel %vm4784, %v5195, 0
      %v5212 = vsel %vm4784, %v5200, 0
      %5214 = vmatprep.subr.mxu0 0.0
      %5215 = vmatpush1.msra.mxu0 %v5204
      %5216 = vmatprep.subr.mxu0 0.0
      %5217 = vmatpush1.msra.mxu0 %v5205
      %5218 = vmatprep.subr.mxu0 0.0
      %5219 = vmatpush1.msra.mxu0 %v5206
      %5220 = vmatprep.subr.mxu0 0.0
      %5221 = vmatpush1.msra.mxu0 %v5207
      %5222 = vmatprep.subr.mxu0 0.0
      %5223 = vmatpush1.msra.mxu0 0.0
      %5224 = vmatprep.subr.mxu0 0.0
      %5225 = vmatpush1.msra.mxu0 0.0
      %5226 = vmatprep.subr.mxu0 0.0
      %5227 = vmatpush1.msra.mxu0 0.0
      %5228 = vmatprep.subr.mxu0 0.0
      %5229 = vmatpush1.msra.mxu0 0.0
      %5230 = vmatprep.subr.mxu0 0.0
      %5231 = vmatpush1.msra.mxu0 0.0
      %5232 = vmatprep.subr.mxu0 0.0
      %5233 = vmatpush1.msra.mxu0 0.0
      %5234 = vmatprep.subr.mxu0 0.0
      %5235 = vmatpush1.msra.mxu0 0.0
      %5236 = vmatprep.subr.mxu0 0.0
      %5237 = vmatpush1.msra.mxu0 0.0
      %5238 = vmatprep.subr.mxu0 0.0
      %5239 = vmatpush1.msra.mxu0 0.0
      %5240 = vmatprep.subr.mxu0 0.0
      %5241 = vmatpush1.msra.mxu0 0.0
      %5242 = vmatprep.subr.mxu0 0.0
      %5243 = vmatpush1.msra.mxu0 0.0
      %5244 = vmatprep.subr.mxu0 0.0
      %5245 = vmatpush1.msra.mxu0 0.0
      %5246 = vmatprep.subr.mxu0 0.0
      %5247 = vmatpush1.msra.mxu0 0.0
      %5248 = vmatprep.subr.mxu0 0.0
      %5249 = vmatpush1.msra.mxu0 0.0
      %5250 = vmatprep.subr.mxu0 0.0
      %5251 = vmatpush1.msra.mxu0 0.0
      %5252 = vmatprep.subr.mxu0 0.0
      %5253 = vmatpush1.msra.mxu0 0.0
      %5254 = vmatprep.subr.mxu0 0.0
      %5255 = vmatpush1.msra.mxu0 0.0
      %5256 = vmatprep.subr.mxu0 0.0
      %5257 = vmatpush1.msra.mxu0 0.0
      %5258 = vmatprep.subr.mxu0 0.0
      %5259 = vmatpush1.msra.mxu0 0.0
      %5260 = vmatprep.subr.mxu0 0.0
      %5261 = vmatpush1.msra.mxu0 0.0
      %5262 = vmatprep.subr.mxu0 0.0
      %5263 = vmatpush1.msra.mxu0 0.0
      %5264 = vmatprep.subr.mxu0 0.0
      %5265 = vmatpush1.msra.mxu0 0.0
      %5266 = vmatprep.subr.mxu0 0.0
      %5267 = vmatpush1.msra.mxu0 0.0
      %5268 = vmatprep.subr.mxu0 0.0
      %5269 = vmatpush1.msra.mxu0 0.0
      %5270 = vmatprep.subr.mxu0 0.0
      %5271 = vmatpush1.msra.mxu0 0.0
      %5272 = vmatprep.subr.mxu0 0.0
      %5273 = vmatpush1.msra.mxu0 0.0
      %5274 = vmatprep.subr.mxu0 0.0
      %5275 = vmatpush1.msra.mxu0 0.0
      %5276 = vmatprep.subr.mxu0 0.0
      %5277 = vmatpush1.msra.mxu0 0.0
      %5278 = vmatprep.mubr.f32.mxu0 0.0
      %5279 = vmatmul.mubr.f32.gmra.mrb[0].mxu0 %v5209
      %v5280 = vpop.f32.mrb[0].mxu0
      %v5281 = vadd.f32 0.0, %v5280
      %v5282 = vpop.f32.mrb[0].mxu0
      %5283 = vmatprep.mubr.f32.mxu0 0.0
      %5284 = vmatmul.mubr.f32.gmra.mrb[0].mxu0 %v5212
      %v5285 = vpop.f32.mrb[0].mxu0
      %v5286 = vadd.f32 0.0, %v5285
      %v5287 = vpop.f32.mrb[0].mxu0
      %5288 = vdwg.mxu0
      %v5289 = vadd.f32 %v5117, %v5281
      %v5290 = vadd.f32 %v5118, %v5286
      %s5291 = scalar_lea.vmem %s8, 64
      %v5292 = vld [vmem:[%s5291] sm:$0xff]
      %v5293 = vld [vmem:[%s5291 + $0x8] sm:$0xff]
      %v5295 = vsel %vm2156, %v5292, 0
      %v5298 = vsel %vm2156, %v5293, 0
      %5300 = vmatprep.subr.mxu0 0.0
      %5301 = vmatpush1.msra.mxu0 %v4606
      %5302 = vmatprep.subr.mxu0 0.0
      %5303 = vmatpush1.msra.mxu0 %v4607
      %5304 = vmatprep.subr.mxu0 0.0
      %5305 = vmatpush1.msra.mxu0 0.0
      %5306 = vmatprep.subr.mxu0 0.0
      %5307 = vmatpush1.msra.mxu0 0.0
      %5308 = vmatprep.subr.mxu0 0.0
      %5309 = vmatpush1.msra.mxu0 0.0
      %5310 = vmatprep.subr.mxu0 0.0
      %5311 = vmatpush1.msra.mxu0 0.0
      %5312 = vmatprep.subr.mxu0 0.0
      %5313 = vmatpush1.msra.mxu0 0.0
      %5314 = vmatprep.subr.mxu0 0.0
      %5315 = vmatpush1.msra.mxu0 0.0
      %5316 = vmatprep.subr.mxu0 0.0
      %5317 = vmatpush1.msra.mxu0 0.0
      %5318 = vmatprep.subr.mxu0 0.0
      %5319 = vmatpush1.msra.mxu0 0.0
      %5320 = vmatprep.subr.mxu0 0.0
      %5321 = vmatpush1.msra.mxu0 0.0
      %5322 = vmatprep.subr.mxu0 0.0
      %5323 = vmatpush1.msra.mxu0 0.0
      %5324 = vmatprep.subr.mxu0 0.0
      %5325 = vmatpush1.msra.mxu0 0.0
      %5326 = vmatprep.subr.mxu0 0.0
      %5327 = vmatpush1.msra.mxu0 0.0
      %5328 = vmatprep.subr.mxu0 0.0
      %5329 = vmatpush1.msra.mxu0 0.0
      %5330 = vmatprep.subr.mxu0 0.0
      %5331 = vmatpush1.msra.mxu0 0.0
      %5332 = vmatprep.subr.mxu0 0.0
      %5333 = vmatpush1.msra.mxu0 0.0
      %5334 = vmatprep.subr.mxu0 0.0
      %5335 = vmatpush1.msra.mxu0 0.0
      %5336 = vmatprep.subr.mxu0 0.0
      %5337 = vmatpush1.msra.mxu0 0.0
      %5338 = vmatprep.subr.mxu0 0.0
      %5339 = vmatpush1.msra.mxu0 0.0
      %5340 = vmatprep.subr.mxu0 0.0
      %5341 = vmatpush1.msra.mxu0 0.0
      %5342 = vmatprep.subr.mxu0 0.0
      %5343 = vmatpush1.msra.mxu0 0.0
      %5344 = vmatprep.subr.mxu0 0.0
      %5345 = vmatpush1.msra.mxu0 0.0
      %5346 = vmatprep.subr.mxu0 0.0
      %5347 = vmatpush1.msra.mxu0 0.0
      %5348 = vmatprep.subr.mxu0 0.0
      %5349 = vmatpush1.msra.mxu0 0.0
      %5350 = vmatprep.subr.mxu0 0.0
      %5351 = vmatpush1.msra.mxu0 0.0
      %5352 = vmatprep.subr.mxu0 0.0
      %5353 = vmatpush1.msra.mxu0 0.0
      %5354 = vmatprep.subr.mxu0 0.0
      %5355 = vmatpush1.msra.mxu0 0.0
      %5356 = vmatprep.subr.mxu0 0.0
      %5357 = vmatpush1.msra.mxu0 0.0
      %5358 = vmatprep.subr.mxu0 0.0
      %5359 = vmatpush1.msra.mxu0 0.0
      %5360 = vmatprep.subr.mxu0 0.0
      %5361 = vmatpush1.msra.mxu0 0.0
      %5362 = vmatprep.subr.mxu0 0.0
      %5363 = vmatpush1.msra.mxu0 0.0
      %5364 = vmatprep.mubr.f32.mxu0 0.0
      %5365 = vmatmul.mubr.f32.gmra.mrb[0].mxu0 %v5295
      %v5366 = vpop.f32.mrb[0].mxu0
      %v5367 = vadd.f32 0.0, %v5366
      %v5368 = vpop.f32.mrb[0].mxu0
      %5369 = vmatprep.mubr.f32.mxu0 0.0
      %5370 = vmatmul.mubr.f32.gmra.mrb[0].mxu0 %v5298
      %v5371 = vpop.f32.mrb[0].mxu0
      %v5372 = vadd.f32 0.0, %v5371
      %v5373 = vpop.f32.mrb[0].mxu0
      %5374 = vdwg.mxu0
      %s5375 = scalar_lea.vmem %s7, 128
      %v5376 = vld [vmem:[%s5375] sm:$0xff]
      %v5377 = vld [vmem:[%s5375 + $0x8] sm:$0xff]
      %v5378 = vld [vmem:[%s5375 + $0x10] sm:$0xff]
      %v5379 = vld [vmem:[%s5375 + $0x18] sm:$0xff]
      %v5381 = vsel %vm4784, %v5367, 0
      %v5384 = vsel %vm4784, %v5372, 0
      %5386 = vmatprep.subr.mxu0 0.0
      %5387 = vmatpush1.msra.mxu0 %v5376
      %5388 = vmatprep.subr.mxu0 0.0
      %5389 = vmatpush1.msra.mxu0 %v5377
      %5390 = vmatprep.subr.mxu0 0.0
      %5391 = vmatpush1.msra.mxu0 %v5378
      %5392 = vmatprep.subr.mxu0 0.0
      %5393 = vmatpush1.msra.mxu0 %v5379
      %5394 = vmatprep.subr.mxu0 0.0
      %5395 = vmatpush1.msra.mxu0 0.0
      %5396 = vmatprep.subr.mxu0 0.0
      %5397 = vmatpush1.msra.mxu0 0.0
      %5398 = vmatprep.subr.mxu0 0.0
      %5399 = vmatpush1.msra.mxu0 0.0
      %5400 = vmatprep.subr.mxu0 0.0
      %5401 = vmatpush1.msra.mxu0 0.0
      %5402 = vmatprep.subr.mxu0 0.0
      %5403 = vmatpush1.msra.mxu0 0.0
      %5404 = vmatprep.subr.mxu0 0.0
      %5405 = vmatpush1.msra.mxu0 0.0
      %5406 = vmatprep.subr.mxu0 0.0
      %5407 = vmatpush1.msra.mxu0 0.0
      %5408 = vmatprep.subr.mxu0 0.0
      %5409 = vmatpush1.msra.mxu0 0.0
      %5410 = vmatprep.subr.mxu0 0.0
      %5411 = vmatpush1.msra.mxu0 0.0
      %5412 = vmatprep.subr.mxu0 0.0
      %5413 = vmatpush1.msra.mxu0 0.0
      %5414 = vmatprep.subr.mxu0 0.0
      %5415 = vmatpush1.msra.mxu0 0.0
      %5416 = vmatprep.subr.mxu0 0.0
      %5417 = vmatpush1.msra.mxu0 0.0
      %5418 = vmatprep.subr.mxu0 0.0
      %5419 = vmatpush1.msra.mxu0 0.0
      %5420 = vmatprep.subr.mxu0 0.0
      %5421 = vmatpush1.msra.mxu0 0.0
      %5422 = vmatprep.subr.mxu0 0.0
      %5423 = vmatpush1.msra.mxu0 0.0
      %5424 = vmatprep.subr.mxu0 0.0
      %5425 = vmatpush1.msra.mxu0 0.0
      %5426 = vmatprep.subr.mxu0 0.0
      %5427 = vmatpush1.msra.mxu0 0.0
      %5428 = vmatprep.subr.mxu0 0.0
      %5429 = vmatpush1.msra.mxu0 0.0
      %5430 = vmatprep.subr.mxu0 0.0
      %5431 = vmatpush1.msra.mxu0 0.0
      %5432 = vmatprep.subr.mxu0 0.0
      %5433 = vmatpush1.msra.mxu0 0.0
      %5434 = vmatprep.subr.mxu0 0.0
      %5435 = vmatpush1.msra.mxu0 0.0
      %5436 = vmatprep.subr.mxu0 0.0
      %5437 = vmatpush1.msra.mxu0 0.0
      %5438 = vmatprep.subr.mxu0 0.0
      %5439 = vmatpush1.msra.mxu0 0.0
      %5440 = vmatprep.subr.mxu0 0.0
      %5441 = vmatpush1.msra.mxu0 0.0
      %5442 = vmatprep.subr.mxu0 0.0
      %5443 = vmatpush1.msra.mxu0 0.0
      %5444 = vmatprep.subr.mxu0 0.0
      %5445 = vmatpush1.msra.mxu0 0.0
      %5446 = vmatprep.subr.mxu0 0.0
      %5447 = vmatpush1.msra.mxu0 0.0
      %5448 = vmatprep.subr.mxu0 0.0
      %5449 = vmatpush1.msra.mxu0 0.0
      %5450 = vmatprep.mubr.f32.mxu0 0.0
      %5451 = vmatmul.mubr.f32.gmra.mrb[0].mxu0 %v5381
      %v5452 = vpop.f32.mrb[0].mxu0
      %v5453 = vadd.f32 0.0, %v5452
      %v5454 = vpop.f32.mrb[0].mxu0
      %5455 = vmatprep.mubr.f32.mxu0 0.0
      %5456 = vmatmul.mubr.f32.gmra.mrb[0].mxu0 %v5384
      %v5457 = vpop.f32.mrb[0].mxu0
      %v5458 = vadd.f32 0.0, %v5457
      %v5459 = vpop.f32.mrb[0].mxu0
      %5460 = vdwg.mxu0
      %v5461 = vadd.f32 %v5289, %v5453
      %v5462 = vadd.f32 %v5290, %v5458
      %s5463 = scalar_lea.vmem %s8, 80
      %v5464 = vld [vmem:[%s5463] sm:$0xff]
      %v5465 = vld [vmem:[%s5463 + $0x8] sm:$0xff]
      %v5467 = vsel %vm2156, %v5464, 0
      %v5470 = vsel %vm2156, %v5465, 0
      %5472 = vmatprep.subr.mxu0 0.0
      %5473 = vmatpush1.msra.mxu0 %v4606
      %5474 = vmatprep.subr.mxu0 0.0
      %5475 = vmatpush1.msra.mxu0 %v4607
      %5476 = vmatprep.subr.mxu0 0.0
      %5477 = vmatpush1.msra.mxu0 0.0
      %5478 = vmatprep.subr.mxu0 0.0
      %5479 = vmatpush1.msra.mxu0 0.0
      %5480 = vmatprep.subr.mxu0 0.0
      %5481 = vmatpush1.msra.mxu0 0.0
      %5482 = vmatprep.subr.mxu0 0.0
      %5483 = vmatpush1.msra.mxu0 0.0
      %5484 = vmatprep.subr.mxu0 0.0
      %5485 = vmatpush1.msra.mxu0 0.0
      %5486 = vmatprep.subr.mxu0 0.0
      %5487 = vmatpush1.msra.mxu0 0.0
      %5488 = vmatprep.subr.mxu0 0.0
      %5489 = vmatpush1.msra.mxu0 0.0
      %5490 = vmatprep.subr.mxu0 0.0
      %5491 = vmatpush1.msra.mxu0 0.0
      %5492 = vmatprep.subr.mxu0 0.0
      %5493 = vmatpush1.msra.mxu0 0.0
      %5494 = vmatprep.subr.mxu0 0.0
      %5495 = vmatpush1.msra.mxu0 0.0
      %5496 = vmatprep.subr.mxu0 0.0
      %5497 = vmatpush1.msra.mxu0 0.0
      %5498 = vmatprep.subr.mxu0 0.0
      %5499 = vmatpush1.msra.mxu0 0.0
      %5500 = vmatprep.subr.mxu0 0.0
      %5501 = vmatpush1.msra.mxu0 0.0
      %5502 = vmatprep.subr.mxu0 0.0
      %5503 = vmatpush1.msra.mxu0 0.0
      %5504 = vmatprep.subr.mxu0 0.0
      %5505 = vmatpush1.msra.mxu0 0.0
      %5506 = vmatprep.subr.mxu0 0.0
      %5507 = vmatpush1.msra.mxu0 0.0
      %5508 = vmatprep.subr.mxu0 0.0
      %5509 = vmatpush1.msra.mxu0 0.0
      %5510 = vmatprep.subr.mxu0 0.0
      %5511 = vmatpush1.msra.mxu0 0.0
      %5512 = vmatprep.subr.mxu0 0.0
      %5513 = vmatpush1.msra.mxu0 0.0
      %5514 = vmatprep.subr.mxu0 0.0
      %5515 = vmatpush1.msra.mxu0 0.0
      %5516 = vmatprep.subr.mxu0 0.0
      %5517 = vmatpush1.msra.mxu0 0.0
      %5518 = vmatprep.subr.mxu0 0.0
      %5519 = vmatpush1.msra.mxu0 0.0
      %5520 = vmatprep.subr.mxu0 0.0
      %5521 = vmatpush1.msra.mxu0 0.0
      %5522 = vmatprep.subr.mxu0 0.0
      %5523 = vmatpush1.msra.mxu0 0.0
      %5524 = vmatprep.subr.mxu0 0.0
      %5525 = vmatpush1.msra.mxu0 0.0
      %5526 = vmatprep.subr.mxu0 0.0
      %5527 = vmatpush1.msra.mxu0 0.0
      %5528 = vmatprep.subr.mxu0 0.0
      %5529 = vmatpush1.msra.mxu0 0.0
      %5530 = vmatprep.subr.mxu0 0.0
      %5531 = vmatpush1.msra.mxu0 0.0
      %5532 = vmatprep.subr.mxu0 0.0
      %5533 = vmatpush1.msra.mxu0 0.0
      %5534 = vmatprep.subr.mxu0 0.0
      %5535 = vmatpush1.msra.mxu0 0.0
      %5536 = vmatprep.mubr.f32.mxu0 0.0
      %5537 = vmatmul.mubr.f32.gmra.mrb[0].mxu0 %v5467
      %v5538 = vpop.f32.mrb[0].mxu0
      %v5539 = vadd.f32 0.0, %v5538
      %v5540 = vpop.f32.mrb[0].mxu0
      %5541 = vmatprep.mubr.f32.mxu0 0.0
      %5542 = vmatmul.mubr.f32.gmra.mrb[0].mxu0 %v5470
      %v5543 = vpop.f32.mrb[0].mxu0
      %v5544 = vadd.f32 0.0, %v5543
      %v5545 = vpop.f32.mrb[0].mxu0
      %5546 = vdwg.mxu0
      %s5547 = scalar_lea.vmem %s7, 160
      %v5548 = vld [vmem:[%s5547] sm:$0xff]
      %v5549 = vld [vmem:[%s5547 + $0x8] sm:$0xff]
      %v5550 = vld [vmem:[%s5547 + $0x10] sm:$0xff]
      %v5551 = vld [vmem:[%s5547 + $0x18] sm:$0xff]
      %v5553 = vsel %vm4784, %v5539, 0
      %v5556 = vsel %vm4784, %v5544, 0
      %5558 = vmatprep.subr.mxu0 0.0
      %5559 = vmatpush1.msra.mxu0 %v5548
      %5560 = vmatprep.subr.mxu0 0.0
      %5561 = vmatpush1.msra.mxu0 %v5549
      %5562 = vmatprep.subr.mxu0 0.0
      %5563 = vmatpush1.msra.mxu0 %v5550
      %5564 = vmatprep.subr.mxu0 0.0
      %5565 = vmatpush1.msra.mxu0 %v5551
      %5566 = vmatprep.subr.mxu0 0.0
      %5567 = vmatpush1.msra.mxu0 0.0
      %5568 = vmatprep.subr.mxu0 0.0
      %5569 = vmatpush1.msra.mxu0 0.0
      %5570 = vmatprep.subr.mxu0 0.0
      %5571 = vmatpush1.msra.mxu0 0.0
      %5572 = vmatprep.subr.mxu0 0.0
      %5573 = vmatpush1.msra.mxu0 0.0
      %5574 = vmatprep.subr.mxu0 0.0
      %5575 = vmatpush1.msra.mxu0 0.0
      %5576 = vmatprep.subr.mxu0 0.0
      %5577 = vmatpush1.msra.mxu0 0.0
      %5578 = vmatprep.subr.mxu0 0.0
      %5579 = vmatpush1.msra.mxu0 0.0
      %5580 = vmatprep.subr.mxu0 0.0
      %5581 = vmatpush1.msra.mxu0 0.0
      %5582 = vmatprep.subr.mxu0 0.0
      %5583 = vmatpush1.msra.mxu0 0.0
      %5584 = vmatprep.subr.mxu0 0.0
      %5585 = vmatpush1.msra.mxu0 0.0
      %5586 = vmatprep.subr.mxu0 0.0
      %5587 = vmatpush1.msra.mxu0 0.0
      %5588 = vmatprep.subr.mxu0 0.0
      %5589 = vmatpush1.msra.mxu0 0.0
      %5590 = vmatprep.subr.mxu0 0.0
      %5591 = vmatpush1.msra.mxu0 0.0
      %5592 = vmatprep.subr.mxu0 0.0
      %5593 = vmatpush1.msra.mxu0 0.0
      %5594 = vmatprep.subr.mxu0 0.0
      %5595 = vmatpush1.msra.mxu0 0.0
      %5596 = vmatprep.subr.mxu0 0.0
      %5597 = vmatpush1.msra.mxu0 0.0
      %5598 = vmatprep.subr.mxu0 0.0
      %5599 = vmatpush1.msra.mxu0 0.0
      %5600 = vmatprep.subr.mxu0 0.0
      %5601 = vmatpush1.msra.mxu0 0.0
      %5602 = vmatprep.subr.mxu0 0.0
      %5603 = vmatpush1.msra.mxu0 0.0
      %5604 = vmatprep.subr.mxu0 0.0
      %5605 = vmatpush1.msra.mxu0 0.0
      %5606 = vmatprep.subr.mxu0 0.0
      %5607 = vmatpush1.msra.mxu0 0.0
      %5608 = vmatprep.subr.mxu0 0.0
      %5609 = vmatpush1.msra.mxu0 0.0
      %5610 = vmatprep.subr.mxu0 0.0
      %5611 = vmatpush1.msra.mxu0 0.0
      %5612 = vmatprep.subr.mxu0 0.0
      %5613 = vmatpush1.msra.mxu0 0.0
      %5614 = vmatprep.subr.mxu0 0.0
      %5615 = vmatpush1.msra.mxu0 0.0
      %5616 = vmatprep.subr.mxu0 0.0
      %5617 = vmatpush1.msra.mxu0 0.0
      %5618 = vmatprep.subr.mxu0 0.0
      %5619 = vmatpush1.msra.mxu0 0.0
      %5620 = vmatprep.subr.mxu0 0.0
      %5621 = vmatpush1.msra.mxu0 0.0
      %5622 = vmatprep.mubr.f32.mxu0 0.0
      %5623 = vmatmul.mubr.f32.gmra.mrb[0].mxu0 %v5553
      %v5624 = vpop.f32.mrb[0].mxu0
      %v5625 = vadd.f32 0.0, %v5624
      %v5626 = vpop.f32.mrb[0].mxu0
      %5627 = vmatprep.mubr.f32.mxu0 0.0
      %5628 = vmatmul.mubr.f32.gmra.mrb[0].mxu0 %v5556
      %v5629 = vpop.f32.mrb[0].mxu0
      %v5630 = vadd.f32 0.0, %v5629
      %v5631 = vpop.f32.mrb[0].mxu0
      %5632 = vdwg.mxu0
      %v5633 = vadd.f32 %v5461, %v5625
      %v5634 = vadd.f32 %v5462, %v5630
      %s5635 = scalar_lea.vmem %s8, 96
      %v5636 = vld [vmem:[%s5635] sm:$0xff]
      %v5637 = vld [vmem:[%s5635 + $0x8] sm:$0xff]
      %v5639 = vsel %vm2156, %v5636, 0
      %v5642 = vsel %vm2156, %v5637, 0
      %5644 = vmatprep.subr.mxu0 0.0
      %5645 = vmatpush1.msra.mxu0 %v4606
      %5646 = vmatprep.subr.mxu0 0.0
      %5647 = vmatpush1.msra.mxu0 %v4607
      %5648 = vmatprep.subr.mxu0 0.0
      %5649 = vmatpush1.msra.mxu0 0.0
      %5650 = vmatprep.subr.mxu0 0.0
      %5651 = vmatpush1.msra.mxu0 0.0
      %5652 = vmatprep.subr.mxu0 0.0
      %5653 = vmatpush1.msra.mxu0 0.0
      %5654 = vmatprep.subr.mxu0 0.0
      %5655 = vmatpush1.msra.mxu0 0.0
      %5656 = vmatprep.subr.mxu0 0.0
      %5657 = vmatpush1.msra.mxu0 0.0
      %5658 = vmatprep.subr.mxu0 0.0
      %5659 = vmatpush1.msra.mxu0 0.0
      %5660 = vmatprep.subr.mxu0 0.0
      %5661 = vmatpush1.msra.mxu0 0.0
      %5662 = vmatprep.subr.mxu0 0.0
      %5663 = vmatpush1.msra.mxu0 0.0
      %5664 = vmatprep.subr.mxu0 0.0
      %5665 = vmatpush1.msra.mxu0 0.0
      %5666 = vmatprep.subr.mxu0 0.0
      %5667 = vmatpush1.msra.mxu0 0.0
      %5668 = vmatprep.subr.mxu0 0.0
      %5669 = vmatpush1.msra.mxu0 0.0
      %5670 = vmatprep.subr.mxu0 0.0
      %5671 = vmatpush1.msra.mxu0 0.0
      %5672 = vmatprep.subr.mxu0 0.0
      %5673 = vmatpush1.msra.mxu0 0.0
      %5674 = vmatprep.subr.mxu0 0.0
      %5675 = vmatpush1.msra.mxu0 0.0
      %5676 = vmatprep.subr.mxu0 0.0
      %5677 = vmatpush1.msra.mxu0 0.0
      %5678 = vmatprep.subr.mxu0 0.0
      %5679 = vmatpush1.msra.mxu0 0.0
      %5680 = vmatprep.subr.mxu0 0.0
      %5681 = vmatpush1.msra.mxu0 0.0
      %5682 = vmatprep.subr.mxu0 0.0
      %5683 = vmatpush1.msra.mxu0 0.0
      %5684 = vmatprep.subr.mxu0 0.0
      %5685 = vmatpush1.msra.mxu0 0.0
      %5686 = vmatprep.subr.mxu0 0.0
      %5687 = vmatpush1.msra.mxu0 0.0
      %5688 = vmatprep.subr.mxu0 0.0
      %5689 = vmatpush1.msra.mxu0 0.0
      %5690 = vmatprep.subr.mxu0 0.0
      %5691 = vmatpush1.msra.mxu0 0.0
      %5692 = vmatprep.subr.mxu0 0.0
      %5693 = vmatpush1.msra.mxu0 0.0
      %5694 = vmatprep.subr.mxu0 0.0
      %5695 = vmatpush1.msra.mxu0 0.0
      %5696 = vmatprep.subr.mxu0 0.0
      %5697 = vmatpush1.msra.mxu0 0.0
      %5698 = vmatprep.subr.mxu0 0.0
      %5699 = vmatpush1.msra.mxu0 0.0
      %5700 = vmatprep.subr.mxu0 0.0
      %5701 = vmatpush1.msra.mxu0 0.0
      %5702 = vmatprep.subr.mxu0 0.0
      %5703 = vmatpush1.msra.mxu0 0.0
      %5704 = vmatprep.subr.mxu0 0.0
      %5705 = vmatpush1.msra.mxu0 0.0
      %5706 = vmatprep.subr.mxu0 0.0
      %5707 = vmatpush1.msra.mxu0 0.0
      %5708 = vmatprep.mubr.f32.mxu0 0.0
      %5709 = vmatmul.mubr.f32.gmra.mrb[0].mxu0 %v5639
      %v5710 = vpop.f32.mrb[0].mxu0
      %v5711 = vadd.f32 0.0, %v5710
      %v5712 = vpop.f32.mrb[0].mxu0
      %5713 = vmatprep.mubr.f32.mxu0 0.0
      %5714 = vmatmul.mubr.f32.gmra.mrb[0].mxu0 %v5642
      %v5715 = vpop.f32.mrb[0].mxu0
      %v5716 = vadd.f32 0.0, %v5715
      %v5717 = vpop.f32.mrb[0].mxu0
      %5718 = vdwg.mxu0
      %s5719 = scalar_lea.vmem %s7, 192
      %v5720 = vld [vmem:[%s5719] sm:$0xff]
      %v5721 = vld [vmem:[%s5719 + $0x8] sm:$0xff]
      %v5722 = vld [vmem:[%s5719 + $0x10] sm:$0xff]
      %v5723 = vld [vmem:[%s5719 + $0x18] sm:$0xff]
      %v5725 = vsel %vm4784, %v5711, 0
      %v5728 = vsel %vm4784, %v5716, 0
      %5730 = vmatprep.subr.mxu0 0.0
      %5731 = vmatpush1.msra.mxu0 %v5720
      %5732 = vmatprep.subr.mxu0 0.0
      %5733 = vmatpush1.msra.mxu0 %v5721
      %5734 = vmatprep.subr.mxu0 0.0
      %5735 = vmatpush1.msra.mxu0 %v5722
      %5736 = vmatprep.subr.mxu0 0.0
      %5737 = vmatpush1.msra.mxu0 %v5723
      %5738 = vmatprep.subr.mxu0 0.0
      %5739 = vmatpush1.msra.mxu0 0.0
      %5740 = vmatprep.subr.mxu0 0.0
      %5741 = vmatpush1.msra.mxu0 0.0
      %5742 = vmatprep.subr.mxu0 0.0
      %5743 = vmatpush1.msra.mxu0 0.0
      %5744 = vmatprep.subr.mxu0 0.0
      %5745 = vmatpush1.msra.mxu0 0.0
      %5746 = vmatprep.subr.mxu0 0.0
      %5747 = vmatpush1.msra.mxu0 0.0
      %5748 = vmatprep.subr.mxu0 0.0
      %5749 = vmatpush1.msra.mxu0 0.0
      %5750 = vmatprep.subr.mxu0 0.0
      %5751 = vmatpush1.msra.mxu0 0.0
      %5752 = vmatprep.subr.mxu0 0.0
      %5753 = vmatpush1.msra.mxu0 0.0
      %5754 = vmatprep.subr.mxu0 0.0
      %5755 = vmatpush1.msra.mxu0 0.0
      %5756 = vmatprep.subr.mxu0 0.0
      %5757 = vmatpush1.msra.mxu0 0.0
      %5758 = vmatprep.subr.mxu0 0.0
      %5759 = vmatpush1.msra.mxu0 0.0
      %5760 = vmatprep.subr.mxu0 0.0
      %5761 = vmatpush1.msra.mxu0 0.0
      %5762 = vmatprep.subr.mxu0 0.0
      %5763 = vmatpush1.msra.mxu0 0.0
      %5764 = vmatprep.subr.mxu0 0.0
      %5765 = vmatpush1.msra.mxu0 0.0
      %5766 = vmatprep.subr.mxu0 0.0
      %5767 = vmatpush1.msra.mxu0 0.0
      %5768 = vmatprep.subr.mxu0 0.0
      %5769 = vmatpush1.msra.mxu0 0.0
      %5770 = vmatprep.subr.mxu0 0.0
      %5771 = vmatpush1.msra.mxu0 0.0
      %5772 = vmatprep.subr.mxu0 0.0
      %5773 = vmatpush1.msra.mxu0 0.0
      %5774 = vmatprep.subr.mxu0 0.0
      %5775 = vmatpush1.msra.mxu0 0.0
      %5776 = vmatprep.subr.mxu0 0.0
      %5777 = vmatpush1.msra.mxu0 0.0
      %5778 = vmatprep.subr.mxu0 0.0
      %5779 = vmatpush1.msra.mxu0 0.0
      %5780 = vmatprep.subr.mxu0 0.0
      %5781 = vmatpush1.msra.mxu0 0.0
      %5782 = vmatprep.subr.mxu0 0.0
      %5783 = vmatpush1.msra.mxu0 0.0
      %5784 = vmatprep.subr.mxu0 0.0
      %5785 = vmatpush1.msra.mxu0 0.0
      %5786 = vmatprep.subr.mxu0 0.0
      %5787 = vmatpush1.msra.mxu0 0.0
      %5788 = vmatprep.subr.mxu0 0.0
      %5789 = vmatpush1.msra.mxu0 0.0
      %5790 = vmatprep.subr.mxu0 0.0
      %5791 = vmatpush1.msra.mxu0 0.0
      %5792 = vmatprep.subr.mxu0 0.0
      %5793 = vmatpush1.msra.mxu0 0.0
      %5794 = vmatprep.mubr.f32.mxu0 0.0
      %5795 = vmatmul.mubr.f32.gmra.mrb[0].mxu0 %v5725
      %v5796 = vpop.f32.mrb[0].mxu0
      %v5797 = vadd.f32 0.0, %v5796
      %v5798 = vpop.f32.mrb[0].mxu0
      %5799 = vmatprep.mubr.f32.mxu0 0.0
      %5800 = vmatmul.mubr.f32.gmra.mrb[0].mxu0 %v5728
      %v5801 = vpop.f32.mrb[0].mxu0
      %v5802 = vadd.f32 0.0, %v5801
      %v5803 = vpop.f32.mrb[0].mxu0
      %5804 = vdwg.mxu0
      %v5805 = vadd.f32 %v5633, %v5797
      %v5806 = vadd.f32 %v5634, %v5802
      %s5807 = scalar_lea.vmem %s8, 112
      %v5808 = vld [vmem:[%s5807] sm:$0xff]
      %v5809 = vld [vmem:[%s5807 + $0x8] sm:$0xff]
      %v5811 = vsel %vm2156, %v5808, 0
      %v5814 = vsel %vm2156, %v5809, 0
      %5816 = vmatprep.subr.mxu0 0.0
      %5817 = vmatpush1.msra.mxu0 %v4606
      %5818 = vmatprep.subr.mxu0 0.0
      %5819 = vmatpush1.msra.mxu0 %v4607
      %5820 = vmatprep.subr.mxu0 0.0
      %5821 = vmatpush1.msra.mxu0 0.0
      %5822 = vmatprep.subr.mxu0 0.0
      %5823 = vmatpush1.msra.mxu0 0.0
      %5824 = vmatprep.subr.mxu0 0.0
      %5825 = vmatpush1.msra.mxu0 0.0
      %5826 = vmatprep.subr.mxu0 0.0
      %5827 = vmatpush1.msra.mxu0 0.0
      %5828 = vmatprep.subr.mxu0 0.0
      %5829 = vmatpush1.msra.mxu0 0.0
      %5830 = vmatprep.subr.mxu0 0.0
      %5831 = vmatpush1.msra.mxu0 0.0
      %5832 = vmatprep.subr.mxu0 0.0
      %5833 = vmatpush1.msra.mxu0 0.0
      %5834 = vmatprep.subr.mxu0 0.0
      %5835 = vmatpush1.msra.mxu0 0.0
      %5836 = vmatprep.subr.mxu0 0.0
      %5837 = vmatpush1.msra.mxu0 0.0
      %5838 = vmatprep.subr.mxu0 0.0
      %5839 = vmatpush1.msra.mxu0 0.0
      %5840 = vmatprep.subr.mxu0 0.0
      %5841 = vmatpush1.msra.mxu0 0.0
      %5842 = vmatprep.subr.mxu0 0.0
      %5843 = vmatpush1.msra.mxu0 0.0
      %5844 = vmatprep.subr.mxu0 0.0
      %5845 = vmatpush1.msra.mxu0 0.0
      %5846 = vmatprep.subr.mxu0 0.0
      %5847 = vmatpush1.msra.mxu0 0.0
      %5848 = vmatprep.subr.mxu0 0.0
      %5849 = vmatpush1.msra.mxu0 0.0
      %5850 = vmatprep.subr.mxu0 0.0
      %5851 = vmatpush1.msra.mxu0 0.0
      %5852 = vmatprep.subr.mxu0 0.0
      %5853 = vmatpush1.msra.mxu0 0.0
      %5854 = vmatprep.subr.mxu0 0.0
      %5855 = vmatpush1.msra.mxu0 0.0
      %5856 = vmatprep.subr.mxu0 0.0
      %5857 = vmatpush1.msra.mxu0 0.0
      %5858 = vmatprep.subr.mxu0 0.0
      %5859 = vmatpush1.msra.mxu0 0.0
      %5860 = vmatprep.subr.mxu0 0.0
      %5861 = vmatpush1.msra.mxu0 0.0
      %5862 = vmatprep.subr.mxu0 0.0
      %5863 = vmatpush1.msra.mxu0 0.0
      %5864 = vmatprep.subr.mxu0 0.0
      %5865 = vmatpush1.msra.mxu0 0.0
      %5866 = vmatprep.subr.mxu0 0.0
      %5867 = vmatpush1.msra.mxu0 0.0
      %5868 = vmatprep.subr.mxu0 0.0
      %5869 = vmatpush1.msra.mxu0 0.0
      %5870 = vmatprep.subr.mxu0 0.0
      %5871 = vmatpush1.msra.mxu0 0.0
      %5872 = vmatprep.subr.mxu0 0.0
      %5873 = vmatpush1.msra.mxu0 0.0
      %5874 = vmatprep.subr.mxu0 0.0
      %5875 = vmatpush1.msra.mxu0 0.0
      %5876 = vmatprep.subr.mxu0 0.0
      %5877 = vmatpush1.msra.mxu0 0.0
      %5878 = vmatprep.subr.mxu0 0.0
      %5879 = vmatpush1.msra.mxu0 0.0
      %5880 = vmatprep.mubr.f32.mxu0 0.0
      %5881 = vmatmul.mubr.f32.gmra.mrb[0].mxu0 %v5811
      %v5882 = vpop.f32.mrb[0].mxu0
      %v5883 = vadd.f32 0.0, %v5882
      %v5884 = vpop.f32.mrb[0].mxu0
      %5885 = vmatprep.mubr.f32.mxu0 0.0
      %5886 = vmatmul.mubr.f32.gmra.mrb[0].mxu0 %v5814
      %v5887 = vpop.f32.mrb[0].mxu0
      %v5888 = vadd.f32 0.0, %v5887
      %v5889 = vpop.f32.mrb[0].mxu0
      %5890 = vdwg.mxu0
      %s5891 = scalar_lea.vmem %s7, 224
      %v5892 = vld [vmem:[%s5891] sm:$0xff]
      %v5893 = vld [vmem:[%s5891 + $0x8] sm:$0xff]
      %v5894 = vld [vmem:[%s5891 + $0x10] sm:$0xff]
      %v5895 = vld [vmem:[%s5891 + $0x18] sm:$0xff]
      %v5897 = vsel %vm4784, %v5883, 0
      %v5900 = vsel %vm4784, %v5888, 0
      %5902 = vmatprep.subr.mxu0 0.0
      %5903 = vmatpush1.msra.mxu0 %v5892
      %5904 = vmatprep.subr.mxu0 0.0
      %5905 = vmatpush1.msra.mxu0 %v5893
      %5906 = vmatprep.subr.mxu0 0.0
      %5907 = vmatpush1.msra.mxu0 %v5894
      %5908 = vmatprep.subr.mxu0 0.0
      %5909 = vmatpush1.msra.mxu0 %v5895
      %5910 = vmatprep.subr.mxu0 0.0
      %5911 = vmatpush1.msra.mxu0 0.0
      %5912 = vmatprep.subr.mxu0 0.0
      %5913 = vmatpush1.msra.mxu0 0.0
      %5914 = vmatprep.subr.mxu0 0.0
      %5915 = vmatpush1.msra.mxu0 0.0
      %5916 = vmatprep.subr.mxu0 0.0
      %5917 = vmatpush1.msra.mxu0 0.0
      %5918 = vmatprep.subr.mxu0 0.0
      %5919 = vmatpush1.msra.mxu0 0.0
      %5920 = vmatprep.subr.mxu0 0.0
      %5921 = vmatpush1.msra.mxu0 0.0
      %5922 = vmatprep.subr.mxu0 0.0
      %5923 = vmatpush1.msra.mxu0 0.0
      %5924 = vmatprep.subr.mxu0 0.0
      %5925 = vmatpush1.msra.mxu0 0.0
      %5926 = vmatprep.subr.mxu0 0.0
      %5927 = vmatpush1.msra.mxu0 0.0
      %5928 = vmatprep.subr.mxu0 0.0
      %5929 = vmatpush1.msra.mxu0 0.0
      %5930 = vmatprep.subr.mxu0 0.0
      %5931 = vmatpush1.msra.mxu0 0.0
      %5932 = vmatprep.subr.mxu0 0.0
      %5933 = vmatpush1.msra.mxu0 0.0
      %5934 = vmatprep.subr.mxu0 0.0
      %5935 = vmatpush1.msra.mxu0 0.0
      %5936 = vmatprep.subr.mxu0 0.0
      %5937 = vmatpush1.msra.mxu0 0.0
      %5938 = vmatprep.subr.mxu0 0.0
      %5939 = vmatpush1.msra.mxu0 0.0
      %5940 = vmatprep.subr.mxu0 0.0
      %5941 = vmatpush1.msra.mxu0 0.0
      %5942 = vmatprep.subr.mxu0 0.0
      %5943 = vmatpush1.msra.mxu0 0.0
      %5944 = vmatprep.subr.mxu0 0.0
      %5945 = vmatpush1.msra.mxu0 0.0
      %5946 = vmatprep.subr.mxu0 0.0
      %5947 = vmatpush1.msra.mxu0 0.0
      %5948 = vmatprep.subr.mxu0 0.0
      %5949 = vmatpush1.msra.mxu0 0.0
      %5950 = vmatprep.subr.mxu0 0.0
      %5951 = vmatpush1.msra.mxu0 0.0
      %5952 = vmatprep.subr.mxu0 0.0
      %5953 = vmatpush1.msra.mxu0 0.0
      %5954 = vmatprep.subr.mxu0 0.0
      %5955 = vmatpush1.msra.mxu0 0.0
      %5956 = vmatprep.subr.mxu0 0.0
      %5957 = vmatpush1.msra.mxu0 0.0
      %5958 = vmatprep.subr.mxu0 0.0
      %5959 = vmatpush1.msra.mxu0 0.0
      %5960 = vmatprep.subr.mxu0 0.0
      %5961 = vmatpush1.msra.mxu0 0.0
      %5962 = vmatprep.subr.mxu0 0.0
      %5963 = vmatpush1.msra.mxu0 0.0
      %5964 = vmatprep.subr.mxu0 0.0
      %5965 = vmatpush1.msra.mxu0 0.0
      %5966 = vmatprep.mubr.f32.mxu0 0.0
      %5967 = vmatmul.mubr.f32.gmra.mrb[0].mxu0 %v5897
      %v5968 = vpop.f32.mrb[0].mxu0
      %v5969 = vadd.f32 0.0, %v5968
      %v5970 = vpop.f32.mrb[0].mxu0
      %5971 = vmatprep.mubr.f32.mxu0 0.0
      %5972 = vmatmul.mubr.f32.gmra.mrb[0].mxu0 %v5900
      %v5973 = vpop.f32.mrb[0].mxu0
      %v5974 = vadd.f32 0.0, %v5973
      %v5975 = vpop.f32.mrb[0].mxu0
      %5976 = vdwg.mxu0
      %v5977 = vadd.f32 %v5805, %v5969
      %v5978 = vadd.f32 %v5806, %v5974
      %s5979 = scalar_lea.vmem %s8, 128
      %v5980 = vld [vmem:[%s5979] sm:$0xff]
      %v5981 = vld [vmem:[%s5979 + $0x8] sm:$0xff]
      %v5983 = vsel %vm2156, %v5980, 0
      %v5986 = vsel %vm2156, %v5981, 0
      %5988 = vmatprep.subr.mxu0 0.0
      %5989 = vmatpush1.msra.mxu0 %v4606
      %5990 = vmatprep.subr.mxu0 0.0
      %5991 = vmatpush1.msra.mxu0 %v4607
      %5992 = vmatprep.subr.mxu0 0.0
      %5993 = vmatpush1.msra.mxu0 0.0
      %5994 = vmatprep.subr.mxu0 0.0
      %5995 = vmatpush1.msra.mxu0 0.0
      %5996 = vmatprep.subr.mxu0 0.0
      %5997 = vmatpush1.msra.mxu0 0.0
      %5998 = vmatprep.subr.mxu0 0.0
      %5999 = vmatpush1.msra.mxu0 0.0
      %6000 = vmatprep.subr.mxu0 0.0
      %6001 = vmatpush1.msra.mxu0 0.0
      %6002 = vmatprep.subr.mxu0 0.0
      %6003 = vmatpush1.msra.mxu0 0.0
      %6004 = vmatprep.subr.mxu0 0.0
      %6005 = vmatpush1.msra.mxu0 0.0
      %6006 = vmatprep.subr.mxu0 0.0
      %6007 = vmatpush1.msra.mxu0 0.0
      %6008 = vmatprep.subr.mxu0 0.0
      %6009 = vmatpush1.msra.mxu0 0.0
      %6010 = vmatprep.subr.mxu0 0.0
      %6011 = vmatpush1.msra.mxu0 0.0
      %6012 = vmatprep.subr.mxu0 0.0
      %6013 = vmatpush1.msra.mxu0 0.0
      %6014 = vmatprep.subr.mxu0 0.0
      %6015 = vmatpush1.msra.mxu0 0.0
      %6016 = vmatprep.subr.mxu0 0.0
      %6017 = vmatpush1.msra.mxu0 0.0
      %6018 = vmatprep.subr.mxu0 0.0
      %6019 = vmatpush1.msra.mxu0 0.0
      %6020 = vmatprep.subr.mxu0 0.0
      %6021 = vmatpush1.msra.mxu0 0.0
      %6022 = vmatprep.subr.mxu0 0.0
      %6023 = vmatpush1.msra.mxu0 0.0
      %6024 = vmatprep.subr.mxu0 0.0
      %6025 = vmatpush1.msra.mxu0 0.0
      %6026 = vmatprep.subr.mxu0 0.0
      %6027 = vmatpush1.msra.mxu0 0.0
      %6028 = vmatprep.subr.mxu0 0.0
      %6029 = vmatpush1.msra.mxu0 0.0
      %6030 = vmatprep.subr.mxu0 0.0
      %6031 = vmatpush1.msra.mxu0 0.0
      %6032 = vmatprep.subr.mxu0 0.0
      %6033 = vmatpush1.msra.mxu0 0.0
      %6034 = vmatprep.subr.mxu0 0.0
      %6035 = vmatpush1.msra.mxu0 0.0
      %6036 = vmatprep.subr.mxu0 0.0
      %6037 = vmatpush1.msra.mxu0 0.0
      %6038 = vmatprep.subr.mxu0 0.0
      %6039 = vmatpush1.msra.mxu0 0.0
      %6040 = vmatprep.subr.mxu0 0.0
      %6041 = vmatpush1.msra.mxu0 0.0
      %6042 = vmatprep.subr.mxu0 0.0
      %6043 = vmatpush1.msra.mxu0 0.0
      %6044 = vmatprep.subr.mxu0 0.0
      %6045 = vmatpush1.msra.mxu0 0.0
      %6046 = vmatprep.subr.mxu0 0.0
      %6047 = vmatpush1.msra.mxu0 0.0
      %6048 = vmatprep.subr.mxu0 0.0
      %6049 = vmatpush1.msra.mxu0 0.0
      %6050 = vmatprep.subr.mxu0 0.0
      %6051 = vmatpush1.msra.mxu0 0.0
      %6052 = vmatprep.mubr.f32.mxu0 0.0
      %6053 = vmatmul.mubr.f32.gmra.mrb[0].mxu0 %v5983
      %v6054 = vpop.f32.mrb[0].mxu0
      %v6055 = vadd.f32 0.0, %v6054
      %v6056 = vpop.f32.mrb[0].mxu0
      %6057 = vmatprep.mubr.f32.mxu0 0.0
      %6058 = vmatmul.mubr.f32.gmra.mrb[0].mxu0 %v5986
      %v6059 = vpop.f32.mrb[0].mxu0
      %v6060 = vadd.f32 0.0, %v6059
      %v6061 = vpop.f32.mrb[0].mxu0
      %6062 = vdwg.mxu0
      %s6063 = scalar_lea.vmem %s7, 256
      %v6064 = vld [vmem:[%s6063] sm:$0xff]
      %v6065 = vld [vmem:[%s6063 + $0x8] sm:$0xff]
      %v6066 = vld [vmem:[%s6063 + $0x10] sm:$0xff]
      %v6067 = vld [vmem:[%s6063 + $0x18] sm:$0xff]
      %v6069 = vsel %vm4784, %v6055, 0
      %v6072 = vsel %vm4784, %v6060, 0
      %6074 = vmatprep.subr.mxu0 0.0
      %6075 = vmatpush1.msra.mxu0 %v6064
      %6076 = vmatprep.subr.mxu0 0.0
      %6077 = vmatpush1.msra.mxu0 %v6065
      %6078 = vmatprep.subr.mxu0 0.0
      %6079 = vmatpush1.msra.mxu0 %v6066
      %6080 = vmatprep.subr.mxu0 0.0
      %6081 = vmatpush1.msra.mxu0 %v6067
      %6082 = vmatprep.subr.mxu0 0.0
      %6083 = vmatpush1.msra.mxu0 0.0
      %6084 = vmatprep.subr.mxu0 0.0
      %6085 = vmatpush1.msra.mxu0 0.0
      %6086 = vmatprep.subr.mxu0 0.0
      %6087 = vmatpush1.msra.mxu0 0.0
      %6088 = vmatprep.subr.mxu0 0.0
      %6089 = vmatpush1.msra.mxu0 0.0
      %6090 = vmatprep.subr.mxu0 0.0
      %6091 = vmatpush1.msra.mxu0 0.0
      %6092 = vmatprep.subr.mxu0 0.0
      %6093 = vmatpush1.msra.mxu0 0.0
      %6094 = vmatprep.subr.mxu0 0.0
      %6095 = vmatpush1.msra.mxu0 0.0
      %6096 = vmatprep.subr.mxu0 0.0
      %6097 = vmatpush1.msra.mxu0 0.0
      %6098 = vmatprep.subr.mxu0 0.0
      %6099 = vmatpush1.msra.mxu0 0.0
      %6100 = vmatprep.subr.mxu0 0.0
      %6101 = vmatpush1.msra.mxu0 0.0
      %6102 = vmatprep.subr.mxu0 0.0
      %6103 = vmatpush1.msra.mxu0 0.0
      %6104 = vmatprep.subr.mxu0 0.0
      %6105 = vmatpush1.msra.mxu0 0.0
      %6106 = vmatprep.subr.mxu0 0.0
      %6107 = vmatpush1.msra.mxu0 0.0
      %6108 = vmatprep.subr.mxu0 0.0
      %6109 = vmatpush1.msra.mxu0 0.0
      %6110 = vmatprep.subr.mxu0 0.0
      %6111 = vmatpush1.msra.mxu0 0.0
      %6112 = vmatprep.subr.mxu0 0.0
      %6113 = vmatpush1.msra.mxu0 0.0
      %6114 = vmatprep.subr.mxu0 0.0
      %6115 = vmatpush1.msra.mxu0 0.0
      %6116 = vmatprep.subr.mxu0 0.0
      %6117 = vmatpush1.msra.mxu0 0.0
      %6118 = vmatprep.subr.mxu0 0.0
      %6119 = vmatpush1.msra.mxu0 0.0
      %6120 = vmatprep.subr.mxu0 0.0
      %6121 = vmatpush1.msra.mxu0 0.0
      %6122 = vmatprep.subr.mxu0 0.0
      %6123 = vmatpush1.msra.mxu0 0.0
      %6124 = vmatprep.subr.mxu0 0.0
      %6125 = vmatpush1.msra.mxu0 0.0
      %6126 = vmatprep.subr.mxu0 0.0
      %6127 = vmatpush1.msra.mxu0 0.0
      %6128 = vmatprep.subr.mxu0 0.0
      %6129 = vmatpush1.msra.mxu0 0.0
      %6130 = vmatprep.subr.mxu0 0.0
      %6131 = vmatpush1.msra.mxu0 0.0
      %6132 = vmatprep.subr.mxu0 0.0
      %6133 = vmatpush1.msra.mxu0 0.0
      %6134 = vmatprep.subr.mxu0 0.0
      %6135 = vmatpush1.msra.mxu0 0.0
      %6136 = vmatprep.subr.mxu0 0.0
      %6137 = vmatpush1.msra.mxu0 0.0
      %6138 = vmatprep.mubr.f32.mxu0 0.0
      %6139 = vmatmul.mubr.f32.gmra.mrb[0].mxu0 %v6069
      %v6140 = vpop.f32.mrb[0].mxu0
      %v6141 = vadd.f32 0.0, %v6140
      %v6142 = vpop.f32.mrb[0].mxu0
      %6143 = vmatprep.mubr.f32.mxu0 0.0
      %6144 = vmatmul.mubr.f32.gmra.mrb[0].mxu0 %v6072
      %v6145 = vpop.f32.mrb[0].mxu0
      %v6146 = vadd.f32 0.0, %v6145
      %v6147 = vpop.f32.mrb[0].mxu0
      %6148 = vdwg.mxu0
      %v6149 = vadd.f32 %v5977, %v6141
      %v6150 = vadd.f32 %v5978, %v6146
      %v6151 = vld [vmem:[%s10] sm:$0x1]
      %v6153 = vlaneseq
      %v6154 = vshrl.u32 %v6153, 7
      %v6155 = vsub.s32 0, %v6154
      %v6156 = vrot.slane %v6151, %v6155
      %v6158 = vadd.f32 %v6149, %v6156
      %v6159 = vadd.f32 %v6150, %v6156
      %v6160 = vld [vmem:[%s9] sm:$0xf]
      %v6162 = vsel %vm2156, %v6160, 0
      %6164 = vmatprep.subr.mxu0 0.0
      %6165 = vmatpush1.msra.mxu0 %v6158
      %6166 = vmatprep.subr.mxu0 0.0
      %6167 = vmatpush1.msra.mxu0 %v6159
      %6168 = vmatprep.subr.mxu0 0.0
      %6169 = vmatpush1.msra.mxu0 0.0
      %6170 = vmatprep.subr.mxu0 0.0
      %6171 = vmatpush1.msra.mxu0 0.0
      %6172 = vmatprep.subr.mxu0 0.0
      %6173 = vmatpush1.msra.mxu0 0.0
      %6174 = vmatprep.subr.mxu0 0.0
      %6175 = vmatpush1.msra.mxu0 0.0
      %6176 = vmatprep.subr.mxu0 0.0
      %6177 = vmatpush1.msra.mxu0 0.0
      %6178 = vmatprep.subr.mxu0 0.0
      %6179 = vmatpush1.msra.mxu0 0.0
      %6180 = vmatprep.subr.mxu0 0.0
      %6181 = vmatpush1.msra.mxu0 0.0
      %6182 = vmatprep.subr.mxu0 0.0
      %6183 = vmatpush1.msra.mxu0 0.0
      %6184 = vmatprep.subr.mxu0 0.0
      %6185 = vmatpush1.msra.mxu0 0.0
      %6186 = vmatprep.subr.mxu0 0.0
      %6187 = vmatpush1.msra.mxu0 0.0
      %6188 = vmatprep.subr.mxu0 0.0
      %6189 = vmatpush1.msra.mxu0 0.0
      %6190 = vmatprep.subr.mxu0 0.0
      %6191 = vmatpush1.msra.mxu0 0.0
      %6192 = vmatprep.subr.mxu0 0.0
      %6193 = vmatpush1.msra.mxu0 0.0
      %6194 = vmatprep.subr.mxu0 0.0
      %6195 = vmatpush1.msra.mxu0 0.0
      %6196 = vmatprep.subr.mxu0 0.0
      %6197 = vmatpush1.msra.mxu0 0.0
      %6198 = vmatprep.subr.mxu0 0.0
      %6199 = vmatpush1.msra.mxu0 0.0
      %6200 = vmatprep.subr.mxu0 0.0
      %6201 = vmatpush1.msra.mxu0 0.0
      %6202 = vmatprep.subr.mxu0 0.0
      %6203 = vmatpush1.msra.mxu0 0.0
      %6204 = vmatprep.subr.mxu0 0.0
      %6205 = vmatpush1.msra.mxu0 0.0
      %6206 = vmatprep.subr.mxu0 0.0
      %6207 = vmatpush1.msra.mxu0 0.0
      %6208 = vmatprep.subr.mxu0 0.0
      %6209 = vmatpush1.msra.mxu0 0.0
      %6210 = vmatprep.subr.mxu0 0.0
      %6211 = vmatpush1.msra.mxu0 0.0
      %6212 = vmatprep.subr.mxu0 0.0
      %6213 = vmatpush1.msra.mxu0 0.0
      %6214 = vmatprep.subr.mxu0 0.0
      %6215 = vmatpush1.msra.mxu0 0.0
      %6216 = vmatprep.subr.mxu0 0.0
      %6217 = vmatpush1.msra.mxu0 0.0
      %6218 = vmatprep.subr.mxu0 0.0
      %6219 = vmatpush1.msra.mxu0 0.0
      %6220 = vmatprep.subr.mxu0 0.0
      %6221 = vmatpush1.msra.mxu0 0.0
      %6222 = vmatprep.subr.mxu0 0.0
      %6223 = vmatpush1.msra.mxu0 0.0
      %6224 = vmatprep.subr.mxu0 0.0
      %6225 = vmatpush1.msra.mxu0 0.0
      %6226 = vmatprep.subr.mxu0 0.0
      %6227 = vmatpush1.msra.mxu0 0.0
      %6228 = vmatprep.mubr.f32.mxu0 0.0
      %6229 = vmatmul.mubr.f32.gmra.mrb[0].mxu0 %v6162
      %v6230 = vpop.f32.mrb[0].mxu0
      %v6231 = vadd.f32 0.0, %v6230
      %v6232 = vpop.f32.mrb[0].mxu0
      %6233 = vdwg.mxu0
      %s6234 = scalar_lea.vmem %s9, 4
      %v6235 = vld [vmem:[%s6234] sm:$0xf]
      %v6237 = vsel %vm2156, %v6235, 0
      %6239 = vmatprep.subr.mxu0 0.0
      %6240 = vmatpush1.msra.mxu0 %v6158
      %6241 = vmatprep.subr.mxu0 0.0
      %6242 = vmatpush1.msra.mxu0 %v6159
      %6243 = vmatprep.subr.mxu0 0.0
      %6244 = vmatpush1.msra.mxu0 0.0
      %6245 = vmatprep.subr.mxu0 0.0
      %6246 = vmatpush1.msra.mxu0 0.0
      %6247 = vmatprep.subr.mxu0 0.0
      %6248 = vmatpush1.msra.mxu0 0.0
      %6249 = vmatprep.subr.mxu0 0.0
      %6250 = vmatpush1.msra.mxu0 0.0
      %6251 = vmatprep.subr.mxu0 0.0
      %6252 = vmatpush1.msra.mxu0 0.0
      %6253 = vmatprep.subr.mxu0 0.0
      %6254 = vmatpush1.msra.mxu0 0.0
      %6255 = vmatprep.subr.mxu0 0.0
      %6256 = vmatpush1.msra.mxu0 0.0
      %6257 = vmatprep.subr.mxu0 0.0
      %6258 = vmatpush1.msra.mxu0 0.0
      %6259 = vmatprep.subr.mxu0 0.0
      %6260 = vmatpush1.msra.mxu0 0.0
      %6261 = vmatprep.subr.mxu0 0.0
      %6262 = vmatpush1.msra.mxu0 0.0
      %6263 = vmatprep.subr.mxu0 0.0
      %6264 = vmatpush1.msra.mxu0 0.0
      %6265 = vmatprep.subr.mxu0 0.0
      %6266 = vmatpush1.msra.mxu0 0.0
      %6267 = vmatprep.subr.mxu0 0.0
      %6268 = vmatpush1.msra.mxu0 0.0
      %6269 = vmatprep.subr.mxu0 0.0
      %6270 = vmatpush1.msra.mxu0 0.0
      %6271 = vmatprep.subr.mxu0 0.0
      %6272 = vmatpush1.msra.mxu0 0.0
      %6273 = vmatprep.subr.mxu0 0.0
      %6274 = vmatpush1.msra.mxu0 0.0
      %6275 = vmatprep.subr.mxu0 0.0
      %6276 = vmatpush1.msra.mxu0 0.0
      %6277 = vmatprep.subr.mxu0 0.0
      %6278 = vmatpush1.msra.mxu0 0.0
      %6279 = vmatprep.subr.mxu0 0.0
      %6280 = vmatpush1.msra.mxu0 0.0
      %6281 = vmatprep.subr.mxu0 0.0
      %6282 = vmatpush1.msra.mxu0 0.0
      %6283 = vmatprep.subr.mxu0 0.0
      %6284 = vmatpush1.msra.mxu0 0.0
      %6285 = vmatprep.subr.mxu0 0.0
      %6286 = vmatpush1.msra.mxu0 0.0
      %6287 = vmatprep.subr.mxu0 0.0
      %6288 = vmatpush1.msra.mxu0 0.0
      %6289 = vmatprep.subr.mxu0 0.0
      %6290 = vmatpush1.msra.mxu0 0.0
      %6291 = vmatprep.subr.mxu0 0.0
      %6292 = vmatpush1.msra.mxu0 0.0
      %6293 = vmatprep.subr.mxu0 0.0
      %6294 = vmatpush1.msra.mxu0 0.0
      %6295 = vmatprep.subr.mxu0 0.0
      %6296 = vmatpush1.msra.mxu0 0.0
      %6297 = vmatprep.subr.mxu0 0.0
      %6298 = vmatpush1.msra.mxu0 0.0
      %6299 = vmatprep.subr.mxu0 0.0
      %6300 = vmatpush1.msra.mxu0 0.0
      %6301 = vmatprep.subr.mxu0 0.0
      %6302 = vmatpush1.msra.mxu0 0.0
      %6303 = vmatprep.mubr.f32.mxu0 0.0
      %6304 = vmatmul.mubr.f32.gmra.mrb[0].mxu0 %v6237
      %v6305 = vpop.f32.mrb[0].mxu0
      %v6306 = vadd.f32 0.0, %v6305
      %v6307 = vpop.f32.mrb[0].mxu0
      %6308 = vdwg.mxu0
      %v6309 = vmax.f32 %v6231, %v6306
      %s6310 = scalar_lea.vmem %s9, 8
      %v6311 = vld [vmem:[%s6310] sm:$0xf]
      %v6313 = vsel %vm2156, %v6311, 0
      %6315 = vmatprep.subr.mxu0 0.0
      %6316 = vmatpush1.msra.mxu0 %v6158
      %6317 = vmatprep.subr.mxu0 0.0
      %6318 = vmatpush1.msra.mxu0 %v6159
      %6319 = vmatprep.subr.mxu0 0.0
      %6320 = vmatpush1.msra.mxu0 0.0
      %6321 = vmatprep.subr.mxu0 0.0
      %6322 = vmatpush1.msra.mxu0 0.0
      %6323 = vmatprep.subr.mxu0 0.0
      %6324 = vmatpush1.msra.mxu0 0.0
      %6325 = vmatprep.subr.mxu0 0.0
      %6326 = vmatpush1.msra.mxu0 0.0
      %6327 = vmatprep.subr.mxu0 0.0
      %6328 = vmatpush1.msra.mxu0 0.0
      %6329 = vmatprep.subr.mxu0 0.0
      %6330 = vmatpush1.msra.mxu0 0.0
      %6331 = vmatprep.subr.mxu0 0.0
      %6332 = vmatpush1.msra.mxu0 0.0
      %6333 = vmatprep.subr.mxu0 0.0
      %6334 = vmatpush1.msra.mxu0 0.0
      %6335 = vmatprep.subr.mxu0 0.0
      %6336 = vmatpush1.msra.mxu0 0.0
      %6337 = vmatprep.subr.mxu0 0.0
      %6338 = vmatpush1.msra.mxu0 0.0
      %6339 = vmatprep.subr.mxu0 0.0
      %6340 = vmatpush1.msra.mxu0 0.0
      %6341 = vmatprep.subr.mxu0 0.0
      %6342 = vmatpush1.msra.mxu0 0.0
      %6343 = vmatprep.subr.mxu0 0.0
      %6344 = vmatpush1.msra.mxu0 0.0
      %6345 = vmatprep.subr.mxu0 0.0
      %6346 = vmatpush1.msra.mxu0 0.0
      %6347 = vmatprep.subr.mxu0 0.0
      %6348 = vmatpush1.msra.mxu0 0.0
      %6349 = vmatprep.subr.mxu0 0.0
      %6350 = vmatpush1.msra.mxu0 0.0
      %6351 = vmatprep.subr.mxu0 0.0
      %6352 = vmatpush1.msra.mxu0 0.0
      %6353 = vmatprep.subr.mxu0 0.0
      %6354 = vmatpush1.msra.mxu0 0.0
      %6355 = vmatprep.subr.mxu0 0.0
      %6356 = vmatpush1.msra.mxu0 0.0
      %6357 = vmatprep.subr.mxu0 0.0
      %6358 = vmatpush1.msra.mxu0 0.0
      %6359 = vmatprep.subr.mxu0 0.0
      %6360 = vmatpush1.msra.mxu0 0.0
      %6361 = vmatprep.subr.mxu0 0.0
      %6362 = vmatpush1.msra.mxu0 0.0
      %6363 = vmatprep.subr.mxu0 0.0
      %6364 = vmatpush1.msra.mxu0 0.0
      %6365 = vmatprep.subr.mxu0 0.0
      %6366 = vmatpush1.msra.mxu0 0.0
      %6367 = vmatprep.subr.mxu0 0.0
      %6368 = vmatpush1.msra.mxu0 0.0
      %6369 = vmatprep.subr.mxu0 0.0
      %6370 = vmatpush1.msra.mxu0 0.0
      %6371 = vmatprep.subr.mxu0 0.0
      %6372 = vmatpush1.msra.mxu0 0.0
      %6373 = vmatprep.subr.mxu0 0.0
      %6374 = vmatpush1.msra.mxu0 0.0
      %6375 = vmatprep.subr.mxu0 0.0
      %6376 = vmatpush1.msra.mxu0 0.0
      %6377 = vmatprep.subr.mxu0 0.0
      %6378 = vmatpush1.msra.mxu0 0.0
      %6379 = vmatprep.mubr.f32.mxu0 0.0
      %6380 = vmatmul.mubr.f32.gmra.mrb[0].mxu0 %v6313
      %v6381 = vpop.f32.mrb[0].mxu0
      %v6382 = vadd.f32 0.0, %v6381
      %v6383 = vpop.f32.mrb[0].mxu0
      %6384 = vdwg.mxu0
      %v6385 = vmax.f32 %v6309, %v6382
      %s6386 = scalar_lea.vmem %s9, 12
      %v6387 = vld [vmem:[%s6386] sm:$0xf]
      %v6389 = vsel %vm2156, %v6387, 0
      %6391 = vmatprep.subr.mxu0 0.0
      %6392 = vmatpush1.msra.mxu0 %v6158
      %6393 = vmatprep.subr.mxu0 0.0
      %6394 = vmatpush1.msra.mxu0 %v6159
      %6395 = vmatprep.subr.mxu0 0.0
      %6396 = vmatpush1.msra.mxu0 0.0
      %6397 = vmatprep.subr.mxu0 0.0
      %6398 = vmatpush1.msra.mxu0 0.0
      %6399 = vmatprep.subr.mxu0 0.0
      %6400 = vmatpush1.msra.mxu0 0.0
      %6401 = vmatprep.subr.mxu0 0.0
      %6402 = vmatpush1.msra.mxu0 0.0
      %6403 = vmatprep.subr.mxu0 0.0
      %6404 = vmatpush1.msra.mxu0 0.0
      %6405 = vmatprep.subr.mxu0 0.0
      %6406 = vmatpush1.msra.mxu0 0.0
      %6407 = vmatprep.subr.mxu0 0.0
      %6408 = vmatpush1.msra.mxu0 0.0
      %6409 = vmatprep.subr.mxu0 0.0
      %6410 = vmatpush1.msra.mxu0 0.0
      %6411 = vmatprep.subr.mxu0 0.0
      %6412 = vmatpush1.msra.mxu0 0.0
      %6413 = vmatprep.subr.mxu0 0.0
      %6414 = vmatpush1.msra.mxu0 0.0
      %6415 = vmatprep.subr.mxu0 0.0
      %6416 = vmatpush1.msra.mxu0 0.0
      %6417 = vmatprep.subr.mxu0 0.0
      %6418 = vmatpush1.msra.mxu0 0.0
      %6419 = vmatprep.subr.mxu0 0.0
      %6420 = vmatpush1.msra.mxu0 0.0
      %6421 = vmatprep.subr.mxu0 0.0
      %6422 = vmatpush1.msra.mxu0 0.0
      %6423 = vmatprep.subr.mxu0 0.0
      %6424 = vmatpush1.msra.mxu0 0.0
      %6425 = vmatprep.subr.mxu0 0.0
      %6426 = vmatpush1.msra.mxu0 0.0
      %6427 = vmatprep.subr.mxu0 0.0
      %6428 = vmatpush1.msra.mxu0 0.0
      %6429 = vmatprep.subr.mxu0 0.0
      %6430 = vmatpush1.msra.mxu0 0.0
      %6431 = vmatprep.subr.mxu0 0.0
      %6432 = vmatpush1.msra.mxu0 0.0
      %6433 = vmatprep.subr.mxu0 0.0
      %6434 = vmatpush1.msra.mxu0 0.0
      %6435 = vmatprep.subr.mxu0 0.0
      %6436 = vmatpush1.msra.mxu0 0.0
      %6437 = vmatprep.subr.mxu0 0.0
      %6438 = vmatpush1.msra.mxu0 0.0
      %6439 = vmatprep.subr.mxu0 0.0
      %6440 = vmatpush1.msra.mxu0 0.0
      %6441 = vmatprep.subr.mxu0 0.0
      %6442 = vmatpush1.msra.mxu0 0.0
      %6443 = vmatprep.subr.mxu0 0.0
      %6444 = vmatpush1.msra.mxu0 0.0
      %6445 = vmatprep.subr.mxu0 0.0
      %6446 = vmatpush1.msra.mxu0 0.0
      %6447 = vmatprep.subr.mxu0 0.0
      %6448 = vmatpush1.msra.mxu0 0.0
      %6449 = vmatprep.subr.mxu0 0.0
      %6450 = vmatpush1.msra.mxu0 0.0
      %6451 = vmatprep.subr.mxu0 0.0
      %6452 = vmatpush1.msra.mxu0 0.0
      %6453 = vmatprep.subr.mxu0 0.0
      %6454 = vmatpush1.msra.mxu0 0.0
      %6455 = vmatprep.mubr.f32.mxu0 0.0
      %6456 = vmatmul.mubr.f32.gmra.mrb[0].mxu0 %v6389
      %v6457 = vpop.f32.mrb[0].mxu0
      %v6458 = vadd.f32 0.0, %v6457
      %v6459 = vpop.f32.mrb[0].mxu0
      %6460 = vdwg.mxu0
      %v6461 = vmax.f32 %v6385, %v6458
      %v6462 = vmax.f32 %v6461, 0.0
      %v6463 = vld [vmem:[%s12] sm:$0xf]
      %vm6464 = vcmask 31744
      %v6466 = vsel %vm6464, %v6463, 0
      %vm6468 = vcmask 1043456
      %v6470 = vsel %vm6468, %v6462, 0
      %6472 = vmatprep.subr.mxu0 0.0
      %6473 = vmatpush1.msra.mxu0 %v6470
      %6474 = vmatprep.subr.mxu0 0.0
      %6475 = vmatpush1.msra.mxu0 0.0
      %6476 = vmatprep.subr.mxu0 0.0
      %6477 = vmatpush1.msra.mxu0 0.0
      %6478 = vmatprep.subr.mxu0 0.0
      %6479 = vmatpush1.msra.mxu0 0.0
      %6480 = vmatprep.subr.mxu0 0.0
      %6481 = vmatpush1.msra.mxu0 0.0
      %6482 = vmatprep.subr.mxu0 0.0
      %6483 = vmatpush1.msra.mxu0 0.0
      %6484 = vmatprep.subr.mxu0 0.0
      %6485 = vmatpush1.msra.mxu0 0.0
      %6486 = vmatprep.subr.mxu0 0.0
      %6487 = vmatpush1.msra.mxu0 0.0
      %6488 = vmatprep.subr.mxu0 0.0
      %6489 = vmatpush1.msra.mxu0 0.0
      %6490 = vmatprep.subr.mxu0 0.0
      %6491 = vmatpush1.msra.mxu0 0.0
      %6492 = vmatprep.subr.mxu0 0.0
      %6493 = vmatpush1.msra.mxu0 0.0
      %6494 = vmatprep.subr.mxu0 0.0
      %6495 = vmatpush1.msra.mxu0 0.0
      %6496 = vmatprep.subr.mxu0 0.0
      %6497 = vmatpush1.msra.mxu0 0.0
      %6498 = vmatprep.subr.mxu0 0.0
      %6499 = vmatpush1.msra.mxu0 0.0
      %6500 = vmatprep.subr.mxu0 0.0
      %6501 = vmatpush1.msra.mxu0 0.0
      %6502 = vmatprep.subr.mxu0 0.0
      %6503 = vmatpush1.msra.mxu0 0.0
      %6504 = vmatprep.subr.mxu0 0.0
      %6505 = vmatpush1.msra.mxu0 0.0
      %6506 = vmatprep.subr.mxu0 0.0
      %6507 = vmatpush1.msra.mxu0 0.0
      %6508 = vmatprep.subr.mxu0 0.0
      %6509 = vmatpush1.msra.mxu0 0.0
      %6510 = vmatprep.subr.mxu0 0.0
      %6511 = vmatpush1.msra.mxu0 0.0
      %6512 = vmatprep.subr.mxu0 0.0
      %6513 = vmatpush1.msra.mxu0 0.0
      %6514 = vmatprep.subr.mxu0 0.0
      %6515 = vmatpush1.msra.mxu0 0.0
      %6516 = vmatprep.subr.mxu0 0.0
      %6517 = vmatpush1.msra.mxu0 0.0
      %6518 = vmatprep.subr.mxu0 0.0
      %6519 = vmatpush1.msra.mxu0 0.0
      %6520 = vmatprep.subr.mxu0 0.0
      %6521 = vmatpush1.msra.mxu0 0.0
      %6522 = vmatprep.subr.mxu0 0.0
      %6523 = vmatpush1.msra.mxu0 0.0
      %6524 = vmatprep.subr.mxu0 0.0
      %6525 = vmatpush1.msra.mxu0 0.0
      %6526 = vmatprep.subr.mxu0 0.0
      %6527 = vmatpush1.msra.mxu0 0.0
      %6528 = vmatprep.subr.mxu0 0.0
      %6529 = vmatpush1.msra.mxu0 0.0
      %6530 = vmatprep.subr.mxu0 0.0
      %6531 = vmatpush1.msra.mxu0 0.0
      %6532 = vmatprep.subr.mxu0 0.0
      %6533 = vmatpush1.msra.mxu0 0.0
      %6534 = vmatprep.subr.mxu0 0.0
      %6535 = vmatpush1.msra.mxu0 0.0
      %6536 = vmatprep.mubr.f32.mxu0 0.0
      %6537 = vmatmul.mubr.f32.gmra.mrb[0].mxu0 %v6466
      %v6538 = vpop.f32.mrb[0].mxu0
      %v6539 = vadd.f32 0.0, %v6538
      %v6540 = vpop.f32.mrb[0].mxu0
      %6541 = vdwg.mxu0
      %v6542 = vld [vmem:[%s11] sm:$0xff]
      %v6543 = vld [vmem:[%s11 + $0x8] sm:$0xff]
      %v6544 = vld [vmem:[%s11 + $0x10] sm:$0xff]
      %v6545 = vld [vmem:[%s11 + $0x18] sm:$0xff]
      %v6546 = vld [vmem:[%s11 + $0x20] sm:$0xff]
      %v6547 = vld [vmem:[%s11 + $0x28] sm:$0xff]
      %v6548 = vld [vmem:[%s11 + $0x30] sm:$0xff]
      %v6549 = vld [vmem:[%s11 + $0x38] sm:$0xff]
      %s6550 = scalar_lea.vmem %s12, 4
      %v6551 = vld [vmem:[%s6550] sm:$0xf]
      %v6553 = vsel %vm6464, %v6551, 0
      %6555 = vmatprep.subr.mxu0 0.0
      %6556 = vmatpush1.msra.mxu0 %v6470
      %6557 = vmatprep.subr.mxu0 0.0
      %6558 = vmatpush1.msra.mxu0 0.0
      %6559 = vmatprep.subr.mxu0 0.0
      %6560 = vmatpush1.msra.mxu0 0.0
      %6561 = vmatprep.subr.mxu0 0.0
      %6562 = vmatpush1.msra.mxu0 0.0
      %6563 = vmatprep.subr.mxu0 0.0
      %6564 = vmatpush1.msra.mxu0 0.0
      %6565 = vmatprep.subr.mxu0 0.0
      %6566 = vmatpush1.msra.mxu0 0.0
      %6567 = vmatprep.subr.mxu0 0.0
      %6568 = vmatpush1.msra.mxu0 0.0
      %6569 = vmatprep.subr.mxu0 0.0
      %6570 = vmatpush1.msra.mxu0 0.0
      %6571 = vmatprep.subr.mxu0 0.0
      %6572 = vmatpush1.msra.mxu0 0.0
      %6573 = vmatprep.subr.mxu0 0.0
      %6574 = vmatpush1.msra.mxu0 0.0
      %6575 = vmatprep.subr.mxu0 0.0
      %6576 = vmatpush1.msra.mxu0 0.0
      %6577 = vmatprep.subr.mxu0 0.0
      %6578 = vmatpush1.msra.mxu0 0.0
      %6579 = vmatprep.subr.mxu0 0.0
      %6580 = vmatpush1.msra.mxu0 0.0
      %6581 = vmatprep.subr.mxu0 0.0
      %6582 = vmatpush1.msra.mxu0 0.0
      %6583 = vmatprep.subr.mxu0 0.0
      %6584 = vmatpush1.msra.mxu0 0.0
      %6585 = vmatprep.subr.mxu0 0.0
      %6586 = vmatpush1.msra.mxu0 0.0
      %6587 = vmatprep.subr.mxu0 0.0
      %6588 = vmatpush1.msra.mxu0 0.0
      %6589 = vmatprep.subr.mxu0 0.0
      %6590 = vmatpush1.msra.mxu0 0.0
      %6591 = vmatprep.subr.mxu0 0.0
      %6592 = vmatpush1.msra.mxu0 0.0
      %6593 = vmatprep.subr.mxu0 0.0
      %6594 = vmatpush1.msra.mxu0 0.0
      %6595 = vmatprep.subr.mxu0 0.0
      %6596 = vmatpush1.msra.mxu0 0.0
      %6597 = vmatprep.subr.mxu0 0.0
      %6598 = vmatpush1.msra.mxu0 0.0
      %6599 = vmatprep.subr.mxu0 0.0
      %6600 = vmatpush1.msra.mxu0 0.0
      %6601 = vmatprep.subr.mxu0 0.0
      %6602 = vmatpush1.msra.mxu0 0.0
      %6603 = vmatprep.subr.mxu0 0.0
      %6604 = vmatpush1.msra.mxu0 0.0
      %6605 = vmatprep.subr.mxu0 0.0
      %6606 = vmatpush1.msra.mxu0 0.0
      %6607 = vmatprep.subr.mxu0 0.0
      %6608 = vmatpush1.msra.mxu0 0.0
      %6609 = vmatprep.subr.mxu0 0.0
      %6610 = vmatpush1.msra.mxu0 0.0
      %6611 = vmatprep.subr.mxu0 0.0
      %6612 = vmatpush1.msra.mxu0 0.0
      %6613 = vmatprep.subr.mxu0 0.0
      %6614 = vmatpush1.msra.mxu0 0.0
      %6615 = vmatprep.subr.mxu0 0.0
      %6616 = vmatpush1.msra.mxu0 0.0
      %6617 = vmatprep.subr.mxu0 0.0
      %6618 = vmatpush1.msra.mxu0 0.0
      %6619 = vmatprep.mubr.f32.mxu0 0.0
      %6620 = vmatmul.mubr.f32.gmra.mrb[0].mxu0 %v6553
      %v6621 = vpop.f32.mrb[0].mxu0
      %v6622 = vadd.f32 0.0, %v6621
      %v6623 = vpop.f32.mrb[0].mxu0
      %6624 = vdwg.mxu0
      %s6625 = scalar_lea.vmem %s11, 64
      %v6626 = vld [vmem:[%s6625] sm:$0xff]
      %v6627 = vld [vmem:[%s6625 + $0x8] sm:$0xff]
      %v6628 = vld [vmem:[%s6625 + $0x10] sm:$0xff]
      %v6629 = vld [vmem:[%s6625 + $0x18] sm:$0xff]
      %v6630 = vld [vmem:[%s6625 + $0x20] sm:$0xff]
      %v6631 = vld [vmem:[%s6625 + $0x28] sm:$0xff]
      %v6632 = vld [vmem:[%s6625 + $0x30] sm:$0xff]
      %v6633 = vld [vmem:[%s6625 + $0x38] sm:$0xff]
      %v6635 = vsel %vm4266, %v6622, 0
      %6637 = vmatprep.subr.mxu0 0.0
      %6638 = vmatpush1.msra.mxu0 %v6626
      %6639 = vmatprep.subr.mxu0 0.0
      %6640 = vmatpush1.msra.mxu0 %v6627
      %6641 = vmatprep.subr.mxu0 0.0
      %6642 = vmatpush1.msra.mxu0 %v6628
      %6643 = vmatprep.subr.mxu0 0.0
      %6644 = vmatpush1.msra.mxu0 %v6629
      %6645 = vmatprep.subr.mxu0 0.0
      %6646 = vmatpush1.msra.mxu0 %v6630
      %6647 = vmatprep.subr.mxu0 0.0
      %6648 = vmatpush1.msra.mxu0 %v6631
      %6649 = vmatprep.subr.mxu0 0.0
      %6650 = vmatpush1.msra.mxu0 %v6632
      %6651 = vmatprep.subr.mxu0 0.0
      %6652 = vmatpush1.msra.mxu0 %v6633
      %6653 = vmatprep.subr.mxu0 0.0
      %6654 = vmatpush1.msra.mxu0 0.0
      %6655 = vmatprep.subr.mxu0 0.0
      %6656 = vmatpush1.msra.mxu0 0.0
      %6657 = vmatprep.subr.mxu0 0.0
      %6658 = vmatpush1.msra.mxu0 0.0
      %6659 = vmatprep.subr.mxu0 0.0
      %6660 = vmatpush1.msra.mxu0 0.0
      %6661 = vmatprep.subr.mxu0 0.0
      %6662 = vmatpush1.msra.mxu0 0.0
      %6663 = vmatprep.subr.mxu0 0.0
      %6664 = vmatpush1.msra.mxu0 0.0
      %6665 = vmatprep.subr.mxu0 0.0
      %6666 = vmatpush1.msra.mxu0 0.0
      %6667 = vmatprep.subr.mxu0 0.0
      %6668 = vmatpush1.msra.mxu0 0.0
      %6669 = vmatprep.subr.mxu0 0.0
      %6670 = vmatpush1.msra.mxu0 0.0
      %6671 = vmatprep.subr.mxu0 0.0
      %6672 = vmatpush1.msra.mxu0 0.0
      %6673 = vmatprep.subr.mxu0 0.0
      %6674 = vmatpush1.msra.mxu0 0.0
      %6675 = vmatprep.subr.mxu0 0.0
      %6676 = vmatpush1.msra.mxu0 0.0
      %6677 = vmatprep.subr.mxu0 0.0
      %6678 = vmatpush1.msra.mxu0 0.0
      %6679 = vmatprep.subr.mxu0 0.0
      %6680 = vmatpush1.msra.mxu0 0.0
      %6681 = vmatprep.subr.mxu0 0.0
      %6682 = vmatpush1.msra.mxu0 0.0
      %6683 = vmatprep.subr.mxu0 0.0
      %6684 = vmatpush1.msra.mxu0 0.0
      %6685 = vmatprep.subr.mxu0 0.0
      %6686 = vmatpush1.msra.mxu0 0.0
      %6687 = vmatprep.subr.mxu0 0.0
      %6688 = vmatpush1.msra.mxu0 0.0
      %6689 = vmatprep.subr.mxu0 0.0
      %6690 = vmatpush1.msra.mxu0 0.0
      %6691 = vmatprep.subr.mxu0 0.0
      %6692 = vmatpush1.msra.mxu0 0.0
      %6693 = vmatprep.subr.mxu0 0.0
      %6694 = vmatpush1.msra.mxu0 0.0
      %6695 = vmatprep.subr.mxu0 0.0
      %6696 = vmatpush1.msra.mxu0 0.0
      %6697 = vmatprep.subr.mxu0 0.0
      %6698 = vmatpush1.msra.mxu0 0.0
      %6699 = vmatprep.subr.mxu0 0.0
      %6700 = vmatpush1.msra.mxu0 0.0
      %6701 = vmatprep.mubr.f32.mxu0 0.0
      %6702 = vmatmul.mubr.f32.gmra.mrb[0].mxu0 %v6635
      %v6703 = vpop.f32.mrb[0].mxu0
      %v6704 = vadd.f32 0.0, %v6703
      %v6705 = vpop.f32.mrb[0].mxu0
      %6706 = vdwg.mxu0
      %v6708 = vsel %vm4266, %v6539, 0
      %6710 = vmatprep.subr.mxu0 0.0
      %6711 = vmatpush1.msra.mxu0 %v6542
      %6712 = vmatprep.subr.mxu0 0.0
      %6713 = vmatpush1.msra.mxu0 %v6543
      %6714 = vmatprep.subr.mxu0 0.0
      %6715 = vmatpush1.msra.mxu0 %v6544
      %6716 = vmatprep.subr.mxu0 0.0
      %6717 = vmatpush1.msra.mxu0 %v6545
      %6718 = vmatprep.subr.mxu0 0.0
      %6719 = vmatpush1.msra.mxu0 %v6546
      %6720 = vmatprep.subr.mxu0 0.0
      %6721 = vmatpush1.msra.mxu0 %v6547
      %6722 = vmatprep.subr.mxu0 0.0
      %6723 = vmatpush1.msra.mxu0 %v6548
      %6724 = vmatprep.subr.mxu0 0.0
      %6725 = vmatpush1.msra.mxu0 %v6549
      %6726 = vmatprep.subr.mxu0 0.0
      %6727 = vmatpush1.msra.mxu0 0.0
      %6728 = vmatprep.subr.mxu0 0.0
      %6729 = vmatpush1.msra.mxu0 0.0
      %6730 = vmatprep.subr.mxu0 0.0
      %6731 = vmatpush1.msra.mxu0 0.0
      %6732 = vmatprep.subr.mxu0 0.0
      %6733 = vmatpush1.msra.mxu0 0.0
      %6734 = vmatprep.subr.mxu0 0.0
      %6735 = vmatpush1.msra.mxu0 0.0
      %6736 = vmatprep.subr.mxu0 0.0
      %6737 = vmatpush1.msra.mxu0 0.0
      %6738 = vmatprep.subr.mxu0 0.0
      %6739 = vmatpush1.msra.mxu0 0.0
      %6740 = vmatprep.subr.mxu0 0.0
      %6741 = vmatpush1.msra.mxu0 0.0
      %6742 = vmatprep.subr.mxu0 0.0
      %6743 = vmatpush1.msra.mxu0 0.0
      %6744 = vmatprep.subr.mxu0 0.0
      %6745 = vmatpush1.msra.mxu0 0.0
      %6746 = vmatprep.subr.mxu0 0.0
      %6747 = vmatpush1.msra.mxu0 0.0
      %6748 = vmatprep.subr.mxu0 0.0
      %6749 = vmatpush1.msra.mxu0 0.0
      %6750 = vmatprep.subr.mxu0 0.0
      %6751 = vmatpush1.msra.mxu0 0.0
      %6752 = vmatprep.subr.mxu0 0.0
      %6753 = vmatpush1.msra.mxu0 0.0
      %6754 = vmatprep.subr.mxu0 0.0
      %6755 = vmatpush1.msra.mxu0 0.0
      %6756 = vmatprep.subr.mxu0 0.0
      %6757 = vmatpush1.msra.mxu0 0.0
      %6758 = vmatprep.subr.mxu0 0.0
      %6759 = vmatpush1.msra.mxu0 0.0
      %6760 = vmatprep.subr.mxu0 0.0
      %6761 = vmatpush1.msra.mxu0 0.0
      %6762 = vmatprep.subr.mxu0 0.0
      %6763 = vmatpush1.msra.mxu0 0.0
      %6764 = vmatprep.subr.mxu0 0.0
      %6765 = vmatpush1.msra.mxu0 0.0
      %6766 = vmatprep.subr.mxu0 0.0
      %6767 = vmatpush1.msra.mxu0 0.0
      %6768 = vmatprep.subr.mxu0 0.0
      %6769 = vmatpush1.msra.mxu0 0.0
      %6770 = vmatprep.subr.mxu0 0.0
      %6771 = vmatpush1.msra.mxu0 0.0
      %6772 = vmatprep.subr.mxu0 0.0
      %6773 = vmatpush1.msra.mxu0 0.0
      %6774 = vmatprep.mubr.f32.mxu0 0.0
      %6775 = vmatmul.mubr.f32.gmra.mrb[0].mxu0 %v6708
      %v6776 = vpop.f32.mrb[0].mxu0
      %v6777 = vadd.f32 %v6704, %v6776
      %v6778 = vpop.f32.mrb[0].mxu0
      %6779 = vdwg.mxu0
      %s6780 = scalar_lea.vmem %s12, 8
      %v6781 = vld [vmem:[%s6780] sm:$0xf]
      %v6783 = vsel %vm6464, %v6781, 0
      %6785 = vmatprep.subr.mxu0 0.0
      %6786 = vmatpush1.msra.mxu0 %v6470
      %6787 = vmatprep.subr.mxu0 0.0
      %6788 = vmatpush1.msra.mxu0 0.0
      %6789 = vmatprep.subr.mxu0 0.0
      %6790 = vmatpush1.msra.mxu0 0.0
      %6791 = vmatprep.subr.mxu0 0.0
      %6792 = vmatpush1.msra.mxu0 0.0
      %6793 = vmatprep.subr.mxu0 0.0
      %6794 = vmatpush1.msra.mxu0 0.0
      %6795 = vmatprep.subr.mxu0 0.0
      %6796 = vmatpush1.msra.mxu0 0.0
      %6797 = vmatprep.subr.mxu0 0.0
      %6798 = vmatpush1.msra.mxu0 0.0
      %6799 = vmatprep.subr.mxu0 0.0
      %6800 = vmatpush1.msra.mxu0 0.0
      %6801 = vmatprep.subr.mxu0 0.0
      %6802 = vmatpush1.msra.mxu0 0.0
      %6803 = vmatprep.subr.mxu0 0.0
      %6804 = vmatpush1.msra.mxu0 0.0
      %6805 = vmatprep.subr.mxu0 0.0
      %6806 = vmatpush1.msra.mxu0 0.0
      %6807 = vmatprep.subr.mxu0 0.0
      %6808 = vmatpush1.msra.mxu0 0.0
      %6809 = vmatprep.subr.mxu0 0.0
      %6810 = vmatpush1.msra.mxu0 0.0
      %6811 = vmatprep.subr.mxu0 0.0
      %6812 = vmatpush1.msra.mxu0 0.0
      %6813 = vmatprep.subr.mxu0 0.0
      %6814 = vmatpush1.msra.mxu0 0.0
      %6815 = vmatprep.subr.mxu0 0.0
      %6816 = vmatpush1.msra.mxu0 0.0
      %6817 = vmatprep.subr.mxu0 0.0
      %6818 = vmatpush1.msra.mxu0 0.0
      %6819 = vmatprep.subr.mxu0 0.0
      %6820 = vmatpush1.msra.mxu0 0.0
      %6821 = vmatprep.subr.mxu0 0.0
      %6822 = vmatpush1.msra.mxu0 0.0
      %6823 = vmatprep.subr.mxu0 0.0
      %6824 = vmatpush1.msra.mxu0 0.0
      %6825 = vmatprep.subr.mxu0 0.0
      %6826 = vmatpush1.msra.mxu0 0.0
      %6827 = vmatprep.subr.mxu0 0.0
      %6828 = vmatpush1.msra.mxu0 0.0
      %6829 = vmatprep.subr.mxu0 0.0
      %6830 = vmatpush1.msra.mxu0 0.0
      %6831 = vmatprep.subr.mxu0 0.0
      %6832 = vmatpush1.msra.mxu0 0.0
      %6833 = vmatprep.subr.mxu0 0.0
      %6834 = vmatpush1.msra.mxu0 0.0
      %6835 = vmatprep.subr.mxu0 0.0
      %6836 = vmatpush1.msra.mxu0 0.0
      %6837 = vmatprep.subr.mxu0 0.0
      %6838 = vmatpush1.msra.mxu0 0.0
      %6839 = vmatprep.subr.mxu0 0.0
      %6840 = vmatpush1.msra.mxu0 0.0
      %6841 = vmatprep.subr.mxu0 0.0
      %6842 = vmatpush1.msra.mxu0 0.0
      %6843 = vmatprep.subr.mxu0 0.0
      %6844 = vmatpush1.msra.mxu0 0.0
      %6845 = vmatprep.subr.mxu0 0.0
      %6846 = vmatpush1.msra.mxu0 0.0
      %6847 = vmatprep.subr.mxu0 0.0
      %6848 = vmatpush1.msra.mxu0 0.0
      %6849 = vmatprep.mubr.f32.mxu0 0.0
      %6850 = vmatmul.mubr.f32.gmra.mrb[0].mxu0 %v6783
      %v6851 = vpop.f32.mrb[0].mxu0
      %v6852 = vadd.f32 0.0, %v6851
      %v6853 = vpop.f32.mrb[0].mxu0
      %6854 = vdwg.mxu0
      %s6855 = scalar_lea.vmem %s11, 128
      %v6856 = vld [vmem:[%s6855] sm:$0xff]
      %v6857 = vld [vmem:[%s6855 + $0x8] sm:$0xff]
      %v6858 = vld [vmem:[%s6855 + $0x10] sm:$0xff]
      %v6859 = vld [vmem:[%s6855 + $0x18] sm:$0xff]
      %v6860 = vld [vmem:[%s6855 + $0x20] sm:$0xff]
      %v6861 = vld [vmem:[%s6855 + $0x28] sm:$0xff]
      %v6862 = vld [vmem:[%s6855 + $0x30] sm:$0xff]
      %v6863 = vld [vmem:[%s6855 + $0x38] sm:$0xff]
      %v6865 = vsel %vm4266, %v6852, 0
      %6867 = vmatprep.subr.mxu0 0.0
      %6868 = vmatpush1.msra.mxu0 %v6856
      %6869 = vmatprep.subr.mxu0 0.0
      %6870 = vmatpush1.msra.mxu0 %v6857
      %6871 = vmatprep.subr.mxu0 0.0
      %6872 = vmatpush1.msra.mxu0 %v6858
      %6873 = vmatprep.subr.mxu0 0.0
      %6874 = vmatpush1.msra.mxu0 %v6859
      %6875 = vmatprep.subr.mxu0 0.0
      %6876 = vmatpush1.msra.mxu0 %v6860
      %6877 = vmatprep.subr.mxu0 0.0
      %6878 = vmatpush1.msra.mxu0 %v6861
      %6879 = vmatprep.subr.mxu0 0.0
      %6880 = vmatpush1.msra.mxu0 %v6862
      %6881 = vmatprep.subr.mxu0 0.0
      %6882 = vmatpush1.msra.mxu0 %v6863
      %6883 = vmatprep.subr.mxu0 0.0
      %6884 = vmatpush1.msra.mxu0 0.0
      %6885 = vmatprep.subr.mxu0 0.0
      %6886 = vmatpush1.msra.mxu0 0.0
      %6887 = vmatprep.subr.mxu0 0.0
      %6888 = vmatpush1.msra.mxu0 0.0
      %6889 = vmatprep.subr.mxu0 0.0
      %6890 = vmatpush1.msra.mxu0 0.0
      %6891 = vmatprep.subr.mxu0 0.0
      %6892 = vmatpush1.msra.mxu0 0.0
      %6893 = vmatprep.subr.mxu0 0.0
      %6894 = vmatpush1.msra.mxu0 0.0
      %6895 = vmatprep.subr.mxu0 0.0
      %6896 = vmatpush1.msra.mxu0 0.0
      %6897 = vmatprep.subr.mxu0 0.0
      %6898 = vmatpush1.msra.mxu0 0.0
      %6899 = vmatprep.subr.mxu0 0.0
      %6900 = vmatpush1.msra.mxu0 0.0
      %6901 = vmatprep.subr.mxu0 0.0
      %6902 = vmatpush1.msra.mxu0 0.0
      %6903 = vmatprep.subr.mxu0 0.0
      %6904 = vmatpush1.msra.mxu0 0.0
      %6905 = vmatprep.subr.mxu0 0.0
      %6906 = vmatpush1.msra.mxu0 0.0
      %6907 = vmatprep.subr.mxu0 0.0
      %6908 = vmatpush1.msra.mxu0 0.0
      %6909 = vmatprep.subr.mxu0 0.0
      %6910 = vmatpush1.msra.mxu0 0.0
      %6911 = vmatprep.subr.mxu0 0.0
      %6912 = vmatpush1.msra.mxu0 0.0
      %6913 = vmatprep.subr.mxu0 0.0
      %6914 = vmatpush1.msra.mxu0 0.0
      %6915 = vmatprep.subr.mxu0 0.0
      %6916 = vmatpush1.msra.mxu0 0.0
      %6917 = vmatprep.subr.mxu0 0.0
      %6918 = vmatpush1.msra.mxu0 0.0
      %6919 = vmatprep.subr.mxu0 0.0
      %6920 = vmatpush1.msra.mxu0 0.0
      %6921 = vmatprep.subr.mxu0 0.0
      %6922 = vmatpush1.msra.mxu0 0.0
      %6923 = vmatprep.subr.mxu0 0.0
      %6924 = vmatpush1.msra.mxu0 0.0
      %6925 = vmatprep.subr.mxu0 0.0
      %6926 = vmatpush1.msra.mxu0 0.0
      %6927 = vmatprep.subr.mxu0 0.0
      %6928 = vmatpush1.msra.mxu0 0.0
      %6929 = vmatprep.subr.mxu0 0.0
      %6930 = vmatpush1.msra.mxu0 0.0
      %6931 = vmatprep.mubr.f32.mxu0 0.0
      %6932 = vmatmul.mubr.f32.gmra.mrb[0].mxu0 %v6865
      %v6933 = vpop.f32.mrb[0].mxu0
      %v6934 = vadd.f32 0.0, %v6933
      %v6935 = vpop.f32.mrb[0].mxu0
      %6936 = vdwg.mxu0
      %v6937 = vadd.f32 %v6777, %v6934
      %s6938 = scalar_lea.vmem %s12, 12
      %v6939 = vld [vmem:[%s6938] sm:$0xf]
      %v6941 = vsel %vm6464, %v6939, 0
      %6943 = vmatprep.subr.mxu0 0.0
      %6944 = vmatpush1.msra.mxu0 %v6470
      %6945 = vmatprep.subr.mxu0 0.0
      %6946 = vmatpush1.msra.mxu0 0.0
      %6947 = vmatprep.subr.mxu0 0.0
      %6948 = vmatpush1.msra.mxu0 0.0
      %6949 = vmatprep.subr.mxu0 0.0
      %6950 = vmatpush1.msra.mxu0 0.0
      %6951 = vmatprep.subr.mxu0 0.0
      %6952 = vmatpush1.msra.mxu0 0.0
      %6953 = vmatprep.subr.mxu0 0.0
      %6954 = vmatpush1.msra.mxu0 0.0
      %6955 = vmatprep.subr.mxu0 0.0
      %6956 = vmatpush1.msra.mxu0 0.0
      %6957 = vmatprep.subr.mxu0 0.0
      %6958 = vmatpush1.msra.mxu0 0.0
      %6959 = vmatprep.subr.mxu0 0.0
      %6960 = vmatpush1.msra.mxu0 0.0
      %6961 = vmatprep.subr.mxu0 0.0
      %6962 = vmatpush1.msra.mxu0 0.0
      %6963 = vmatprep.subr.mxu0 0.0
      %6964 = vmatpush1.msra.mxu0 0.0
      %6965 = vmatprep.subr.mxu0 0.0
      %6966 = vmatpush1.msra.mxu0 0.0
      %6967 = vmatprep.subr.mxu0 0.0
      %6968 = vmatpush1.msra.mxu0 0.0
      %6969 = vmatprep.subr.mxu0 0.0
      %6970 = vmatpush1.msra.mxu0 0.0
      %6971 = vmatprep.subr.mxu0 0.0
      %6972 = vmatpush1.msra.mxu0 0.0
      %6973 = vmatprep.subr.mxu0 0.0
      %6974 = vmatpush1.msra.mxu0 0.0
      %6975 = vmatprep.subr.mxu0 0.0
      %6976 = vmatpush1.msra.mxu0 0.0
      %6977 = vmatprep.subr.mxu0 0.0
      %6978 = vmatpush1.msra.mxu0 0.0
      %6979 = vmatprep.subr.mxu0 0.0
      %6980 = vmatpush1.msra.mxu0 0.0
      %6981 = vmatprep.subr.mxu0 0.0
      %6982 = vmatpush1.msra.mxu0 0.0
      %6983 = vmatprep.subr.mxu0 0.0
      %6984 = vmatpush1.msra.mxu0 0.0
      %6985 = vmatprep.subr.mxu0 0.0
      %6986 = vmatpush1.msra.mxu0 0.0
      %6987 = vmatprep.subr.mxu0 0.0
      %6988 = vmatpush1.msra.mxu0 0.0
      %6989 = vmatprep.subr.mxu0 0.0
      %6990 = vmatpush1.msra.mxu0 0.0
      %6991 = vmatprep.subr.mxu0 0.0
      %6992 = vmatpush1.msra.mxu0 0.0
      %6993 = vmatprep.subr.mxu0 0.0
      %6994 = vmatpush1.msra.mxu0 0.0
      %6995 = vmatprep.subr.mxu0 0.0
      %6996 = vmatpush1.msra.mxu0 0.0
      %6997 = vmatprep.subr.mxu0 0.0
      %6998 = vmatpush1.msra.mxu0 0.0
      %6999 = vmatprep.subr.mxu0 0.0
      %7000 = vmatpush1.msra.mxu0 0.0
      %7001 = vmatprep.subr.mxu0 0.0
      %7002 = vmatpush1.msra.mxu0 0.0
      %7003 = vmatprep.subr.mxu0 0.0
      %7004 = vmatpush1.msra.mxu0 0.0
      %7005 = vmatprep.subr.mxu0 0.0
      %7006 = vmatpush1.msra.mxu0 0.0
      %7007 = vmatprep.mubr.f32.mxu0 0.0
      %7008 = vmatmul.mubr.f32.gmra.mrb[0].mxu0 %v6941
      %v7009 = vpop.f32.mrb[0].mxu0
      %v7010 = vadd.f32 0.0, %v7009
      %v7011 = vpop.f32.mrb[0].mxu0
      %7012 = vdwg.mxu0
      %s7013 = scalar_lea.vmem %s11, 192
      %v7014 = vld [vmem:[%s7013] sm:$0xff]
      %v7015 = vld [vmem:[%s7013 + $0x8] sm:$0xff]
      %v7016 = vld [vmem:[%s7013 + $0x10] sm:$0xff]
      %v7017 = vld [vmem:[%s7013 + $0x18] sm:$0xff]
      %v7018 = vld [vmem:[%s7013 + $0x20] sm:$0xff]
      %v7019 = vld [vmem:[%s7013 + $0x28] sm:$0xff]
      %v7020 = vld [vmem:[%s7013 + $0x30] sm:$0xff]
      %v7021 = vld [vmem:[%s7013 + $0x38] sm:$0xff]
      %v7023 = vsel %vm4266, %v7010, 0
      %7025 = vmatprep.subr.mxu0 0.0
      %7026 = vmatpush1.msra.mxu0 %v7014
      %7027 = vmatprep.subr.mxu0 0.0
      %7028 = vmatpush1.msra.mxu0 %v7015
      %7029 = vmatprep.subr.mxu0 0.0
      %7030 = vmatpush1.msra.mxu0 %v7016
      %7031 = vmatprep.subr.mxu0 0.0
      %7032 = vmatpush1.msra.mxu0 %v7017
      %7033 = vmatprep.subr.mxu0 0.0
      %7034 = vmatpush1.msra.mxu0 %v7018
      %7035 = vmatprep.subr.mxu0 0.0
      %7036 = vmatpush1.msra.mxu0 %v7019
      %7037 = vmatprep.subr.mxu0 0.0
      %7038 = vmatpush1.msra.mxu0 %v7020
      %7039 = vmatprep.subr.mxu0 0.0
      %7040 = vmatpush1.msra.mxu0 %v7021
      %7041 = vmatprep.subr.mxu0 0.0
      %7042 = vmatpush1.msra.mxu0 0.0
      %7043 = vmatprep.subr.mxu0 0.0
      %7044 = vmatpush1.msra.mxu0 0.0
      %7045 = vmatprep.subr.mxu0 0.0
      %7046 = vmatpush1.msra.mxu0 0.0
      %7047 = vmatprep.subr.mxu0 0.0
      %7048 = vmatpush1.msra.mxu0 0.0
      %7049 = vmatprep.subr.mxu0 0.0
      %7050 = vmatpush1.msra.mxu0 0.0
      %7051 = vmatprep.subr.mxu0 0.0
      %7052 = vmatpush1.msra.mxu0 0.0
      %7053 = vmatprep.subr.mxu0 0.0
      %7054 = vmatpush1.msra.mxu0 0.0
      %7055 = vmatprep.subr.mxu0 0.0
      %7056 = vmatpush1.msra.mxu0 0.0
      %7057 = vmatprep.subr.mxu0 0.0
      %7058 = vmatpush1.msra.mxu0 0.0
      %7059 = vmatprep.subr.mxu0 0.0
      %7060 = vmatpush1.msra.mxu0 0.0
      %7061 = vmatprep.subr.mxu0 0.0
      %7062 = vmatpush1.msra.mxu0 0.0
      %7063 = vmatprep.subr.mxu0 0.0
      %7064 = vmatpush1.msra.mxu0 0.0
      %7065 = vmatprep.subr.mxu0 0.0
      %7066 = vmatpush1.msra.mxu0 0.0
      %7067 = vmatprep.subr.mxu0 0.0
      %7068 = vmatpush1.msra.mxu0 0.0
      %7069 = vmatprep.subr.mxu0 0.0
      %7070 = vmatpush1.msra.mxu0 0.0
      %7071 = vmatprep.subr.mxu0 0.0
      %7072 = vmatpush1.msra.mxu0 0.0
      %7073 = vmatprep.subr.mxu0 0.0
      %7074 = vmatpush1.msra.mxu0 0.0
      %7075 = vmatprep.subr.mxu0 0.0
      %7076 = vmatpush1.msra.mxu0 0.0
      %7077 = vmatprep.subr.mxu0 0.0
      %7078 = vmatpush1.msra.mxu0 0.0
      %7079 = vmatprep.subr.mxu0 0.0
      %7080 = vmatpush1.msra.mxu0 0.0
      %7081 = vmatprep.subr.mxu0 0.0
      %7082 = vmatpush1.msra.mxu0 0.0
      %7083 = vmatprep.subr.mxu0 0.0
      %7084 = vmatpush1.msra.mxu0 0.0
      %7085 = vmatprep.subr.mxu0 0.0
      %7086 = vmatpush1.msra.mxu0 0.0
      %7087 = vmatprep.subr.mxu0 0.0
      %7088 = vmatpush1.msra.mxu0 0.0
      %7089 = vmatprep.mubr.f32.mxu0 0.0
      %7090 = vmatmul.mubr.f32.gmra.mrb[0].mxu0 %v7023
      %v7091 = vpop.f32.mrb[0].mxu0
      %v7092 = vadd.f32 0.0, %v7091
      %v7093 = vpop.f32.mrb[0].mxu0
      %7094 = vdwg.mxu0
      %v7095 = vadd.f32 %v6937, %v7092
      %s7096 = scalar_lea.vmem %s12, 16
      %v7097 = vld [vmem:[%s7096] sm:$0xf]
      %v7099 = vsel %vm6464, %v7097, 0
      %7101 = vmatprep.subr.mxu0 0.0
      %7102 = vmatpush1.msra.mxu0 %v6470
      %7103 = vmatprep.subr.mxu0 0.0
      %7104 = vmatpush1.msra.mxu0 0.0
      %7105 = vmatprep.subr.mxu0 0.0
      %7106 = vmatpush1.msra.mxu0 0.0
      %7107 = vmatprep.subr.mxu0 0.0
      %7108 = vmatpush1.msra.mxu0 0.0
      %7109 = vmatprep.subr.mxu0 0.0
      %7110 = vmatpush1.msra.mxu0 0.0
      %7111 = vmatprep.subr.mxu0 0.0
      %7112 = vmatpush1.msra.mxu0 0.0
      %7113 = vmatprep.subr.mxu0 0.0
      %7114 = vmatpush1.msra.mxu0 0.0
      %7115 = vmatprep.subr.mxu0 0.0
      %7116 = vmatpush1.msra.mxu0 0.0
      %7117 = vmatprep.subr.mxu0 0.0
      %7118 = vmatpush1.msra.mxu0 0.0
      %7119 = vmatprep.subr.mxu0 0.0
      %7120 = vmatpush1.msra.mxu0 0.0
      %7121 = vmatprep.subr.mxu0 0.0
      %7122 = vmatpush1.msra.mxu0 0.0
      %7123 = vmatprep.subr.mxu0 0.0
      %7124 = vmatpush1.msra.mxu0 0.0
      %7125 = vmatprep.subr.mxu0 0.0
      %7126 = vmatpush1.msra.mxu0 0.0
      %7127 = vmatprep.subr.mxu0 0.0
      %7128 = vmatpush1.msra.mxu0 0.0
      %7129 = vmatprep.subr.mxu0 0.0
      %7130 = vmatpush1.msra.mxu0 0.0
      %7131 = vmatprep.subr.mxu0 0.0
      %7132 = vmatpush1.msra.mxu0 0.0
      %7133 = vmatprep.subr.mxu0 0.0
      %7134 = vmatpush1.msra.mxu0 0.0
      %7135 = vmatprep.subr.mxu0 0.0
      %7136 = vmatpush1.msra.mxu0 0.0
      %7137 = vmatprep.subr.mxu0 0.0
      %7138 = vmatpush1.msra.mxu0 0.0
      %7139 = vmatprep.subr.mxu0 0.0
      %7140 = vmatpush1.msra.mxu0 0.0
      %7141 = vmatprep.subr.mxu0 0.0
      %7142 = vmatpush1.msra.mxu0 0.0
      %7143 = vmatprep.subr.mxu0 0.0
      %7144 = vmatpush1.msra.mxu0 0.0
      %7145 = vmatprep.subr.mxu0 0.0
      %7146 = vmatpush1.msra.mxu0 0.0
      %7147 = vmatprep.subr.mxu0 0.0
      %7148 = vmatpush1.msra.mxu0 0.0
      %7149 = vmatprep.subr.mxu0 0.0
      %7150 = vmatpush1.msra.mxu0 0.0
      %7151 = vmatprep.subr.mxu0 0.0
      %7152 = vmatpush1.msra.mxu0 0.0
      %7153 = vmatprep.subr.mxu0 0.0
      %7154 = vmatpush1.msra.mxu0 0.0
      %7155 = vmatprep.subr.mxu0 0.0
      %7156 = vmatpush1.msra.mxu0 0.0
      %7157 = vmatprep.subr.mxu0 0.0
      %7158 = vmatpush1.msra.mxu0 0.0
      %7159 = vmatprep.subr.mxu0 0.0
      %7160 = vmatpush1.msra.mxu0 0.0
      %7161 = vmatprep.subr.mxu0 0.0
      %7162 = vmatpush1.msra.mxu0 0.0
      %7163 = vmatprep.subr.mxu0 0.0
      %7164 = vmatpush1.msra.mxu0 0.0
      %7165 = vmatprep.mubr.f32.mxu0 0.0
      %7166 = vmatmul.mubr.f32.gmra.mrb[0].mxu0 %v7099
      %v7167 = vpop.f32.mrb[0].mxu0
      %v7168 = vadd.f32 0.0, %v7167
      %v7169 = vpop.f32.mrb[0].mxu0
      %7170 = vdwg.mxu0
      %s7171 = scalar_lea.vmem %s11, 256
      %v7172 = vld [vmem:[%s7171] sm:$0xff]
      %v7173 = vld [vmem:[%s7171 + $0x8] sm:$0xff]
      %v7174 = vld [vmem:[%s7171 + $0x10] sm:$0xff]
      %v7175 = vld [vmem:[%s7171 + $0x18] sm:$0xff]
      %v7176 = vld [vmem:[%s7171 + $0x20] sm:$0xff]
      %v7177 = vld [vmem:[%s7171 + $0x28] sm:$0xff]
      %v7178 = vld [vmem:[%s7171 + $0x30] sm:$0xff]
      %v7179 = vld [vmem:[%s7171 + $0x38] sm:$0xff]
      %v7181 = vsel %vm4266, %v7168, 0
      %7183 = vmatprep.subr.mxu0 0.0
      %7184 = vmatpush1.msra.mxu0 %v7172
      %7185 = vmatprep.subr.mxu0 0.0
      %7186 = vmatpush1.msra.mxu0 %v7173
      %7187 = vmatprep.subr.mxu0 0.0
      %7188 = vmatpush1.msra.mxu0 %v7174
      %7189 = vmatprep.subr.mxu0 0.0
      %7190 = vmatpush1.msra.mxu0 %v7175
      %7191 = vmatprep.subr.mxu0 0.0
      %7192 = vmatpush1.msra.mxu0 %v7176
      %7193 = vmatprep.subr.mxu0 0.0
      %7194 = vmatpush1.msra.mxu0 %v7177
      %7195 = vmatprep.subr.mxu0 0.0
      %7196 = vmatpush1.msra.mxu0 %v7178
      %7197 = vmatprep.subr.mxu0 0.0
      %7198 = vmatpush1.msra.mxu0 %v7179
      %7199 = vmatprep.subr.mxu0 0.0
      %7200 = vmatpush1.msra.mxu0 0.0
      %7201 = vmatprep.subr.mxu0 0.0
      %7202 = vmatpush1.msra.mxu0 0.0
      %7203 = vmatprep.subr.mxu0 0.0
      %7204 = vmatpush1.msra.mxu0 0.0
      %7205 = vmatprep.subr.mxu0 0.0
      %7206 = vmatpush1.msra.mxu0 0.0
      %7207 = vmatprep.subr.mxu0 0.0
      %7208 = vmatpush1.msra.mxu0 0.0
      %7209 = vmatprep.subr.mxu0 0.0
      %7210 = vmatpush1.msra.mxu0 0.0
      %7211 = vmatprep.subr.mxu0 0.0
      %7212 = vmatpush1.msra.mxu0 0.0
      %7213 = vmatprep.subr.mxu0 0.0
      %7214 = vmatpush1.msra.mxu0 0.0
      %7215 = vmatprep.subr.mxu0 0.0
      %7216 = vmatpush1.msra.mxu0 0.0
      %7217 = vmatprep.subr.mxu0 0.0
      %7218 = vmatpush1.msra.mxu0 0.0
      %7219 = vmatprep.subr.mxu0 0.0
      %7220 = vmatpush1.msra.mxu0 0.0
      %7221 = vmatprep.subr.mxu0 0.0
      %7222 = vmatpush1.msra.mxu0 0.0
      %7223 = vmatprep.subr.mxu0 0.0
      %7224 = vmatpush1.msra.mxu0 0.0
      %7225 = vmatprep.subr.mxu0 0.0
      %7226 = vmatpush1.msra.mxu0 0.0
      %7227 = vmatprep.subr.mxu0 0.0
      %7228 = vmatpush1.msra.mxu0 0.0
      %7229 = vmatprep.subr.mxu0 0.0
      %7230 = vmatpush1.msra.mxu0 0.0
      %7231 = vmatprep.subr.mxu0 0.0
      %7232 = vmatpush1.msra.mxu0 0.0
      %7233 = vmatprep.subr.mxu0 0.0
      %7234 = vmatpush1.msra.mxu0 0.0
      %7235 = vmatprep.subr.mxu0 0.0
      %7236 = vmatpush1.msra.mxu0 0.0
      %7237 = vmatprep.subr.mxu0 0.0
      %7238 = vmatpush1.msra.mxu0 0.0
      %7239 = vmatprep.subr.mxu0 0.0
      %7240 = vmatpush1.msra.mxu0 0.0
      %7241 = vmatprep.subr.mxu0 0.0
      %7242 = vmatpush1.msra.mxu0 0.0
      %7243 = vmatprep.subr.mxu0 0.0
      %7244 = vmatpush1.msra.mxu0 0.0
      %7245 = vmatprep.subr.mxu0 0.0
      %7246 = vmatpush1.msra.mxu0 0.0
      %7247 = vmatprep.mubr.f32.mxu0 0.0
      %7248 = vmatmul.mubr.f32.gmra.mrb[0].mxu0 %v7181
      %v7249 = vpop.f32.mrb[0].mxu0
      %v7250 = vadd.f32 0.0, %v7249
      %v7251 = vpop.f32.mrb[0].mxu0
      %7252 = vdwg.mxu0
      %v7253 = vadd.f32 %v7095, %v7250
      %s7254 = scalar_lea.vmem %s12, 20
      %v7255 = vld [vmem:[%s7254] sm:$0xf]
      %v7257 = vsel %vm6464, %v7255, 0
      %7259 = vmatprep.subr.mxu0 0.0
      %7260 = vmatpush1.msra.mxu0 %v6470
      %7261 = vmatprep.subr.mxu0 0.0
      %7262 = vmatpush1.msra.mxu0 0.0
      %7263 = vmatprep.subr.mxu0 0.0
      %7264 = vmatpush1.msra.mxu0 0.0
      %7265 = vmatprep.subr.mxu0 0.0
      %7266 = vmatpush1.msra.mxu0 0.0
      %7267 = vmatprep.subr.mxu0 0.0
      %7268 = vmatpush1.msra.mxu0 0.0
      %7269 = vmatprep.subr.mxu0 0.0
      %7270 = vmatpush1.msra.mxu0 0.0
      %7271 = vmatprep.subr.mxu0 0.0
      %7272 = vmatpush1.msra.mxu0 0.0
      %7273 = vmatprep.subr.mxu0 0.0
      %7274 = vmatpush1.msra.mxu0 0.0
      %7275 = vmatprep.subr.mxu0 0.0
      %7276 = vmatpush1.msra.mxu0 0.0
      %7277 = vmatprep.subr.mxu0 0.0
      %7278 = vmatpush1.msra.mxu0 0.0
      %7279 = vmatprep.subr.mxu0 0.0
      %7280 = vmatpush1.msra.mxu0 0.0
      %7281 = vmatprep.subr.mxu0 0.0
      %7282 = vmatpush1.msra.mxu0 0.0
      %7283 = vmatprep.subr.mxu0 0.0
      %7284 = vmatpush1.msra.mxu0 0.0
      %7285 = vmatprep.subr.mxu0 0.0
      %7286 = vmatpush1.msra.mxu0 0.0
      %7287 = vmatprep.subr.mxu0 0.0
      %7288 = vmatpush1.msra.mxu0 0.0
      %7289 = vmatprep.subr.mxu0 0.0
      %7290 = vmatpush1.msra.mxu0 0.0
      %7291 = vmatprep.subr.mxu0 0.0
      %7292 = vmatpush1.msra.mxu0 0.0
      %7293 = vmatprep.subr.mxu0 0.0
      %7294 = vmatpush1.msra.mxu0 0.0
      %7295 = vmatprep.subr.mxu0 0.0
      %7296 = vmatpush1.msra.mxu0 0.0
      %7297 = vmatprep.subr.mxu0 0.0
      %7298 = vmatpush1.msra.mxu0 0.0
      %7299 = vmatprep.subr.mxu0 0.0
      %7300 = vmatpush1.msra.mxu0 0.0
      %7301 = vmatprep.subr.mxu0 0.0
      %7302 = vmatpush1.msra.mxu0 0.0
      %7303 = vmatprep.subr.mxu0 0.0
      %7304 = vmatpush1.msra.mxu0 0.0
      %7305 = vmatprep.subr.mxu0 0.0
      %7306 = vmatpush1.msra.mxu0 0.0
      %7307 = vmatprep.subr.mxu0 0.0
      %7308 = vmatpush1.msra.mxu0 0.0
      %7309 = vmatprep.subr.mxu0 0.0
      %7310 = vmatpush1.msra.mxu0 0.0
      %7311 = vmatprep.subr.mxu0 0.0
      %7312 = vmatpush1.msra.mxu0 0.0
      %7313 = vmatprep.subr.mxu0 0.0
      %7314 = vmatpush1.msra.mxu0 0.0
      %7315 = vmatprep.subr.mxu0 0.0
      %7316 = vmatpush1.msra.mxu0 0.0
      %7317 = vmatprep.subr.mxu0 0.0
      %7318 = vmatpush1.msra.mxu0 0.0
      %7319 = vmatprep.subr.mxu0 0.0
      %7320 = vmatpush1.msra.mxu0 0.0
      %7321 = vmatprep.subr.mxu0 0.0
      %7322 = vmatpush1.msra.mxu0 0.0
      %7323 = vmatprep.mubr.f32.mxu0 0.0
      %7324 = vmatmul.mubr.f32.gmra.mrb[0].mxu0 %v7257
      %v7325 = vpop.f32.mrb[0].mxu0
      %v7326 = vadd.f32 0.0, %v7325
      %v7327 = vpop.f32.mrb[0].mxu0
      %7328 = vdwg.mxu0
      %s7329 = scalar_lea.vmem %s11, 320
      %v7330 = vld [vmem:[%s7329] sm:$0xff]
      %v7331 = vld [vmem:[%s7329 + $0x8] sm:$0xff]
      %v7332 = vld [vmem:[%s7329 + $0x10] sm:$0xff]
      %v7333 = vld [vmem:[%s7329 + $0x18] sm:$0xff]
      %v7334 = vld [vmem:[%s7329 + $0x20] sm:$0xff]
      %v7335 = vld [vmem:[%s7329 + $0x28] sm:$0xff]
      %v7336 = vld [vmem:[%s7329 + $0x30] sm:$0xff]
      %v7337 = vld [vmem:[%s7329 + $0x38] sm:$0xff]
      %v7339 = vsel %vm4266, %v7326, 0
      %7341 = vmatprep.subr.mxu0 0.0
      %7342 = vmatpush1.msra.mxu0 %v7330
      %7343 = vmatprep.subr.mxu0 0.0
      %7344 = vmatpush1.msra.mxu0 %v7331
      %7345 = vmatprep.subr.mxu0 0.0
      %7346 = vmatpush1.msra.mxu0 %v7332
      %7347 = vmatprep.subr.mxu0 0.0
      %7348 = vmatpush1.msra.mxu0 %v7333
      %7349 = vmatprep.subr.mxu0 0.0
      %7350 = vmatpush1.msra.mxu0 %v7334
      %7351 = vmatprep.subr.mxu0 0.0
      %7352 = vmatpush1.msra.mxu0 %v7335
      %7353 = vmatprep.subr.mxu0 0.0
      %7354 = vmatpush1.msra.mxu0 %v7336
      %7355 = vmatprep.subr.mxu0 0.0
      %7356 = vmatpush1.msra.mxu0 %v7337
      %7357 = vmatprep.subr.mxu0 0.0
      %7358 = vmatpush1.msra.mxu0 0.0
      %7359 = vmatprep.subr.mxu0 0.0
      %7360 = vmatpush1.msra.mxu0 0.0
      %7361 = vmatprep.subr.mxu0 0.0
      %7362 = vmatpush1.msra.mxu0 0.0
      %7363 = vmatprep.subr.mxu0 0.0
      %7364 = vmatpush1.msra.mxu0 0.0
      %7365 = vmatprep.subr.mxu0 0.0
      %7366 = vmatpush1.msra.mxu0 0.0
      %7367 = vmatprep.subr.mxu0 0.0
      %7368 = vmatpush1.msra.mxu0 0.0
      %7369 = vmatprep.subr.mxu0 0.0
      %7370 = vmatpush1.msra.mxu0 0.0
      %7371 = vmatprep.subr.mxu0 0.0
      %7372 = vmatpush1.msra.mxu0 0.0
      %7373 = vmatprep.subr.mxu0 0.0
      %7374 = vmatpush1.msra.mxu0 0.0
      %7375 = vmatprep.subr.mxu0 0.0
      %7376 = vmatpush1.msra.mxu0 0.0
      %7377 = vmatprep.subr.mxu0 0.0
      %7378 = vmatpush1.msra.mxu0 0.0
      %7379 = vmatprep.subr.mxu0 0.0
      %7380 = vmatpush1.msra.mxu0 0.0
      %7381 = vmatprep.subr.mxu0 0.0
      %7382 = vmatpush1.msra.mxu0 0.0
      %7383 = vmatprep.subr.mxu0 0.0
      %7384 = vmatpush1.msra.mxu0 0.0
      %7385 = vmatprep.subr.mxu0 0.0
      %7386 = vmatpush1.msra.mxu0 0.0
      %7387 = vmatprep.subr.mxu0 0.0
      %7388 = vmatpush1.msra.mxu0 0.0
      %7389 = vmatprep.subr.mxu0 0.0
      %7390 = vmatpush1.msra.mxu0 0.0
      %7391 = vmatprep.subr.mxu0 0.0
      %7392 = vmatpush1.msra.mxu0 0.0
      %7393 = vmatprep.subr.mxu0 0.0
      %7394 = vmatpush1.msra.mxu0 0.0
      %7395 = vmatprep.subr.mxu0 0.0
      %7396 = vmatpush1.msra.mxu0 0.0
      %7397 = vmatprep.subr.mxu0 0.0
      %7398 = vmatpush1.msra.mxu0 0.0
      %7399 = vmatprep.subr.mxu0 0.0
      %7400 = vmatpush1.msra.mxu0 0.0
      %7401 = vmatprep.subr.mxu0 0.0
      %7402 = vmatpush1.msra.mxu0 0.0
      %7403 = vmatprep.subr.mxu0 0.0
      %7404 = vmatpush1.msra.mxu0 0.0
      %7405 = vmatprep.mubr.f32.mxu0 0.0
      %7406 = vmatmul.mubr.f32.gmra.mrb[0].mxu0 %v7339
      %v7407 = vpop.f32.mrb[0].mxu0
      %v7408 = vadd.f32 0.0, %v7407
      %v7409 = vpop.f32.mrb[0].mxu0
      %7410 = vdwg.mxu0
      %v7411 = vadd.f32 %v7253, %v7408
      %s7412 = scalar_lea.vmem %s12, 24
      %v7413 = vld [vmem:[%s7412] sm:$0xf]
      %v7415 = vsel %vm6464, %v7413, 0
      %7417 = vmatprep.subr.mxu0 0.0
      %7418 = vmatpush1.msra.mxu0 %v6470
      %7419 = vmatprep.subr.mxu0 0.0
      %7420 = vmatpush1.msra.mxu0 0.0
      %7421 = vmatprep.subr.mxu0 0.0
      %7422 = vmatpush1.msra.mxu0 0.0
      %7423 = vmatprep.subr.mxu0 0.0
      %7424 = vmatpush1.msra.mxu0 0.0
      %7425 = vmatprep.subr.mxu0 0.0
      %7426 = vmatpush1.msra.mxu0 0.0
      %7427 = vmatprep.subr.mxu0 0.0
      %7428 = vmatpush1.msra.mxu0 0.0
      %7429 = vmatprep.subr.mxu0 0.0
      %7430 = vmatpush1.msra.mxu0 0.0
      %7431 = vmatprep.subr.mxu0 0.0
      %7432 = vmatpush1.msra.mxu0 0.0
      %7433 = vmatprep.subr.mxu0 0.0
      %7434 = vmatpush1.msra.mxu0 0.0
      %7435 = vmatprep.subr.mxu0 0.0
      %7436 = vmatpush1.msra.mxu0 0.0
      %7437 = vmatprep.subr.mxu0 0.0
      %7438 = vmatpush1.msra.mxu0 0.0
      %7439 = vmatprep.subr.mxu0 0.0
      %7440 = vmatpush1.msra.mxu0 0.0
      %7441 = vmatprep.subr.mxu0 0.0
      %7442 = vmatpush1.msra.mxu0 0.0
      %7443 = vmatprep.subr.mxu0 0.0
      %7444 = vmatpush1.msra.mxu0 0.0
      %7445 = vmatprep.subr.mxu0 0.0
      %7446 = vmatpush1.msra.mxu0 0.0
      %7447 = vmatprep.subr.mxu0 0.0
      %7448 = vmatpush1.msra.mxu0 0.0
      %7449 = vmatprep.subr.mxu0 0.0
      %7450 = vmatpush1.msra.mxu0 0.0
      %7451 = vmatprep.subr.mxu0 0.0
      %7452 = vmatpush1.msra.mxu0 0.0
      %7453 = vmatprep.subr.mxu0 0.0
      %7454 = vmatpush1.msra.mxu0 0.0
      %7455 = vmatprep.subr.mxu0 0.0
      %7456 = vmatpush1.msra.mxu0 0.0
      %7457 = vmatprep.subr.mxu0 0.0
      %7458 = vmatpush1.msra.mxu0 0.0
      %7459 = vmatprep.subr.mxu0 0.0
      %7460 = vmatpush1.msra.mxu0 0.0
      %7461 = vmatprep.subr.mxu0 0.0
      %7462 = vmatpush1.msra.mxu0 0.0
      %7463 = vmatprep.subr.mxu0 0.0
      %7464 = vmatpush1.msra.mxu0 0.0
      %7465 = vmatprep.subr.mxu0 0.0
      %7466 = vmatpush1.msra.mxu0 0.0
      %7467 = vmatprep.subr.mxu0 0.0
      %7468 = vmatpush1.msra.mxu0 0.0
      %7469 = vmatprep.subr.mxu0 0.0
      %7470 = vmatpush1.msra.mxu0 0.0
      %7471 = vmatprep.subr.mxu0 0.0
      %7472 = vmatpush1.msra.mxu0 0.0
      %7473 = vmatprep.subr.mxu0 0.0
      %7474 = vmatpush1.msra.mxu0 0.0
      %7475 = vmatprep.subr.mxu0 0.0
      %7476 = vmatpush1.msra.mxu0 0.0
      %7477 = vmatprep.subr.mxu0 0.0
      %7478 = vmatpush1.msra.mxu0 0.0
      %7479 = vmatprep.subr.mxu0 0.0
      %7480 = vmatpush1.msra.mxu0 0.0
      %7481 = vmatprep.mubr.f32.mxu0 0.0
      %7482 = vmatmul.mubr.f32.gmra.mrb[0].mxu0 %v7415
      %v7483 = vpop.f32.mrb[0].mxu0
      %v7484 = vadd.f32 0.0, %v7483
      %v7485 = vpop.f32.mrb[0].mxu0
      %7486 = vdwg.mxu0
      %s7487 = scalar_lea.vmem %s11, 384
      %v7488 = vld [vmem:[%s7487] sm:$0xff]
      %v7489 = vld [vmem:[%s7487 + $0x8] sm:$0xff]
      %v7490 = vld [vmem:[%s7487 + $0x10] sm:$0xff]
      %v7491 = vld [vmem:[%s7487 + $0x18] sm:$0xff]
      %v7492 = vld [vmem:[%s7487 + $0x20] sm:$0xff]
      %v7493 = vld [vmem:[%s7487 + $0x28] sm:$0xff]
      %v7494 = vld [vmem:[%s7487 + $0x30] sm:$0xff]
      %v7495 = vld [vmem:[%s7487 + $0x38] sm:$0xff]
      %v7497 = vsel %vm4266, %v7484, 0
      %7499 = vmatprep.subr.mxu0 0.0
      %7500 = vmatpush1.msra.mxu0 %v7488
      %7501 = vmatprep.subr.mxu0 0.0
      %7502 = vmatpush1.msra.mxu0 %v7489
      %7503 = vmatprep.subr.mxu0 0.0
      %7504 = vmatpush1.msra.mxu0 %v7490
      %7505 = vmatprep.subr.mxu0 0.0
      %7506 = vmatpush1.msra.mxu0 %v7491
      %7507 = vmatprep.subr.mxu0 0.0
      %7508 = vmatpush1.msra.mxu0 %v7492
      %7509 = vmatprep.subr.mxu0 0.0
      %7510 = vmatpush1.msra.mxu0 %v7493
      %7511 = vmatprep.subr.mxu0 0.0
      %7512 = vmatpush1.msra.mxu0 %v7494
      %7513 = vmatprep.subr.mxu0 0.0
      %7514 = vmatpush1.msra.mxu0 %v7495
      %7515 = vmatprep.subr.mxu0 0.0
      %7516 = vmatpush1.msra.mxu0 0.0
      %7517 = vmatprep.subr.mxu0 0.0
      %7518 = vmatpush1.msra.mxu0 0.0
      %7519 = vmatprep.subr.mxu0 0.0
      %7520 = vmatpush1.msra.mxu0 0.0
      %7521 = vmatprep.subr.mxu0 0.0
      %7522 = vmatpush1.msra.mxu0 0.0
      %7523 = vmatprep.subr.mxu0 0.0
      %7524 = vmatpush1.msra.mxu0 0.0
      %7525 = vmatprep.subr.mxu0 0.0
      %7526 = vmatpush1.msra.mxu0 0.0
      %7527 = vmatprep.subr.mxu0 0.0
      %7528 = vmatpush1.msra.mxu0 0.0
      %7529 = vmatprep.subr.mxu0 0.0
      %7530 = vmatpush1.msra.mxu0 0.0
      %7531 = vmatprep.subr.mxu0 0.0
      %7532 = vmatpush1.msra.mxu0 0.0
      %7533 = vmatprep.subr.mxu0 0.0
      %7534 = vmatpush1.msra.mxu0 0.0
      %7535 = vmatprep.subr.mxu0 0.0
      %7536 = vmatpush1.msra.mxu0 0.0
      %7537 = vmatprep.subr.mxu0 0.0
      %7538 = vmatpush1.msra.mxu0 0.0
      %7539 = vmatprep.subr.mxu0 0.0
      %7540 = vmatpush1.msra.mxu0 0.0
      %7541 = vmatprep.subr.mxu0 0.0
      %7542 = vmatpush1.msra.mxu0 0.0
      %7543 = vmatprep.subr.mxu0 0.0
      %7544 = vmatpush1.msra.mxu0 0.0
      %7545 = vmatprep.subr.mxu0 0.0
      %7546 = vmatpush1.msra.mxu0 0.0
      %7547 = vmatprep.subr.mxu0 0.0
      %7548 = vmatpush1.msra.mxu0 0.0
      %7549 = vmatprep.subr.mxu0 0.0
      %7550 = vmatpush1.msra.mxu0 0.0
      %7551 = vmatprep.subr.mxu0 0.0
      %7552 = vmatpush1.msra.mxu0 0.0
      %7553 = vmatprep.subr.mxu0 0.0
      %7554 = vmatpush1.msra.mxu0 0.0
      %7555 = vmatprep.subr.mxu0 0.0
      %7556 = vmatpush1.msra.mxu0 0.0
      %7557 = vmatprep.subr.mxu0 0.0
      %7558 = vmatpush1.msra.mxu0 0.0
      %7559 = vmatprep.subr.mxu0 0.0
      %7560 = vmatpush1.msra.mxu0 0.0
      %7561 = vmatprep.subr.mxu0 0.0
      %7562 = vmatpush1.msra.mxu0 0.0
      %7563 = vmatprep.mubr.f32.mxu0 0.0
      %7564 = vmatmul.mubr.f32.gmra.mrb[0].mxu0 %v7497
      %v7565 = vpop.f32.mrb[0].mxu0
      %v7566 = vadd.f32 0.0, %v7565
      %v7567 = vpop.f32.mrb[0].mxu0
      %7568 = vdwg.mxu0
      %v7569 = vadd.f32 %v7411, %v7566
      %s7570 = scalar_lea.vmem %s12, 28
      %v7571 = vld [vmem:[%s7570] sm:$0xf]
      %v7573 = vsel %vm6464, %v7571, 0
      %7575 = vmatprep.subr.mxu0 0.0
      %7576 = vmatpush1.msra.mxu0 %v6470
      %7577 = vmatprep.subr.mxu0 0.0
      %7578 = vmatpush1.msra.mxu0 0.0
      %7579 = vmatprep.subr.mxu0 0.0
      %7580 = vmatpush1.msra.mxu0 0.0
      %7581 = vmatprep.subr.mxu0 0.0
      %7582 = vmatpush1.msra.mxu0 0.0
      %7583 = vmatprep.subr.mxu0 0.0
      %7584 = vmatpush1.msra.mxu0 0.0
      %7585 = vmatprep.subr.mxu0 0.0
      %7586 = vmatpush1.msra.mxu0 0.0
      %7587 = vmatprep.subr.mxu0 0.0
      %7588 = vmatpush1.msra.mxu0 0.0
      %7589 = vmatprep.subr.mxu0 0.0
      %7590 = vmatpush1.msra.mxu0 0.0
      %7591 = vmatprep.subr.mxu0 0.0
      %7592 = vmatpush1.msra.mxu0 0.0
      %7593 = vmatprep.subr.mxu0 0.0
      %7594 = vmatpush1.msra.mxu0 0.0
      %7595 = vmatprep.subr.mxu0 0.0
      %7596 = vmatpush1.msra.mxu0 0.0
      %7597 = vmatprep.subr.mxu0 0.0
      %7598 = vmatpush1.msra.mxu0 0.0
      %7599 = vmatprep.subr.mxu0 0.0
      %7600 = vmatpush1.msra.mxu0 0.0
      %7601 = vmatprep.subr.mxu0 0.0
      %7602 = vmatpush1.msra.mxu0 0.0
      %7603 = vmatprep.subr.mxu0 0.0
      %7604 = vmatpush1.msra.mxu0 0.0
      %7605 = vmatprep.subr.mxu0 0.0
      %7606 = vmatpush1.msra.mxu0 0.0
      %7607 = vmatprep.subr.mxu0 0.0
      %7608 = vmatpush1.msra.mxu0 0.0
      %7609 = vmatprep.subr.mxu0 0.0
      %7610 = vmatpush1.msra.mxu0 0.0
      %7611 = vmatprep.subr.mxu0 0.0
      %7612 = vmatpush1.msra.mxu0 0.0
      %7613 = vmatprep.subr.mxu0 0.0
      %7614 = vmatpush1.msra.mxu0 0.0
      %7615 = vmatprep.subr.mxu0 0.0
      %7616 = vmatpush1.msra.mxu0 0.0
      %7617 = vmatprep.subr.mxu0 0.0
      %7618 = vmatpush1.msra.mxu0 0.0
      %7619 = vmatprep.subr.mxu0 0.0
      %7620 = vmatpush1.msra.mxu0 0.0
      %7621 = vmatprep.subr.mxu0 0.0
      %7622 = vmatpush1.msra.mxu0 0.0
      %7623 = vmatprep.subr.mxu0 0.0
      %7624 = vmatpush1.msra.mxu0 0.0
      %7625 = vmatprep.subr.mxu0 0.0
      %7626 = vmatpush1.msra.mxu0 0.0
      %7627 = vmatprep.subr.mxu0 0.0
      %7628 = vmatpush1.msra.mxu0 0.0
      %7629 = vmatprep.subr.mxu0 0.0
      %7630 = vmatpush1.msra.mxu0 0.0
      %7631 = vmatprep.subr.mxu0 0.0
      %7632 = vmatpush1.msra.mxu0 0.0
      %7633 = vmatprep.subr.mxu0 0.0
      %7634 = vmatpush1.msra.mxu0 0.0
      %7635 = vmatprep.subr.mxu0 0.0
      %7636 = vmatpush1.msra.mxu0 0.0
      %7637 = vmatprep.subr.mxu0 0.0
      %7638 = vmatpush1.msra.mxu0 0.0
      %7639 = vmatprep.mubr.f32.mxu0 0.0
      %7640 = vmatmul.mubr.f32.gmra.mrb[0].mxu0 %v7573
      %v7641 = vpop.f32.mrb[0].mxu0
      %v7642 = vadd.f32 0.0, %v7641
      %v7643 = vpop.f32.mrb[0].mxu0
      %7644 = vdwg.mxu0
      %s7645 = scalar_lea.vmem %s11, 448
      %v7646 = vld [vmem:[%s7645] sm:$0xff]
      %v7647 = vld [vmem:[%s7645 + $0x8] sm:$0xff]
      %v7648 = vld [vmem:[%s7645 + $0x10] sm:$0xff]
      %v7649 = vld [vmem:[%s7645 + $0x18] sm:$0xff]
      %v7650 = vld [vmem:[%s7645 + $0x20] sm:$0xff]
      %v7651 = vld [vmem:[%s7645 + $0x28] sm:$0xff]
      %v7652 = vld [vmem:[%s7645 + $0x30] sm:$0xff]
      %v7653 = vld [vmem:[%s7645 + $0x38] sm:$0xff]
      %v7655 = vsel %vm4266, %v7642, 0
      %7657 = vmatprep.subr.mxu0 0.0
      %7658 = vmatpush1.msra.mxu0 %v7646
      %7659 = vmatprep.subr.mxu0 0.0
      %7660 = vmatpush1.msra.mxu0 %v7647
      %7661 = vmatprep.subr.mxu0 0.0
      %7662 = vmatpush1.msra.mxu0 %v7648
      %7663 = vmatprep.subr.mxu0 0.0
      %7664 = vmatpush1.msra.mxu0 %v7649
      %7665 = vmatprep.subr.mxu0 0.0
      %7666 = vmatpush1.msra.mxu0 %v7650
      %7667 = vmatprep.subr.mxu0 0.0
      %7668 = vmatpush1.msra.mxu0 %v7651
      %7669 = vmatprep.subr.mxu0 0.0
      %7670 = vmatpush1.msra.mxu0 %v7652
      %7671 = vmatprep.subr.mxu0 0.0
      %7672 = vmatpush1.msra.mxu0 %v7653
      %7673 = vmatprep.subr.mxu0 0.0
      %7674 = vmatpush1.msra.mxu0 0.0
      %7675 = vmatprep.subr.mxu0 0.0
      %7676 = vmatpush1.msra.mxu0 0.0
      %7677 = vmatprep.subr.mxu0 0.0
      %7678 = vmatpush1.msra.mxu0 0.0
      %7679 = vmatprep.subr.mxu0 0.0
      %7680 = vmatpush1.msra.mxu0 0.0
      %7681 = vmatprep.subr.mxu0 0.0
      %7682 = vmatpush1.msra.mxu0 0.0
      %7683 = vmatprep.subr.mxu0 0.0
      %7684 = vmatpush1.msra.mxu0 0.0
      %7685 = vmatprep.subr.mxu0 0.0
      %7686 = vmatpush1.msra.mxu0 0.0
      %7687 = vmatprep.subr.mxu0 0.0
      %7688 = vmatpush1.msra.mxu0 0.0
      %7689 = vmatprep.subr.mxu0 0.0
      %7690 = vmatpush1.msra.mxu0 0.0
      %7691 = vmatprep.subr.mxu0 0.0
      %7692 = vmatpush1.msra.mxu0 0.0
      %7693 = vmatprep.subr.mxu0 0.0
      %7694 = vmatpush1.msra.mxu0 0.0
      %7695 = vmatprep.subr.mxu0 0.0
      %7696 = vmatpush1.msra.mxu0 0.0
      %7697 = vmatprep.subr.mxu0 0.0
      %7698 = vmatpush1.msra.mxu0 0.0
      %7699 = vmatprep.subr.mxu0 0.0
      %7700 = vmatpush1.msra.mxu0 0.0
      %7701 = vmatprep.subr.mxu0 0.0
      %7702 = vmatpush1.msra.mxu0 0.0
      %7703 = vmatprep.subr.mxu0 0.0
      %7704 = vmatpush1.msra.mxu0 0.0
      %7705 = vmatprep.subr.mxu0 0.0
      %7706 = vmatpush1.msra.mxu0 0.0
      %7707 = vmatprep.subr.mxu0 0.0
      %7708 = vmatpush1.msra.mxu0 0.0
      %7709 = vmatprep.subr.mxu0 0.0
      %7710 = vmatpush1.msra.mxu0 0.0
      %7711 = vmatprep.subr.mxu0 0.0
      %7712 = vmatpush1.msra.mxu0 0.0
      %7713 = vmatprep.subr.mxu0 0.0
      %7714 = vmatpush1.msra.mxu0 0.0
      %7715 = vmatprep.subr.mxu0 0.0
      %7716 = vmatpush1.msra.mxu0 0.0
      %7717 = vmatprep.subr.mxu0 0.0
      %7718 = vmatpush1.msra.mxu0 0.0
      %7719 = vmatprep.subr.mxu0 0.0
      %7720 = vmatpush1.msra.mxu0 0.0
      %7721 = vmatprep.mubr.f32.mxu0 0.0
      %7722 = vmatmul.mubr.f32.gmra.mrb[0].mxu0 %v7655
      %v7723 = vpop.f32.mrb[0].mxu0
      %v7724 = vadd.f32 0.0, %v7723
      %v7725 = vpop.f32.mrb[0].mxu0
      %7726 = vdwg.mxu0
      %v7727 = vadd.f32 %v7569, %v7724
      %s7728 = scalar_lea.vmem %s12, 32
      %v7729 = vld [vmem:[%s7728] sm:$0xf]
      %v7731 = vsel %vm6464, %v7729, 0
      %7733 = vmatprep.subr.mxu0 0.0
      %7734 = vmatpush1.msra.mxu0 %v6470
      %7735 = vmatprep.subr.mxu0 0.0
      %7736 = vmatpush1.msra.mxu0 0.0
      %7737 = vmatprep.subr.mxu0 0.0
      %7738 = vmatpush1.msra.mxu0 0.0
      %7739 = vmatprep.subr.mxu0 0.0
      %7740 = vmatpush1.msra.mxu0 0.0
      %7741 = vmatprep.subr.mxu0 0.0
      %7742 = vmatpush1.msra.mxu0 0.0
      %7743 = vmatprep.subr.mxu0 0.0
      %7744 = vmatpush1.msra.mxu0 0.0
      %7745 = vmatprep.subr.mxu0 0.0
      %7746 = vmatpush1.msra.mxu0 0.0
      %7747 = vmatprep.subr.mxu0 0.0
      %7748 = vmatpush1.msra.mxu0 0.0
      %7749 = vmatprep.subr.mxu0 0.0
      %7750 = vmatpush1.msra.mxu0 0.0
      %7751 = vmatprep.subr.mxu0 0.0
      %7752 = vmatpush1.msra.mxu0 0.0
      %7753 = vmatprep.subr.mxu0 0.0
      %7754 = vmatpush1.msra.mxu0 0.0
      %7755 = vmatprep.subr.mxu0 0.0
      %7756 = vmatpush1.msra.mxu0 0.0
      %7757 = vmatprep.subr.mxu0 0.0
      %7758 = vmatpush1.msra.mxu0 0.0
      %7759 = vmatprep.subr.mxu0 0.0
      %7760 = vmatpush1.msra.mxu0 0.0
      %7761 = vmatprep.subr.mxu0 0.0
      %7762 = vmatpush1.msra.mxu0 0.0
      %7763 = vmatprep.subr.mxu0 0.0
      %7764 = vmatpush1.msra.mxu0 0.0
      %7765 = vmatprep.subr.mxu0 0.0
      %7766 = vmatpush1.msra.mxu0 0.0
      %7767 = vmatprep.subr.mxu0 0.0
      %7768 = vmatpush1.msra.mxu0 0.0
      %7769 = vmatprep.subr.mxu0 0.0
      %7770 = vmatpush1.msra.mxu0 0.0
      %7771 = vmatprep.subr.mxu0 0.0
      %7772 = vmatpush1.msra.mxu0 0.0
      %7773 = vmatprep.subr.mxu0 0.0
      %7774 = vmatpush1.msra.mxu0 0.0
      %7775 = vmatprep.subr.mxu0 0.0
      %7776 = vmatpush1.msra.mxu0 0.0
      %7777 = vmatprep.subr.mxu0 0.0
      %7778 = vmatpush1.msra.mxu0 0.0
      %7779 = vmatprep.subr.mxu0 0.0
      %7780 = vmatpush1.msra.mxu0 0.0
      %7781 = vmatprep.subr.mxu0 0.0
      %7782 = vmatpush1.msra.mxu0 0.0
      %7783 = vmatprep.subr.mxu0 0.0
      %7784 = vmatpush1.msra.mxu0 0.0
      %7785 = vmatprep.subr.mxu0 0.0
      %7786 = vmatpush1.msra.mxu0 0.0
      %7787 = vmatprep.subr.mxu0 0.0
      %7788 = vmatpush1.msra.mxu0 0.0
      %7789 = vmatprep.subr.mxu0 0.0
      %7790 = vmatpush1.msra.mxu0 0.0
      %7791 = vmatprep.subr.mxu0 0.0
      %7792 = vmatpush1.msra.mxu0 0.0
      %7793 = vmatprep.subr.mxu0 0.0
      %7794 = vmatpush1.msra.mxu0 0.0
      %7795 = vmatprep.subr.mxu0 0.0
      %7796 = vmatpush1.msra.mxu0 0.0
      %7797 = vmatprep.mubr.f32.mxu0 0.0
      %7798 = vmatmul.mubr.f32.gmra.mrb[0].mxu0 %v7731
      %v7799 = vpop.f32.mrb[0].mxu0
      %v7800 = vadd.f32 0.0, %v7799
      %v7801 = vpop.f32.mrb[0].mxu0
      %7802 = vdwg.mxu0
      %s7803 = scalar_lea.vmem %s11, 512
      %v7804 = vld [vmem:[%s7803] sm:$0xff]
      %v7805 = vld [vmem:[%s7803 + $0x8] sm:$0xff]
      %v7806 = vld [vmem:[%s7803 + $0x10] sm:$0xff]
      %v7807 = vld [vmem:[%s7803 + $0x18] sm:$0xff]
      %v7808 = vld [vmem:[%s7803 + $0x20] sm:$0xff]
      %v7809 = vld [vmem:[%s7803 + $0x28] sm:$0xff]
      %v7810 = vld [vmem:[%s7803 + $0x30] sm:$0xff]
      %v7811 = vld [vmem:[%s7803 + $0x38] sm:$0xff]
      %v7813 = vsel %vm4266, %v7800, 0
      %7815 = vmatprep.subr.mxu0 0.0
      %7816 = vmatpush1.msra.mxu0 %v7804
      %7817 = vmatprep.subr.mxu0 0.0
      %7818 = vmatpush1.msra.mxu0 %v7805
      %7819 = vmatprep.subr.mxu0 0.0
      %7820 = vmatpush1.msra.mxu0 %v7806
      %7821 = vmatprep.subr.mxu0 0.0
      %7822 = vmatpush1.msra.mxu0 %v7807
      %7823 = vmatprep.subr.mxu0 0.0
      %7824 = vmatpush1.msra.mxu0 %v7808
      %7825 = vmatprep.subr.mxu0 0.0
      %7826 = vmatpush1.msra.mxu0 %v7809
      %7827 = vmatprep.subr.mxu0 0.0
      %7828 = vmatpush1.msra.mxu0 %v7810
      %7829 = vmatprep.subr.mxu0 0.0
      %7830 = vmatpush1.msra.mxu0 %v7811
      %7831 = vmatprep.subr.mxu0 0.0
      %7832 = vmatpush1.msra.mxu0 0.0
      %7833 = vmatprep.subr.mxu0 0.0
      %7834 = vmatpush1.msra.mxu0 0.0
      %7835 = vmatprep.subr.mxu0 0.0
      %7836 = vmatpush1.msra.mxu0 0.0
      %7837 = vmatprep.subr.mxu0 0.0
      %7838 = vmatpush1.msra.mxu0 0.0
      %7839 = vmatprep.subr.mxu0 0.0
      %7840 = vmatpush1.msra.mxu0 0.0
      %7841 = vmatprep.subr.mxu0 0.0
      %7842 = vmatpush1.msra.mxu0 0.0
      %7843 = vmatprep.subr.mxu0 0.0
      %7844 = vmatpush1.msra.mxu0 0.0
      %7845 = vmatprep.subr.mxu0 0.0
      %7846 = vmatpush1.msra.mxu0 0.0
      %7847 = vmatprep.subr.mxu0 0.0
      %7848 = vmatpush1.msra.mxu0 0.0
      %7849 = vmatprep.subr.mxu0 0.0
      %7850 = vmatpush1.msra.mxu0 0.0
      %7851 = vmatprep.subr.mxu0 0.0
      %7852 = vmatpush1.msra.mxu0 0.0
      %7853 = vmatprep.subr.mxu0 0.0
      %7854 = vmatpush1.msra.mxu0 0.0
      %7855 = vmatprep.subr.mxu0 0.0
      %7856 = vmatpush1.msra.mxu0 0.0
      %7857 = vmatprep.subr.mxu0 0.0
      %7858 = vmatpush1.msra.mxu0 0.0
      %7859 = vmatprep.subr.mxu0 0.0
      %7860 = vmatpush1.msra.mxu0 0.0
      %7861 = vmatprep.subr.mxu0 0.0
      %7862 = vmatpush1.msra.mxu0 0.0
      %7863 = vmatprep.subr.mxu0 0.0
      %7864 = vmatpush1.msra.mxu0 0.0
      %7865 = vmatprep.subr.mxu0 0.0
      %7866 = vmatpush1.msra.mxu0 0.0
      %7867 = vmatprep.subr.mxu0 0.0
      %7868 = vmatpush1.msra.mxu0 0.0
      %7869 = vmatprep.subr.mxu0 0.0
      %7870 = vmatpush1.msra.mxu0 0.0
      %7871 = vmatprep.subr.mxu0 0.0
      %7872 = vmatpush1.msra.mxu0 0.0
      %7873 = vmatprep.subr.mxu0 0.0
      %7874 = vmatpush1.msra.mxu0 0.0
      %7875 = vmatprep.subr.mxu0 0.0
      %7876 = vmatpush1.msra.mxu0 0.0
      %7877 = vmatprep.subr.mxu0 0.0
      %7878 = vmatpush1.msra.mxu0 0.0
      %7879 = vmatprep.mubr.f32.mxu0 0.0
      %7880 = vmatmul.mubr.f32.gmra.mrb[0].mxu0 %v7813
      %v7881 = vpop.f32.mrb[0].mxu0
      %v7882 = vadd.f32 0.0, %v7881
      %v7883 = vpop.f32.mrb[0].mxu0
      %7884 = vdwg.mxu0
      %v7885 = vadd.f32 %v7727, %v7882
      %v7886 = vld [vmem:[%s14] sm:$0x1]
      %v7888 = vlaneseq
      %v7889 = vshrl.u32 %v7888, 7
      %v7890 = vsub.s32 0, %v7889
      %v7891 = vrot.slane %v7886, %v7890
      %v7893 = vadd.f32 %v7885, %v7891
      %v7894 = vld [vmem:[%s13] sm:$0x1]
      %v7896 = vsel %vm6464, %v7894, 0
      %v7899 = vsel %vm6468, %v7893, 0
      %7901 = vmatprep.subr.mxu0 0.0
      %7902 = vmatpush1.msra.mxu0 %v7899
      %7903 = vmatprep.subr.mxu0 0.0
      %7904 = vmatpush1.msra.mxu0 0.0
      %7905 = vmatprep.subr.mxu0 0.0
      %7906 = vmatpush1.msra.mxu0 0.0
      %7907 = vmatprep.subr.mxu0 0.0
      %7908 = vmatpush1.msra.mxu0 0.0
      %7909 = vmatprep.subr.mxu0 0.0
      %7910 = vmatpush1.msra.mxu0 0.0
      %7911 = vmatprep.subr.mxu0 0.0
      %7912 = vmatpush1.msra.mxu0 0.0
      %7913 = vmatprep.subr.mxu0 0.0
      %7914 = vmatpush1.msra.mxu0 0.0
      %7915 = vmatprep.subr.mxu0 0.0
      %7916 = vmatpush1.msra.mxu0 0.0
      %7917 = vmatprep.subr.mxu0 0.0
      %7918 = vmatpush1.msra.mxu0 0.0
      %7919 = vmatprep.subr.mxu0 0.0
      %7920 = vmatpush1.msra.mxu0 0.0
      %7921 = vmatprep.subr.mxu0 0.0
      %7922 = vmatpush1.msra.mxu0 0.0
      %7923 = vmatprep.subr.mxu0 0.0
      %7924 = vmatpush1.msra.mxu0 0.0
      %7925 = vmatprep.subr.mxu0 0.0
      %7926 = vmatpush1.msra.mxu0 0.0
      %7927 = vmatprep.subr.mxu0 0.0
      %7928 = vmatpush1.msra.mxu0 0.0
      %7929 = vmatprep.subr.mxu0 0.0
      %7930 = vmatpush1.msra.mxu0 0.0
      %7931 = vmatprep.subr.mxu0 0.0
      %7932 = vmatpush1.msra.mxu0 0.0
      %7933 = vmatprep.subr.mxu0 0.0
      %7934 = vmatpush1.msra.mxu0 0.0
      %7935 = vmatprep.subr.mxu0 0.0
      %7936 = vmatpush1.msra.mxu0 0.0
      %7937 = vmatprep.subr.mxu0 0.0
      %7938 = vmatpush1.msra.mxu0 0.0
      %7939 = vmatprep.subr.mxu0 0.0
      %7940 = vmatpush1.msra.mxu0 0.0
      %7941 = vmatprep.subr.mxu0 0.0
      %7942 = vmatpush1.msra.mxu0 0.0
      %7943 = vmatprep.subr.mxu0 0.0
      %7944 = vmatpush1.msra.mxu0 0.0
      %7945 = vmatprep.subr.mxu0 0.0
      %7946 = vmatpush1.msra.mxu0 0.0
      %7947 = vmatprep.subr.mxu0 0.0
      %7948 = vmatpush1.msra.mxu0 0.0
      %7949 = vmatprep.subr.mxu0 0.0
      %7950 = vmatpush1.msra.mxu0 0.0
      %7951 = vmatprep.subr.mxu0 0.0
      %7952 = vmatpush1.msra.mxu0 0.0
      %7953 = vmatprep.subr.mxu0 0.0
      %7954 = vmatpush1.msra.mxu0 0.0
      %7955 = vmatprep.subr.mxu0 0.0
      %7956 = vmatpush1.msra.mxu0 0.0
      %7957 = vmatprep.subr.mxu0 0.0
      %7958 = vmatpush1.msra.mxu0 0.0
      %7959 = vmatprep.subr.mxu0 0.0
      %7960 = vmatpush1.msra.mxu0 0.0
      %7961 = vmatprep.subr.mxu0 0.0
      %7962 = vmatpush1.msra.mxu0 0.0
      %7963 = vmatprep.subr.mxu0 0.0
      %7964 = vmatpush1.msra.mxu0 0.0
      %7965 = vmatprep.mubr.f32.mxu0 0.0
      %7966 = vmatmul.mubr.f32.gmra.mrb[0].mxu0 %v7896
      %v7967 = vpop.f32.mrb[0].mxu0
      %v7968 = vadd.f32 0.0, %v7967
      %v7969 = vpop.f32.mrb[0].mxu0
      %7970 = vdwg.mxu0
      %s7971 = scalar_lea.vmem %s13, 1
      %v7972 = vld [vmem:[%s7971] sm:$0x1]
      %v7974 = vsel %vm6464, %v7972, 0
      %7976 = vmatprep.subr.mxu0 0.0
      %7977 = vmatpush1.msra.mxu0 %v7899
      %7978 = vmatprep.subr.mxu0 0.0
      %7979 = vmatpush1.msra.mxu0 0.0
      %7980 = vmatprep.subr.mxu0 0.0
      %7981 = vmatpush1.msra.mxu0 0.0
      %7982 = vmatprep.subr.mxu0 0.0
      %7983 = vmatpush1.msra.mxu0 0.0
      %7984 = vmatprep.subr.mxu0 0.0
      %7985 = vmatpush1.msra.mxu0 0.0
      %7986 = vmatprep.subr.mxu0 0.0
      %7987 = vmatpush1.msra.mxu0 0.0
      %7988 = vmatprep.subr.mxu0 0.0
      %7989 = vmatpush1.msra.mxu0 0.0
      %7990 = vmatprep.subr.mxu0 0.0
      %7991 = vmatpush1.msra.mxu0 0.0
      %7992 = vmatprep.subr.mxu0 0.0
      %7993 = vmatpush1.msra.mxu0 0.0
      %7994 = vmatprep.subr.mxu0 0.0
      %7995 = vmatpush1.msra.mxu0 0.0
      %7996 = vmatprep.subr.mxu0 0.0
      %7997 = vmatpush1.msra.mxu0 0.0
      %7998 = vmatprep.subr.mxu0 0.0
      %7999 = vmatpush1.msra.mxu0 0.0
      %8000 = vmatprep.subr.mxu0 0.0
      %8001 = vmatpush1.msra.mxu0 0.0
      %8002 = vmatprep.subr.mxu0 0.0
      %8003 = vmatpush1.msra.mxu0 0.0
      %8004 = vmatprep.subr.mxu0 0.0
      %8005 = vmatpush1.msra.mxu0 0.0
      %8006 = vmatprep.subr.mxu0 0.0
      %8007 = vmatpush1.msra.mxu0 0.0
      %8008 = vmatprep.subr.mxu0 0.0
      %8009 = vmatpush1.msra.mxu0 0.0
      %8010 = vmatprep.subr.mxu0 0.0
      %8011 = vmatpush1.msra.mxu0 0.0
      %8012 = vmatprep.subr.mxu0 0.0
      %8013 = vmatpush1.msra.mxu0 0.0
      %8014 = vmatprep.subr.mxu0 0.0
      %8015 = vmatpush1.msra.mxu0 0.0
      %8016 = vmatprep.subr.mxu0 0.0
      %8017 = vmatpush1.msra.mxu0 0.0
      %8018 = vmatprep.subr.mxu0 0.0
      %8019 = vmatpush1.msra.mxu0 0.0
      %8020 = vmatprep.subr.mxu0 0.0
      %8021 = vmatpush1.msra.mxu0 0.0
      %8022 = vmatprep.subr.mxu0 0.0
      %8023 = vmatpush1.msra.mxu0 0.0
      %8024 = vmatprep.subr.mxu0 0.0
      %8025 = vmatpush1.msra.mxu0 0.0
      %8026 = vmatprep.subr.mxu0 0.0
      %8027 = vmatpush1.msra.mxu0 0.0
      %8028 = vmatprep.subr.mxu0 0.0
      %8029 = vmatpush1.msra.mxu0 0.0
      %8030 = vmatprep.subr.mxu0 0.0
      %8031 = vmatpush1.msra.mxu0 0.0
      %8032 = vmatprep.subr.mxu0 0.0
      %8033 = vmatpush1.msra.mxu0 0.0
      %8034 = vmatprep.subr.mxu0 0.0
      %8035 = vmatpush1.msra.mxu0 0.0
      %8036 = vmatprep.subr.mxu0 0.0
      %8037 = vmatpush1.msra.mxu0 0.0
      %8038 = vmatprep.subr.mxu0 0.0
      %8039 = vmatpush1.msra.mxu0 0.0
      %8040 = vmatprep.mubr.f32.mxu0 0.0
      %8041 = vmatmul.mubr.f32.gmra.mrb[0].mxu0 %v7974
      %v8042 = vpop.f32.mrb[0].mxu0
      %v8043 = vadd.f32 0.0, %v8042
      %v8044 = vpop.f32.mrb[0].mxu0
      %8045 = vdwg.mxu0
      %v8046 = vmax.f32 %v7968, %v8043
      %s8047 = scalar_lea.vmem %s13, 2
      %v8048 = vld [vmem:[%s8047] sm:$0x1]
      %v8050 = vsel %vm6464, %v8048, 0
      %8052 = vmatprep.subr.mxu0 0.0
      %8053 = vmatpush1.msra.mxu0 %v7899
      %8054 = vmatprep.subr.mxu0 0.0
      %8055 = vmatpush1.msra.mxu0 0.0
      %8056 = vmatprep.subr.mxu0 0.0
      %8057 = vmatpush1.msra.mxu0 0.0
      %8058 = vmatprep.subr.mxu0 0.0
      %8059 = vmatpush1.msra.mxu0 0.0
      %8060 = vmatprep.subr.mxu0 0.0
      %8061 = vmatpush1.msra.mxu0 0.0
      %8062 = vmatprep.subr.mxu0 0.0
      %8063 = vmatpush1.msra.mxu0 0.0
      %8064 = vmatprep.subr.mxu0 0.0
      %8065 = vmatpush1.msra.mxu0 0.0
      %8066 = vmatprep.subr.mxu0 0.0
      %8067 = vmatpush1.msra.mxu0 0.0
      %8068 = vmatprep.subr.mxu0 0.0
      %8069 = vmatpush1.msra.mxu0 0.0
      %8070 = vmatprep.subr.mxu0 0.0
      %8071 = vmatpush1.msra.mxu0 0.0
      %8072 = vmatprep.subr.mxu0 0.0
      %8073 = vmatpush1.msra.mxu0 0.0
      %8074 = vmatprep.subr.mxu0 0.0
      %8075 = vmatpush1.msra.mxu0 0.0
      %8076 = vmatprep.subr.mxu0 0.0
      %8077 = vmatpush1.msra.mxu0 0.0
      %8078 = vmatprep.subr.mxu0 0.0
      %8079 = vmatpush1.msra.mxu0 0.0
      %8080 = vmatprep.subr.mxu0 0.0
      %8081 = vmatpush1.msra.mxu0 0.0
      %8082 = vmatprep.subr.mxu0 0.0
      %8083 = vmatpush1.msra.mxu0 0.0
      %8084 = vmatprep.subr.mxu0 0.0
      %8085 = vmatpush1.msra.mxu0 0.0
      %8086 = vmatprep.subr.mxu0 0.0
      %8087 = vmatpush1.msra.mxu0 0.0
      %8088 = vmatprep.subr.mxu0 0.0
      %8089 = vmatpush1.msra.mxu0 0.0
      %8090 = vmatprep.subr.mxu0 0.0
      %8091 = vmatpush1.msra.mxu0 0.0
      %8092 = vmatprep.subr.mxu0 0.0
      %8093 = vmatpush1.msra.mxu0 0.0
      %8094 = vmatprep.subr.mxu0 0.0
      %8095 = vmatpush1.msra.mxu0 0.0
      %8096 = vmatprep.subr.mxu0 0.0
      %8097 = vmatpush1.msra.mxu0 0.0
      %8098 = vmatprep.subr.mxu0 0.0
      %8099 = vmatpush1.msra.mxu0 0.0
      %8100 = vmatprep.subr.mxu0 0.0
      %8101 = vmatpush1.msra.mxu0 0.0
      %8102 = vmatprep.subr.mxu0 0.0
      %8103 = vmatpush1.msra.mxu0 0.0
      %8104 = vmatprep.subr.mxu0 0.0
      %8105 = vmatpush1.msra.mxu0 0.0
      %8106 = vmatprep.subr.mxu0 0.0
      %8107 = vmatpush1.msra.mxu0 0.0
      %8108 = vmatprep.subr.mxu0 0.0
      %8109 = vmatpush1.msra.mxu0 0.0
      %8110 = vmatprep.subr.mxu0 0.0
      %8111 = vmatpush1.msra.mxu0 0.0
      %8112 = vmatprep.subr.mxu0 0.0
      %8113 = vmatpush1.msra.mxu0 0.0
      %8114 = vmatprep.subr.mxu0 0.0
      %8115 = vmatpush1.msra.mxu0 0.0
      %8116 = vmatprep.mubr.f32.mxu0 0.0
      %8117 = vmatmul.mubr.f32.gmra.mrb[0].mxu0 %v8050
      %v8118 = vpop.f32.mrb[0].mxu0
      %v8119 = vadd.f32 0.0, %v8118
      %v8120 = vpop.f32.mrb[0].mxu0
      %8121 = vdwg.mxu0
      %v8122 = vmax.f32 %v8046, %v8119
      %s8123 = scalar_lea.vmem %s13, 3
      %v8124 = vld [vmem:[%s8123] sm:$0x1]
      %v8126 = vsel %vm6464, %v8124, 0
      %8128 = vmatprep.subr.mxu0 0.0
      %8129 = vmatpush1.msra.mxu0 %v7899
      %8130 = vmatprep.subr.mxu0 0.0
      %8131 = vmatpush1.msra.mxu0 0.0
      %8132 = vmatprep.subr.mxu0 0.0
      %8133 = vmatpush1.msra.mxu0 0.0
      %8134 = vmatprep.subr.mxu0 0.0
      %8135 = vmatpush1.msra.mxu0 0.0
      %8136 = vmatprep.subr.mxu0 0.0
      %8137 = vmatpush1.msra.mxu0 0.0
      %8138 = vmatprep.subr.mxu0 0.0
      %8139 = vmatpush1.msra.mxu0 0.0
      %8140 = vmatprep.subr.mxu0 0.0
      %8141 = vmatpush1.msra.mxu0 0.0
      %8142 = vmatprep.subr.mxu0 0.0
      %8143 = vmatpush1.msra.mxu0 0.0
      %8144 = vmatprep.subr.mxu0 0.0
      %8145 = vmatpush1.msra.mxu0 0.0
      %8146 = vmatprep.subr.mxu0 0.0
      %8147 = vmatpush1.msra.mxu0 0.0
      %8148 = vmatprep.subr.mxu0 0.0
      %8149 = vmatpush1.msra.mxu0 0.0
      %8150 = vmatprep.subr.mxu0 0.0
      %8151 = vmatpush1.msra.mxu0 0.0
      %8152 = vmatprep.subr.mxu0 0.0
      %8153 = vmatpush1.msra.mxu0 0.0
      %8154 = vmatprep.subr.mxu0 0.0
      %8155 = vmatpush1.msra.mxu0 0.0
      %8156 = vmatprep.subr.mxu0 0.0
      %8157 = vmatpush1.msra.mxu0 0.0
      %8158 = vmatprep.subr.mxu0 0.0
      %8159 = vmatpush1.msra.mxu0 0.0
      %8160 = vmatprep.subr.mxu0 0.0
      %8161 = vmatpush1.msra.mxu0 0.0
      %8162 = vmatprep.subr.mxu0 0.0
      %8163 = vmatpush1.msra.mxu0 0.0
      %8164 = vmatprep.subr.mxu0 0.0
      %8165 = vmatpush1.msra.mxu0 0.0
      %8166 = vmatprep.subr.mxu0 0.0
      %8167 = vmatpush1.msra.mxu0 0.0
      %8168 = vmatprep.subr.mxu0 0.0
      %8169 = vmatpush1.msra.mxu0 0.0
      %8170 = vmatprep.subr.mxu0 0.0
      %8171 = vmatpush1.msra.mxu0 0.0
      %8172 = vmatprep.subr.mxu0 0.0
      %8173 = vmatpush1.msra.mxu0 0.0
      %8174 = vmatprep.subr.mxu0 0.0
      %8175 = vmatpush1.msra.mxu0 0.0
      %8176 = vmatprep.subr.mxu0 0.0
      %8177 = vmatpush1.msra.mxu0 0.0
      %8178 = vmatprep.subr.mxu0 0.0
      %8179 = vmatpush1.msra.mxu0 0.0
      %8180 = vmatprep.subr.mxu0 0.0
      %8181 = vmatpush1.msra.mxu0 0.0
      %8182 = vmatprep.subr.mxu0 0.0
      %8183 = vmatpush1.msra.mxu0 0.0
      %8184 = vmatprep.subr.mxu0 0.0
      %8185 = vmatpush1.msra.mxu0 0.0
      %8186 = vmatprep.subr.mxu0 0.0
      %8187 = vmatpush1.msra.mxu0 0.0
      %8188 = vmatprep.subr.mxu0 0.0
      %8189 = vmatpush1.msra.mxu0 0.0
      %8190 = vmatprep.subr.mxu0 0.0
      %8191 = vmatpush1.msra.mxu0 0.0
      %8192 = vmatprep.mubr.f32.mxu0 0.0
      %8193 = vmatmul.mubr.f32.gmra.mrb[0].mxu0 %v8126
      %v8194 = vpop.f32.mrb[0].mxu0
      %v8195 = vadd.f32 0.0, %v8194
      %v8196 = vpop.f32.mrb[0].mxu0
      %8197 = vdwg.mxu0
      %v8198 = vmax.f32 %v8122, %v8195
      %v8199 = vmax.f32 %v8198, 0.0
      %v8200 = vld [vmem:[%s15] sm:$0xff]
      %v8201 = vld [vmem:[%s15 + $0x8] sm:$0xff]
      %v8202 = vld [vmem:[%s15 + $0x10] sm:$0xff]
      %v8203 = vld [vmem:[%s15 + $0x18] sm:$0xff]
      %v8204 = vld [vmem:[%s15 + $0x20] sm:$0xff]
      %v8205 = vld [vmem:[%s15 + $0x28] sm:$0xff]
      %v8206 = vld [vmem:[%s15 + $0x30] sm:$0xff]
      %v8207 = vld [vmem:[%s15 + $0x38] sm:$0xff]
      %v8208 = vld [vmem:[%s15 + $0x40] sm:$0xff]
      %v8209 = vld [vmem:[%s15 + $0x48] sm:$0xff]
      %v8210 = vld [vmem:[%s15 + $0x50] sm:$0xff]
      %v8211 = vld [vmem:[%s15 + $0x58] sm:$0xff]
      %v8212 = vld [vmem:[%s15 + $0x60] sm:$0xff]
      %v8213 = vld [vmem:[%s15 + $0x68] sm:$0xff]
      %v8214 = vld [vmem:[%s15 + $0x70] sm:$0xff]
      %v8215 = vld [vmem:[%s15 + $0x78] sm:$0xff]
      %v8216 = vld [vmem:[%s15 + $0x80] sm:$0xff]
      %v8217 = vld [vmem:[%s15 + $0x88] sm:$0xff]
      %v8218 = vld [vmem:[%s15 + $0x90] sm:$0xff]
      %v8219 = vld [vmem:[%s15 + $0x98] sm:$0xff]
      %v8220 = vld [vmem:[%s15 + $0xa0] sm:$0xff]
      %v8221 = vld [vmem:[%s15 + $0xa8] sm:$0xff]
      %v8222 = vld [vmem:[%s15 + $0xb0] sm:$0xff]
      %v8223 = vld [vmem:[%s15 + $0xb8] sm:$0xff]
      %v8224 = vld [vmem:[%s15 + $0xc0] sm:$0xff]
      %v8225 = vld [vmem:[%s15 + $0xc8] sm:$0xff]
      %v8226 = vld [vmem:[%s15 + $0xd0] sm:$0xff]
      %v8227 = vld [vmem:[%s15 + $0xd8] sm:$0xff]
      %v8228 = vld [vmem:[%s15 + $0xe0] sm:$0xff]
      %v8229 = vld [vmem:[%s15 + $0xe8] sm:$0xff]
      %v8230 = vld [vmem:[%s15 + $0xf0] sm:$0xff]
      %v8231 = vld [vmem:[%s15 + $0xf8] sm:$0xff]
      %v8232 = vld [vmem:[%s15 + $0x100] sm:$0xff]
      %v8233 = vld [vmem:[%s15 + $0x108] sm:$0xff]
      %v8234 = vld [vmem:[%s15 + $0x110] sm:$0xff]
      %v8235 = vld [vmem:[%s15 + $0x118] sm:$0xff]
      %v8236 = vld [vmem:[%s15 + $0x120] sm:$0xff]
      %v8237 = vld [vmem:[%s15 + $0x128] sm:$0xff]
      %v8238 = vld [vmem:[%s15 + $0x130] sm:$0xff]
      %v8239 = vld [vmem:[%s15 + $0x138] sm:$0xff]
      %v8240 = vld [vmem:[%s15 + $0x140] sm:$0xff]
      %v8241 = vld [vmem:[%s15 + $0x148] sm:$0xff]
      %v8242 = vld [vmem:[%s15 + $0x150] sm:$0xff]
      %v8243 = vld [vmem:[%s15 + $0x158] sm:$0xff]
      %v8244 = vld [vmem:[%s15 + $0x160] sm:$0xff]
      %v8245 = vld [vmem:[%s15 + $0x168] sm:$0xff]
      %v8246 = vld [vmem:[%s15 + $0x170] sm:$0xff]
      %v8247 = vld [vmem:[%s15 + $0x178] sm:$0xff]
      %v8248 = vld [vmem:[%s15 + $0x180] sm:$0xff]
      %v8249 = vld [vmem:[%s15 + $0x188] sm:$0xff]
      %v8250 = vld [vmem:[%s15 + $0x190] sm:$0xff]
      %v8251 = vld [vmem:[%s15 + $0x198] sm:$0xff]
      %v8252 = vld [vmem:[%s15 + $0x1a0] sm:$0xff]
      %v8253 = vld [vmem:[%s15 + $0x1a8] sm:$0xff]
      %v8254 = vld [vmem:[%s15 + $0x1b0] sm:$0xff]
      %v8255 = vld [vmem:[%s15 + $0x1b8] sm:$0xff]
      %v8256 = vld [vmem:[%s15 + $0x1c0] sm:$0xff]
      %v8257 = vld [vmem:[%s15 + $0x1c8] sm:$0xff]
      %v8258 = vld [vmem:[%s15 + $0x1d0] sm:$0xff]
      %v8259 = vld [vmem:[%s15 + $0x1d8] sm:$0xff]
      %v8260 = vld [vmem:[%s15 + $0x1e0] sm:$0xff]
      %v8261 = vld [vmem:[%s15 + $0x1e8] sm:$0xff]
      %v8262 = vld [vmem:[%s15 + $0x1f0] sm:$0xff]
      %v8263 = vld [vmem:[%s15 + $0x1f8] sm:$0xff]
      %v8264 = vld [vmem:[%s16] sm:$0xf]
      %v8266 = vlaneseq
      %v8267 = vshrl.u32 %v8266, 7
      %v8268 = vsub.s32 0, %v8267
      %v8269 = vrot.slane %v8264, %v8268
      %v8270 = vlaneseq
      %v8271 = vshrl.u32 %v8270, 7
      %v8272 = vsub.s32 1, %v8271
      %v8273 = vrot.slane %v8264, %v8272
      %v8274 = vlaneseq
      %v8275 = vshrl.u32 %v8274, 7
      %v8276 = vsub.s32 2, %v8275
      %v8277 = vrot.slane %v8264, %v8276
      %v8278 = vlaneseq
      %v8279 = vshrl.u32 %v8278, 7
      %v8280 = vsub.s32 3, %v8279
      %v8281 = vrot.slane %v8264, %v8280
      %8286 = vmatprep.subr.mxu0 %v8201
      %8287 = vmatpush1.msra.mxu0 %v8200
      %8288 = vmatprep.subr.mxu0 %v8205
      %8289 = vmatpush1.msra.mxu0 %v8204
      %8290 = vmatprep.subr.mxu0 %v8209
      %8291 = vmatpush1.msra.mxu0 %v8208
      %8292 = vmatprep.subr.mxu0 %v8213
      %8293 = vmatpush1.msra.mxu0 %v8212
      %8294 = vmatprep.subr.mxu0 %v8217
      %8295 = vmatpush1.msra.mxu0 %v8216
      %8296 = vmatprep.subr.mxu0 %v8221
      %8297 = vmatpush1.msra.mxu0 %v8220
      %8298 = vmatprep.subr.mxu0 %v8225
      %8299 = vmatpush1.msra.mxu0 %v8224
      %8300 = vmatprep.subr.mxu0 %v8229
      %8301 = vmatpush1.msra.mxu0 %v8228
      %8302 = vmatprep.subr.mxu0 %v8233
      %8303 = vmatpush1.msra.mxu0 %v8232
      %8304 = vmatprep.subr.mxu0 %v8237
      %8305 = vmatpush1.msra.mxu0 %v8236
      %8306 = vmatprep.subr.mxu0 %v8241
      %8307 = vmatpush1.msra.mxu0 %v8240
      %8308 = vmatprep.subr.mxu0 %v8245
      %8309 = vmatpush1.msra.mxu0 %v8244
      %8310 = vmatprep.subr.mxu0 %v8249
      %8311 = vmatpush1.msra.mxu0 %v8248
      %8312 = vmatprep.subr.mxu0 %v8253
      %8313 = vmatpush1.msra.mxu0 %v8252
      %8314 = vmatprep.subr.mxu0 %v8257
      %8315 = vmatpush1.msra.mxu0 %v8256
      %8316 = vmatprep.subr.mxu0 %v8261
      %8317 = vmatpush1.msra.mxu0 %v8260
      %8318 = vmatprep.subr.mxu0 0.0
      %8319 = vmatpush1.msra.mxu0 0.0
      %8320 = vmatprep.subr.mxu0 0.0
      %8321 = vmatpush1.msra.mxu0 0.0
      %8322 = vmatprep.subr.mxu0 0.0
      %8323 = vmatpush1.msra.mxu0 0.0
      %8324 = vmatprep.subr.mxu0 0.0
      %8325 = vmatpush1.msra.mxu0 0.0
      %8326 = vmatprep.subr.mxu0 0.0
      %8327 = vmatpush1.msra.mxu0 0.0
      %8328 = vmatprep.subr.mxu0 0.0
      %8329 = vmatpush1.msra.mxu0 0.0
      %8330 = vmatprep.subr.mxu0 0.0
      %8331 = vmatpush1.msra.mxu0 0.0
      %8332 = vmatprep.subr.mxu0 0.0
      %8333 = vmatpush1.msra.mxu0 0.0
      %8334 = vmatprep.subr.mxu0 0.0
      %8335 = vmatpush1.msra.mxu0 0.0
      %8336 = vmatprep.subr.mxu0 0.0
      %8337 = vmatpush1.msra.mxu0 0.0
      %8338 = vmatprep.subr.mxu0 0.0
      %8339 = vmatpush1.msra.mxu0 0.0
      %8340 = vmatprep.subr.mxu0 0.0
      %8341 = vmatpush1.msra.mxu0 0.0
      %8342 = vmatprep.subr.mxu0 0.0
      %8343 = vmatpush1.msra.mxu0 0.0
      %8344 = vmatprep.subr.mxu0 0.0
      %8345 = vmatpush1.msra.mxu0 0.0
      %8346 = vmatprep.subr.mxu0 0.0
      %8347 = vmatpush1.msra.mxu0 0.0
      %8348 = vmatprep.subr.mxu0 0.0
      %8349 = vmatpush1.msra.mxu0 0.0
      %8350 = vmatprep.mubr.f32.mxu0 0.0
      %8351 = vmatmul.mubr.f32.gmra.mrb[0].mxu0 %v8199
      %v8352 = vpop.f32.mrb[0].mxu0
      %v8353 = vadd.f32 %v8269, %v8352
      %v8354 = vpop.f32.mrb[0].mxu0
      %v8355 = vadd.f32 %v8273, %v8354
      %8356 = vdwg.mxu0
      %8357 = vmatprep.subr.mxu0 %v8203
      %8358 = vmatpush1.msra.mxu0 %v8202
      %8359 = vmatprep.subr.mxu0 %v8207
      %8360 = vmatpush1.msra.mxu0 %v8206
      %8361 = vmatprep.subr.mxu0 %v8211
      %8362 = vmatpush1.msra.mxu0 %v8210
      %8363 = vmatprep.subr.mxu0 %v8215
      %8364 = vmatpush1.msra.mxu0 %v8214
      %8365 = vmatprep.subr.mxu0 %v8219
      %8366 = vmatpush1.msra.mxu0 %v8218
      %8367 = vmatprep.subr.mxu0 %v8223
      %8368 = vmatpush1.msra.mxu0 %v8222
      %8369 = vmatprep.subr.mxu0 %v8227
      %8370 = vmatpush1.msra.mxu0 %v8226
      %8371 = vmatprep.subr.mxu0 %v8231
      %8372 = vmatpush1.msra.mxu0 %v8230
      %8373 = vmatprep.subr.mxu0 %v8235
      %8374 = vmatpush1.msra.mxu0 %v8234
      %8375 = vmatprep.subr.mxu0 %v8239
      %8376 = vmatpush1.msra.mxu0 %v8238
      %8377 = vmatprep.subr.mxu0 %v8243
      %8378 = vmatpush1.msra.mxu0 %v8242
      %8379 = vmatprep.subr.mxu0 %v8247
      %8380 = vmatpush1.msra.mxu0 %v8246
      %8381 = vmatprep.subr.mxu0 %v8251
      %8382 = vmatpush1.msra.mxu0 %v8250
      %8383 = vmatprep.subr.mxu0 %v8255
      %8384 = vmatpush1.msra.mxu0 %v8254
      %8385 = vmatprep.subr.mxu0 %v8259
      %8386 = vmatpush1.msra.mxu0 %v8258
      %8387 = vmatprep.subr.mxu0 %v8263
      %8388 = vmatpush1.msra.mxu0 %v8262
      %8389 = vmatprep.subr.mxu0 0.0
      %8390 = vmatpush1.msra.mxu0 0.0
      %8391 = vmatprep.subr.mxu0 0.0
      %8392 = vmatpush1.msra.mxu0 0.0
      %8393 = vmatprep.subr.mxu0 0.0
      %8394 = vmatpush1.msra.mxu0 0.0
      %8395 = vmatprep.subr.mxu0 0.0
      %8396 = vmatpush1.msra.mxu0 0.0
      %8397 = vmatprep.subr.mxu0 0.0
      %8398 = vmatpush1.msra.mxu0 0.0
      %8399 = vmatprep.subr.mxu0 0.0
      %8400 = vmatpush1.msra.mxu0 0.0
      %8401 = vmatprep.subr.mxu0 0.0
      %8402 = vmatpush1.msra.mxu0 0.0
      %8403 = vmatprep.subr.mxu0 0.0
      %8404 = vmatpush1.msra.mxu0 0.0
      %8405 = vmatprep.subr.mxu0 0.0
      %8406 = vmatpush1.msra.mxu0 0.0
      %8407 = vmatprep.subr.mxu0 0.0
      %8408 = vmatpush1.msra.mxu0 0.0
      %8409 = vmatprep.subr.mxu0 0.0
      %8410 = vmatpush1.msra.mxu0 0.0
      %8411 = vmatprep.subr.mxu0 0.0
      %8412 = vmatpush1.msra.mxu0 0.0
      %8413 = vmatprep.subr.mxu0 0.0
      %8414 = vmatpush1.msra.mxu0 0.0
      %8415 = vmatprep.subr.mxu0 0.0
      %8416 = vmatpush1.msra.mxu0 0.0
      %8417 = vmatprep.subr.mxu0 0.0
      %8418 = vmatpush1.msra.mxu0 0.0
      %8419 = vmatprep.subr.mxu0 0.0
      %8420 = vmatpush1.msra.mxu0 0.0
      %8421 = vmatprep.mubr.f32.mxu0 0.0
      %8422 = vmatmul.mubr.f32.gmra.mrb[0].mxu0 %v8199
      %v8423 = vpop.f32.mrb[0].mxu0
      %v8424 = vadd.f32 %v8277, %v8423
      %v8425 = vpop.f32.mrb[0].mxu0
      %v8426 = vadd.f32 %v8281, %v8425
      %8427 = vdwg.mxu0
      %v8428 = vmax.f32 %v8353, 0.0
      %v8429 = vmax.f32 %v8355, 0.0
      %v8430 = vmax.f32 %v8424, 0.0
      %v8431 = vmax.f32 %v8426, 0.0
      %v8436 = vcombine.low %v8428, %v8429
      %v8437 = vcombine.low %v8430, %v8431
      %v8439 = vunpack.c.l.s4 1966171168
      %v8440 = vunpack.c.0.s8 %v8439
      %v8441 = vlaneseq
      %v8442 = vshrl.u32 %v8441, 7
      %v8443 = vsub.s32 %v8440, %v8442
      %v8444 = vrot.slane %v8436, %v8443
      %v8446 = vunpack.c.l.s4 1966171168
      %v8447 = vunpack.c.0.s8 %v8446
      %v8448 = vlaneseq
      %v8449 = vshrl.u32 %v8448, 7
      %v8450 = vsub.s32 %v8447, %v8449
      %v8451 = vrot.slane %v8437, %v8450
      %v8452 = vcombine.low %v8444, %v8451
      %v8454 = vunpack.c.l.s4 1966171168
      %v8455 = vunpack.c.0.s8 %v8454
      %v8456 = vlaneseq
      %v8457 = vshrl.u32 %v8456, 7
      %v8458 = vsub.s32 %v8455, %v8457
      %v8459 = vrot.slane %v8452, %v8458
      %v8461 = vlaneseq
      %vm8462 = vcmp.ge.s32.totalorder %v8461, 0
      %vm8463 = vcmp.lt.s32.totalorder %v8461, 512
      %vm8464 = vmand %vm8462, %vm8463
      %8465 = vst.msk [vmem:[%s546] sm:$0xf] %vm8464, %v8459
      %p8466 = scmp.lt.s32.totalorder %s28, 1
      %s8467 = scalar_select %p8466, %s28, 1
      %s8468 = smul.addr %s8467, 4
      %s8469 = scalar_lea.vmem %s17, %s8468
      // Predicated region
      $region89: #{naive_cnn_forward.1} parent=87 // pred_check
        %p8470 = pneg %p408
      $region90: #{naive_cnn_forward.1} parent=87 // pred_check_branch
        %8472 = sbr.rel (%p8470) target = $region92
      $region91: #{naive_cnn_forward.1} parent=87 // pred_region
        _
      $region92: #{naive_cnn_forward.1} parent=87 // pred_fallthru
        _
    $region88: #{naive_cnn_forward.1} parent=5 // pred_fallthru
      _
    %p8473 = scmp.le.s32.totalorder 2, %s23
    // Predicated region
    $region93: #{naive_cnn_forward.1} parent=5 // pred_check
      %p8474 = pneg %p8473
    $region94: #{naive_cnn_forward.1} parent=5 // pred_check_branch
      %8476 = sbr.rel (%p8474) target = $region96
    $region95: #{naive_cnn_forward.1} parent=5 // pred_region
      %s8477 = ssub.s32 %s23, 2
      // Predicated region
      $region97: #{naive_cnn_forward.1} parent=95 // pred_check
        %p8478 = pneg %p414
      $region98: #{naive_cnn_forward.1} parent=95 // pred_check_branch
        %8480 = sbr.rel (%p8478) target = $region100
      $region99: #{naive_cnn_forward.1} parent=95 // pred_region
        %p8481 = scmp.lt.s32.totalorder %s29, 1
        %s8482 = scalar_select %p8481, %s29, 1
        %s8483 = smul.addr %s8482, 4
        %s8484 = scalar_lea.vmem %s17, %s8483
      $region100: #{naive_cnn_forward.1} parent=95 // pred_fallthru
        _
    $region96: #{naive_cnn_forward.1} parent=5 // pred_fallthru
      _
  $region6: #{naive_cnn_forward.1} parent=0 // loop_footer
    %s27 = sadd.s32 1, %s23
  $region7: #{naive_cnn_forward.1} parent=0 // loop_footer_branch
    %22 = sbr.rel target = $region3
  $region8: #{naive_cnn_forward.1} parent=0 // loop_exit
    _

</llo_original>
